<compile_context>
chip_gen: v7x
topology: tpu7x:2x2x1
jax: 0.10.0
libtpu: 0.0.40
codegen_flags: <defaults>
</compile_context>

<pallas_src>
import functools

import numpy as np
import jax
import jax.numpy as jnp
from jax.experimental import pallas as pl
from jax.experimental.pallas import tpu as pltpu

EPS = 1e-5
C_PAD = 128          # lane width; every channel axis is zero-padded to this


def _round_up(v, m):
    return ((v + m - 1) // m) * m


def _full_spec(shape):
    # whole-array block, single grid point
    return pl.BlockSpec(shape, lambda i: (0,) * len(shape))


def _cparams():
    return pltpu.CompilerParams(dimension_semantics=("arbitrary",))


# --------------------------- Pallas kernels ---------------------------------

def _stem_kernel(p_ref, w_ref, g_ref, b_ref, o_ref, *, inv_m):
    # 7x7 stride-2 conv (wrapper im2col, real K=147 zero-padded to 256),
    # BN with batch stats (centered variance), ReLU.  bf16 operands, f32 acc.
    y = jnp.dot(p_ref[...], w_ref[...], preferred_element_type=jnp.float32)
    mean = jnp.sum(y, axis=0, keepdims=True) * inv_m
    d = y - mean
    var = jnp.sum(d * d, axis=0, keepdims=True) * inv_m
    scale = g_ref[...] * jax.lax.rsqrt(var + EPS)
    o_ref[...] = jnp.maximum(d * scale + b_ref[...], 0.0)


def _make_block_kernel(*, deltas, c_in, c_mid, goff, m_g, inv_m, has_ds):
    """Whole BasicBlock (conv3x3+BN+ReLU, optional 1x1 ds+BN, conv3x3+BN+res+ReLU)
    in one kernel.  Activations are guarded flat (M_B, 128) buffers whose guard
    rows / spatial-border rows / padded channels are exactly zero."""

    def kernel(*refs):
        if has_ds:
            (xg_ref, w1_ref, g1_ref, b1_ref, w2_ref, g2_ref, b2_ref,
             wd_ref, gd_ref, bd_ref, mask_ref, og_ref, hbuf_ref) = refs
        else:
            (xg_ref, w1_ref, g1_ref, b1_ref, w2_ref, g2_ref, b2_ref,
             mask_ref, og_ref, hbuf_ref) = refs

        mask = mask_ref[...]                                    # (m_g, 1) f32

        def conv3x3(src_ref, w_ref, cin):
            # in-kernel im2col: 9 shifted flat slices (only the real cin lanes)
            # dotted with per-tap (cin, 128) bf16 weights; f32 accumulation.
            acc = jnp.zeros((m_g, C_PAD), jnp.float32)
            for t, dlt in enumerate(deltas):
                a = src_ref[pl.ds(goff + dlt, m_g),
                            pl.ds(0, cin)].astype(jnp.bfloat16)
                w = w_ref[pl.ds(t * cin, cin), :]
                acc = acc + jnp.dot(a, w, preferred_element_type=jnp.float32)
            return acc

        def bn(y_raw, g_ref, b_ref):
            # training-mode BatchNorm: batch stats over the N*H*W interior
            # pixels only (mask zeroes the garbage at border/guard rows),
            # centered two-pass variance, folded affine.  Output is zero
            # outside the interior so the zero-border invariant is preserved.
            y = y_raw * mask
            mean = jnp.sum(y, axis=0, keepdims=True) * inv_m
            d = (y - mean) * mask
            var = jnp.sum(d * d, axis=0, keepdims=True) * inv_m
            scale = g_ref[...] * jax.lax.rsqrt(var + EPS)
            return (d * scale + b_ref[...]) * mask

        # conv1 -> bn1 -> relu
        h = jnp.maximum(bn(conv3x3(xg_ref, w1_ref, c_in), g1_ref, b1_ref), 0.0)

        # stash h in a guarded VMEM scratch so conv2 reuses the shifted-slice
        # trick without any HBM round trip of the mid activation.
        hbuf_ref[...] = jnp.zeros_like(hbuf_ref)
        hbuf_ref[pl.ds(goff, m_g), :] = h

        # identity branch
        if has_ds:
            xin = xg_ref[pl.ds(goff, m_g), pl.ds(0, c_in)].astype(jnp.bfloat16)
            yd = jnp.dot(xin, wd_ref[...], preferred_element_type=jnp.float32)
            identity = bn(yd, gd_ref, bd_ref)
        else:
            identity = xg_ref[pl.ds(goff, m_g), :]

        # conv2 -> bn2 -> +identity -> relu   (borders/guards stay exactly 0)
        out = jnp.maximum(
            bn(conv3x3(hbuf_ref, w2_ref, c_mid), g2_ref, b2_ref) + identity,
            0.0)

        og_ref[...] = jnp.zeros_like(og_ref)
        og_ref[pl.ds(goff, m_g), :] = out

    return kernel


def _head_kernel(xg_ref, s_ref, w1_ref, b1_ref, w2_ref, b2_ref, o_ref):
    # global average pool as one matmul with the interior-selection matrix
    # (1/(H*W) folded in), then fc1 + fc2; all outputs are 128 lanes wide.
    pooled = jnp.dot(s_ref[...], xg_ref[...],
                     preferred_element_type=jnp.float32)          # (N, 128)
    h = jnp.dot(pooled.astype(jnp.bfloat16), w1_ref[...],
                preferred_element_type=jnp.float32) + b1_ref[...]
    o_ref[...] = jnp.dot(h.astype(jnp.bfloat16), w2_ref[...],
                         preferred_element_type=jnp.float32) + b2_ref[...]


# ----------------------------- kernel wrappers -------------------------------

def fused_stem(patches, sp, inv_m):
    m, kp = patches.shape
    kern = functools.partial(_stem_kernel, inv_m=inv_m)
    vec = _full_spec((1, C_PAD))
    return pl.pallas_call(
        kern,
        grid=(1,),
        in_specs=[_full_spec((m, kp)), _full_spec(sp['w'].shape), vec, vec],
        out_specs=_full_spec((m, C_PAD)),
        out_shape=jax.ShapeDtypeStruct((m, C_PAD), jnp.float32),
        compiler_params=_cparams(),
    )(patches, sp['w'], sp['g'], sp['b'])


def fused_basic_block(xg, bp, geo):
    has_ds = 'ds' in bp
    c_in = bp['conv1']['w'].shape[0] // 9          # real input channels
    c_mid = bp['conv2']['w'].shape[0] // 9         # real mid channels
    kern = _make_block_kernel(deltas=geo['deltas'], c_in=c_in, c_mid=c_mid,
                              goff=geo['goff'], m_g=geo['m_g'],
                              inv_m=geo['inv_m'], has_ds=has_ds)
    m_b = geo['m_b']
    vec = _full_spec((1, C_PAD))
    in_specs = [_full_spec((m_b, C_PAD)),
                _full_spec(bp['conv1']['w'].shape), vec, vec,
                _full_spec(bp['conv2']['w'].shape), vec, vec]
    args = [xg, bp['conv1']['w'], bp['conv1']['g'], bp['conv1']['b'],
            bp['conv2']['w'], bp['conv2']['g'], bp['conv2']['b']]
    if has_ds:
        in_specs += [_full_spec(bp['ds']['w'].shape), vec, vec]
        args += [bp['ds']['w'], bp['ds']['g'], bp['ds']['b']]
    in_specs.append(_full_spec((geo['m_g'], 1)))
    args.append(geo['mask'])
    return pl.pallas_call(
        kern,
        grid=(1,),
        in_specs=in_specs,
        out_specs=_full_spec((m_b, C_PAD)),
        out_shape=jax.ShapeDtypeStruct((m_b, C_PAD), jnp.float32),
        scratch_shapes=[pltpu.VMEM((m_b, C_PAD), jnp.float32)],
        compiler_params=_cparams(),
    )(*args)


def fused_head(xg, pool_mat, w1, b1, w2, b2):
    n = pool_mat.shape[0]
    m_b = xg.shape[0]
    vec = _full_spec((1, C_PAD))
    return pl.pallas_call(
        _head_kernel,
        grid=(1,),
        in_specs=[_full_spec((m_b, C_PAD)), _full_spec((n, m_b)),
                  _full_spec(w1.shape), vec, _full_spec(w2.shape), vec],
        out_specs=_full_spec((n, C_PAD)),
        out_shape=jax.ShapeDtypeStruct((n, C_PAD), jnp.float32),
        compiler_params=_cparams(),
    )(xg, pool_mat, w1, b1, w2, b2)


# ------------------------------ JAX glue -------------------------------------

def im2col(x, kh, kw, stride):
    """x: padded NHWC -> (N*Ho*Wo, kh*kw*C) patches, ordering (kh, kw, C)."""
    n, h, w, c = x.shape
    ho = (h - kh) // stride + 1
    wo = (w - kw) // stride + 1
    cols = []
    for i in range(kh):
        for j in range(kw):
            cols.append(x[:, i:i + (ho - 1) * stride + 1:stride,
                          j:j + (wo - 1) * stride + 1:stride, :])
    patches = jnp.concatenate(cols, axis=-1)
    return patches.reshape(n * ho * wo, kh * kw * c), (n, ho, wo)


def _geometry(n, h, w):
    """Static geometry of the guarded flat activation layout for HxW images
    padded by 1 on each side: rows = [goff guard][n*(h+2)*(w+2) data][tail guard]."""
    hp, wp = h + 2, w + 2
    m_g = n * hp * wp
    goff = max(16, _round_up(wp + 1, 8))          # >= wp+1 and sublane-aligned
    tail = goff
    m_b = goff + m_g + tail
    if m_b % 8:
        tail += 8 - m_b % 8
        m_b = goff + m_g + tail
    deltas = tuple((i - 1) * wp + (j - 1) for i in range(3) for j in range(3))
    idx = np.arange(m_g)
    yy = (idx // wp) % hp
    xx = idx % wp
    interior = (yy >= 1) & (yy <= h) & (xx >= 1) & (xx <= w)
    mask = interior.astype(np.float32).reshape(m_g, 1)
    pool = np.zeros((n, m_b), np.float32)
    rows = np.where(interior)[0]
    pool[rows // (hp * wp), goff + rows] = 1.0 / (h * w)   # avg-pool folded in
    return dict(m_g=m_g, m_b=m_b, goff=goff, tail=tail, deltas=deltas,
                mask=jnp.asarray(mask), pool=jnp.asarray(pool),
                inv_m=1.0 / (n * h * w))


def resnet_vision_forward(x_nchw, p, features):
    n = x_nchw.shape[0]
    x = jnp.transpose(x_nchw, (0, 2, 3, 1)).astype(jnp.float32)      # NHWC
    # ---- stem: 7x7 stride-2 conv with reflect padding 3, BN, ReLU (1 call)
    xp = jnp.pad(x, ((0, 0), (3, 3), (3, 3), (0, 0)), mode='reflect')
    patches, (_, ho, wo) = im2col(xp, 7, 7, 2)
    kp = p['stem']['w'].shape[0]
    patches = jnp.pad(patches, ((0, 0), (0, kp - patches.shape[1])))
    patches = patches.astype(jnp.bfloat16)
    stem = fused_stem(patches, p['stem'], 1.0 / (n * ho * wo))   # (n*ho*wo,128)

    # ---- one-time placement of the stem output into the guarded flat layout
    geo = _geometry(n, ho, wo)
    xg = stem.reshape(n, ho, wo, C_PAD)
    xg = jnp.pad(xg, ((0, 0), (1, 1), (1, 1), (0, 0)))
    xg = xg.reshape(geo['m_g'], C_PAD)
    xg = jnp.pad(xg, ((geo['goff'], geo['tail']), (0, 0)))

    # ---- three fused BasicBlocks (one pallas_call each, no glue in between)
    xg = fused_basic_block(xg, p['block1'], geo)
    xg = fused_basic_block(xg, p['block2'], geo)
    xg = fused_basic_block(xg, p['block3'], geo)

    # ---- fused global-average-pool + fc1 + fc2 (one call), slice real columns
    z = fused_head(xg, geo['pool'], p['fc1_w'], p['fc1_b'],
                   p['fc2_w'], p['fc2_b'])
    return z[:, :2 * features]


# ------------------------- parameter preparation -----------------------------

def _pad_to(a, axis, target):
    if a.shape[axis] == target:
        return a
    pads = [(0, 0)] * a.ndim
    pads[axis] = (0, target - a.shape[axis])
    return jnp.pad(a, pads)


def _prep_bn(gamma, beta):
    return (_pad_to(gamma, 0, C_PAD).reshape(1, C_PAD),
            _pad_to(beta, 0, C_PAD).reshape(1, C_PAD))


def _prep_conv(w, gamma, beta):
    """PyTorch conv weight (Cout, Cin, kh, kw) -> tap-stacked matmul layout
    (kh*kw*Cin, 128) bf16.  Cout zero-padded to 128 (lane-dense outputs);
    Cin / reduction dim kept at its REAL size (no K padding)."""
    cout, cin, kh, kw = w.shape
    wm = jnp.transpose(w, (2, 3, 1, 0)).reshape(kh * kw * cin, cout)
    wm = _pad_to(wm, 1, C_PAD).astype(jnp.bfloat16)
    g, b = _prep_bn(gamma, beta)
    return {'w': wm, 'g': g, 'b': b}


def _prep_stem(w, gamma, beta):
    cout, cin, kh, kw = w.shape
    wm = jnp.transpose(w, (2, 3, 1, 0)).reshape(kh * kw * cin, cout)
    wm = _pad_to(wm, 1, C_PAD)
    wm = _pad_to(wm, 0, _round_up(wm.shape[0], 128)).astype(jnp.bfloat16)
    g, b = _prep_bn(gamma, beta)
    return {'w': wm, 'g': g, 'b': b}


def prepare_params(params):
    p = {'stem': _prep_stem(params['stem_w'], params['stem_bn_g'],
                            params['stem_bn_b'])}

    def prep_block(bp):
        d = {'conv1': _prep_conv(bp['conv1_w'], bp['bn1_g'], bp['bn1_b']),
             'conv2': _prep_conv(bp['conv2_w'], bp['bn2_g'], bp['bn2_b'])}
        if 'ds_conv_w' in bp:
            d['ds'] = _prep_conv(bp['ds_conv_w'], bp['ds_bn_g'], bp['ds_bn_b'])
        return d

    p['block1'] = prep_block(params['block1'])
    p['block2'] = prep_block(params['block2'])
    p['block3'] = prep_block(params['block3'])
    # FC head: pooled features arrive with 128 zero-padded lanes; pad fc rows
    # to match and fc output columns to 128 for lane-dense stores.
    p['fc1_w'] = _pad_to(_pad_to(params['fc1_w'], 0, C_PAD), 1,
                         C_PAD).astype(jnp.bfloat16)
    p['fc1_b'] = _pad_to(params['fc1_b'], 1, C_PAD)
    p['fc2_w'] = _pad_to(_pad_to(params['fc2_w'], 0, C_PAD), 1,
                         C_PAD).astype(jnp.bfloat16)
    p['fc2_b'] = _pad_to(params['fc2_b'], 1, C_PAD)
    return p


# --------------------------- parameter init ----------------------------------

def init_params(key, features):
    half = features // 2
    keys = iter(jax.random.split(key, 64))

    def conv(cout, cin, kh, kw):
        return 0.1 * jax.random.normal(next(keys), (cout, cin, kh, kw), jnp.float32)

    def bn(c):
        g = 1.0 + 0.1 * jax.random.normal(next(keys), (c,), jnp.float32)
        b = 0.1 * jax.random.normal(next(keys), (c,), jnp.float32)
        return g, b

    def block(cin, cout, downsample):
        p = {}
        p['conv1_w'] = conv(cout, cin, 3, 3)
        p['bn1_g'], p['bn1_b'] = bn(cout)
        p['conv2_w'] = conv(cout, cout, 3, 3)
        p['bn2_g'], p['bn2_b'] = bn(cout)
        if downsample:
            p['ds_conv_w'] = conv(cout, cin, 1, 1)
            p['ds_bn_g'], p['ds_bn_b'] = bn(cout)
        return p

    params = {}
    params['stem_w'] = conv(64, 3, 7, 7)
    params['stem_bn_g'], params['stem_bn_b'] = bn(64)
    params['block1'] = block(64, half, True)
    params['block2'] = block(half, half, False)
    params['block3'] = block(half, half, False)
    # Linear weights stored as (in, out); biases as (1, out)
    params['fc1_w'] = 0.1 * jax.random.normal(next(keys), (half, features), jnp.float32)
    params['fc1_b'] = 0.1 * jax.random.normal(next(keys), (1, features), jnp.float32)
    params['fc2_w'] = 0.1 * jax.random.normal(next(keys), (features, 2 * features), jnp.float32)
    params['fc2_b'] = 0.1 * jax.random.normal(next(keys), (1, 2 * features), jnp.float32)
    return params


if __name__ == "__main__":
    key = jax.random.PRNGKey(0)
    pkey, xkey = jax.random.split(key)
    features = 32
    params = init_params(pkey, features)
    prepped = prepare_params(params)            # one-time layout / dtype prep
    x = jax.random.normal(xkey, (2, 3, 16, 16), jnp.float32)   # NCHW, 3 chans

    fwd = jax.jit(resnet_vision_forward, static_argnums=(2,))
    z = fwd(x, prepped, features)
    z = jax.block_until_ready(z)
    assert z.shape == (2, 2 * features), z.shape
    assert bool(jnp.all(jnp.isfinite(z)))
    print("KERNEL_OK")
</pallas_src>

<mosaic_0001>
module attributes {stable_mosaic.version = 11 : i64} {
  func.func @_stem_kernel(%arg0: i32, %arg1: memref<128x256xbf16, #tpu.memory_space<vmem>>, %arg2: memref<256x128xbf16, #tpu.memory_space<vmem>>, %arg3: memref<1x128xf32, #tpu.memory_space<vmem>>, %arg4: memref<1x128xf32, #tpu.memory_space<vmem>>, %arg5: memref<128x128xf32, #tpu.memory_space<vmem>>) attributes {dimension_semantics = [#tpu.dimension_semantics<arbitrary>], iteration_bounds = array<i64: 1>, scalar_prefetch = 0 : i64, scratch_operands = 0 : i64, tpu.core_type = #tpu.core_type<tc>, window_params = [{pipeline_mode = #tpu.pipeline_mode<synchronous>, transform_indices = @transform_0, window_bounds = array<i64: 128, 256>}, {pipeline_mode = #tpu.pipeline_mode<synchronous>, transform_indices = @transform_1, window_bounds = array<i64: 256, 128>}, {pipeline_mode = #tpu.pipeline_mode<synchronous>, transform_indices = @transform_2, window_bounds = array<i64: 1, 128>}, {pipeline_mode = #tpu.pipeline_mode<synchronous>, transform_indices = @transform_3, window_bounds = array<i64: 1, 128>}, {pipeline_mode = #tpu.pipeline_mode<synchronous>, transform_indices = @transform_4, window_bounds = array<i64: 128, 128>}]} {
    %c0 = arith.constant 0 : index
    %c0_0 = arith.constant 0 : index
    %0 = vector.load %arg1[%c0, %c0_0] : memref<128x256xbf16, #tpu.memory_space<vmem>>, vector<128x256xbf16>
    %c0_1 = arith.constant 0 : index
    %c0_2 = arith.constant 0 : index
    %1 = vector.load %arg2[%c0_1, %c0_2] : memref<256x128xbf16, #tpu.memory_space<vmem>>, vector<256x128xbf16>
    %cst = arith.constant dense<0.000000e+00> : vector<128x128xf32>
    %2 = tpu.matmul %0, %1, %cst {dimension_numbers = #tpu.dot_dimension_numbers<[1], [0], [0], [1], [0, 0, 1, 1], [], []>} : vector<128x256xbf16>, vector<256x128xbf16>, vector<128x128xf32> -> vector<128x128xf32>
    %cst_3 = arith.constant dense<0.000000e+00> : vector<128xf32>
    %3 = vector.multi_reduction <add>, %2, %cst_3 [0] : vector<128x128xf32> to vector<128xf32>
    %4 = vector.shape_cast %3 : vector<128xf32> to vector<1x128xf32>
    %cst_4 = arith.constant 7.812500e-03 : f32
    %5 = vector.broadcast %cst_4 : f32 to vector<1x128xf32>
    %6 = arith.mulf %4, %5 : vector<1x128xf32>
    %7 = vector.broadcast %6 : vector<1x128xf32> to vector<128x128xf32>
    %8 = arith.subf %2, %7 : vector<128x128xf32>
    %9 = arith.mulf %8, %8 : vector<128x128xf32>
    %cst_5 = arith.constant dense<0.000000e+00> : vector<128xf32>
    %10 = vector.multi_reduction <add>, %9, %cst_5 [0] : vector<128x128xf32> to vector<128xf32>
    %11 = vector.shape_cast %10 : vector<128xf32> to vector<1x128xf32>
    %cst_6 = arith.constant 7.812500e-03 : f32
    %12 = vector.broadcast %cst_6 : f32 to vector<1x128xf32>
    %13 = arith.mulf %11, %12 : vector<1x128xf32>
    %c0_7 = arith.constant 0 : index
    %c0_8 = arith.constant 0 : index
    %14 = vector.load %arg3[%c0_7, %c0_8] : memref<1x128xf32, #tpu.memory_space<vmem>>, vector<1x128xf32>
    %cst_9 = arith.constant 9.99999974E-6 : f32
    %15 = vector.broadcast %cst_9 : f32 to vector<1x128xf32>
    %16 = arith.addf %13, %15 : vector<1x128xf32>
    %17 = math.rsqrt %16 : vector<1x128xf32>
    %18 = arith.mulf %14, %17 : vector<1x128xf32>
    %19 = vector.broadcast %18 : vector<1x128xf32> to vector<128x128xf32>
    %20 = arith.mulf %8, %19 : vector<128x128xf32>
    %c0_10 = arith.constant 0 : index
    %c0_11 = arith.constant 0 : index
    %21 = vector.load %arg4[%c0_10, %c0_11] : memref<1x128xf32, #tpu.memory_space<vmem>>, vector<1x128xf32>
    %22 = vector.broadcast %21 : vector<1x128xf32> to vector<128x128xf32>
    %23 = arith.addf %20, %22 : vector<128x128xf32>
    %cst_12 = arith.constant 0.000000e+00 : f32
    %24 = vector.broadcast %cst_12 : f32 to vector<128x128xf32>
    %25 = arith.maximumf %23, %24 : vector<128x128xf32>
    %c0_13 = arith.constant 0 : index
    %c0_14 = arith.constant 0 : index
    %26 = vector.load %arg5[%c0_13, %c0_14] : memref<128x128xf32, #tpu.memory_space<vmem>>, vector<128x128xf32>
    tpu.vector_store %arg5[%c0_13, %c0_14], %25 {strides = array<i32>} : memref<128x128xf32, #tpu.memory_space<vmem>>, vector<128x128xf32>,
    return
  }
  func.func @transform_0(%arg0: i32) -> (i32, i32) {
    %c0_i32 = arith.constant 0 : i32
    %c0_i32_0 = arith.constant 0 : i32
    %c0_i32_1 = arith.constant 0 : i32
    return %c0_i32, %c0_i32_0 : i32, i32
  }
  func.func @transform_1(%arg0: i32) -> (i32, i32) {
    %c0_i32 = arith.constant 0 : i32
    %c0_i32_0 = arith.constant 0 : i32
    %c0_i32_1 = arith.constant 0 : i32
    return %c0_i32, %c0_i32_0 : i32, i32
  }
  func.func @transform_2(%arg0: i32) -> (i32, i32) {
    %c0_i32 = arith.constant 0 : i32
    %c0_i32_0 = arith.constant 0 : i32
    %c0_i32_1 = arith.constant 0 : i32
    return %c0_i32, %c0_i32_0 : i32, i32
  }
  func.func @transform_3(%arg0: i32) -> (i32, i32) {
    %c0_i32 = arith.constant 0 : i32
    %c0_i32_0 = arith.constant 0 : i32
    %c0_i32_1 = arith.constant 0 : i32
    return %c0_i32, %c0_i32_0 : i32, i32
  }
  func.func @transform_4(%arg0: i32) -> (i32, i32) {
    %c0_i32 = arith.constant 0 : i32
    %c0_i32_0 = arith.constant 0 : i32
    %c0_i32_1 = arith.constant 0 : i32
    return %c0_i32, %c0_i32_0 : i32, i32
  }
}

module attributes {stable_mosaic.version = 11 : i64} {
  func.func @kernel(%arg0: i32, %arg1: memref<232x128xf32, #tpu.memory_space<vmem>>, %arg2: memref<576x128xbf16, #tpu.memory_space<vmem>>, %arg3: memref<1x128xf32, #tpu.memory_space<vmem>>, %arg4: memref<1x128xf32, #tpu.memory_space<vmem>>, %arg5: memref<144x128xbf16, #tpu.memory_space<vmem>>, %arg6: memref<1x128xf32, #tpu.memory_space<vmem>>, %arg7: memref<1x128xf32, #tpu.memory_space<vmem>>, %arg8: memref<64x128xbf16, #tpu.memory_space<vmem>>, %arg9: memref<1x128xf32, #tpu.memory_space<vmem>>, %arg10: memref<1x128xf32, #tpu.memory_space<vmem>>, %arg11: memref<200x1xf32, #tpu.memory_space<vmem>>, %arg12: memref<232x128xf32, #tpu.memory_space<vmem>>, %arg13: memref<232x128xf32, #tpu.memory_space<vmem>>) attributes {dimension_semantics = [#tpu.dimension_semantics<arbitrary>], iteration_bounds = array<i64: 1>, scalar_prefetch = 0 : i64, scratch_operands = 1 : i64, tpu.core_type = #tpu.core_type<tc>, window_params = [{pipeline_mode = #tpu.pipeline_mode<synchronous>, transform_indices = @transform_0, window_bounds = array<i64: 232, 128>}, {pipeline_mode = #tpu.pipeline_mode<synchronous>, transform_indices = @transform_1, window_bounds = array<i64: 576, 128>}, {pipeline_mode = #tpu.pipeline_mode<synchronous>, transform_indices = @transform_2, window_bounds = array<i64: 1, 128>}, {pipeline_mode = #tpu.pipeline_mode<synchronous>, transform_indices = @transform_3, window_bounds = array<i64: 1, 128>}, {pipeline_mode = #tpu.pipeline_mode<synchronous>, transform_indices = @transform_4, window_bounds = array<i64: 144, 128>}, {pipeline_mode = #tpu.pipeline_mode<synchronous>, transform_indices = @transform_5, window_bounds = array<i64: 1, 128>}, {pipeline_mode = #tpu.pipeline_mode<synchronous>, transform_indices = @transform_6, window_bounds = array<i64: 1, 128>}, {pipeline_mode = #tpu.pipeline_mode<synchronous>, transform_indices = @transform_7, window_bounds = array<i64: 64, 128>}, {pipeline_mode = #tpu.pipeline_mode<synchronous>, transform_indices = @transform_8, window_bounds = array<i64: 1, 128>}, {pipeline_mode = #tpu.pipeline_mode<synchronous>, transform_indices = @transform_9, window_bounds = array<i64: 1, 128>}, {pipeline_mode = #tpu.pipeline_mode<synchronous>, transform_indices = @transform_10, window_bounds = array<i64: 200, 1>}, {pipeline_mode = #tpu.pipeline_mode<synchronous>, transform_indices = @transform_11, window_bounds = array<i64: 232, 128>}]} {
    %c0 = arith.constant 0 : index
    %c0_0 = arith.constant 0 : index
    %0 = vector.load %arg11[%c0, %c0_0] : memref<200x1xf32, #tpu.memory_space<vmem>>, vector<200x1xf32>
    %cst = arith.constant 0.000000e+00 : f32
    %1 = vector.broadcast %cst : f32 to vector<200x128xf32>
    %c5 = arith.constant 5 : index
    %c0_1 = arith.constant 0 : index
    %2 = vector.load %arg1[%c5, %c0_1] : memref<232x128xf32, #tpu.memory_space<vmem>>, vector<200x64xf32>
    %3 = arith.truncf %2 : vector<200x64xf32> to vector<200x64xbf16>
    %c0_2 = arith.constant 0 : index
    %c0_3 = arith.constant 0 : index
    %4 = vector.load %arg2[%c0_2, %c0_3] : memref<576x128xbf16, #tpu.memory_space<vmem>>, vector<64x128xbf16>
    %cst_4 = arith.constant dense<0.000000e+00> : vector<200x128xf32>
    %5 = tpu.matmul %3, %4, %cst_4 {dimension_numbers = #tpu.dot_dimension_numbers<[1], [0], [0], [1], [0, 0, 1, 1], [], []>} : vector<200x64xbf16>, vector<64x128xbf16>, vector<200x128xf32> -> vector<200x128xf32>
    %6 = arith.addf %1, %5 : vector<200x128xf32>
    %c6 = arith.constant 6 : index
    %c0_5 = arith.constant 0 : index
    %7 = vector.load %arg1[%c6, %c0_5] : memref<232x128xf32, #tpu.memory_space<vmem>>, vector<200x64xf32>
    %8 = arith.truncf %7 : vector<200x64xf32> to vector<200x64xbf16>
    %c64 = arith.constant 64 : index
    %c0_6 = arith.constant 0 : index
    %9 = vector.load %arg2[%c64, %c0_6] : memref<576x128xbf16, #tpu.memory_space<vmem>>, vector<64x128xbf16>
    %cst_7 = arith.constant dense<0.000000e+00> : vector<200x128xf32>
    %10 = tpu.matmul %8, %9, %cst_7 {dimension_numbers = #tpu.dot_dimension_numbers<[1], [0], [0], [1], [0, 0, 1, 1], [], []>} : vector<200x64xbf16>, vector<64x128xbf16>, vector<200x128xf32> -> vector<200x128xf32>
    %11 = arith.addf %6, %10 : vector<200x128xf32>
    %c7 = arith.constant 7 : index
    %c0_8 = arith.constant 0 : index
    %12 = vector.load %arg1[%c7, %c0_8] : memref<232x128xf32, #tpu.memory_space<vmem>>, vector<200x64xf32>
    %13 = arith.truncf %12 : vector<200x64xf32> to vector<200x64xbf16>
    %c128 = arith.constant 128 : index
    %c0_9 = arith.constant 0 : index
    %14 = vector.load %arg2[%c128, %c0_9] : memref<576x128xbf16, #tpu.memory_space<vmem>>, vector<64x128xbf16>
    %cst_10 = arith.constant dense<0.000000e+00> : vector<200x128xf32>
    %15 = tpu.matmul %13, %14, %cst_10 {dimension_numbers = #tpu.dot_dimension_numbers<[1], [0], [0], [1], [0, 0, 1, 1], [], []>} : vector<200x64xbf16>, vector<64x128xbf16>, vector<200x128xf32> -> vector<200x128xf32>
    %16 = arith.addf %11, %15 : vector<200x128xf32>
    %c15 = arith.constant 15 : index
    %c0_11 = arith.constant 0 : index
    %17 = vector.load %arg1[%c15, %c0_11] : memref<232x128xf32, #tpu.memory_space<vmem>>, vector<200x64xf32>
    %18 = arith.truncf %17 : vector<200x64xf32> to vector<200x64xbf16>
    %c192 = arith.constant 192 : index
    %c0_12 = arith.constant 0 : index
    %19 = vector.load %arg2[%c192, %c0_12] : memref<576x128xbf16, #tpu.memory_space<vmem>>, vector<64x128xbf16>
    %cst_13 = arith.constant dense<0.000000e+00> : vector<200x128xf32>
    %20 = tpu.matmul %18, %19, %cst_13 {dimension_numbers = #tpu.dot_dimension_numbers<[1], [0], [0], [1], [0, 0, 1, 1], [], []>} : vector<200x64xbf16>, vector<64x128xbf16>, vector<200x128xf32> -> vector<200x128xf32>
    %21 = arith.addf %16, %20 : vector<200x128xf32>
    %c16 = arith.constant 16 : index
    %c0_14 = arith.constant 0 : index
    %22 = vector.load %arg1[%c16, %c0_14] : memref<232x128xf32, #tpu.memory_space<vmem>>, vector<200x64xf32>
    %23 = arith.truncf %22 : vector<200x64xf32> to vector<200x64xbf16>
    %c256 = arith.constant 256 : index
    %c0_15 = arith.constant 0 : index
    %24 = vector.load %arg2[%c256, %c0_15] : memref<576x128xbf16, #tpu.memory_space<vmem>>, vector<64x128xbf16>
    %cst_16 = arith.constant dense<0.000000e+00> : vector<200x128xf32>
    %25 = tpu.matmul %23, %24, %cst_16 {dimension_numbers = #tpu.dot_dimension_numbers<[1], [0], [0], [1], [0, 0, 1, 1], [], []>} : vector<200x64xbf16>, vector<64x128xbf16>, vector<200x128xf32> -> vector<200x128xf32>
    %26 = arith.addf %21, %25 : vector<200x128xf32>
    %c17 = arith.constant 17 : index
    %c0_17 = arith.constant 0 : index
    %27 = vector.load %arg1[%c17, %c0_17] : memref<232x128xf32, #tpu.memory_space<vmem>>, vector<200x64xf32>
    %28 = arith.truncf %27 : vector<200x64xf32> to vector<200x64xbf16>
    %c320 = arith.constant 320 : index
    %c0_18 = arith.constant 0 : index
    %29 = vector.load %arg2[%c320, %c0_18] : memref<576x128xbf16, #tpu.memory_space<vmem>>, vector<64x128xbf16>
    %cst_19 = arith.constant dense<0.000000e+00> : vector<200x128xf32>
    %30 = tpu.matmul %28, %29, %cst_19 {dimension_numbers = #tpu.dot_dimension_numbers<[1], [0], [0], [1], [0, 0, 1, 1], [], []>} : vector<200x64xbf16>, vector<64x128xbf16>, vector<200x128xf32> -> vector<200x128xf32>
    %31 = arith.addf %26, %30 : vector<200x128xf32>
    %c25 = arith.constant 25 : index
    %c0_20 = arith.constant 0 : index
    %32 = vector.load %arg1[%c25, %c0_20] : memref<232x128xf32, #tpu.memory_space<vmem>>, vector<200x64xf32>
    %33 = arith.truncf %32 : vector<200x64xf32> to vector<200x64xbf16>
    %c384 = arith.constant 384 : index
    %c0_21 = arith.constant 0 : index
    %34 = vector.load %arg2[%c384, %c0_21] : memref<576x128xbf16, #tpu.memory_space<vmem>>, vector<64x128xbf16>
    %cst_22 = arith.constant dense<0.000000e+00> : vector<200x128xf32>
    %35 = tpu.matmul %33, %34, %cst_22 {dimension_numbers = #tpu.dot_dimension_numbers<[1], [0], [0], [1], [0, 0, 1, 1], [], []>} : vector<200x64xbf16>, vector<64x128xbf16>, vector<200x128xf32> -> vector<200x128xf32>
    %36 = arith.addf %31, %35 : vector<200x128xf32>
    %c26 = arith.constant 26 : index
    %c0_23 = arith.constant 0 : index
    %37 = vector.load %arg1[%c26, %c0_23] : memref<232x128xf32, #tpu.memory_space<vmem>>, vector<200x64xf32>
    %38 = arith.truncf %37 : vector<200x64xf32> to vector<200x64xbf16>
    %c448 = arith.constant 448 : index
    %c0_24 = arith.constant 0 : index
    %39 = vector.load %arg2[%c448, %c0_24] : memref<576x128xbf16, #tpu.memory_space<vmem>>, vector<64x128xbf16>
    %cst_25 = arith.constant dense<0.000000e+00> : vector<200x128xf32>
    %40 = tpu.matmul %38, %39, %cst_25 {dimension_numbers = #tpu.dot_dimension_numbers<[1], [0], [0], [1], [0, 0, 1, 1], [], []>} : vector<200x64xbf16>, vector<64x128xbf16>, vector<200x128xf32> -> vector<200x128xf32>
    %41 = arith.addf %36, %40 : vector<200x128xf32>
    %c27 = arith.constant 27 : index
    %c0_26 = arith.constant 0 : index
    %42 = vector.load %arg1[%c27, %c0_26] : memref<232x128xf32, #tpu.memory_space<vmem>>, vector<200x64xf32>
    %43 = arith.truncf %42 : vector<200x64xf32> to vector<200x64xbf16>
    %c512 = arith.constant 512 : index
    %c0_27 = arith.constant 0 : index
    %44 = vector.load %arg2[%c512, %c0_27] : memref<576x128xbf16, #tpu.memory_space<vmem>>, vector<64x128xbf16>
    %cst_28 = arith.constant dense<0.000000e+00> : vector<200x128xf32>
    %45 = tpu.matmul %43, %44, %cst_28 {dimension_numbers = #tpu.dot_dimension_numbers<[1], [0], [0], [1], [0, 0, 1, 1], [], []>} : vector<200x64xbf16>, vector<64x128xbf16>, vector<200x128xf32> -> vector<200x128xf32>
    %46 = arith.addf %41, %45 : vector<200x128xf32>
    %47 = vector.broadcast %0 : vector<200x1xf32> to vector<200x128xf32>
    %48 = arith.mulf %46, %47 : vector<200x128xf32>
    %cst_29 = arith.constant dense<0.000000e+00> : vector<128xf32>
    %49 = vector.multi_reduction <add>, %48, %cst_29 [0] : vector<200x128xf32> to vector<128xf32>
    %50 = vector.shape_cast %49 : vector<128xf32> to vector<1x128xf32>
    %cst_30 = arith.constant 7.812500e-03 : f32
    %51 = vector.broadcast %cst_30 : f32 to vector<1x128xf32>
    %52 = arith.mulf %50, %51 : vector<1x128xf32>
    %53 = vector.broadcast %52 : vector<1x128xf32> to vector<200x128xf32>
    %54 = arith.subf %48, %53 : vector<200x128xf32>
    %55 = vector.broadcast %0 : vector<200x1xf32> to vector<200x128xf32>
    %56 = arith.mulf %54, %55 : vector<200x128xf32>
    %57 = arith.mulf %56, %56 : vector<200x128xf32>
    %cst_31 = arith.constant dense<0.000000e+00> : vector<128xf32>
    %58 = vector.multi_reduction <add>, %57, %cst_31 [0] : vector<200x128xf32> to vector<128xf32>
    %59 = vector.shape_cast %58 : vector<128xf32> to vector<1x128xf32>
    %cst_32 = arith.constant 7.812500e-03 : f32
    %60 = vector.broadcast %cst_32 : f32 to vector<1x128xf32>
    %61 = arith.mulf %59, %60 : vector<1x128xf32>
    %c0_33 = arith.constant 0 : index
    %c0_34 = arith.constant 0 : index
    %62 = vector.load %arg3[%c0_33, %c0_34] : memref<1x128xf32, #tpu.memory_space<vmem>>, vector<1x128xf32>
    %cst_35 = arith.constant 9.99999974E-6 : f32
    %63 = vector.broadcast %cst_35 : f32 to vector<1x128xf32>
    %64 = arith.addf %61, %63 : vector<1x128xf32>
    %65 = math.rsqrt %64 : vector<1x128xf32>
    %66 = arith.mulf %62, %65 : vector<1x128xf32>
    %67 = vector.broadcast %66 : vector<1x128xf32> to vector<200x128xf32>
    %68 = arith.mulf %56, %67 : vector<200x128xf32>
    %c0_36 = arith.constant 0 : index
    %c0_37 = arith.constant 0 : index
    %69 = vector.load %arg4[%c0_36, %c0_37] : memref<1x128xf32, #tpu.memory_space<vmem>>, vector<1x128xf32>
    %70 = vector.broadcast %69 : vector<1x128xf32> to vector<200x128xf32>
    %71 = arith.addf %68, %70 : vector<200x128xf32>
    %72 = vector.broadcast %0 : vector<200x1xf32> to vector<200x128xf32>
    %73 = arith.mulf %71, %72 : vector<200x128xf32>
    %cst_38 = arith.constant 0.000000e+00 : f32
    %74 = vector.broadcast %cst_38 : f32 to vector<200x128xf32>
    %75 = arith.maximumf %73, %74 : vector<200x128xf32>
    %cst_39 = arith.constant 0.000000e+00 : f32
    %76 = vector.broadcast %cst_39 : f32 to vector<232x128xf32>
    %c0_40 = arith.constant 0 : index
    %c0_41 = arith.constant 0 : index
    %77 = vector.load %arg13[%c0_40, %c0_41] : memref<232x128xf32, #tpu.memory_space<vmem>>, vector<232x128xf32>
    tpu.vector_store %arg13[%c0_40, %c0_41], %76 {strides = array<i32>} : memref<232x128xf32, #tpu.memory_space<vmem>>, vector<232x128xf32>,
    %c16_42 = arith.constant 16 : index
    %c0_43 = arith.constant 0 : index
    %78 = vector.load %arg13[%c16_42, %c0_43] : memref<232x128xf32, #tpu.memory_space<vmem>>, vector<200x128xf32>
    tpu.vector_store %arg13[%c16_42, %c0_43], %75 {strides = array<i32>} : memref<232x128xf32, #tpu.memory_space<vmem>>, vector<200x128xf32>,
    %c16_44 = arith.constant 16 : index
    %c0_45 = arith.constant 0 : index
    %79 = vector.load %arg1[%c16_44, %c0_45] : memref<232x128xf32, #tpu.memory_space<vmem>>, vector<200x64xf32>
    %80 = arith.truncf %79 : vector<200x64xf32> to vector<200x64xbf16>
    %c0_46 = arith.constant 0 : index
    %c0_47 = arith.constant 0 : index
    %81 = vector.load %arg8[%c0_46, %c0_47] : memref<64x128xbf16, #tpu.memory_space<vmem>>, vector<64x128xbf16>
    %cst_48 = arith.constant dense<0.000000e+00> : vector<200x128xf32>
    %82 = tpu.matmul %80, %81, %cst_48 {dimension_numbers = #tpu.dot_dimension_numbers<[1], [0], [0], [1], [0, 0, 1, 1], [], []>} : vector<200x64xbf16>, vector<64x128xbf16>, vector<200x128xf32> -> vector<200x128xf32>
    %83 = vector.broadcast %0 : vector<200x1xf32> to vector<200x128xf32>
    %84 = arith.mulf %82, %83 : vector<200x128xf32>
    %cst_49 = arith.constant dense<0.000000e+00> : vector<128xf32>
    %85 = vector.multi_reduction <add>, %84, %cst_49 [0] : vector<200x128xf32> to vector<128xf32>
    %86 = vector.shape_cast %85 : vector<128xf32> to vector<1x128xf32>
    %cst_50 = arith.constant 7.812500e-03 : f32
    %87 = vector.broadcast %cst_50 : f32 to vector<1x128xf32>
    %88 = arith.mulf %86, %87 : vector<1x128xf32>
    %89 = vector.broadcast %88 : vector<1x128xf32> to vector<200x128xf32>
    %90 = arith.subf %84, %89 : vector<200x128xf32>
    %91 = vector.broadcast %0 : vector<200x1xf32> to vector<200x128xf32>
    %92 = arith.mulf %90, %91 : vector<200x128xf32>
    %93 = arith.mulf %92, %92 : vector<200x128xf32>
    %cst_51 = arith.constant dense<0.000000e+00> : vector<128xf32>
    %94 = vector.multi_reduction <add>, %93, %cst_51 [0] : vector<200x128xf32> to vector<128xf32>
    %95 = vector.shape_cast %94 : vector<128xf32> to vector<1x128xf32>
    %cst_52 = arith.constant 7.812500e-03 : f32
    %96 = vector.broadcast %cst_52 : f32 to vector<1x128xf32>
    %97 = arith.mulf %95, %96 : vector<1x128xf32>
    %c0_53 = arith.constant 0 : index
    %c0_54 = arith.constant 0 : index
    %98 = vector.load %arg9[%c0_53, %c0_54] : memref<1x128xf32, #tpu.memory_space<vmem>>, vector<1x128xf32>
    %cst_55 = arith.constant 9.99999974E-6 : f32
    %99 = vector.broadcast %cst_55 : f32 to vector<1x128xf32>
    %100 = arith.addf %97, %99 : vector<1x128xf32>
    %101 = math.rsqrt %100 : vector<1x128xf32>
    %102 = arith.mulf %98, %101 : vector<1x128xf32>
    %103 = vector.broadcast %102 : vector<1x128xf32> to vector<200x128xf32>
    %104 = arith.mulf %92, %103 : vector<200x128xf32>
    %c0_56 = arith.constant 0 : index
    %c0_57 = arith.constant 0 : index
    %105 = vector.load %arg10[%c0_56, %c0_57] : memref<1x128xf32, #tpu.memory_space<vmem>>, vector<1x128xf32>
    %106 = vector.broadcast %105 : vector<1x128xf32> to vector<200x128xf32>
    %107 = arith.addf %104, %106 : vector<200x128xf32>
    %108 = vector.broadcast %0 : vector<200x1xf32> to vector<200x128xf32>
    %109 = arith.mulf %107, %108 : vector<200x128xf32>
    %cst_58 = arith.constant 0.000000e+00 : f32
    %110 = vector.broadcast %cst_58 : f32 to vector<200x128xf32>
    %c5_59 = arith.constant 5 : index
    %c0_60 = arith.constant 0 : index
    %111 = vector.load %arg13[%c5_59, %c0_60] : memref<232x128xf32, #tpu.memory_space<vmem>>, vector<200x16xf32>
    %112 = arith.truncf %111 : vector<200x16xf32> to vector<200x16xbf16>
    %c0_61 = arith.constant 0 : index
    %c0_62 = arith.constant 0 : index
    %113 = vector.load %arg5[%c0_61, %c0_62] : memref<144x128xbf16, #tpu.memory_space<vmem>>, vector<16x128xbf16>
    %cst_63 = arith.constant dense<0.000000e+00> : vector<200x128xf32>
    %114 = tpu.matmul %112, %113, %cst_63 {dimension_numbers = #tpu.dot_dimension_numbers<[1], [0], [0], [1], [0, 0, 1, 1], [], []>} : vector<200x16xbf16>, vector<16x128xbf16>, vector<200x128xf32> -> vector<200x128xf32>
    %115 = arith.addf %110, %114 : vector<200x128xf32>
    %c6_64 = arith.constant 6 : index
    %c0_65 = arith.constant 0 : index
    %116 = vector.load %arg13[%c6_64, %c0_65] : memref<232x128xf32, #tpu.memory_space<vmem>>, vector<200x16xf32>
    %117 = arith.truncf %116 : vector<200x16xf32> to vector<200x16xbf16>
    %c16_66 = arith.constant 16 : index
    %c0_67 = arith.constant 0 : index
    %118 = vector.load %arg5[%c16_66, %c0_67] : memref<144x128xbf16, #tpu.memory_space<vmem>>, vector<16x128xbf16>
    %cst_68 = arith.constant dense<0.000000e+00> : vector<200x128xf32>
    %119 = tpu.matmul %117, %118, %cst_68 {dimension_numbers = #tpu.dot_dimension_numbers<[1], [0], [0], [1], [0, 0, 1, 1], [], []>} : vector<200x16xbf16>, vector<16x128xbf16>, vector<200x128xf32> -> vector<200x128xf32>
    %120 = arith.addf %115, %119 : vector<200x128xf32>
    %c7_69 = arith.constant 7 : index
    %c0_70 = arith.constant 0 : index
    %121 = vector.load %arg13[%c7_69, %c0_70] : memref<232x128xf32, #tpu.memory_space<vmem>>, vector<200x16xf32>
    %122 = arith.truncf %121 : vector<200x16xf32> to vector<200x16xbf16>
    %c32 = arith.constant 32 : index
    %c0_71 = arith.constant 0 : index
    %123 = vector.load %arg5[%c32, %c0_71] : memref<144x128xbf16, #tpu.memory_space<vmem>>, vector<16x128xbf16>
    %cst_72 = arith.constant dense<0.000000e+00> : vector<200x128xf32>
    %124 = tpu.matmul %122, %123, %cst_72 {dimension_numbers = #tpu.dot_dimension_numbers<[1], [0], [0], [1], [0, 0, 1, 1], [], []>} : vector<200x16xbf16>, vector<16x128xbf16>, vector<200x128xf32> -> vector<200x128xf32>
    %125 = arith.addf %120, %124 : vector<200x128xf32>
    %c15_73 = arith.constant 15 : index
    %c0_74 = arith.constant 0 : index
    %126 = vector.load %arg13[%c15_73, %c0_74] : memref<232x128xf32, #tpu.memory_space<vmem>>, vector<200x16xf32>
    %127 = arith.truncf %126 : vector<200x16xf32> to vector<200x16xbf16>
    %c48 = arith.constant 48 : index
    %c0_75 = arith.constant 0 : index
    %128 = vector.load %arg5[%c48, %c0_75] : memref<144x128xbf16, #tpu.memory_space<vmem>>, vector<16x128xbf16>
    %cst_76 = arith.constant dense<0.000000e+00> : vector<200x128xf32>
    %129 = tpu.matmul %127, %128, %cst_76 {dimension_numbers = #tpu.dot_dimension_numbers<[1], [0], [0], [1], [0, 0, 1, 1], [], []>} : vector<200x16xbf16>, vector<16x128xbf16>, vector<200x128xf32> -> vector<200x128xf32>
    %130 = arith.addf %125, %129 : vector<200x128xf32>
    %c16_77 = arith.constant 16 : index
    %c0_78 = arith.constant 0 : index
    %131 = vector.load %arg13[%c16_77, %c0_78] : memref<232x128xf32, #tpu.memory_space<vmem>>, vector<200x16xf32>
    %132 = arith.truncf %131 : vector<200x16xf32> to vector<200x16xbf16>
    %c64_79 = arith.constant 64 : index
    %c0_80 = arith.constant 0 : index
    %133 = vector.load %arg5[%c64_79, %c0_80] : memref<144x128xbf16, #tpu.memory_space<vmem>>, vector<16x128xbf16>
    %cst_81 = arith.constant dense<0.000000e+00> : vector<200x128xf32>
    %134 = tpu.matmul %132, %133, %cst_81 {dimension_numbers = #tpu.dot_dimension_numbers<[1], [0], [0], [1], [0, 0, 1, 1], [], []>} : vector<200x16xbf16>, vector<16x128xbf16>, vector<200x128xf32> -> vector<200x128xf32>
    %135 = arith.addf %130, %134 : vector<200x128xf32>
    %c17_82 = arith.constant 17 : index
    %c0_83 = arith.constant 0 : index
    %136 = vector.load %arg13[%c17_82, %c0_83] : memref<232x128xf32, #tpu.memory_space<vmem>>, vector<200x16xf32>
    %137 = arith.truncf %136 : vector<200x16xf32> to vector<200x16xbf16>
    %c80 = arith.constant 80 : index
    %c0_84 = arith.constant 0 : index
    %138 = vector.load %arg5[%c80, %c0_84] : memref<144x128xbf16, #tpu.memory_space<vmem>>, vector<16x128xbf16>
    %cst_85 = arith.constant dense<0.000000e+00> : vector<200x128xf32>
    %139 = tpu.matmul %137, %138, %cst_85 {dimension_numbers = #tpu.dot_dimension_numbers<[1], [0], [0], [1], [0, 0, 1, 1], [], []>} : vector<200x16xbf16>, vector<16x128xbf16>, vector<200x128xf32> -> vector<200x128xf32>
    %140 = arith.addf %135, %139 : vector<200x128xf32>
    %c25_86 = arith.constant 25 : index
    %c0_87 = arith.constant 0 : index
    %141 = vector.load %arg13[%c25_86, %c0_87] : memref<232x128xf32, #tpu.memory_space<vmem>>, vector<200x16xf32>
    %142 = arith.truncf %141 : vector<200x16xf32> to vector<200x16xbf16>
    %c96 = arith.constant 96 : index
    %c0_88 = arith.constant 0 : index
    %143 = vector.load %arg5[%c96, %c0_88] : memref<144x128xbf16, #tpu.memory_space<vmem>>, vector<16x128xbf16>
    %cst_89 = arith.constant dense<0.000000e+00> : vector<200x128xf32>
    %144 = tpu.matmul %142, %143, %cst_89 {dimension_numbers = #tpu.dot_dimension_numbers<[1], [0], [0], [1], [0, 0, 1, 1], [], []>} : vector<200x16xbf16>, vector<16x128xbf16>, vector<200x128xf32> -> vector<200x128xf32>
    %145 = arith.addf %140, %144 : vector<200x128xf32>
    %c26_90 = arith.constant 26 : index
    %c0_91 = arith.constant 0 : index
    %146 = vector.load %arg13[%c26_90, %c0_91] : memref<232x128xf32, #tpu.memory_space<vmem>>, vector<200x16xf32>
    %147 = arith.truncf %146 : vector<200x16xf32> to vector<200x16xbf16>
    %c112 = arith.constant 112 : index
    %c0_92 = arith.constant 0 : index
    %148 = vector.load %arg5[%c112, %c0_92] : memref<144x128xbf16, #tpu.memory_space<vmem>>, vector<16x128xbf16>
    %cst_93 = arith.constant dense<0.000000e+00> : vector<200x128xf32>
    %149 = tpu.matmul %147, %148, %cst_93 {dimension_numbers = #tpu.dot_dimension_numbers<[1], [0], [0], [1], [0, 0, 1, 1], [], []>} : vector<200x16xbf16>, vector<16x128xbf16>, vector<200x128xf32> -> vector<200x128xf32>
    %150 = arith.addf %145, %149 : vector<200x128xf32>
    %c27_94 = arith.constant 27 : index
    %c0_95 = arith.constant 0 : index
    %151 = vector.load %arg13[%c27_94, %c0_95] : memref<232x128xf32, #tpu.memory_space<vmem>>, vector<200x16xf32>
    %152 = arith.truncf %151 : vector<200x16xf32> to vector<200x16xbf16>
    %c128_96 = arith.constant 128 : index
    %c0_97 = arith.constant 0 : index
    %153 = vector.load %arg5[%c128_96, %c0_97] : memref<144x128xbf16, #tpu.memory_space<vmem>>, vector<16x128xbf16>
    %cst_98 = arith.constant dense<0.000000e+00> : vector<200x128xf32>
    %154 = tpu.matmul %152, %153, %cst_98 {dimension_numbers = #tpu.dot_dimension_numbers<[1], [0], [0], [1], [0, 0, 1, 1], [], []>} : vector<200x16xbf16>, vector<16x128xbf16>, vector<200x128xf32> -> vector<200x128xf32>
    %155 = arith.addf %150, %154 : vector<200x128xf32>
    %156 = vector.broadcast %0 : vector<200x1xf32> to vector<200x128xf32>
    %157 = arith.mulf %155, %156 : vector<200x128xf32>
    %cst_99 = arith.constant dense<0.000000e+00> : vector<128xf32>
    %158 = vector.multi_reduction <add>, %157, %cst_99 [0] : vector<200x128xf32> to vector<128xf32>
    %159 = vector.shape_cast %158 : vector<128xf32> to vector<1x128xf32>
    %cst_100 = arith.constant 7.812500e-03 : f32
    %160 = vector.broadcast %cst_100 : f32 to vector<1x128xf32>
    %161 = arith.mulf %159, %160 : vector<1x128xf32>
    %162 = vector.broadcast %161 : vector<1x128xf32> to vector<200x128xf32>
    %163 = arith.subf %157, %162 : vector<200x128xf32>
    %164 = vector.broadcast %0 : vector<200x1xf32> to vector<200x128xf32>
    %165 = arith.mulf %163, %164 : vector<200x128xf32>
    %166 = arith.mulf %165, %165 : vector<200x128xf32>
    %cst_101 = arith.constant dense<0.000000e+00> : vector<128xf32>
    %167 = vector.multi_reduction <add>, %166, %cst_101 [0] : vector<200x128xf32> to vector<128xf32>
    %168 = vector.shape_cast %167 : vector<128xf32> to vector<1x128xf32>
    %cst_102 = arith.constant 7.812500e-03 : f32
    %169 = vector.broadcast %cst_102 : f32 to vector<1x128xf32>
    %170 = arith.mulf %168, %169 : vector<1x128xf32>
    %c0_103 = arith.constant 0 : index
    %c0_104 = arith.constant 0 : index
    %171 = vector.load %arg6[%c0_103, %c0_104] : memref<1x128xf32, #tpu.memory_space<vmem>>, vector<1x128xf32>
    %cst_105 = arith.constant 9.99999974E-6 : f32
    %172 = vector.broadcast %cst_105 : f32 to vector<1x128xf32>
    %173 = arith.addf %170, %172 : vector<1x128xf32>
    %174 = math.rsqrt %173 : vector<1x128xf32>
    %175 = arith.mulf %171, %174 : vector<1x128xf32>
    %176 = vector.broadcast %175 : vector<1x128xf32> to vector<200x128xf32>
    %177 = arith.mulf %165, %176 : vector<200x128xf32>
    %c0_106 = arith.constant 0 : index
    %c0_107 = arith.constant 0 : index
    %178 = vector.load %arg7[%c0_106, %c0_107] : memref<1x128xf32, #tpu.memory_space<vmem>>, vector<1x128xf32>
    %179 = vector.broadcast %178 : vector<1x128xf32> to vector<200x128xf32>
    %180 = arith.addf %177, %179 : vector<200x128xf32>
    %181 = vector.broadcast %0 : vector<200x1xf32> to vector<200x128xf32>
    %182 = arith.mulf %180, %181 : vector<200x128xf32>
    %183 = arith.addf %182, %109 : vector<200x128xf32>
    %cst_108 = arith.constant 0.000000e+00 : f32
    %184 = vector.broadcast %cst_108 : f32 to vector<200x128xf32>
    %185 = arith.maximumf %183, %184 : vector<200x128xf32>
    %cst_109 = arith.constant 0.000000e+00 : f32
    %186 = vector.broadcast %cst_109 : f32 to vector<232x128xf32>
    %c0_110 = arith.constant 0 : index
    %c0_111 = arith.constant 0 : index
    %187 = vector.load %arg12[%c0_110, %c0_111] : memref<232x128xf32, #tpu.memory_space<vmem>>, vector<232x128xf32>
    tpu.vector_store %arg12[%c0_110, %c0_111], %186 {strides = array<i32>} : memref<232x128xf32, #tpu.memory_space<vmem>>, vector<232x128xf32>,
    %c16_112 = arith.constant 16 : index
    %c0_113 = arith.constant 0 : index
    %188 = vector.load %arg12[%c16_112, %c0_113] : memref<232x128xf32, #tpu.memory_space<vmem>>, vector<200x128xf32>
    tpu.vector_store %arg12[%c16_112, %c0_113], %185 {strides = array<i32>} : memref<232x128xf32, #tpu.memory_space<vmem>>, vector<200x128xf32>,
    return
  }
  func.func @transform_0(%arg0: i32) -> (i32, i32) {
    %c0_i32 = arith.constant 0 : i32
    %c0_i32_0 = arith.constant 0 : i32
    %c0_i32_1 = arith.constant 0 : i32
    return %c0_i32, %c0_i32_0 : i32, i32
  }
  func.func @transform_1(%arg0: i32) -> (i32, i32) {
    %c0_i32 = arith.constant 0 : i32
    %c0_i32_0 = arith.constant 0 : i32
    %c0_i32_1 = arith.constant 0 : i32
    return %c0_i32, %c0_i32_0 : i32, i32
  }
  func.func @transform_2(%arg0: i32) -> (i32, i32) {
    %c0_i32 = arith.constant 0 : i32
    %c0_i32_0 = arith.constant 0 : i32
    %c0_i32_1 = arith.constant 0 : i32
    return %c0_i32, %c0_i32_0 : i32, i32
  }
  func.func @transform_3(%arg0: i32) -> (i32, i32) {
    %c0_i32 = arith.constant 0 : i32
    %c0_i32_0 = arith.constant 0 : i32
    %c0_i32_1 = arith.constant 0 : i32
    return %c0_i32, %c0_i32_0 : i32, i32
  }
  func.func @transform_4(%arg0: i32) -> (i32, i32) {
    %c0_i32 = arith.constant 0 : i32
    %c0_i32_0 = arith.constant 0 : i32
    %c0_i32_1 = arith.constant 0 : i32
    return %c0_i32, %c0_i32_0 : i32, i32
  }
  func.func @transform_5(%arg0: i32) -> (i32, i32) {
    %c0_i32 = arith.constant 0 : i32
    %c0_i32_0 = arith.constant 0 : i32
    %c0_i32_1 = arith.constant 0 : i32
    return %c0_i32, %c0_i32_0 : i32, i32
  }
  func.func @transform_6(%arg0: i32) -> (i32, i32) {
    %c0_i32 = arith.constant 0 : i32
    %c0_i32_0 = arith.constant 0 : i32
    %c0_i32_1 = arith.constant 0 : i32
    return %c0_i32, %c0_i32_0 : i32, i32
  }
  func.func @transform_7(%arg0: i32) -> (i32, i32) {
    %c0_i32 = arith.constant 0 : i32
    %c0_i32_0 = arith.constant 0 : i32
    %c0_i32_1 = arith.constant 0 : i32
    return %c0_i32, %c0_i32_0 : i32, i32
  }
  func.func @transform_8(%arg0: i32) -> (i32, i32) {
    %c0_i32 = arith.constant 0 : i32
    %c0_i32_0 = arith.constant 0 : i32
    %c0_i32_1 = arith.constant 0 : i32
    return %c0_i32, %c0_i32_0 : i32, i32
  }
  func.func @transform_9(%arg0: i32) -> (i32, i32) {
    %c0_i32 = arith.constant 0 : i32
    %c0_i32_0 = arith.constant 0 : i32
    %c0_i32_1 = arith.constant 0 : i32
    return %c0_i32, %c0_i32_0 : i32, i32
  }
  func.func @transform_10(%arg0: i32) -> (i32, i32) {
    %c0_i32 = arith.constant 0 : i32
    %c0_i32_0 = arith.constant 0 : i32
    %c0_i32_1 = arith.constant 0 : i32
    return %c0_i32, %c0_i32_0 : i32, i32
  }
  func.func @transform_11(%arg0: i32) -> (i32, i32) {
    %c0_i32 = arith.constant 0 : i32
    %c0_i32_0 = arith.constant 0 : i32
    %c0_i32_1 = arith.constant 0 : i32
    return %c0_i32, %c0_i32_0 : i32, i32
  }
}

module attributes {stable_mosaic.version = 11 : i64} {
  func.func @_head_kernel(%arg0: i32, %arg1: memref<232x128xf32, #tpu.memory_space<vmem>>, %arg2: memref<2x232xf32, #tpu.memory_space<vmem>>, %arg3: memref<128x128xbf16, #tpu.memory_space<vmem>>, %arg4: memref<1x128xf32, #tpu.memory_space<vmem>>, %arg5: memref<128x128xbf16, #tpu.memory_space<vmem>>, %arg6: memref<1x128xf32, #tpu.memory_space<vmem>>, %arg7: memref<2x128xf32, #tpu.memory_space<vmem>>) attributes {dimension_semantics = [#tpu.dimension_semantics<arbitrary>], iteration_bounds = array<i64: 1>, scalar_prefetch = 0 : i64, scratch_operands = 0 : i64, tpu.core_type = #tpu.core_type<tc>, window_params = [{pipeline_mode = #tpu.pipeline_mode<synchronous>, transform_indices = @transform_0, window_bounds = array<i64: 232, 128>}, {pipeline_mode = #tpu.pipeline_mode<synchronous>, transform_indices = @transform_1, window_bounds = array<i64: 2, 232>}, {pipeline_mode = #tpu.pipeline_mode<synchronous>, transform_indices = @transform_2, window_bounds = array<i64: 128, 128>}, {pipeline_mode = #tpu.pipeline_mode<synchronous>, transform_indices = @transform_3, window_bounds = array<i64: 1, 128>}, {pipeline_mode = #tpu.pipeline_mode<synchronous>, transform_indices = @transform_4, window_bounds = array<i64: 128, 128>}, {pipeline_mode = #tpu.pipeline_mode<synchronous>, transform_indices = @transform_5, window_bounds = array<i64: 1, 128>}, {pipeline_mode = #tpu.pipeline_mode<synchronous>, transform_indices = @transform_6, window_bounds = array<i64: 2, 128>}]} {
    %c0 = arith.constant 0 : index
    %c0_0 = arith.constant 0 : index
    %0 = vector.load %arg2[%c0, %c0_0] : memref<2x232xf32, #tpu.memory_space<vmem>>, vector<2x232xf32>
    %c0_1 = arith.constant 0 : index
    %c0_2 = arith.constant 0 : index
    %1 = vector.load %arg1[%c0_1, %c0_2] : memref<232x128xf32, #tpu.memory_space<vmem>>, vector<232x128xf32>
    %cst = arith.constant dense<0.000000e+00> : vector<2x128xf32>
    %2 = tpu.matmul %0, %1, %cst {dimension_numbers = #tpu.dot_dimension_numbers<[1], [0], [0], [1], [0, 0, 1, 1], [], []>} : vector<2x232xf32>, vector<232x128xf32>, vector<2x128xf32> -> vector<2x128xf32>
    %3 = arith.truncf %2 : vector<2x128xf32> to vector<2x128xbf16>
    %c0_3 = arith.constant 0 : index
    %c0_4 = arith.constant 0 : index
    %4 = vector.load %arg3[%c0_3, %c0_4] : memref<128x128xbf16, #tpu.memory_space<vmem>>, vector<128x128xbf16>
    %cst_5 = arith.constant dense<0.000000e+00> : vector<2x128xf32>
    %5 = tpu.matmul %3, %4, %cst_5 {dimension_numbers = #tpu.dot_dimension_numbers<[1], [0], [0], [1], [0, 0, 1, 1], [], []>} : vector<2x128xbf16>, vector<128x128xbf16>, vector<2x128xf32> -> vector<2x128xf32>
    %c0_6 = arith.constant 0 : index
    %c0_7 = arith.constant 0 : index
    %6 = vector.load %arg4[%c0_6, %c0_7] : memref<1x128xf32, #tpu.memory_space<vmem>>, vector<1x128xf32>
    %7 = vector.broadcast %6 : vector<1x128xf32> to vector<2x128xf32>
    %8 = arith.addf %5, %7 : vector<2x128xf32>
    %9 = arith.truncf %8 : vector<2x128xf32> to vector<2x128xbf16>
    %c0_8 = arith.constant 0 : index
    %c0_9 = arith.constant 0 : index
    %10 = vector.load %arg5[%c0_8, %c0_9] : memref<128x128xbf16, #tpu.memory_space<vmem>>, vector<128x128xbf16>
    %cst_10 = arith.constant dense<0.000000e+00> : vector<2x128xf32>
    %11 = tpu.matmul %9, %10, %cst_10 {dimension_numbers = #tpu.dot_dimension_numbers<[1], [0], [0], [1], [0, 0, 1, 1], [], []>} : vector<2x128xbf16>, vector<128x128xbf16>, vector<2x128xf32> -> vector<2x128xf32>
    %c0_11 = arith.constant 0 : index
    %c0_12 = arith.constant 0 : index
    %12 = vector.load %arg6[%c0_11, %c0_12] : memref<1x128xf32, #tpu.memory_space<vmem>>, vector<1x128xf32>
    %13 = vector.broadcast %12 : vector<1x128xf32> to vector<2x128xf32>
    %14 = arith.addf %11, %13 : vector<2x128xf32>
    %c0_13 = arith.constant 0 : index
    %c0_14 = arith.constant 0 : index
    %15 = vector.load %arg7[%c0_13, %c0_14] : memref<2x128xf32, #tpu.memory_space<vmem>>, vector<2x128xf32>
    tpu.vector_store %arg7[%c0_13, %c0_14], %14 {strides = array<i32>} : memref<2x128xf32, #tpu.memory_space<vmem>>, vector<2x128xf32>,
    return
  }
  func.func @transform_0(%arg0: i32) -> (i32, i32) {
    %c0_i32 = arith.constant 0 : i32
    %c0_i32_0 = arith.constant 0 : i32
    %c0_i32_1 = arith.constant 0 : i32
    return %c0_i32, %c0_i32_0 : i32, i32
  }
  func.func @transform_1(%arg0: i32) -> (i32, i32) {
    %c0_i32 = arith.constant 0 : i32
    %c0_i32_0 = arith.constant 0 : i32
    %c0_i32_1 = arith.constant 0 : i32
    return %c0_i32, %c0_i32_0 : i32, i32
  }
  func.func @transform_2(%arg0: i32) -> (i32, i32) {
    %c0_i32 = arith.constant 0 : i32
    %c0_i32_0 = arith.constant 0 : i32
    %c0_i32_1 = arith.constant 0 : i32
    return %c0_i32, %c0_i32_0 : i32, i32
  }
  func.func @transform_3(%arg0: i32) -> (i32, i32) {
    %c0_i32 = arith.constant 0 : i32
    %c0_i32_0 = arith.constant 0 : i32
    %c0_i32_1 = arith.constant 0 : i32
    return %c0_i32, %c0_i32_0 : i32, i32
  }
  func.func @transform_4(%arg0: i32) -> (i32, i32) {
    %c0_i32 = arith.constant 0 : i32
    %c0_i32_0 = arith.constant 0 : i32
    %c0_i32_1 = arith.constant 0 : i32
    return %c0_i32, %c0_i32_0 : i32, i32
  }
  func.func @transform_5(%arg0: i32) -> (i32, i32) {
    %c0_i32 = arith.constant 0 : i32
    %c0_i32_0 = arith.constant 0 : i32
    %c0_i32_1 = arith.constant 0 : i32
    return %c0_i32, %c0_i32_0 : i32, i32
  }
  func.func @transform_6(%arg0: i32) -> (i32, i32) {
    %c0_i32 = arith.constant 0 : i32
    %c0_i32_0 = arith.constant 0 : i32
    %c0_i32_1 = arith.constant 0 : i32
    return %c0_i32, %c0_i32_0 : i32, i32
  }
}

module attributes {stable_mosaic.version = 11 : i64} {
  func.func @kernel(%arg0: i32, %arg1: memref<232x128xf32, #tpu.memory_space<vmem>>, %arg2: memref<144x128xbf16, #tpu.memory_space<vmem>>, %arg3: memref<1x128xf32, #tpu.memory_space<vmem>>, %arg4: memref<1x128xf32, #tpu.memory_space<vmem>>, %arg5: memref<144x128xbf16, #tpu.memory_space<vmem>>, %arg6: memref<1x128xf32, #tpu.memory_space<vmem>>, %arg7: memref<1x128xf32, #tpu.memory_space<vmem>>, %arg8: memref<200x1xf32, #tpu.memory_space<vmem>>, %arg9: memref<232x128xf32, #tpu.memory_space<vmem>>, %arg10: memref<232x128xf32, #tpu.memory_space<vmem>>) attributes {dimension_semantics = [#tpu.dimension_semantics<arbitrary>], iteration_bounds = array<i64: 1>, scalar_prefetch = 0 : i64, scratch_operands = 1 : i64, tpu.core_type = #tpu.core_type<tc>, window_params = [{pipeline_mode = #tpu.pipeline_mode<synchronous>, transform_indices = @transform_0, window_bounds = array<i64: 232, 128>}, {pipeline_mode = #tpu.pipeline_mode<synchronous>, transform_indices = @transform_1, window_bounds = array<i64: 144, 128>}, {pipeline_mode = #tpu.pipeline_mode<synchronous>, transform_indices = @transform_2, window_bounds = array<i64: 1, 128>}, {pipeline_mode = #tpu.pipeline_mode<synchronous>, transform_indices = @transform_3, window_bounds = array<i64: 1, 128>}, {pipeline_mode = #tpu.pipeline_mode<synchronous>, transform_indices = @transform_4, window_bounds = array<i64: 144, 128>}, {pipeline_mode = #tpu.pipeline_mode<synchronous>, transform_indices = @transform_5, window_bounds = array<i64: 1, 128>}, {pipeline_mode = #tpu.pipeline_mode<synchronous>, transform_indices = @transform_6, window_bounds = array<i64: 1, 128>}, {pipeline_mode = #tpu.pipeline_mode<synchronous>, transform_indices = @transform_7, window_bounds = array<i64: 200, 1>}, {pipeline_mode = #tpu.pipeline_mode<synchronous>, transform_indices = @transform_8, window_bounds = array<i64: 232, 128>}]} {
    %c0 = arith.constant 0 : index
    %c0_0 = arith.constant 0 : index
    %0 = vector.load %arg8[%c0, %c0_0] : memref<200x1xf32, #tpu.memory_space<vmem>>, vector<200x1xf32>
    %cst = arith.constant 0.000000e+00 : f32
    %1 = vector.broadcast %cst : f32 to vector<200x128xf32>
    %c5 = arith.constant 5 : index
    %c0_1 = arith.constant 0 : index
    %2 = vector.load %arg1[%c5, %c0_1] : memref<232x128xf32, #tpu.memory_space<vmem>>, vector<200x16xf32>
    %3 = arith.truncf %2 : vector<200x16xf32> to vector<200x16xbf16>
    %c0_2 = arith.constant 0 : index
    %c0_3 = arith.constant 0 : index
    %4 = vector.load %arg2[%c0_2, %c0_3] : memref<144x128xbf16, #tpu.memory_space<vmem>>, vector<16x128xbf16>
    %cst_4 = arith.constant dense<0.000000e+00> : vector<200x128xf32>
    %5 = tpu.matmul %3, %4, %cst_4 {dimension_numbers = #tpu.dot_dimension_numbers<[1], [0], [0], [1], [0, 0, 1, 1], [], []>} : vector<200x16xbf16>, vector<16x128xbf16>, vector<200x128xf32> -> vector<200x128xf32>
    %6 = arith.addf %1, %5 : vector<200x128xf32>
    %c6 = arith.constant 6 : index
    %c0_5 = arith.constant 0 : index
    %7 = vector.load %arg1[%c6, %c0_5] : memref<232x128xf32, #tpu.memory_space<vmem>>, vector<200x16xf32>
    %8 = arith.truncf %7 : vector<200x16xf32> to vector<200x16xbf16>
    %c16 = arith.constant 16 : index
    %c0_6 = arith.constant 0 : index
    %9 = vector.load %arg2[%c16, %c0_6] : memref<144x128xbf16, #tpu.memory_space<vmem>>, vector<16x128xbf16>
    %cst_7 = arith.constant dense<0.000000e+00> : vector<200x128xf32>
    %10 = tpu.matmul %8, %9, %cst_7 {dimension_numbers = #tpu.dot_dimension_numbers<[1], [0], [0], [1], [0, 0, 1, 1], [], []>} : vector<200x16xbf16>, vector<16x128xbf16>, vector<200x128xf32> -> vector<200x128xf32>
    %11 = arith.addf %6, %10 : vector<200x128xf32>
    %c7 = arith.constant 7 : index
    %c0_8 = arith.constant 0 : index
    %12 = vector.load %arg1[%c7, %c0_8] : memref<232x128xf32, #tpu.memory_space<vmem>>, vector<200x16xf32>
    %13 = arith.truncf %12 : vector<200x16xf32> to vector<200x16xbf16>
    %c32 = arith.constant 32 : index
    %c0_9 = arith.constant 0 : index
    %14 = vector.load %arg2[%c32, %c0_9] : memref<144x128xbf16, #tpu.memory_space<vmem>>, vector<16x128xbf16>
    %cst_10 = arith.constant dense<0.000000e+00> : vector<200x128xf32>
    %15 = tpu.matmul %13, %14, %cst_10 {dimension_numbers = #tpu.dot_dimension_numbers<[1], [0], [0], [1], [0, 0, 1, 1], [], []>} : vector<200x16xbf16>, vector<16x128xbf16>, vector<200x128xf32> -> vector<200x128xf32>
    %16 = arith.addf %11, %15 : vector<200x128xf32>
    %c15 = arith.constant 15 : index
    %c0_11 = arith.constant 0 : index
    %17 = vector.load %arg1[%c15, %c0_11] : memref<232x128xf32, #tpu.memory_space<vmem>>, vector<200x16xf32>
    %18 = arith.truncf %17 : vector<200x16xf32> to vector<200x16xbf16>
    %c48 = arith.constant 48 : index
    %c0_12 = arith.constant 0 : index
    %19 = vector.load %arg2[%c48, %c0_12] : memref<144x128xbf16, #tpu.memory_space<vmem>>, vector<16x128xbf16>
    %cst_13 = arith.constant dense<0.000000e+00> : vector<200x128xf32>
    %20 = tpu.matmul %18, %19, %cst_13 {dimension_numbers = #tpu.dot_dimension_numbers<[1], [0], [0], [1], [0, 0, 1, 1], [], []>} : vector<200x16xbf16>, vector<16x128xbf16>, vector<200x128xf32> -> vector<200x128xf32>
    %21 = arith.addf %16, %20 : vector<200x128xf32>
    %c16_14 = arith.constant 16 : index
    %c0_15 = arith.constant 0 : index
    %22 = vector.load %arg1[%c16_14, %c0_15] : memref<232x128xf32, #tpu.memory_space<vmem>>, vector<200x16xf32>
    %23 = arith.truncf %22 : vector<200x16xf32> to vector<200x16xbf16>
    %c64 = arith.constant 64 : index
    %c0_16 = arith.constant 0 : index
    %24 = vector.load %arg2[%c64, %c0_16] : memref<144x128xbf16, #tpu.memory_space<vmem>>, vector<16x128xbf16>
    %cst_17 = arith.constant dense<0.000000e+00> : vector<200x128xf32>
    %25 = tpu.matmul %23, %24, %cst_17 {dimension_numbers = #tpu.dot_dimension_numbers<[1], [0], [0], [1], [0, 0, 1, 1], [], []>} : vector<200x16xbf16>, vector<16x128xbf16>, vector<200x128xf32> -> vector<200x128xf32>
    %26 = arith.addf %21, %25 : vector<200x128xf32>
    %c17 = arith.constant 17 : index
    %c0_18 = arith.constant 0 : index
    %27 = vector.load %arg1[%c17, %c0_18] : memref<232x128xf32, #tpu.memory_space<vmem>>, vector<200x16xf32>
    %28 = arith.truncf %27 : vector<200x16xf32> to vector<200x16xbf16>
    %c80 = arith.constant 80 : index
    %c0_19 = arith.constant 0 : index
    %29 = vector.load %arg2[%c80, %c0_19] : memref<144x128xbf16, #tpu.memory_space<vmem>>, vector<16x128xbf16>
    %cst_20 = arith.constant dense<0.000000e+00> : vector<200x128xf32>
    %30 = tpu.matmul %28, %29, %cst_20 {dimension_numbers = #tpu.dot_dimension_numbers<[1], [0], [0], [1], [0, 0, 1, 1], [], []>} : vector<200x16xbf16>, vector<16x128xbf16>, vector<200x128xf32> -> vector<200x128xf32>
    %31 = arith.addf %26, %30 : vector<200x128xf32>
    %c25 = arith.constant 25 : index
    %c0_21 = arith.constant 0 : index
    %32 = vector.load %arg1[%c25, %c0_21] : memref<232x128xf32, #tpu.memory_space<vmem>>, vector<200x16xf32>
    %33 = arith.truncf %32 : vector<200x16xf32> to vector<200x16xbf16>
    %c96 = arith.constant 96 : index
    %c0_22 = arith.constant 0 : index
    %34 = vector.load %arg2[%c96, %c0_22] : memref<144x128xbf16, #tpu.memory_space<vmem>>, vector<16x128xbf16>
    %cst_23 = arith.constant dense<0.000000e+00> : vector<200x128xf32>
    %35 = tpu.matmul %33, %34, %cst_23 {dimension_numbers = #tpu.dot_dimension_numbers<[1], [0], [0], [1], [0, 0, 1, 1], [], []>} : vector<200x16xbf16>, vector<16x128xbf16>, vector<200x128xf32> -> vector<200x128xf32>
    %36 = arith.addf %31, %35 : vector<200x128xf32>
    %c26 = arith.constant 26 : index
    %c0_24 = arith.constant 0 : index
    %37 = vector.load %arg1[%c26, %c0_24] : memref<232x128xf32, #tpu.memory_space<vmem>>, vector<200x16xf32>
    %38 = arith.truncf %37 : vector<200x16xf32> to vector<200x16xbf16>
    %c112 = arith.constant 112 : index
    %c0_25 = arith.constant 0 : index
    %39 = vector.load %arg2[%c112, %c0_25] : memref<144x128xbf16, #tpu.memory_space<vmem>>, vector<16x128xbf16>
    %cst_26 = arith.constant dense<0.000000e+00> : vector<200x128xf32>
    %40 = tpu.matmul %38, %39, %cst_26 {dimension_numbers = #tpu.dot_dimension_numbers<[1], [0], [0], [1], [0, 0, 1, 1], [], []>} : vector<200x16xbf16>, vector<16x128xbf16>, vector<200x128xf32> -> vector<200x128xf32>
    %41 = arith.addf %36, %40 : vector<200x128xf32>
    %c27 = arith.constant 27 : index
    %c0_27 = arith.constant 0 : index
    %42 = vector.load %arg1[%c27, %c0_27] : memref<232x128xf32, #tpu.memory_space<vmem>>, vector<200x16xf32>
    %43 = arith.truncf %42 : vector<200x16xf32> to vector<200x16xbf16>
    %c128 = arith.constant 128 : index
    %c0_28 = arith.constant 0 : index
    %44 = vector.load %arg2[%c128, %c0_28] : memref<144x128xbf16, #tpu.memory_space<vmem>>, vector<16x128xbf16>
    %cst_29 = arith.constant dense<0.000000e+00> : vector<200x128xf32>
    %45 = tpu.matmul %43, %44, %cst_29 {dimension_numbers = #tpu.dot_dimension_numbers<[1], [0], [0], [1], [0, 0, 1, 1], [], []>} : vector<200x16xbf16>, vector<16x128xbf16>, vector<200x128xf32> -> vector<200x128xf32>
    %46 = arith.addf %41, %45 : vector<200x128xf32>
    %47 = vector.broadcast %0 : vector<200x1xf32> to vector<200x128xf32>
    %48 = arith.mulf %46, %47 : vector<200x128xf32>
    %cst_30 = arith.constant dense<0.000000e+00> : vector<128xf32>
    %49 = vector.multi_reduction <add>, %48, %cst_30 [0] : vector<200x128xf32> to vector<128xf32>
    %50 = vector.shape_cast %49 : vector<128xf32> to vector<1x128xf32>
    %cst_31 = arith.constant 7.812500e-03 : f32
    %51 = vector.broadcast %cst_31 : f32 to vector<1x128xf32>
    %52 = arith.mulf %50, %51 : vector<1x128xf32>
    %53 = vector.broadcast %52 : vector<1x128xf32> to vector<200x128xf32>
    %54 = arith.subf %48, %53 : vector<200x128xf32>
    %55 = vector.broadcast %0 : vector<200x1xf32> to vector<200x128xf32>
    %56 = arith.mulf %54, %55 : vector<200x128xf32>
    %57 = arith.mulf %56, %56 : vector<200x128xf32>
    %cst_32 = arith.constant dense<0.000000e+00> : vector<128xf32>
    %58 = vector.multi_reduction <add>, %57, %cst_32 [0] : vector<200x128xf32> to vector<128xf32>
    %59 = vector.shape_cast %58 : vector<128xf32> to vector<1x128xf32>
    %cst_33 = arith.constant 7.812500e-03 : f32
    %60 = vector.broadcast %cst_33 : f32 to vector<1x128xf32>
    %61 = arith.mulf %59, %60 : vector<1x128xf32>
    %c0_34 = arith.constant 0 : index
    %c0_35 = arith.constant 0 : index
    %62 = vector.load %arg3[%c0_34, %c0_35] : memref<1x128xf32, #tpu.memory_space<vmem>>, vector<1x128xf32>
    %cst_36 = arith.constant 9.99999974E-6 : f32
    %63 = vector.broadcast %cst_36 : f32 to vector<1x128xf32>
    %64 = arith.addf %61, %63 : vector<1x128xf32>
    %65 = math.rsqrt %64 : vector<1x128xf32>
    %66 = arith.mulf %62, %65 : vector<1x128xf32>
    %67 = vector.broadcast %66 : vector<1x128xf32> to vector<200x128xf32>
    %68 = arith.mulf %56, %67 : vector<200x128xf32>
    %c0_37 = arith.constant 0 : index
    %c0_38 = arith.constant 0 : index
    %69 = vector.load %arg4[%c0_37, %c0_38] : memref<1x128xf32, #tpu.memory_space<vmem>>, vector<1x128xf32>
    %70 = vector.broadcast %69 : vector<1x128xf32> to vector<200x128xf32>
    %71 = arith.addf %68, %70 : vector<200x128xf32>
    %72 = vector.broadcast %0 : vector<200x1xf32> to vector<200x128xf32>
    %73 = arith.mulf %71, %72 : vector<200x128xf32>
    %cst_39 = arith.constant 0.000000e+00 : f32
    %74 = vector.broadcast %cst_39 : f32 to vector<200x128xf32>
    %75 = arith.maximumf %73, %74 : vector<200x128xf32>
    %cst_40 = arith.constant 0.000000e+00 : f32
    %76 = vector.broadcast %cst_40 : f32 to vector<232x128xf32>
    %c0_41 = arith.constant 0 : index
    %c0_42 = arith.constant 0 : index
    %77 = vector.load %arg10[%c0_41, %c0_42] : memref<232x128xf32, #tpu.memory_space<vmem>>, vector<232x128xf32>
    tpu.vector_store %arg10[%c0_41, %c0_42], %76 {strides = array<i32>} : memref<232x128xf32, #tpu.memory_space<vmem>>, vector<232x128xf32>,
    %c16_43 = arith.constant 16 : index
    %c0_44 = arith.constant 0 : index
    %78 = vector.load %arg10[%c16_43, %c0_44] : memref<232x128xf32, #tpu.memory_space<vmem>>, vector<200x128xf32>
    tpu.vector_store %arg10[%c16_43, %c0_44], %75 {strides = array<i32>} : memref<232x128xf32, #tpu.memory_space<vmem>>, vector<200x128xf32>,
    %c16_45 = arith.constant 16 : index
    %c0_46 = arith.constant 0 : index
    %79 = vector.load %arg1[%c16_45, %c0_46] : memref<232x128xf32, #tpu.memory_space<vmem>>, vector<200x128xf32>
    %cst_47 = arith.constant 0.000000e+00 : f32
    %80 = vector.broadcast %cst_47 : f32 to vector<200x128xf32>
    %c5_48 = arith.constant 5 : index
    %c0_49 = arith.constant 0 : index
    %81 = vector.load %arg10[%c5_48, %c0_49] : memref<232x128xf32, #tpu.memory_space<vmem>>, vector<200x16xf32>
    %82 = arith.truncf %81 : vector<200x16xf32> to vector<200x16xbf16>
    %c0_50 = arith.constant 0 : index
    %c0_51 = arith.constant 0 : index
    %83 = vector.load %arg5[%c0_50, %c0_51] : memref<144x128xbf16, #tpu.memory_space<vmem>>, vector<16x128xbf16>
    %cst_52 = arith.constant dense<0.000000e+00> : vector<200x128xf32>
    %84 = tpu.matmul %82, %83, %cst_52 {dimension_numbers = #tpu.dot_dimension_numbers<[1], [0], [0], [1], [0, 0, 1, 1], [], []>} : vector<200x16xbf16>, vector<16x128xbf16>, vector<200x128xf32> -> vector<200x128xf32>
    %85 = arith.addf %80, %84 : vector<200x128xf32>
    %c6_53 = arith.constant 6 : index
    %c0_54 = arith.constant 0 : index
    %86 = vector.load %arg10[%c6_53, %c0_54] : memref<232x128xf32, #tpu.memory_space<vmem>>, vector<200x16xf32>
    %87 = arith.truncf %86 : vector<200x16xf32> to vector<200x16xbf16>
    %c16_55 = arith.constant 16 : index
    %c0_56 = arith.constant 0 : index
    %88 = vector.load %arg5[%c16_55, %c0_56] : memref<144x128xbf16, #tpu.memory_space<vmem>>, vector<16x128xbf16>
    %cst_57 = arith.constant dense<0.000000e+00> : vector<200x128xf32>
    %89 = tpu.matmul %87, %88, %cst_57 {dimension_numbers = #tpu.dot_dimension_numbers<[1], [0], [0], [1], [0, 0, 1, 1], [], []>} : vector<200x16xbf16>, vector<16x128xbf16>, vector<200x128xf32> -> vector<200x128xf32>
    %90 = arith.addf %85, %89 : vector<200x128xf32>
    %c7_58 = arith.constant 7 : index
    %c0_59 = arith.constant 0 : index
    %91 = vector.load %arg10[%c7_58, %c0_59] : memref<232x128xf32, #tpu.memory_space<vmem>>, vector<200x16xf32>
    %92 = arith.truncf %91 : vector<200x16xf32> to vector<200x16xbf16>
    %c32_60 = arith.constant 32 : index
    %c0_61 = arith.constant 0 : index
    %93 = vector.load %arg5[%c32_60, %c0_61] : memref<144x128xbf16, #tpu.memory_space<vmem>>, vector<16x128xbf16>
    %cst_62 = arith.constant dense<0.000000e+00> : vector<200x128xf32>
    %94 = tpu.matmul %92, %93, %cst_62 {dimension_numbers = #tpu.dot_dimension_numbers<[1], [0], [0], [1], [0, 0, 1, 1], [], []>} : vector<200x16xbf16>, vector<16x128xbf16>, vector<200x128xf32> -> vector<200x128xf32>
    %95 = arith.addf %90, %94 : vector<200x128xf32>
    %c15_63 = arith.constant 15 : index
    %c0_64 = arith.constant 0 : index
    %96 = vector.load %arg10[%c15_63, %c0_64] : memref<232x128xf32, #tpu.memory_space<vmem>>, vector<200x16xf32>
    %97 = arith.truncf %96 : vector<200x16xf32> to vector<200x16xbf16>
    %c48_65 = arith.constant 48 : index
    %c0_66 = arith.constant 0 : index
    %98 = vector.load %arg5[%c48_65, %c0_66] : memref<144x128xbf16, #tpu.memory_space<vmem>>, vector<16x128xbf16>
    %cst_67 = arith.constant dense<0.000000e+00> : vector<200x128xf32>
    %99 = tpu.matmul %97, %98, %cst_67 {dimension_numbers = #tpu.dot_dimension_numbers<[1], [0], [0], [1], [0, 0, 1, 1], [], []>} : vector<200x16xbf16>, vector<16x128xbf16>, vector<200x128xf32> -> vector<200x128xf32>
    %100 = arith.addf %95, %99 : vector<200x128xf32>
    %c16_68 = arith.constant 16 : index
    %c0_69 = arith.constant 0 : index
    %101 = vector.load %arg10[%c16_68, %c0_69] : memref<232x128xf32, #tpu.memory_space<vmem>>, vector<200x16xf32>
    %102 = arith.truncf %101 : vector<200x16xf32> to vector<200x16xbf16>
    %c64_70 = arith.constant 64 : index
    %c0_71 = arith.constant 0 : index
    %103 = vector.load %arg5[%c64_70, %c0_71] : memref<144x128xbf16, #tpu.memory_space<vmem>>, vector<16x128xbf16>
    %cst_72 = arith.constant dense<0.000000e+00> : vector<200x128xf32>
    %104 = tpu.matmul %102, %103, %cst_72 {dimension_numbers = #tpu.dot_dimension_numbers<[1], [0], [0], [1], [0, 0, 1, 1], [], []>} : vector<200x16xbf16>, vector<16x128xbf16>, vector<200x128xf32> -> vector<200x128xf32>
    %105 = arith.addf %100, %104 : vector<200x128xf32>
    %c17_73 = arith.constant 17 : index
    %c0_74 = arith.constant 0 : index
    %106 = vector.load %arg10[%c17_73, %c0_74] : memref<232x128xf32, #tpu.memory_space<vmem>>, vector<200x16xf32>
    %107 = arith.truncf %106 : vector<200x16xf32> to vector<200x16xbf16>
    %c80_75 = arith.constant 80 : index
    %c0_76 = arith.constant 0 : index
    %108 = vector.load %arg5[%c80_75, %c0_76] : memref<144x128xbf16, #tpu.memory_space<vmem>>, vector<16x128xbf16>
    %cst_77 = arith.constant dense<0.000000e+00> : vector<200x128xf32>
    %109 = tpu.matmul %107, %108, %cst_77 {dimension_numbers = #tpu.dot_dimension_numbers<[1], [0], [0], [1], [0, 0, 1, 1], [], []>} : vector<200x16xbf16>, vector<16x128xbf16>, vector<200x128xf32> -> vector<200x128xf32>
    %110 = arith.addf %105, %109 : vector<200x128xf32>
    %c25_78 = arith.constant 25 : index
    %c0_79 = arith.constant 0 : index
    %111 = vector.load %arg10[%c25_78, %c0_79] : memref<232x128xf32, #tpu.memory_space<vmem>>, vector<200x16xf32>
    %112 = arith.truncf %111 : vector<200x16xf32> to vector<200x16xbf16>
    %c96_80 = arith.constant 96 : index
    %c0_81 = arith.constant 0 : index
    %113 = vector.load %arg5[%c96_80, %c0_81] : memref<144x128xbf16, #tpu.memory_space<vmem>>, vector<16x128xbf16>
    %cst_82 = arith.constant dense<0.000000e+00> : vector<200x128xf32>
    %114 = tpu.matmul %112, %113, %cst_82 {dimension_numbers = #tpu.dot_dimension_numbers<[1], [0], [0], [1], [0, 0, 1, 1], [], []>} : vector<200x16xbf16>, vector<16x128xbf16>, vector<200x128xf32> -> vector<200x128xf32>
    %115 = arith.addf %110, %114 : vector<200x128xf32>
    %c26_83 = arith.constant 26 : index
    %c0_84 = arith.constant 0 : index
    %116 = vector.load %arg10[%c26_83, %c0_84] : memref<232x128xf32, #tpu.memory_space<vmem>>, vector<200x16xf32>
    %117 = arith.truncf %116 : vector<200x16xf32> to vector<200x16xbf16>
    %c112_85 = arith.constant 112 : index
    %c0_86 = arith.constant 0 : index
    %118 = vector.load %arg5[%c112_85, %c0_86] : memref<144x128xbf16, #tpu.memory_space<vmem>>, vector<16x128xbf16>
    %cst_87 = arith.constant dense<0.000000e+00> : vector<200x128xf32>
    %119 = tpu.matmul %117, %118, %cst_87 {dimension_numbers = #tpu.dot_dimension_numbers<[1], [0], [0], [1], [0, 0, 1, 1], [], []>} : vector<200x16xbf16>, vector<16x128xbf16>, vector<200x128xf32> -> vector<200x128xf32>
    %120 = arith.addf %115, %119 : vector<200x128xf32>
    %c27_88 = arith.constant 27 : index
    %c0_89 = arith.constant 0 : index
    %121 = vector.load %arg10[%c27_88, %c0_89] : memref<232x128xf32, #tpu.memory_space<vmem>>, vector<200x16xf32>
    %122 = arith.truncf %121 : vector<200x16xf32> to vector<200x16xbf16>
    %c128_90 = arith.constant 128 : index
    %c0_91 = arith.constant 0 : index
    %123 = vector.load %arg5[%c128_90, %c0_91] : memref<144x128xbf16, #tpu.memory_space<vmem>>, vector<16x128xbf16>
    %cst_92 = arith.constant dense<0.000000e+00> : vector<200x128xf32>
    %124 = tpu.matmul %122, %123, %cst_92 {dimension_numbers = #tpu.dot_dimension_numbers<[1], [0], [0], [1], [0, 0, 1, 1], [], []>} : vector<200x16xbf16>, vector<16x128xbf16>, vector<200x128xf32> -> vector<200x128xf32>
    %125 = arith.addf %120, %124 : vector<200x128xf32>
    %126 = vector.broadcast %0 : vector<200x1xf32> to vector<200x128xf32>
    %127 = arith.mulf %125, %126 : vector<200x128xf32>
    %cst_93 = arith.constant dense<0.000000e+00> : vector<128xf32>
    %128 = vector.multi_reduction <add>, %127, %cst_93 [0] : vector<200x128xf32> to vector<128xf32>
    %129 = vector.shape_cast %128 : vector<128xf32> to vector<1x128xf32>
    %cst_94 = arith.constant 7.812500e-03 : f32
    %130 = vector.broadcast %cst_94 : f32 to vector<1x128xf32>
    %131 = arith.mulf %129, %130 : vector<1x128xf32>
    %132 = vector.broadcast %131 : vector<1x128xf32> to vector<200x128xf32>
    %133 = arith.subf %127, %132 : vector<200x128xf32>
    %134 = vector.broadcast %0 : vector<200x1xf32> to vector<200x128xf32>
    %135 = arith.mulf %133, %134 : vector<200x128xf32>
    %136 = arith.mulf %135, %135 : vector<200x128xf32>
    %cst_95 = arith.constant dense<0.000000e+00> : vector<128xf32>
    %137 = vector.multi_reduction <add>, %136, %cst_95 [0] : vector<200x128xf32> to vector<128xf32>
    %138 = vector.shape_cast %137 : vector<128xf32> to vector<1x128xf32>
    %cst_96 = arith.constant 7.812500e-03 : f32
    %139 = vector.broadcast %cst_96 : f32 to vector<1x128xf32>
    %140 = arith.mulf %138, %139 : vector<1x128xf32>
    %c0_97 = arith.constant 0 : index
    %c0_98 = arith.constant 0 : index
    %141 = vector.load %arg6[%c0_97, %c0_98] : memref<1x128xf32, #tpu.memory_space<vmem>>, vector<1x128xf32>
    %cst_99 = arith.constant 9.99999974E-6 : f32
    %142 = vector.broadcast %cst_99 : f32 to vector<1x128xf32>
    %143 = arith.addf %140, %142 : vector<1x128xf32>
    %144 = math.rsqrt %143 : vector<1x128xf32>
    %145 = arith.mulf %141, %144 : vector<1x128xf32>
    %146 = vector.broadcast %145 : vector<1x128xf32> to vector<200x128xf32>
    %147 = arith.mulf %135, %146 : vector<200x128xf32>
    %c0_100 = arith.constant 0 : index
    %c0_101 = arith.constant 0 : index
    %148 = vector.load %arg7[%c0_100, %c0_101] : memref<1x128xf32, #tpu.memory_space<vmem>>, vector<1x128xf32>
    %149 = vector.broadcast %148 : vector<1x128xf32> to vector<200x128xf32>
    %150 = arith.addf %147, %149 : vector<200x128xf32>
    %151 = vector.broadcast %0 : vector<200x1xf32> to vector<200x128xf32>
    %152 = arith.mulf %150, %151 : vector<200x128xf32>
    %153 = arith.addf %152, %79 : vector<200x128xf32>
    %cst_102 = arith.constant 0.000000e+00 : f32
    %154 = vector.broadcast %cst_102 : f32 to vector<200x128xf32>
    %155 = arith.maximumf %153, %154 : vector<200x128xf32>
    %cst_103 = arith.constant 0.000000e+00 : f32
    %156 = vector.broadcast %cst_103 : f32 to vector<232x128xf32>
    %c0_104 = arith.constant 0 : index
    %c0_105 = arith.constant 0 : index
    %157 = vector.load %arg9[%c0_104, %c0_105] : memref<232x128xf32, #tpu.memory_space<vmem>>, vector<232x128xf32>
    tpu.vector_store %arg9[%c0_104, %c0_105], %156 {strides = array<i32>} : memref<232x128xf32, #tpu.memory_space<vmem>>, vector<232x128xf32>,
    %c16_106 = arith.constant 16 : index
    %c0_107 = arith.constant 0 : index
    %158 = vector.load %arg9[%c16_106, %c0_107] : memref<232x128xf32, #tpu.memory_space<vmem>>, vector<200x128xf32>
    tpu.vector_store %arg9[%c16_106, %c0_107], %155 {strides = array<i32>} : memref<232x128xf32, #tpu.memory_space<vmem>>, vector<200x128xf32>,
    return
  }
  func.func @transform_0(%arg0: i32) -> (i32, i32) {
    %c0_i32 = arith.constant 0 : i32
    %c0_i32_0 = arith.constant 0 : i32
    %c0_i32_1 = arith.constant 0 : i32
    return %c0_i32, %c0_i32_0 : i32, i32
  }
  func.func @transform_1(%arg0: i32) -> (i32, i32) {
    %c0_i32 = arith.constant 0 : i32
    %c0_i32_0 = arith.constant 0 : i32
    %c0_i32_1 = arith.constant 0 : i32
    return %c0_i32, %c0_i32_0 : i32, i32
  }
  func.func @transform_2(%arg0: i32) -> (i32, i32) {
    %c0_i32 = arith.constant 0 : i32
    %c0_i32_0 = arith.constant 0 : i32
    %c0_i32_1 = arith.constant 0 : i32
    return %c0_i32, %c0_i32_0 : i32, i32
  }
  func.func @transform_3(%arg0: i32) -> (i32, i32) {
    %c0_i32 = arith.constant 0 : i32
    %c0_i32_0 = arith.constant 0 : i32
    %c0_i32_1 = arith.constant 0 : i32
    return %c0_i32, %c0_i32_0 : i32, i32
  }
  func.func @transform_4(%arg0: i32) -> (i32, i32) {
    %c0_i32 = arith.constant 0 : i32
    %c0_i32_0 = arith.constant 0 : i32
    %c0_i32_1 = arith.constant 0 : i32
    return %c0_i32, %c0_i32_0 : i32, i32
  }
  func.func @transform_5(%arg0: i32) -> (i32, i32) {
    %c0_i32 = arith.constant 0 : i32
    %c0_i32_0 = arith.constant 0 : i32
    %c0_i32_1 = arith.constant 0 : i32
    return %c0_i32, %c0_i32_0 : i32, i32
  }
  func.func @transform_6(%arg0: i32) -> (i32, i32) {
    %c0_i32 = arith.constant 0 : i32
    %c0_i32_0 = arith.constant 0 : i32
    %c0_i32_1 = arith.constant 0 : i32
    return %c0_i32, %c0_i32_0 : i32, i32
  }
  func.func @transform_7(%arg0: i32) -> (i32, i32) {
    %c0_i32 = arith.constant 0 : i32
    %c0_i32_0 = arith.constant 0 : i32
    %c0_i32_1 = arith.constant 0 : i32
    return %c0_i32, %c0_i32_0 : i32, i32
  }
  func.func @transform_8(%arg0: i32) -> (i32, i32) {
    %c0_i32 = arith.constant 0 : i32
    %c0_i32_0 = arith.constant 0 : i32
    %c0_i32_1 = arith.constant 0 : i32
    return %c0_i32, %c0_i32_0 : i32, i32
  }
}

</mosaic_0001>

<llo_original>
// kernel: resnet_vision_forward.9
$region0: #{resnet_vision_forward.9}
  #allocation0 [shape = 'u32[]', space=smem, size = 0x4, offset = 0x4, fixed_abs, tag = 'smem constant byte address 0x4 - core index']
  #allocation1 [shape = 'u32[144,128]{1,0:T(1,128)}', space=vmem, size = 0x12000, scoped, tag = 'internal scratch']
  %s0 = inlined_call_operand.vmem [shape: f32[232,128], index: 0, kind: input, shape index: {}]
  %s1 = inlined_call_operand.vmem [shape: f32[2,232], index: 1, kind: input, shape index: {}]
  %s2 = inlined_call_operand.vmem [shape: bf16[128,128], index: 2, kind: input, shape index: {}]
  %s3 = inlined_call_operand.vmem [shape: f32[1,128], index: 3, kind: input, shape index: {}]
  %s4 = inlined_call_operand.vmem [shape: bf16[128,128], index: 4, kind: input, shape index: {}]
  %s5 = inlined_call_operand.vmem [shape: f32[1,128], index: 5, kind: input, shape index: {}]
  %s6 = inlined_call_operand.hbm [shape: f32[2,128], index: 6, kind: output, shape index: {}]
  %s7 = sld [smem:[#allocation0]]
  $region34: #{resnet_vision_forward.9} parent=0
    _
  %s9 = ssub.s32 1, %s7
  %s10 = scalar_select 0, %s9, %s7
  $region1: #{resnet_vision_forward.9} parent=0
    #allocation2 [shape = 'u8[1024]{0}', space=vmem, size = 0x400, scoped, tag = 'output window, operand 0, single buffered']
    #allocation3 [shape = 's32[1]{0}', space=sflag, size = 0x4, scoped, tag = 'scoped memory for resnet_vision_forward.9']
    %11 = vsyncpa [#allocation3], 0
    // Predicated region
    $region2: #{resnet_vision_forward.9} parent=1 // pred_check
      _
    $region3: #{resnet_vision_forward.9} parent=1 // pred_check_branch
      %13 = sbr.rel (0) target = $region5
    $region4: #{resnet_vision_forward.9} parent=1 // pred_region
      _
    $region5: #{resnet_vision_forward.9} parent=1 // pred_fallthru
      _
    // Predicated region
    $region6: #{resnet_vision_forward.9} parent=1 // pred_check
      _
    $region7: #{resnet_vision_forward.9} parent=1 // pred_check_branch
      %15 = sbr.rel (0) target = $region9
    $region8: #{resnet_vision_forward.9} parent=1 // pred_region
      _
    $region9: #{resnet_vision_forward.9} parent=1 // pred_fallthru
      _
    // Predicated region
    $region10: #{resnet_vision_forward.9} parent=1 // pred_check
      _
    $region11: #{resnet_vision_forward.9} parent=1 // pred_check_branch
      %17 = sbr.rel (0) target = $region13
    $region12: #{resnet_vision_forward.9} parent=1 // pred_region
      _
    $region13: #{resnet_vision_forward.9} parent=1 // pred_fallthru
      _
    // Predicated region
    $region14: #{resnet_vision_forward.9} parent=1 // pred_check
      _
    $region15: #{resnet_vision_forward.9} parent=1 // pred_check_branch
      %19 = sbr.rel (0) target = $region17
    $region16: #{resnet_vision_forward.9} parent=1 // pred_region
      _
    $region17: #{resnet_vision_forward.9} parent=1 // pred_fallthru
      _
    // Predicated region
    $region18: #{resnet_vision_forward.9} parent=1 // pred_check
      _
    $region19: #{resnet_vision_forward.9} parent=1 // pred_check_branch
      %21 = sbr.rel (0) target = $region21
    $region20: #{resnet_vision_forward.9} parent=1 // pred_region
      _
    $region21: #{resnet_vision_forward.9} parent=1 // pred_fallthru
      _
    // Predicated region
    $region22: #{resnet_vision_forward.9} parent=1 // pred_check
      _
    $region23: #{resnet_vision_forward.9} parent=1 // pred_check_branch
      %23 = sbr.rel (0) target = $region25
    $region24: #{resnet_vision_forward.9} parent=1 // pred_region
      _
    $region25: #{resnet_vision_forward.9} parent=1 // pred_fallthru
      _
    %v25 = vld [vmem:[%s1] sm:$0xf]
    %v26 = vld [vmem:[%s0] sm:$0xff]
    %v27 = vld [vmem:[%s0 + $0x8] sm:$0xff]
    %v28 = vld [vmem:[%s0 + $0x10] sm:$0xff]
    %v29 = vld [vmem:[%s0 + $0x18] sm:$0xff]
    %v30 = vld [vmem:[%s0 + $0x20] sm:$0xff]
    %v31 = vld [vmem:[%s0 + $0x28] sm:$0xff]
    %v32 = vld [vmem:[%s0 + $0x30] sm:$0xff]
    %v33 = vld [vmem:[%s0 + $0x38] sm:$0xff]
    %v34 = vld [vmem:[%s0 + $0x40] sm:$0xff]
    %v35 = vld [vmem:[%s0 + $0x48] sm:$0xff]
    %v36 = vld [vmem:[%s0 + $0x50] sm:$0xff]
    %v37 = vld [vmem:[%s0 + $0x58] sm:$0xff]
    %v38 = vld [vmem:[%s0 + $0x60] sm:$0xff]
    %v39 = vld [vmem:[%s0 + $0x68] sm:$0xff]
    %v40 = vld [vmem:[%s0 + $0x70] sm:$0xff]
    %v41 = vld [vmem:[%s0 + $0x78] sm:$0xff]
    %v42 = vld [vmem:[%s0 + $0x80] sm:$0xff]
    %v43 = vld [vmem:[%s0 + $0x88] sm:$0xff]
    %v44 = vld [vmem:[%s0 + $0x90] sm:$0xff]
    %v45 = vld [vmem:[%s0 + $0x98] sm:$0xff]
    %v46 = vld [vmem:[%s0 + $0xa0] sm:$0xff]
    %v47 = vld [vmem:[%s0 + $0xa8] sm:$0xff]
    %v48 = vld [vmem:[%s0 + $0xb0] sm:$0xff]
    %v49 = vld [vmem:[%s0 + $0xb8] sm:$0xff]
    %v50 = vld [vmem:[%s0 + $0xc0] sm:$0xff]
    %v51 = vld [vmem:[%s0 + $0xc8] sm:$0xff]
    %v52 = vld [vmem:[%s0 + $0xd0] sm:$0xff]
    %v53 = vld [vmem:[%s0 + $0xd8] sm:$0xff]
    %v54 = vld [vmem:[%s0 + $0xe0] sm:$0xff]
    %v57 = vunpack.c.l.s4 1983009808
    %v58 = vunpack.c.0.s8 %v57
    %v59 = vlaneseq
    %v60 = vshrl.u32 %v59, 7
    %v61 = vsub.s32 %v58, %v60
    %v62 = vrot.slane %v25, %v61
    %v63 = vcombine.high %v62, %v62
    %vm65 = vcmask 850944
    %v66 = vsel %vm65, %v63, 0
    %68 = vmatprep.subr.mxu0 0.0
    %69 = vmatpush1.msra.mxu0 %v26
    %70 = vmatprep.subr.mxu0 0.0
    %71 = vmatpush1.msra.mxu0 %v27
    %72 = vmatprep.subr.mxu0 0.0
    %73 = vmatpush1.msra.mxu0 %v28
    %74 = vmatprep.subr.mxu0 0.0
    %75 = vmatpush1.msra.mxu0 %v29
    %76 = vmatprep.subr.mxu0 0.0
    %77 = vmatpush1.msra.mxu0 %v30
    %78 = vmatprep.subr.mxu0 0.0
    %79 = vmatpush1.msra.mxu0 %v31
    %80 = vmatprep.subr.mxu0 0.0
    %81 = vmatpush1.msra.mxu0 %v32
    %82 = vmatprep.subr.mxu0 0.0
    %83 = vmatpush1.msra.mxu0 %v33
    %84 = vmatprep.subr.mxu0 0.0
    %85 = vmatpush1.msra.mxu0 %v34
    %86 = vmatprep.subr.mxu0 0.0
    %87 = vmatpush1.msra.mxu0 %v35
    %88 = vmatprep.subr.mxu0 0.0
    %89 = vmatpush1.msra.mxu0 %v36
    %90 = vmatprep.subr.mxu0 0.0
    %91 = vmatpush1.msra.mxu0 %v37
    %92 = vmatprep.subr.mxu0 0.0
    %93 = vmatpush1.msra.mxu0 %v38
    %94 = vmatprep.subr.mxu0 0.0
    %95 = vmatpush1.msra.mxu0 %v39
    %96 = vmatprep.subr.mxu0 0.0
    %97 = vmatpush1.msra.mxu0 %v40
    %98 = vmatprep.subr.mxu0 0.0
    %99 = vmatpush1.msra.mxu0 %v41
    %100 = vmatprep.subr.mxu0 0.0
    %101 = vmatpush1.msra.mxu0 %v42
    %102 = vmatprep.subr.mxu0 0.0
    %103 = vmatpush1.msra.mxu0 %v43
    %104 = vmatprep.subr.mxu0 0.0
    %105 = vmatpush1.msra.mxu0 %v44
    %106 = vmatprep.subr.mxu0 0.0
    %107 = vmatpush1.msra.mxu0 %v45
    %108 = vmatprep.subr.mxu0 0.0
    %109 = vmatpush1.msra.mxu0 %v46
    %110 = vmatprep.subr.mxu0 0.0
    %111 = vmatpush1.msra.mxu0 %v47
    %112 = vmatprep.subr.mxu0 0.0
    %113 = vmatpush1.msra.mxu0 %v48
    %114 = vmatprep.subr.mxu0 0.0
    %115 = vmatpush1.msra.mxu0 %v49
    %116 = vmatprep.subr.mxu0 0.0
    %117 = vmatpush1.msra.mxu0 %v50
    %118 = vmatprep.subr.mxu0 0.0
    %119 = vmatpush1.msra.mxu0 %v51
    %120 = vmatprep.subr.mxu0 0.0
    %121 = vmatpush1.msra.mxu0 %v52
    %122 = vmatprep.subr.mxu0 0.0
    %123 = vmatpush1.msra.mxu0 %v53
    %124 = vmatprep.subr.mxu0 0.0
    %125 = vmatpush1.msra.mxu0 %v54
    %126 = vmatprep.subr.mxu0 0.0
    %127 = vmatpush1.msra.mxu0 0.0
    %128 = vmatprep.subr.mxu0 0.0
    %129 = vmatpush1.msra.mxu0 0.0
    %130 = vmatprep.subr.mxu0 0.0
    %131 = vmatpush1.msra.mxu0 0.0
    %132 = vmatprep.mubr.f32.mxu0 %v66
    %133 = vmatmul.mubr.f32.gmra.mrb[0].mxu0 %v62
    %v134 = vpop.f32.mrb[0].mxu0
    %v135 = vadd.f32 0.0, %v134
    %v136 = vpop.f32.mrb[0].mxu0
    %137 = vdwg.mxu0
    %v138 = vpack.c.bf16 %v135, %v135
    %v139 = vld [vmem:[%s2] sm:$0xf]
    %v140 = vld [vmem:[%s2 + $0x4] sm:$0xf]
    %v141 = vld [vmem:[%s2 + $0x8] sm:$0xf]
    %v142 = vld [vmem:[%s2 + $0xc] sm:$0xf]
    %v143 = vld [vmem:[%s2 + $0x10] sm:$0xf]
    %v144 = vld [vmem:[%s2 + $0x14] sm:$0xf]
    %v145 = vld [vmem:[%s2 + $0x18] sm:$0xf]
    %v146 = vld [vmem:[%s2 + $0x1c] sm:$0xf]
    %v147 = vld [vmem:[%s2 + $0x20] sm:$0xf]
    %v148 = vld [vmem:[%s2 + $0x24] sm:$0xf]
    %v149 = vld [vmem:[%s2 + $0x28] sm:$0xf]
    %v150 = vld [vmem:[%s2 + $0x2c] sm:$0xf]
    %v151 = vld [vmem:[%s2 + $0x30] sm:$0xf]
    %v152 = vld [vmem:[%s2 + $0x34] sm:$0xf]
    %v153 = vld [vmem:[%s2 + $0x38] sm:$0xf]
    %v154 = vld [vmem:[%s2 + $0x3c] sm:$0xf]
    %v155 = vld [vmem:[%s3] sm:$0x1]
    %v157 = vlaneseq
    %v158 = vshrl.u32 %v157, 7
    %v159 = vsub.s32 0, %v158
    %v160 = vrot.slane %v155, %v159
    %v178 = vunpack.c.l.b16 %v139
    %v179 = vunpack.c.l.b16 %v140
    %v180 = vunpack.c.l.b16 %v141
    %v181 = vunpack.c.l.b16 %v142
    %v182 = vunpack.c.l.b16 %v143
    %v183 = vunpack.c.l.b16 %v144
    %v184 = vunpack.c.l.b16 %v145
    %v185 = vunpack.c.l.b16 %v146
    %v186 = vunpack.c.l.b16 %v147
    %v187 = vunpack.c.l.b16 %v148
    %v188 = vunpack.c.l.b16 %v149
    %v189 = vunpack.c.l.b16 %v150
    %v190 = vunpack.c.l.b16 %v151
    %v191 = vunpack.c.l.b16 %v152
    %v192 = vunpack.c.l.b16 %v153
    %v193 = vunpack.c.l.b16 %v154
    %v194 = vpack.c.b16 %v179, %v178
    %v195 = vpack.c.b16 %v181, %v180
    %v196 = vpack.c.b16 %v183, %v182
    %v197 = vpack.c.b16 %v185, %v184
    %v198 = vpack.c.b16 %v187, %v186
    %v199 = vpack.c.b16 %v189, %v188
    %v200 = vpack.c.b16 %v191, %v190
    %v201 = vpack.c.b16 %v193, %v192
    %210 = vmatprep.subr.bf16.mxu0 0
    %211 = vmatpush1.bf16.msra.mxu0 %v194
    %212 = vmatprep.subr.bf16.mxu0 0
    %213 = vmatpush1.bf16.msra.mxu0 %v195
    %214 = vmatprep.subr.bf16.mxu0 0
    %215 = vmatpush1.bf16.msra.mxu0 %v196
    %216 = vmatprep.subr.bf16.mxu0 0
    %217 = vmatpush1.bf16.msra.mxu0 %v197
    %218 = vmatprep.subr.bf16.mxu0 0
    %219 = vmatpush1.bf16.msra.mxu0 %v198
    %220 = vmatprep.subr.bf16.mxu0 0
    %221 = vmatpush1.bf16.msra.mxu0 %v199
    %222 = vmatprep.subr.bf16.mxu0 0
    %223 = vmatpush1.bf16.msra.mxu0 %v200
    %224 = vmatprep.subr.bf16.mxu0 0
    %225 = vmatpush1.bf16.msra.mxu0 %v201
    %226 = vmatprep.subr.bf16.mxu0 0
    %227 = vmatpush1.bf16.msra.mxu0 0
    %228 = vmatprep.subr.bf16.mxu0 0
    %229 = vmatpush1.bf16.msra.mxu0 0
    %230 = vmatprep.subr.bf16.mxu0 0
    %231 = vmatpush1.bf16.msra.mxu0 0
    %232 = vmatprep.subr.bf16.mxu0 0
    %233 = vmatpush1.bf16.msra.mxu0 0
    %234 = vmatprep.subr.bf16.mxu0 0
    %235 = vmatpush1.bf16.msra.mxu0 0
    %236 = vmatprep.subr.bf16.mxu0 0
    %237 = vmatpush1.bf16.msra.mxu0 0
    %238 = vmatprep.subr.bf16.mxu0 0
    %239 = vmatpush1.bf16.msra.mxu0 0
    %240 = vmatprep.subr.bf16.mxu0 0
    %241 = vmatpush1.bf16.msra.mxu0 0
    %242 = vmatprep.mubr.bf16.mxu0 0
    %243 = vmatmul.mubr.bf16.gmra.mrb[0].mxu0 %v138
    %v244 = vpop.f32.mrb[0].mxu0
    %v245 = vadd.f32 %v160, %v244
    %v246 = vpop.f32.mrb[0].mxu0
    %v247 = vpop.f32.mrb[0].mxu0
    %v248 = vpop.f32.mrb[0].mxu0
    %249 = vdwg.mxu0
    %v250 = vpack.c.bf16 %v245, %v245
    %v251 = vld [vmem:[%s4] sm:$0xf]
    %v252 = vld [vmem:[%s4 + $0x4] sm:$0xf]
    %v253 = vld [vmem:[%s4 + $0x8] sm:$0xf]
    %v254 = vld [vmem:[%s4 + $0xc] sm:$0xf]
    %v255 = vld [vmem:[%s4 + $0x10] sm:$0xf]
    %v256 = vld [vmem:[%s4 + $0x14] sm:$0xf]
    %v257 = vld [vmem:[%s4 + $0x18] sm:$0xf]
    %v258 = vld [vmem:[%s4 + $0x1c] sm:$0xf]
    %v259 = vld [vmem:[%s4 + $0x20] sm:$0xf]
    %v260 = vld [vmem:[%s4 + $0x24] sm:$0xf]
    %v261 = vld [vmem:[%s4 + $0x28] sm:$0xf]
    %v262 = vld [vmem:[%s4 + $0x2c] sm:$0xf]
    %v263 = vld [vmem:[%s4 + $0x30] sm:$0xf]
    %v264 = vld [vmem:[%s4 + $0x34] sm:$0xf]
    %v265 = vld [vmem:[%s4 + $0x38] sm:$0xf]
    %v266 = vld [vmem:[%s4 + $0x3c] sm:$0xf]
    %v267 = vld [vmem:[%s5] sm:$0x1]
    %v269 = vlaneseq
    %v270 = vshrl.u32 %v269, 7
    %v271 = vsub.s32 0, %v270
    %v272 = vrot.slane %v267, %v271
    %v290 = vunpack.c.l.b16 %v251
    %v291 = vunpack.c.l.b16 %v252
    %v292 = vunpack.c.l.b16 %v253
    %v293 = vunpack.c.l.b16 %v254
    %v294 = vunpack.c.l.b16 %v255
    %v295 = vunpack.c.l.b16 %v256
    %v296 = vunpack.c.l.b16 %v257
    %v297 = vunpack.c.l.b16 %v258
    %v298 = vunpack.c.l.b16 %v259
    %v299 = vunpack.c.l.b16 %v260
    %v300 = vunpack.c.l.b16 %v261
    %v301 = vunpack.c.l.b16 %v262
    %v302 = vunpack.c.l.b16 %v263
    %v303 = vunpack.c.l.b16 %v264
    %v304 = vunpack.c.l.b16 %v265
    %v305 = vunpack.c.l.b16 %v266
    %v306 = vpack.c.b16 %v291, %v290
    %v307 = vpack.c.b16 %v293, %v292
    %v308 = vpack.c.b16 %v295, %v294
    %v309 = vpack.c.b16 %v297, %v296
    %v310 = vpack.c.b16 %v299, %v298
    %v311 = vpack.c.b16 %v301, %v300
    %v312 = vpack.c.b16 %v303, %v302
    %v313 = vpack.c.b16 %v305, %v304
    %322 = vmatprep.subr.bf16.mxu0 0
    %323 = vmatpush1.bf16.msra.mxu0 %v306
    %324 = vmatprep.subr.bf16.mxu0 0
    %325 = vmatpush1.bf16.msra.mxu0 %v307
    %326 = vmatprep.subr.bf16.mxu0 0
    %327 = vmatpush1.bf16.msra.mxu0 %v308
    %328 = vmatprep.subr.bf16.mxu0 0
    %329 = vmatpush1.bf16.msra.mxu0 %v309
    %330 = vmatprep.subr.bf16.mxu0 0
    %331 = vmatpush1.bf16.msra.mxu0 %v310
    %332 = vmatprep.subr.bf16.mxu0 0
    %333 = vmatpush1.bf16.msra.mxu0 %v311
    %334 = vmatprep.subr.bf16.mxu0 0
    %335 = vmatpush1.bf16.msra.mxu0 %v312
    %336 = vmatprep.subr.bf16.mxu0 0
    %337 = vmatpush1.bf16.msra.mxu0 %v313
    %338 = vmatprep.subr.bf16.mxu0 0
    %339 = vmatpush1.bf16.msra.mxu0 0
    %340 = vmatprep.subr.bf16.mxu0 0
    %341 = vmatpush1.bf16.msra.mxu0 0
    %342 = vmatprep.subr.bf16.mxu0 0
    %343 = vmatpush1.bf16.msra.mxu0 0
    %344 = vmatprep.subr.bf16.mxu0 0
    %345 = vmatpush1.bf16.msra.mxu0 0
    %346 = vmatprep.subr.bf16.mxu0 0
    %347 = vmatpush1.bf16.msra.mxu0 0
    %348 = vmatprep.subr.bf16.mxu0 0
    %349 = vmatpush1.bf16.msra.mxu0 0
    %350 = vmatprep.subr.bf16.mxu0 0
    %351 = vmatpush1.bf16.msra.mxu0 0
    %352 = vmatprep.subr.bf16.mxu0 0
    %353 = vmatpush1.bf16.msra.mxu0 0
    %354 = vmatprep.mubr.bf16.mxu0 0
    %355 = vmatmul.mubr.bf16.gmra.mrb[0].mxu0 %v250
    %v356 = vpop.f32.mrb[0].mxu0
    %v357 = vadd.f32 %v272, %v356
    %v358 = vpop.f32.mrb[0].mxu0
    %v359 = vpop.f32.mrb[0].mxu0
    %v360 = vpop.f32.mrb[0].mxu0
    %361 = vdwg.mxu0
    %362 = vst [vmem:[#allocation2] sm:$0x3] %v357
    // Predicated region
    $region26: #{resnet_vision_forward.9} parent=1 // pred_check
      _
    $region27: #{resnet_vision_forward.9} parent=1 // pred_check_branch
      %364 = sbr.rel (0) target = $region29
    $region28: #{resnet_vision_forward.9} parent=1 // pred_region
      %s366 = ssub.s32 32, 32
      %367 = vsyncadd [#allocation3], %s366
      %s369 = sshll.u32 [#allocation2], 4
      %s370 = int_to_ptr.vmem [resolvable:$true] %s369
      %372 = dma.vmem_to_hbm [thread:$0]  %s370, 32, %s6, [#allocation3]
    $region29: #{resnet_vision_forward.9} parent=1 // pred_fallthru
      _
    // Predicated region
    $region30: #{resnet_vision_forward.9} parent=1 // pred_check
      _
    $region31: #{resnet_vision_forward.9} parent=1 // pred_check_branch
      %374 = sbr.rel (0) target = $region33
    $region32: #{resnet_vision_forward.9} parent=1 // pred_region
      %375 = dma.done [#allocation3], 32
    $region33: #{resnet_vision_forward.9} parent=1 // pred_fallthru
      _
    %376 = vsyncpa [#allocation3], 1

// kernel: resnet_vision_forward.5
$region0: #{resnet_vision_forward.5}
  #allocation0 [shape = 'u32[]', space=smem, size = 0x4, offset = 0x4, fixed_abs, tag = 'smem constant byte address 0x4 - core index']
  #allocation1 [shape = 'u32[144,128]{1,0:T(1,128)}', space=vmem, size = 0x12000, scoped, tag = 'internal scratch']
  %s0 = inlined_call_operand.vmem [shape: bf16[128,256], index: 0, kind: input, shape index: {}]
  %s1 = inlined_call_operand.vmem [shape: bf16[256,128], index: 1, kind: input, shape index: {}]
  %s2 = inlined_call_operand.vmem [shape: f32[1,128], index: 2, kind: input, shape index: {}]
  %s3 = inlined_call_operand.vmem [shape: f32[1,128], index: 3, kind: input, shape index: {}]
  %s4 = inlined_call_operand.vmem [shape: f32[128,128], index: 4, kind: output, shape index: {}]
  %s5 = sld [smem:[#allocation0]]
  $region26: #{resnet_vision_forward.5} parent=0
    _
  %s7 = ssub.s32 1, %s5
  %s8 = scalar_select 0, %s7, %s5
  // Predicated region
  $region2: #{resnet_vision_forward.5} parent=0 // pred_check
    _
  $region3: #{resnet_vision_forward.5} parent=0 // pred_check_branch
    %10 = sbr.rel (0) target = $region5
  $region4: #{resnet_vision_forward.5} parent=0 // pred_region
    _
  $region5: #{resnet_vision_forward.5} parent=0 // pred_fallthru
    _
  // Predicated region
  $region6: #{resnet_vision_forward.5} parent=0 // pred_check
    _
  $region7: #{resnet_vision_forward.5} parent=0 // pred_check_branch
    %12 = sbr.rel (0) target = $region9
  $region8: #{resnet_vision_forward.5} parent=0 // pred_region
    _
  $region9: #{resnet_vision_forward.5} parent=0 // pred_fallthru
    _
  // Predicated region
  $region10: #{resnet_vision_forward.5} parent=0 // pred_check
    _
  $region11: #{resnet_vision_forward.5} parent=0 // pred_check_branch
    %14 = sbr.rel (0) target = $region13
  $region12: #{resnet_vision_forward.5} parent=0 // pred_region
    _
  $region13: #{resnet_vision_forward.5} parent=0 // pred_fallthru
    _
  // Predicated region
  $region14: #{resnet_vision_forward.5} parent=0 // pred_check
    _
  $region15: #{resnet_vision_forward.5} parent=0 // pred_check_branch
    %16 = sbr.rel (0) target = $region17
  $region16: #{resnet_vision_forward.5} parent=0 // pred_region
    _
  $region17: #{resnet_vision_forward.5} parent=0 // pred_fallthru
    _
  %v18 = vld [vmem:[%s0] sm:$0xff]
  %v19 = vld [vmem:[%s0 + $0x8] sm:$0xff]
  %v20 = vld [vmem:[%s0 + $0x10] sm:$0xff]
  %v21 = vld [vmem:[%s0 + $0x18] sm:$0xff]
  %v22 = vld [vmem:[%s0 + $0x20] sm:$0xff]
  %v23 = vld [vmem:[%s0 + $0x28] sm:$0xff]
  %v24 = vld [vmem:[%s0 + $0x30] sm:$0xff]
  %v25 = vld [vmem:[%s0 + $0x38] sm:$0xff]
  %v26 = vld [vmem:[%s0 + $0x40] sm:$0xff]
  %v27 = vld [vmem:[%s0 + $0x48] sm:$0xff]
  %v28 = vld [vmem:[%s0 + $0x50] sm:$0xff]
  %v29 = vld [vmem:[%s0 + $0x58] sm:$0xff]
  %v30 = vld [vmem:[%s0 + $0x60] sm:$0xff]
  %v31 = vld [vmem:[%s0 + $0x68] sm:$0xff]
  %v32 = vld [vmem:[%s0 + $0x70] sm:$0xff]
  %v33 = vld [vmem:[%s0 + $0x78] sm:$0xff]
  %v34 = vld [vmem:[%s1] sm:$0xf]
  %v35 = vld [vmem:[%s1 + $0x4] sm:$0xf]
  %v36 = vld [vmem:[%s1 + $0x8] sm:$0xf]
  %v37 = vld [vmem:[%s1 + $0xc] sm:$0xf]
  %v38 = vld [vmem:[%s1 + $0x10] sm:$0xf]
  %v39 = vld [vmem:[%s1 + $0x14] sm:$0xf]
  %v40 = vld [vmem:[%s1 + $0x18] sm:$0xf]
  %v41 = vld [vmem:[%s1 + $0x1c] sm:$0xf]
  %v42 = vld [vmem:[%s1 + $0x20] sm:$0xf]
  %v43 = vld [vmem:[%s1 + $0x24] sm:$0xf]
  %v44 = vld [vmem:[%s1 + $0x28] sm:$0xf]
  %v45 = vld [vmem:[%s1 + $0x2c] sm:$0xf]
  %v46 = vld [vmem:[%s1 + $0x30] sm:$0xf]
  %v47 = vld [vmem:[%s1 + $0x34] sm:$0xf]
  %v48 = vld [vmem:[%s1 + $0x38] sm:$0xf]
  %v49 = vld [vmem:[%s1 + $0x3c] sm:$0xf]
  %v50 = vld [vmem:[%s1 + $0x40] sm:$0xf]
  %v51 = vld [vmem:[%s1 + $0x44] sm:$0xf]
  %v52 = vld [vmem:[%s1 + $0x48] sm:$0xf]
  %v53 = vld [vmem:[%s1 + $0x4c] sm:$0xf]
  %v54 = vld [vmem:[%s1 + $0x50] sm:$0xf]
  %v55 = vld [vmem:[%s1 + $0x54] sm:$0xf]
  %v56 = vld [vmem:[%s1 + $0x58] sm:$0xf]
  %v57 = vld [vmem:[%s1 + $0x5c] sm:$0xf]
  %v58 = vld [vmem:[%s1 + $0x60] sm:$0xf]
  %v59 = vld [vmem:[%s1 + $0x64] sm:$0xf]
  %v60 = vld [vmem:[%s1 + $0x68] sm:$0xf]
  %v61 = vld [vmem:[%s1 + $0x6c] sm:$0xf]
  %v62 = vld [vmem:[%s1 + $0x70] sm:$0xf]
  %v63 = vld [vmem:[%s1 + $0x74] sm:$0xf]
  %v64 = vld [vmem:[%s1 + $0x78] sm:$0xf]
  %v65 = vld [vmem:[%s1 + $0x7c] sm:$0xf]
  %v82 = vunpack.c.l.b16 %v18
  %v83 = vunpack.c.h.b16 %v18
  %v84 = vunpack.c.l.b16 %v19
  %v85 = vunpack.c.h.b16 %v19
  %v86 = vunpack.c.l.b16 %v20
  %v87 = vunpack.c.h.b16 %v20
  %v88 = vunpack.c.l.b16 %v21
  %v89 = vunpack.c.h.b16 %v21
  %v90 = vunpack.c.l.b16 %v22
  %v91 = vunpack.c.h.b16 %v22
  %v92 = vunpack.c.l.b16 %v23
  %v93 = vunpack.c.h.b16 %v23
  %v94 = vunpack.c.l.b16 %v24
  %v95 = vunpack.c.h.b16 %v24
  %v96 = vunpack.c.l.b16 %v25
  %v97 = vunpack.c.h.b16 %v25
  %v98 = vunpack.c.l.b16 %v26
  %v99 = vunpack.c.h.b16 %v26
  %v100 = vunpack.c.l.b16 %v27
  %v101 = vunpack.c.h.b16 %v27
  %v102 = vunpack.c.l.b16 %v28
  %v103 = vunpack.c.h.b16 %v28
  %v104 = vunpack.c.l.b16 %v29
  %v105 = vunpack.c.h.b16 %v29
  %v106 = vunpack.c.l.b16 %v30
  %v107 = vunpack.c.h.b16 %v30
  %v108 = vunpack.c.l.b16 %v31
  %v109 = vunpack.c.h.b16 %v31
  %v110 = vunpack.c.l.b16 %v32
  %v111 = vunpack.c.h.b16 %v32
  %v112 = vunpack.c.l.b16 %v33
  %v113 = vunpack.c.h.b16 %v33
  %v114 = vpack.c.b16 %v84, %v82
  %v115 = vpack.c.b16 %v85, %v83
  %v116 = vpack.c.b16 %v88, %v86
  %v117 = vpack.c.b16 %v89, %v87
  %v118 = vpack.c.b16 %v92, %v90
  %v119 = vpack.c.b16 %v93, %v91
  %v120 = vpack.c.b16 %v96, %v94
  %v121 = vpack.c.b16 %v97, %v95
  %v122 = vpack.c.b16 %v100, %v98
  %v123 = vpack.c.b16 %v101, %v99
  %v124 = vpack.c.b16 %v104, %v102
  %v125 = vpack.c.b16 %v105, %v103
  %v126 = vpack.c.b16 %v108, %v106
  %v127 = vpack.c.b16 %v109, %v107
  %v128 = vpack.c.b16 %v112, %v110
  %v129 = vpack.c.b16 %v113, %v111
  %v178 = vunpack.c.l.b16 %v34
  %v179 = vunpack.c.l.b16 %v35
  %v180 = vunpack.c.l.b16 %v36
  %v181 = vunpack.c.l.b16 %v37
  %v182 = vunpack.c.l.b16 %v38
  %v183 = vunpack.c.l.b16 %v39
  %v184 = vunpack.c.l.b16 %v40
  %v185 = vunpack.c.l.b16 %v41
  %v186 = vunpack.c.l.b16 %v42
  %v187 = vunpack.c.l.b16 %v43
  %v188 = vunpack.c.l.b16 %v44
  %v189 = vunpack.c.l.b16 %v45
  %v190 = vunpack.c.l.b16 %v46
  %v191 = vunpack.c.l.b16 %v47
  %v192 = vunpack.c.l.b16 %v48
  %v193 = vunpack.c.l.b16 %v49
  %v194 = vunpack.c.l.b16 %v50
  %v195 = vunpack.c.l.b16 %v51
  %v196 = vunpack.c.l.b16 %v52
  %v197 = vunpack.c.l.b16 %v53
  %v198 = vunpack.c.l.b16 %v54
  %v199 = vunpack.c.l.b16 %v55
  %v200 = vunpack.c.l.b16 %v56
  %v201 = vunpack.c.l.b16 %v57
  %v202 = vunpack.c.l.b16 %v58
  %v203 = vunpack.c.l.b16 %v59
  %v204 = vunpack.c.l.b16 %v60
  %v205 = vunpack.c.l.b16 %v61
  %v206 = vunpack.c.l.b16 %v62
  %v207 = vunpack.c.l.b16 %v63
  %v208 = vunpack.c.l.b16 %v64
  %v209 = vunpack.c.l.b16 %v65
  %v210 = vpack.c.b16 %v179, %v178
  %v211 = vpack.c.b16 %v181, %v180
  %v212 = vpack.c.b16 %v183, %v182
  %v213 = vpack.c.b16 %v185, %v184
  %v214 = vpack.c.b16 %v187, %v186
  %v215 = vpack.c.b16 %v189, %v188
  %v216 = vpack.c.b16 %v191, %v190
  %v217 = vpack.c.b16 %v193, %v192
  %v218 = vpack.c.b16 %v195, %v194
  %v219 = vpack.c.b16 %v197, %v196
  %v220 = vpack.c.b16 %v199, %v198
  %v221 = vpack.c.b16 %v201, %v200
  %v222 = vpack.c.b16 %v203, %v202
  %v223 = vpack.c.b16 %v205, %v204
  %v224 = vpack.c.b16 %v207, %v206
  %v225 = vpack.c.b16 %v209, %v208
  %242 = vmatprep.subr.bf16.mxu0 0
  %243 = vmatpush1.bf16.msra.mxu0 %v210
  %244 = vmatprep.subr.bf16.mxu0 0
  %245 = vmatpush1.bf16.msra.mxu0 %v211
  %246 = vmatprep.subr.bf16.mxu0 0
  %247 = vmatpush1.bf16.msra.mxu0 %v212
  %248 = vmatprep.subr.bf16.mxu0 0
  %249 = vmatpush1.bf16.msra.mxu0 %v213
  %250 = vmatprep.subr.bf16.mxu0 0
  %251 = vmatpush1.bf16.msra.mxu0 %v214
  %252 = vmatprep.subr.bf16.mxu0 0
  %253 = vmatpush1.bf16.msra.mxu0 %v215
  %254 = vmatprep.subr.bf16.mxu0 0
  %255 = vmatpush1.bf16.msra.mxu0 %v216
  %256 = vmatprep.subr.bf16.mxu0 0
  %257 = vmatpush1.bf16.msra.mxu0 %v217
  %258 = vmatprep.subr.bf16.mxu0 0
  %259 = vmatpush1.bf16.msra.mxu0 %v218
  %260 = vmatprep.subr.bf16.mxu0 0
  %261 = vmatpush1.bf16.msra.mxu0 %v219
  %262 = vmatprep.subr.bf16.mxu0 0
  %263 = vmatpush1.bf16.msra.mxu0 %v220
  %264 = vmatprep.subr.bf16.mxu0 0
  %265 = vmatpush1.bf16.msra.mxu0 %v221
  %266 = vmatprep.subr.bf16.mxu0 0
  %267 = vmatpush1.bf16.msra.mxu0 %v222
  %268 = vmatprep.subr.bf16.mxu0 0
  %269 = vmatpush1.bf16.msra.mxu0 %v223
  %270 = vmatprep.subr.bf16.mxu0 0
  %271 = vmatpush1.bf16.msra.mxu0 %v224
  %272 = vmatprep.subr.bf16.mxu0 0
  %273 = vmatpush1.bf16.msra.mxu0 %v225
  %274 = vmatprep.mubr.bf16.mxu0 %v115
  %275 = vmatmul.mubr.bf16.gmra.mrb[0].mxu0 %v114
  %v276 = vpop.f32.mrb[0].mxu0
  %v277 = vadd.f32 0.0, %v276
  %v278 = vpop.f32.mrb[0].mxu0
  %v279 = vpop.f32.mrb[0].mxu0
  %v280 = vadd.f32 0.0, %v279
  %v281 = vpop.f32.mrb[0].mxu0
  %282 = vmatprep.mubr.bf16.mxu0 %v117
  %283 = vmatmul.mubr.bf16.gmra.mrb[0].mxu0 %v116
  %v284 = vpop.f32.mrb[0].mxu0
  %v285 = vadd.f32 0.0, %v284
  %v286 = vpop.f32.mrb[0].mxu0
  %v287 = vpop.f32.mrb[0].mxu0
  %v288 = vadd.f32 0.0, %v287
  %v289 = vpop.f32.mrb[0].mxu0
  %290 = vmatprep.mubr.bf16.mxu0 %v119
  %291 = vmatmul.mubr.bf16.gmra.mrb[0].mxu0 %v118
  %v292 = vpop.f32.mrb[0].mxu0
  %v293 = vadd.f32 0.0, %v292
  %v294 = vpop.f32.mrb[0].mxu0
  %v295 = vpop.f32.mrb[0].mxu0
  %v296 = vadd.f32 0.0, %v295
  %v297 = vpop.f32.mrb[0].mxu0
  %298 = vmatprep.mubr.bf16.mxu0 %v121
  %299 = vmatmul.mubr.bf16.gmra.mrb[0].mxu0 %v120
  %v300 = vpop.f32.mrb[0].mxu0
  %v301 = vadd.f32 0.0, %v300
  %v302 = vpop.f32.mrb[0].mxu0
  %v303 = vpop.f32.mrb[0].mxu0
  %v304 = vadd.f32 0.0, %v303
  %v305 = vpop.f32.mrb[0].mxu0
  %306 = vmatprep.mubr.bf16.mxu0 %v123
  %307 = vmatmul.mubr.bf16.gmra.mrb[0].mxu0 %v122
  %v308 = vpop.f32.mrb[0].mxu0
  %v309 = vadd.f32 0.0, %v308
  %v310 = vpop.f32.mrb[0].mxu0
  %v311 = vpop.f32.mrb[0].mxu0
  %v312 = vadd.f32 0.0, %v311
  %v313 = vpop.f32.mrb[0].mxu0
  %314 = vmatprep.mubr.bf16.mxu0 %v125
  %315 = vmatmul.mubr.bf16.gmra.mrb[0].mxu0 %v124
  %v316 = vpop.f32.mrb[0].mxu0
  %v317 = vadd.f32 0.0, %v316
  %v318 = vpop.f32.mrb[0].mxu0
  %v319 = vpop.f32.mrb[0].mxu0
  %v320 = vadd.f32 0.0, %v319
  %v321 = vpop.f32.mrb[0].mxu0
  %322 = vmatprep.mubr.bf16.mxu0 %v127
  %323 = vmatmul.mubr.bf16.gmra.mrb[0].mxu0 %v126
  %v324 = vpop.f32.mrb[0].mxu0
  %v325 = vadd.f32 0.0, %v324
  %v326 = vpop.f32.mrb[0].mxu0
  %v327 = vpop.f32.mrb[0].mxu0
  %v328 = vadd.f32 0.0, %v327
  %v329 = vpop.f32.mrb[0].mxu0
  %330 = vmatprep.mubr.bf16.mxu0 %v129
  %331 = vmatmul.mubr.bf16.gmra.mrb[0].mxu0 %v128
  %v332 = vpop.f32.mrb[0].mxu0
  %v333 = vadd.f32 0.0, %v332
  %v334 = vpop.f32.mrb[0].mxu0
  %v335 = vpop.f32.mrb[0].mxu0
  %v336 = vadd.f32 0.0, %v335
  %v337 = vpop.f32.mrb[0].mxu0
  %338 = vdwg.mxu0
  %v339 = vadd.f32 %v277, %v280
  %v340 = vadd.f32 %v339, %v285
  %v341 = vadd.f32 %v340, %v288
  %v342 = vadd.f32 %v341, %v293
  %v343 = vadd.f32 %v342, %v296
  %v344 = vadd.f32 %v343, %v301
  %v345 = vadd.f32 %v344, %v304
  %v346 = vadd.f32 %v345, %v309
  %v347 = vadd.f32 %v346, %v312
  %v348 = vadd.f32 %v347, %v317
  %v349 = vadd.f32 %v348, %v320
  %v350 = vadd.f32 %v349, %v325
  %v351 = vadd.f32 %v350, %v328
  %v352 = vadd.f32 %v351, %v333
  %v353 = vadd.f32 %v352, %v336
  %v354 = vrot.slane %v353, 4
  %v355 = vadd.f32 %v353, %v354
  %v356 = vrot.slane %v355, 2
  %v357 = vadd.f32 %v355, %v356
  %v358 = vrot.slane %v357, 1
  %v359 = vadd.f32 %v357, %v358
  %v360 = vmul.f32 %v359, 0.0078125
  %v361 = vsub.f32 %v277, %v360
  %v362 = vsub.f32 %v280, %v360
  %v363 = vsub.f32 %v285, %v360
  %v364 = vsub.f32 %v288, %v360
  %v365 = vsub.f32 %v293, %v360
  %v366 = vsub.f32 %v296, %v360
  %v367 = vsub.f32 %v301, %v360
  %v368 = vsub.f32 %v304, %v360
  %v369 = vsub.f32 %v309, %v360
  %v370 = vsub.f32 %v312, %v360
  %v371 = vsub.f32 %v317, %v360
  %v372 = vsub.f32 %v320, %v360
  %v373 = vsub.f32 %v325, %v360
  %v374 = vsub.f32 %v328, %v360
  %v375 = vsub.f32 %v333, %v360
  %v376 = vsub.f32 %v336, %v360
  %v377 = vmul.f32 %v361, %v361
  %v378 = vmul.f32 %v362, %v362
  %v379 = vmul.f32 %v363, %v363
  %v380 = vmul.f32 %v364, %v364
  %v381 = vmul.f32 %v365, %v365
  %v382 = vmul.f32 %v366, %v366
  %v383 = vmul.f32 %v367, %v367
  %v384 = vmul.f32 %v368, %v368
  %v385 = vmul.f32 %v369, %v369
  %v386 = vmul.f32 %v370, %v370
  %v387 = vmul.f32 %v371, %v371
  %v388 = vmul.f32 %v372, %v372
  %v389 = vmul.f32 %v373, %v373
  %v390 = vmul.f32 %v374, %v374
  %v391 = vmul.f32 %v375, %v375
  %v392 = vmul.f32 %v376, %v376
  %v393 = vadd.f32 %v377, %v378
  %v394 = vadd.f32 %v393, %v379
  %v395 = vadd.f32 %v394, %v380
  %v396 = vadd.f32 %v395, %v381
  %v397 = vadd.f32 %v396, %v382
  %v398 = vadd.f32 %v397, %v383
  %v399 = vadd.f32 %v398, %v384
  %v400 = vadd.f32 %v399, %v385
  %v401 = vadd.f32 %v400, %v386
  %v402 = vadd.f32 %v401, %v387
  %v403 = vadd.f32 %v402, %v388
  %v404 = vadd.f32 %v403, %v389
  %v405 = vadd.f32 %v404, %v390
  %v406 = vadd.f32 %v405, %v391
  %v407 = vadd.f32 %v406, %v392
  %v408 = vrot.slane %v407, 4
  %v409 = vadd.f32 %v407, %v408
  %v410 = vrot.slane %v409, 2
  %v411 = vadd.f32 %v409, %v410
  %v412 = vrot.slane %v411, 1
  %v413 = vadd.f32 %v411, %v412
  %v414 = vmul.f32 %v413, 0.0078125
  %v415 = vld [vmem:[%s2] sm:$0x1]
  %v416 = vadd.f32 %v414, 1e-05
  %v417 = vrsqrt.pop %v416
  %v418 = vmul.f32 %v415, %v417
  %v420 = vlaneseq
  %v421 = vshrl.u32 %v420, 7
  %v422 = vsub.s32 0, %v421
  %v423 = vrot.slane %v418, %v422
  %v425 = vmul.f32 %v361, %v423
  %v426 = vmul.f32 %v362, %v423
  %v427 = vmul.f32 %v363, %v423
  %v428 = vmul.f32 %v364, %v423
  %v429 = vmul.f32 %v365, %v423
  %v430 = vmul.f32 %v366, %v423
  %v431 = vmul.f32 %v367, %v423
  %v432 = vmul.f32 %v368, %v423
  %v433 = vmul.f32 %v369, %v423
  %v434 = vmul.f32 %v370, %v423
  %v435 = vmul.f32 %v371, %v423
  %v436 = vmul.f32 %v372, %v423
  %v437 = vmul.f32 %v373, %v423
  %v438 = vmul.f32 %v374, %v423
  %v439 = vmul.f32 %v375, %v423
  %v440 = vmul.f32 %v376, %v423
  %v441 = vld [vmem:[%s3] sm:$0x1]
  %v443 = vlaneseq
  %v444 = vshrl.u32 %v443, 7
  %v445 = vsub.s32 0, %v444
  %v446 = vrot.slane %v441, %v445
  %v448 = vadd.f32 %v425, %v446
  %v449 = vadd.f32 %v426, %v446
  %v450 = vadd.f32 %v427, %v446
  %v451 = vadd.f32 %v428, %v446
  %v452 = vadd.f32 %v429, %v446
  %v453 = vadd.f32 %v430, %v446
  %v454 = vadd.f32 %v431, %v446
  %v455 = vadd.f32 %v432, %v446
  %v456 = vadd.f32 %v433, %v446
  %v457 = vadd.f32 %v434, %v446
  %v458 = vadd.f32 %v435, %v446
  %v459 = vadd.f32 %v436, %v446
  %v460 = vadd.f32 %v437, %v446
  %v461 = vadd.f32 %v438, %v446
  %v462 = vadd.f32 %v439, %v446
  %v463 = vadd.f32 %v440, %v446
  %v464 = vmax.f32 %v448, 0.0
  %v465 = vmax.f32 %v449, 0.0
  %v466 = vmax.f32 %v450, 0.0
  %v467 = vmax.f32 %v451, 0.0
  %v468 = vmax.f32 %v452, 0.0
  %v469 = vmax.f32 %v453, 0.0
  %v470 = vmax.f32 %v454, 0.0
  %v471 = vmax.f32 %v455, 0.0
  %v472 = vmax.f32 %v456, 0.0
  %v473 = vmax.f32 %v457, 0.0
  %v474 = vmax.f32 %v458, 0.0
  %v475 = vmax.f32 %v459, 0.0
  %v476 = vmax.f32 %v460, 0.0
  %v477 = vmax.f32 %v461, 0.0
  %v478 = vmax.f32 %v462, 0.0
  %v479 = vmax.f32 %v463, 0.0
  %480 = vst [vmem:[%s4] sm:$0xff] %v464
  %481 = vst [vmem:[%s4 + $0x8] sm:$0xff] %v465
  %482 = vst [vmem:[%s4 + $0x10] sm:$0xff] %v466
  %483 = vst [vmem:[%s4 + $0x18] sm:$0xff] %v467
  %484 = vst [vmem:[%s4 + $0x20] sm:$0xff] %v468
  %485 = vst [vmem:[%s4 + $0x28] sm:$0xff] %v469
  %486 = vst [vmem:[%s4 + $0x30] sm:$0xff] %v470
  %487 = vst [vmem:[%s4 + $0x38] sm:$0xff] %v471
  %488 = vst [vmem:[%s4 + $0x40] sm:$0xff] %v472
  %489 = vst [vmem:[%s4 + $0x48] sm:$0xff] %v473
  %490 = vst [vmem:[%s4 + $0x50] sm:$0xff] %v474
  %491 = vst [vmem:[%s4 + $0x58] sm:$0xff] %v475
  %492 = vst [vmem:[%s4 + $0x60] sm:$0xff] %v476
  %493 = vst [vmem:[%s4 + $0x68] sm:$0xff] %v477
  %494 = vst [vmem:[%s4 + $0x70] sm:$0xff] %v478
  %495 = vst [vmem:[%s4 + $0x78] sm:$0xff] %v479
  // Predicated region
  $region18: #{resnet_vision_forward.5} parent=0 // pred_check
    _
  $region19: #{resnet_vision_forward.5} parent=0 // pred_check_branch
    %497 = sbr.rel (0) target = $region21
  $region20: #{resnet_vision_forward.5} parent=0 // pred_region
    _
  $region21: #{resnet_vision_forward.5} parent=0 // pred_fallthru
    _
  // Predicated region
  $region22: #{resnet_vision_forward.5} parent=0 // pred_check
    _
  $region23: #{resnet_vision_forward.5} parent=0 // pred_check_branch
    %499 = sbr.rel (0) target = $region25
  $region24: #{resnet_vision_forward.5} parent=0 // pred_region
    _
  $region25: #{resnet_vision_forward.5} parent=0 // pred_fallthru
    _

// kernel: resnet_vision_forward.6
$region0: #{resnet_vision_forward.6}
  #allocation0 [shape = 'u32[]', space=smem, size = 0x4, offset = 0x4, fixed_abs, tag = 'smem constant byte address 0x4 - core index']
  #allocation1 [shape = 'u32[144,128]{1,0:T(1,128)}', space=vmem, size = 0x12000, scoped, tag = 'internal scratch']
  #allocation2 [shape = 'f32[232,128]{1,0:T(8,128)}', space=vmem, size = 0x1d000, scoped, tag = 'scratch operand']
  %s0 = inlined_call_operand.vmem [shape: f32[232,128], index: 0, kind: input, shape index: {}]
  %s1 = inlined_call_operand.vmem [shape: bf16[576,128], index: 1, kind: input, shape index: {}]
  %s2 = inlined_call_operand.vmem [shape: f32[1,128], index: 2, kind: input, shape index: {}]
  %s3 = inlined_call_operand.vmem [shape: f32[1,128], index: 3, kind: input, shape index: {}]
  %s4 = inlined_call_operand.vmem [shape: bf16[144,128], index: 4, kind: input, shape index: {}]
  %s5 = inlined_call_operand.vmem [shape: f32[1,128], index: 5, kind: input, shape index: {}]
  %s6 = inlined_call_operand.vmem [shape: f32[1,128], index: 6, kind: input, shape index: {}]
  %s7 = inlined_call_operand.vmem [shape: bf16[64,128], index: 7, kind: input, shape index: {}]
  %s8 = inlined_call_operand.vmem [shape: f32[1,128], index: 8, kind: input, shape index: {}]
  %s9 = inlined_call_operand.vmem [shape: f32[1,128], index: 9, kind: input, shape index: {}]
  %s10 = inlined_call_operand.vmem [shape: f32[200,1], index: 10, kind: input, shape index: {}]
  %s11 = inlined_call_operand.vmem [shape: f32[232,128], index: 11, kind: output, shape index: {}]
  %s12 = sld [smem:[#allocation0]]
  $region54: #{resnet_vision_forward.6} parent=0
    _
  %s14 = ssub.s32 1, %s12
  %s15 = scalar_select 0, %s14, %s12
  // Predicated region
  $region2: #{resnet_vision_forward.6} parent=0 // pred_check
    _
  $region3: #{resnet_vision_forward.6} parent=0 // pred_check_branch
    %17 = sbr.rel (0) target = $region5
  $region4: #{resnet_vision_forward.6} parent=0 // pred_region
    _
  $region5: #{resnet_vision_forward.6} parent=0 // pred_fallthru
    _
  // Predicated region
  $region6: #{resnet_vision_forward.6} parent=0 // pred_check
    _
  $region7: #{resnet_vision_forward.6} parent=0 // pred_check_branch
    %19 = sbr.rel (0) target = $region9
  $region8: #{resnet_vision_forward.6} parent=0 // pred_region
    _
  $region9: #{resnet_vision_forward.6} parent=0 // pred_fallthru
    _
  // Predicated region
  $region10: #{resnet_vision_forward.6} parent=0 // pred_check
    _
  $region11: #{resnet_vision_forward.6} parent=0 // pred_check_branch
    %21 = sbr.rel (0) target = $region13
  $region12: #{resnet_vision_forward.6} parent=0 // pred_region
    _
  $region13: #{resnet_vision_forward.6} parent=0 // pred_fallthru
    _
  // Predicated region
  $region14: #{resnet_vision_forward.6} parent=0 // pred_check
    _
  $region15: #{resnet_vision_forward.6} parent=0 // pred_check_branch
    %23 = sbr.rel (0) target = $region17
  $region16: #{resnet_vision_forward.6} parent=0 // pred_region
    _
  $region17: #{resnet_vision_forward.6} parent=0 // pred_fallthru
    _
  // Predicated region
  $region18: #{resnet_vision_forward.6} parent=0 // pred_check
    _
  $region19: #{resnet_vision_forward.6} parent=0 // pred_check_branch
    %25 = sbr.rel (0) target = $region21
  $region20: #{resnet_vision_forward.6} parent=0 // pred_region
    _
  $region21: #{resnet_vision_forward.6} parent=0 // pred_fallthru
    _
  // Predicated region
  $region22: #{resnet_vision_forward.6} parent=0 // pred_check
    _
  $region23: #{resnet_vision_forward.6} parent=0 // pred_check_branch
    %27 = sbr.rel (0) target = $region25
  $region24: #{resnet_vision_forward.6} parent=0 // pred_region
    _
  $region25: #{resnet_vision_forward.6} parent=0 // pred_fallthru
    _
  // Predicated region
  $region26: #{resnet_vision_forward.6} parent=0 // pred_check
    _
  $region27: #{resnet_vision_forward.6} parent=0 // pred_check_branch
    %29 = sbr.rel (0) target = $region29
  $region28: #{resnet_vision_forward.6} parent=0 // pred_region
    _
  $region29: #{resnet_vision_forward.6} parent=0 // pred_fallthru
    _
  // Predicated region
  $region30: #{resnet_vision_forward.6} parent=0 // pred_check
    _
  $region31: #{resnet_vision_forward.6} parent=0 // pred_check_branch
    %31 = sbr.rel (0) target = $region33
  $region32: #{resnet_vision_forward.6} parent=0 // pred_region
    _
  $region33: #{resnet_vision_forward.6} parent=0 // pred_fallthru
    _
  // Predicated region
  $region34: #{resnet_vision_forward.6} parent=0 // pred_check
    _
  $region35: #{resnet_vision_forward.6} parent=0 // pred_check_branch
    %33 = sbr.rel (0) target = $region37
  $region36: #{resnet_vision_forward.6} parent=0 // pred_region
    _
  $region37: #{resnet_vision_forward.6} parent=0 // pred_fallthru
    _
  // Predicated region
  $region38: #{resnet_vision_forward.6} parent=0 // pred_check
    _
  $region39: #{resnet_vision_forward.6} parent=0 // pred_check_branch
    %35 = sbr.rel (0) target = $region41
  $region40: #{resnet_vision_forward.6} parent=0 // pred_region
    _
  $region41: #{resnet_vision_forward.6} parent=0 // pred_fallthru
    _
  // Predicated region
  $region42: #{resnet_vision_forward.6} parent=0 // pred_check
    _
  $region43: #{resnet_vision_forward.6} parent=0 // pred_check_branch
    %37 = sbr.rel (0) target = $region45
  $region44: #{resnet_vision_forward.6} parent=0 // pred_region
    _
  $region45: #{resnet_vision_forward.6} parent=0 // pred_fallthru
    _
  %v39 = vld [vmem:[%s10] sm:$0xff]
  %v40 = vld [vmem:[%s10 + $0x8] sm:$0xff]
  %v41 = vld [vmem:[%s10 + $0x10] sm:$0xff]
  %v42 = vld [vmem:[%s10 + $0x18] sm:$0xff]
  %v43 = vld [vmem:[%s10 + $0x20] sm:$0xff]
  %v44 = vld [vmem:[%s10 + $0x28] sm:$0xff]
  %v45 = vld [vmem:[%s10 + $0x30] sm:$0xff]
  %v46 = vld [vmem:[%s10 + $0x38] sm:$0xff]
  %v47 = vld [vmem:[%s10 + $0x40] sm:$0xff]
  %v48 = vld [vmem:[%s10 + $0x48] sm:$0xff]
  %v49 = vld [vmem:[%s10 + $0x50] sm:$0xff]
  %v50 = vld [vmem:[%s10 + $0x58] sm:$0xff]
  %v51 = vld [vmem:[%s10 + $0x60] sm:$0xff]
  %v52 = vld [vmem:[%s10 + $0x68] sm:$0xff]
  %v53 = vld [vmem:[%s10 + $0x70] sm:$0xff]
  %v54 = vld [vmem:[%s10 + $0x78] sm:$0xff]
  %v55 = vld [vmem:[%s10 + $0x80] sm:$0xff]
  %v56 = vld [vmem:[%s10 + $0x88] sm:$0xff]
  %v57 = vld [vmem:[%s10 + $0x90] sm:$0xff]
  %v58 = vld [vmem:[%s10 + $0x98] sm:$0xff]
  %v59 = vld [vmem:[%s10 + $0xa0] sm:$0xff]
  %v60 = vld [vmem:[%s10 + $0xa8] sm:$0xff]
  %v61 = vld [vmem:[%s10 + $0xb0] sm:$0xff]
  %v62 = vld [vmem:[%s10 + $0xb8] sm:$0xff]
  %v63 = vld [vmem:[%s10 + $0xc0] sm:$0xff]
  %v64 = vld [vmem:[%s0 + $0x5] sm:$0xff]
  %v65 = vld [vmem:[%s0 + $0xd] sm:$0xff]
  %v66 = vld [vmem:[%s0 + $0x15] sm:$0xff]
  %v67 = vld [vmem:[%s0 + $0x1d] sm:$0xff]
  %v68 = vld [vmem:[%s0 + $0x25] sm:$0xff]
  %v69 = vld [vmem:[%s0 + $0x2d] sm:$0xff]
  %v70 = vld [vmem:[%s0 + $0x35] sm:$0xff]
  %v71 = vld [vmem:[%s0 + $0x3d] sm:$0xff]
  %v72 = vld [vmem:[%s0 + $0x45] sm:$0xff]
  %v73 = vld [vmem:[%s0 + $0x4d] sm:$0xff]
  %v74 = vld [vmem:[%s0 + $0x55] sm:$0xff]
  %v75 = vld [vmem:[%s0 + $0x5d] sm:$0xff]
  %v76 = vld [vmem:[%s0 + $0x65] sm:$0xff]
  %v77 = vld [vmem:[%s0 + $0x6d] sm:$0xff]
  %v78 = vld [vmem:[%s0 + $0x75] sm:$0xff]
  %v79 = vld [vmem:[%s0 + $0x7d] sm:$0xff]
  %v80 = vld [vmem:[%s0 + $0x85] sm:$0xff]
  %v81 = vld [vmem:[%s0 + $0x8d] sm:$0xff]
  %v82 = vld [vmem:[%s0 + $0x95] sm:$0xff]
  %v83 = vld [vmem:[%s0 + $0x9d] sm:$0xff]
  %v84 = vld [vmem:[%s0 + $0xa5] sm:$0xff]
  %v85 = vld [vmem:[%s0 + $0xad] sm:$0xff]
  %v86 = vld [vmem:[%s0 + $0xb5] sm:$0xff]
  %v87 = vld [vmem:[%s0 + $0xbd] sm:$0xff]
  %v88 = vld [vmem:[%s0 + $0xc5] sm:$0xff]
  %v89 = vpack.c.bf16 %v65, %v64
  %v90 = vpack.c.bf16 %v67, %v66
  %v91 = vpack.c.bf16 %v69, %v68
  %v92 = vpack.c.bf16 %v71, %v70
  %v93 = vpack.c.bf16 %v73, %v72
  %v94 = vpack.c.bf16 %v75, %v74
  %v95 = vpack.c.bf16 %v77, %v76
  %v96 = vpack.c.bf16 %v79, %v78
  %v97 = vpack.c.bf16 %v81, %v80
  %v98 = vpack.c.bf16 %v83, %v82
  %v99 = vpack.c.bf16 %v85, %v84
  %v100 = vpack.c.bf16 %v87, %v86
  %v101 = vpack.c.bf16 %v88, %v88
  %v102 = vld [vmem:[%s1] sm:$0xf]
  %v103 = vld [vmem:[%s1 + $0x4] sm:$0xf]
  %v104 = vld [vmem:[%s1 + $0x8] sm:$0xf]
  %v105 = vld [vmem:[%s1 + $0xc] sm:$0xf]
  %v106 = vld [vmem:[%s1 + $0x10] sm:$0xf]
  %v107 = vld [vmem:[%s1 + $0x14] sm:$0xf]
  %v108 = vld [vmem:[%s1 + $0x18] sm:$0xf]
  %v109 = vld [vmem:[%s1 + $0x1c] sm:$0xf]
  %v110 = vld [vmem:[%s0 + $0x6] sm:$0xff]
  %v111 = vld [vmem:[%s0 + $0xe] sm:$0xff]
  %v112 = vld [vmem:[%s0 + $0x16] sm:$0xff]
  %v113 = vld [vmem:[%s0 + $0x1e] sm:$0xff]
  %v114 = vld [vmem:[%s0 + $0x26] sm:$0xff]
  %v115 = vld [vmem:[%s0 + $0x2e] sm:$0xff]
  %v116 = vld [vmem:[%s0 + $0x36] sm:$0xff]
  %v117 = vld [vmem:[%s0 + $0x3e] sm:$0xff]
  %v118 = vld [vmem:[%s0 + $0x46] sm:$0xff]
  %v119 = vld [vmem:[%s0 + $0x4e] sm:$0xff]
  %v120 = vld [vmem:[%s0 + $0x56] sm:$0xff]
  %v121 = vld [vmem:[%s0 + $0x5e] sm:$0xff]
  %v122 = vld [vmem:[%s0 + $0x66] sm:$0xff]
  %v123 = vld [vmem:[%s0 + $0x6e] sm:$0xff]
  %v124 = vld [vmem:[%s0 + $0x76] sm:$0xff]
  %v125 = vld [vmem:[%s0 + $0x7e] sm:$0xff]
  %v126 = vld [vmem:[%s0 + $0x86] sm:$0xff]
  %v127 = vld [vmem:[%s0 + $0x8e] sm:$0xff]
  %v128 = vld [vmem:[%s0 + $0x96] sm:$0xff]
  %v129 = vld [vmem:[%s0 + $0x9e] sm:$0xff]
  %v130 = vld [vmem:[%s0 + $0xa6] sm:$0xff]
  %v131 = vld [vmem:[%s0 + $0xae] sm:$0xff]
  %v132 = vld [vmem:[%s0 + $0xb6] sm:$0xff]
  %v133 = vld [vmem:[%s0 + $0xbe] sm:$0xff]
  %v134 = vld [vmem:[%s0 + $0xc6] sm:$0xff]
  %v135 = vpack.c.bf16 %v111, %v110
  %v136 = vpack.c.bf16 %v113, %v112
  %v137 = vpack.c.bf16 %v115, %v114
  %v138 = vpack.c.bf16 %v117, %v116
  %v139 = vpack.c.bf16 %v119, %v118
  %v140 = vpack.c.bf16 %v121, %v120
  %v141 = vpack.c.bf16 %v123, %v122
  %v142 = vpack.c.bf16 %v125, %v124
  %v143 = vpack.c.bf16 %v127, %v126
  %v144 = vpack.c.bf16 %v129, %v128
  %v145 = vpack.c.bf16 %v131, %v130
  %v146 = vpack.c.bf16 %v133, %v132
  %v147 = vpack.c.bf16 %v134, %v134
  %v148 = vld [vmem:[%s1 + $0x20] sm:$0xf]
  %v149 = vld [vmem:[%s1 + $0x24] sm:$0xf]
  %v150 = vld [vmem:[%s1 + $0x28] sm:$0xf]
  %v151 = vld [vmem:[%s1 + $0x2c] sm:$0xf]
  %v152 = vld [vmem:[%s1 + $0x30] sm:$0xf]
  %v153 = vld [vmem:[%s1 + $0x34] sm:$0xf]
  %v154 = vld [vmem:[%s1 + $0x38] sm:$0xf]
  %v155 = vld [vmem:[%s1 + $0x3c] sm:$0xf]
  %v164 = vunpack.c.l.b16 %v148
  %v165 = vunpack.c.l.b16 %v149
  %v166 = vunpack.c.l.b16 %v150
  %v167 = vunpack.c.l.b16 %v151
  %v168 = vunpack.c.l.b16 %v152
  %v169 = vunpack.c.l.b16 %v153
  %v170 = vunpack.c.l.b16 %v154
  %v171 = vunpack.c.l.b16 %v155
  %v172 = vpack.c.b16 %v165, %v164
  %v173 = vpack.c.b16 %v167, %v166
  %v174 = vpack.c.b16 %v169, %v168
  %v175 = vpack.c.b16 %v171, %v170
  %vm180 = vcmask 523264
  %v182 = vsel %vm180, %v135, 0
  %v185 = vsel %vm180, %v136, 0
  %v188 = vsel %vm180, %v137, 0
  %v191 = vsel %vm180, %v138, 0
  %v194 = vsel %vm180, %v139, 0
  %v197 = vsel %vm180, %v140, 0
  %v200 = vsel %vm180, %v141, 0
  %v203 = vsel %vm180, %v142, 0
  %v206 = vsel %vm180, %v143, 0
  %v209 = vsel %vm180, %v144, 0
  %v212 = vsel %vm180, %v145, 0
  %v215 = vsel %vm180, %v146, 0
  %v218 = vsel %vm180, %v147, 0
  %220 = vmatprep.subr.bf16.mxu0 0
  %221 = vmatpush1.bf16.msra.mxu0 %v172
  %222 = vmatprep.subr.bf16.mxu0 0
  %223 = vmatpush1.bf16.msra.mxu0 %v173
  %224 = vmatprep.subr.bf16.mxu0 0
  %225 = vmatpush1.bf16.msra.mxu0 %v174
  %226 = vmatprep.subr.bf16.mxu0 0
  %227 = vmatpush1.bf16.msra.mxu0 %v175
  %228 = vmatprep.subr.bf16.mxu0 0
  %229 = vmatpush1.bf16.msra.mxu0 0
  %230 = vmatprep.subr.bf16.mxu0 0
  %231 = vmatpush1.bf16.msra.mxu0 0
  %232 = vmatprep.subr.bf16.mxu0 0
  %233 = vmatpush1.bf16.msra.mxu0 0
  %234 = vmatprep.subr.bf16.mxu0 0
  %235 = vmatpush1.bf16.msra.mxu0 0
  %236 = vmatprep.subr.bf16.mxu0 0
  %237 = vmatpush1.bf16.msra.mxu0 0
  %238 = vmatprep.subr.bf16.mxu0 0
  %239 = vmatpush1.bf16.msra.mxu0 0
  %240 = vmatprep.subr.bf16.mxu0 0
  %241 = vmatpush1.bf16.msra.mxu0 0
  %242 = vmatprep.subr.bf16.mxu0 0
  %243 = vmatpush1.bf16.msra.mxu0 0
  %244 = vmatprep.subr.bf16.mxu0 0
  %245 = vmatpush1.bf16.msra.mxu0 0
  %246 = vmatprep.subr.bf16.mxu0 0
  %247 = vmatpush1.bf16.msra.mxu0 0
  %248 = vmatprep.subr.bf16.mxu0 0
  %249 = vmatpush1.bf16.msra.mxu0 0
  %250 = vmatprep.subr.bf16.mxu0 0
  %251 = vmatpush1.bf16.msra.mxu0 0
  %252 = vmatprep.mubr.bf16.mxu0 0
  %253 = vmatmul.mubr.bf16.gmra.mrb[0].mxu0 %v182
  %v254 = vpop.f32.mrb[0].mxu0
  %v255 = vadd.f32 0.0, %v254
  %v256 = vpop.f32.mrb[0].mxu0
  %v257 = vpop.f32.mrb[0].mxu0
  %v258 = vadd.f32 0.0, %v257
  %v259 = vpop.f32.mrb[0].mxu0
  %260 = vmatprep.mubr.bf16.mxu0 0
  %261 = vmatmul.mubr.bf16.gmra.mrb[0].mxu0 %v185
  %v262 = vpop.f32.mrb[0].mxu0
  %v263 = vadd.f32 0.0, %v262
  %v264 = vpop.f32.mrb[0].mxu0
  %v265 = vpop.f32.mrb[0].mxu0
  %v266 = vadd.f32 0.0, %v265
  %v267 = vpop.f32.mrb[0].mxu0
  %268 = vmatprep.mubr.bf16.mxu0 0
  %269 = vmatmul.mubr.bf16.gmra.mrb[0].mxu0 %v188
  %v270 = vpop.f32.mrb[0].mxu0
  %v271 = vadd.f32 0.0, %v270
  %v272 = vpop.f32.mrb[0].mxu0
  %v273 = vpop.f32.mrb[0].mxu0
  %v274 = vadd.f32 0.0, %v273
  %v275 = vpop.f32.mrb[0].mxu0
  %276 = vmatprep.mubr.bf16.mxu0 0
  %277 = vmatmul.mubr.bf16.gmra.mrb[0].mxu0 %v191
  %v278 = vpop.f32.mrb[0].mxu0
  %v279 = vadd.f32 0.0, %v278
  %v280 = vpop.f32.mrb[0].mxu0
  %v281 = vpop.f32.mrb[0].mxu0
  %v282 = vadd.f32 0.0, %v281
  %v283 = vpop.f32.mrb[0].mxu0
  %284 = vmatprep.mubr.bf16.mxu0 0
  %285 = vmatmul.mubr.bf16.gmra.mrb[0].mxu0 %v194
  %v286 = vpop.f32.mrb[0].mxu0
  %v287 = vadd.f32 0.0, %v286
  %v288 = vpop.f32.mrb[0].mxu0
  %v289 = vpop.f32.mrb[0].mxu0
  %v290 = vadd.f32 0.0, %v289
  %v291 = vpop.f32.mrb[0].mxu0
  %292 = vmatprep.mubr.bf16.mxu0 0
  %293 = vmatmul.mubr.bf16.gmra.mrb[0].mxu0 %v197
  %v294 = vpop.f32.mrb[0].mxu0
  %v295 = vadd.f32 0.0, %v294
  %v296 = vpop.f32.mrb[0].mxu0
  %v297 = vpop.f32.mrb[0].mxu0
  %v298 = vadd.f32 0.0, %v297
  %v299 = vpop.f32.mrb[0].mxu0
  %300 = vmatprep.mubr.bf16.mxu0 0
  %301 = vmatmul.mubr.bf16.gmra.mrb[0].mxu0 %v200
  %v302 = vpop.f32.mrb[0].mxu0
  %v303 = vadd.f32 0.0, %v302
  %v304 = vpop.f32.mrb[0].mxu0
  %v305 = vpop.f32.mrb[0].mxu0
  %v306 = vadd.f32 0.0, %v305
  %v307 = vpop.f32.mrb[0].mxu0
  %308 = vmatprep.mubr.bf16.mxu0 0
  %309 = vmatmul.mubr.bf16.gmra.mrb[0].mxu0 %v203
  %v310 = vpop.f32.mrb[0].mxu0
  %v311 = vadd.f32 0.0, %v310
  %v312 = vpop.f32.mrb[0].mxu0
  %v313 = vpop.f32.mrb[0].mxu0
  %v314 = vadd.f32 0.0, %v313
  %v315 = vpop.f32.mrb[0].mxu0
  %316 = vmatprep.mubr.bf16.mxu0 0
  %317 = vmatmul.mubr.bf16.gmra.mrb[0].mxu0 %v206
  %v318 = vpop.f32.mrb[0].mxu0
  %v319 = vadd.f32 0.0, %v318
  %v320 = vpop.f32.mrb[0].mxu0
  %v321 = vpop.f32.mrb[0].mxu0
  %v322 = vadd.f32 0.0, %v321
  %v323 = vpop.f32.mrb[0].mxu0
  %324 = vmatprep.mubr.bf16.mxu0 0
  %325 = vmatmul.mubr.bf16.gmra.mrb[0].mxu0 %v209
  %v326 = vpop.f32.mrb[0].mxu0
  %v327 = vadd.f32 0.0, %v326
  %v328 = vpop.f32.mrb[0].mxu0
  %v329 = vpop.f32.mrb[0].mxu0
  %v330 = vadd.f32 0.0, %v329
  %v331 = vpop.f32.mrb[0].mxu0
  %332 = vmatprep.mubr.bf16.mxu0 0
  %333 = vmatmul.mubr.bf16.gmra.mrb[0].mxu0 %v212
  %v334 = vpop.f32.mrb[0].mxu0
  %v335 = vadd.f32 0.0, %v334
  %v336 = vpop.f32.mrb[0].mxu0
  %v337 = vpop.f32.mrb[0].mxu0
  %v338 = vadd.f32 0.0, %v337
  %v339 = vpop.f32.mrb[0].mxu0
  %340 = vmatprep.mubr.bf16.mxu0 0
  %341 = vmatmul.mubr.bf16.gmra.mrb[0].mxu0 %v215
  %v342 = vpop.f32.mrb[0].mxu0
  %v343 = vadd.f32 0.0, %v342
  %v344 = vpop.f32.mrb[0].mxu0
  %v345 = vpop.f32.mrb[0].mxu0
  %v346 = vadd.f32 0.0, %v345
  %v347 = vpop.f32.mrb[0].mxu0
  %348 = vmatprep.mubr.bf16.mxu0 0
  %349 = vmatmul.mubr.bf16.gmra.mrb[0].mxu0 %v218
  %v350 = vpop.f32.mrb[0].mxu0
  %v351 = vadd.f32 0.0, %v350
  %v352 = vpop.f32.mrb[0].mxu0
  %v353 = vpop.f32.mrb[0].mxu0
  %v354 = vpop.f32.mrb[0].mxu0
  %355 = vdwg.mxu0
  %v364 = vunpack.c.l.b16 %v102
  %v365 = vunpack.c.l.b16 %v103
  %v366 = vunpack.c.l.b16 %v104
  %v367 = vunpack.c.l.b16 %v105
  %v368 = vunpack.c.l.b16 %v106
  %v369 = vunpack.c.l.b16 %v107
  %v370 = vunpack.c.l.b16 %v108
  %v371 = vunpack.c.l.b16 %v109
  %v372 = vpack.c.b16 %v365, %v364
  %v373 = vpack.c.b16 %v367, %v366
  %v374 = vpack.c.b16 %v369, %v368
  %v375 = vpack.c.b16 %v371, %v370
  %v381 = vsel %vm180, %v89, 0
  %v384 = vsel %vm180, %v90, 0
  %v387 = vsel %vm180, %v91, 0
  %v390 = vsel %vm180, %v92, 0
  %v393 = vsel %vm180, %v93, 0
  %v396 = vsel %vm180, %v94, 0
  %v399 = vsel %vm180, %v95, 0
  %v402 = vsel %vm180, %v96, 0
  %v405 = vsel %vm180, %v97, 0
  %v408 = vsel %vm180, %v98, 0
  %v411 = vsel %vm180, %v99, 0
  %v414 = vsel %vm180, %v100, 0
  %v417 = vsel %vm180, %v101, 0
  %419 = vmatprep.subr.bf16.mxu0 0
  %420 = vmatpush1.bf16.msra.mxu0 %v372
  %421 = vmatprep.subr.bf16.mxu0 0
  %422 = vmatpush1.bf16.msra.mxu0 %v373
  %423 = vmatprep.subr.bf16.mxu0 0
  %424 = vmatpush1.bf16.msra.mxu0 %v374
  %425 = vmatprep.subr.bf16.mxu0 0
  %426 = vmatpush1.bf16.msra.mxu0 %v375
  %427 = vmatprep.subr.bf16.mxu0 0
  %428 = vmatpush1.bf16.msra.mxu0 0
  %429 = vmatprep.subr.bf16.mxu0 0
  %430 = vmatpush1.bf16.msra.mxu0 0
  %431 = vmatprep.subr.bf16.mxu0 0
  %432 = vmatpush1.bf16.msra.mxu0 0
  %433 = vmatprep.subr.bf16.mxu0 0
  %434 = vmatpush1.bf16.msra.mxu0 0
  %435 = vmatprep.subr.bf16.mxu0 0
  %436 = vmatpush1.bf16.msra.mxu0 0
  %437 = vmatprep.subr.bf16.mxu0 0
  %438 = vmatpush1.bf16.msra.mxu0 0
  %439 = vmatprep.subr.bf16.mxu0 0
  %440 = vmatpush1.bf16.msra.mxu0 0
  %441 = vmatprep.subr.bf16.mxu0 0
  %442 = vmatpush1.bf16.msra.mxu0 0
  %443 = vmatprep.subr.bf16.mxu0 0
  %444 = vmatpush1.bf16.msra.mxu0 0
  %445 = vmatprep.subr.bf16.mxu0 0
  %446 = vmatpush1.bf16.msra.mxu0 0
  %447 = vmatprep.subr.bf16.mxu0 0
  %448 = vmatpush1.bf16.msra.mxu0 0
  %449 = vmatprep.subr.bf16.mxu0 0
  %450 = vmatpush1.bf16.msra.mxu0 0
  %451 = vmatprep.mubr.bf16.mxu0 0
  %452 = vmatmul.mubr.bf16.gmra.mrb[0].mxu0 %v381
  %v453 = vpop.f32.mrb[0].mxu0
  %v454 = vadd.f32 %v255, %v453
  %v455 = vpop.f32.mrb[0].mxu0
  %v456 = vpop.f32.mrb[0].mxu0
  %v457 = vadd.f32 %v258, %v456
  %v458 = vpop.f32.mrb[0].mxu0
  %459 = vmatprep.mubr.bf16.mxu0 0
  %460 = vmatmul.mubr.bf16.gmra.mrb[0].mxu0 %v384
  %v461 = vpop.f32.mrb[0].mxu0
  %v462 = vadd.f32 %v263, %v461
  %v463 = vpop.f32.mrb[0].mxu0
  %v464 = vpop.f32.mrb[0].mxu0
  %v465 = vadd.f32 %v266, %v464
  %v466 = vpop.f32.mrb[0].mxu0
  %467 = vmatprep.mubr.bf16.mxu0 0
  %468 = vmatmul.mubr.bf16.gmra.mrb[0].mxu0 %v387
  %v469 = vpop.f32.mrb[0].mxu0
  %v470 = vadd.f32 %v271, %v469
  %v471 = vpop.f32.mrb[0].mxu0
  %v472 = vpop.f32.mrb[0].mxu0
  %v473 = vadd.f32 %v274, %v472
  %v474 = vpop.f32.mrb[0].mxu0
  %475 = vmatprep.mubr.bf16.mxu0 0
  %476 = vmatmul.mubr.bf16.gmra.mrb[0].mxu0 %v390
  %v477 = vpop.f32.mrb[0].mxu0
  %v478 = vadd.f32 %v279, %v477
  %v479 = vpop.f32.mrb[0].mxu0
  %v480 = vpop.f32.mrb[0].mxu0
  %v481 = vadd.f32 %v282, %v480
  %v482 = vpop.f32.mrb[0].mxu0
  %483 = vmatprep.mubr.bf16.mxu0 0
  %484 = vmatmul.mubr.bf16.gmra.mrb[0].mxu0 %v393
  %v485 = vpop.f32.mrb[0].mxu0
  %v486 = vadd.f32 %v287, %v485
  %v487 = vpop.f32.mrb[0].mxu0
  %v488 = vpop.f32.mrb[0].mxu0
  %v489 = vadd.f32 %v290, %v488
  %v490 = vpop.f32.mrb[0].mxu0
  %491 = vmatprep.mubr.bf16.mxu0 0
  %492 = vmatmul.mubr.bf16.gmra.mrb[0].mxu0 %v396
  %v493 = vpop.f32.mrb[0].mxu0
  %v494 = vadd.f32 %v295, %v493
  %v495 = vpop.f32.mrb[0].mxu0
  %v496 = vpop.f32.mrb[0].mxu0
  %v497 = vadd.f32 %v298, %v496
  %v498 = vpop.f32.mrb[0].mxu0
  %499 = vmatprep.mubr.bf16.mxu0 0
  %500 = vmatmul.mubr.bf16.gmra.mrb[0].mxu0 %v399
  %v501 = vpop.f32.mrb[0].mxu0
  %v502 = vadd.f32 %v303, %v501
  %v503 = vpop.f32.mrb[0].mxu0
  %v504 = vpop.f32.mrb[0].mxu0
  %v505 = vadd.f32 %v306, %v504
  %v506 = vpop.f32.mrb[0].mxu0
  %507 = vmatprep.mubr.bf16.mxu0 0
  %508 = vmatmul.mubr.bf16.gmra.mrb[0].mxu0 %v402
  %v509 = vpop.f32.mrb[0].mxu0
  %v510 = vadd.f32 %v311, %v509
  %v511 = vpop.f32.mrb[0].mxu0
  %v512 = vpop.f32.mrb[0].mxu0
  %v513 = vadd.f32 %v314, %v512
  %v514 = vpop.f32.mrb[0].mxu0
  %515 = vmatprep.mubr.bf16.mxu0 0
  %516 = vmatmul.mubr.bf16.gmra.mrb[0].mxu0 %v405
  %v517 = vpop.f32.mrb[0].mxu0
  %v518 = vadd.f32 %v319, %v517
  %v519 = vpop.f32.mrb[0].mxu0
  %v520 = vpop.f32.mrb[0].mxu0
  %v521 = vadd.f32 %v322, %v520
  %v522 = vpop.f32.mrb[0].mxu0
  %523 = vmatprep.mubr.bf16.mxu0 0
  %524 = vmatmul.mubr.bf16.gmra.mrb[0].mxu0 %v408
  %v525 = vpop.f32.mrb[0].mxu0
  %v526 = vadd.f32 %v327, %v525
  %v527 = vpop.f32.mrb[0].mxu0
  %v528 = vpop.f32.mrb[0].mxu0
  %v529 = vadd.f32 %v330, %v528
  %v530 = vpop.f32.mrb[0].mxu0
  %531 = vmatprep.mubr.bf16.mxu0 0
  %532 = vmatmul.mubr.bf16.gmra.mrb[0].mxu0 %v411
  %v533 = vpop.f32.mrb[0].mxu0
  %v534 = vadd.f32 %v335, %v533
  %v535 = vpop.f32.mrb[0].mxu0
  %v536 = vpop.f32.mrb[0].mxu0
  %v537 = vadd.f32 %v338, %v536
  %v538 = vpop.f32.mrb[0].mxu0
  %539 = vmatprep.mubr.bf16.mxu0 0
  %540 = vmatmul.mubr.bf16.gmra.mrb[0].mxu0 %v414
  %v541 = vpop.f32.mrb[0].mxu0
  %v542 = vadd.f32 %v343, %v541
  %v543 = vpop.f32.mrb[0].mxu0
  %v544 = vpop.f32.mrb[0].mxu0
  %v545 = vadd.f32 %v346, %v544
  %v546 = vpop.f32.mrb[0].mxu0
  %547 = vmatprep.mubr.bf16.mxu0 0
  %548 = vmatmul.mubr.bf16.gmra.mrb[0].mxu0 %v417
  %v549 = vpop.f32.mrb[0].mxu0
  %v550 = vadd.f32 %v351, %v549
  %v551 = vpop.f32.mrb[0].mxu0
  %v552 = vpop.f32.mrb[0].mxu0
  %v553 = vpop.f32.mrb[0].mxu0
  %554 = vdwg.mxu0
  %v555 = vld [vmem:[%s0 + $0x7] sm:$0xff]
  %v556 = vld [vmem:[%s0 + $0xf] sm:$0xff]
  %v557 = vld [vmem:[%s0 + $0x17] sm:$0xff]
  %v558 = vld [vmem:[%s0 + $0x1f] sm:$0xff]
  %v559 = vld [vmem:[%s0 + $0x27] sm:$0xff]
  %v560 = vld [vmem:[%s0 + $0x2f] sm:$0xff]
  %v561 = vld [vmem:[%s0 + $0x37] sm:$0xff]
  %v562 = vld [vmem:[%s0 + $0x3f] sm:$0xff]
  %v563 = vld [vmem:[%s0 + $0x47] sm:$0xff]
  %v564 = vld [vmem:[%s0 + $0x4f] sm:$0xff]
  %v565 = vld [vmem:[%s0 + $0x57] sm:$0xff]
  %v566 = vld [vmem:[%s0 + $0x5f] sm:$0xff]
  %v567 = vld [vmem:[%s0 + $0x67] sm:$0xff]
  %v568 = vld [vmem:[%s0 + $0x6f] sm:$0xff]
  %v569 = vld [vmem:[%s0 + $0x77] sm:$0xff]
  %v570 = vld [vmem:[%s0 + $0x7f] sm:$0xff]
  %v571 = vld [vmem:[%s0 + $0x87] sm:$0xff]
  %v572 = vld [vmem:[%s0 + $0x8f] sm:$0xff]
  %v573 = vld [vmem:[%s0 + $0x97] sm:$0xff]
  %v574 = vld [vmem:[%s0 + $0x9f] sm:$0xff]
  %v575 = vld [vmem:[%s0 + $0xa7] sm:$0xff]
  %v576 = vld [vmem:[%s0 + $0xaf] sm:$0xff]
  %v577 = vld [vmem:[%s0 + $0xb7] sm:$0xff]
  %v578 = vld [vmem:[%s0 + $0xbf] sm:$0xff]
  %v579 = vld [vmem:[%s0 + $0xc7] sm:$0xff]
  %v580 = vpack.c.bf16 %v556, %v555
  %v581 = vpack.c.bf16 %v558, %v557
  %v582 = vpack.c.bf16 %v560, %v559
  %v583 = vpack.c.bf16 %v562, %v561
  %v584 = vpack.c.bf16 %v564, %v563
  %v585 = vpack.c.bf16 %v566, %v565
  %v586 = vpack.c.bf16 %v568, %v567
  %v587 = vpack.c.bf16 %v570, %v569
  %v588 = vpack.c.bf16 %v572, %v571
  %v589 = vpack.c.bf16 %v574, %v573
  %v590 = vpack.c.bf16 %v576, %v575
  %v591 = vpack.c.bf16 %v578, %v577
  %v592 = vpack.c.bf16 %v579, %v579
  %v593 = vld [vmem:[%s1 + $0x40] sm:$0xf]
  %v594 = vld [vmem:[%s1 + $0x44] sm:$0xf]
  %v595 = vld [vmem:[%s1 + $0x48] sm:$0xf]
  %v596 = vld [vmem:[%s1 + $0x4c] sm:$0xf]
  %v597 = vld [vmem:[%s1 + $0x50] sm:$0xf]
  %v598 = vld [vmem:[%s1 + $0x54] sm:$0xf]
  %v599 = vld [vmem:[%s1 + $0x58] sm:$0xf]
  %v600 = vld [vmem:[%s1 + $0x5c] sm:$0xf]
  %v609 = vunpack.c.l.b16 %v593
  %v610 = vunpack.c.l.b16 %v594
  %v611 = vunpack.c.l.b16 %v595
  %v612 = vunpack.c.l.b16 %v596
  %v613 = vunpack.c.l.b16 %v597
  %v614 = vunpack.c.l.b16 %v598
  %v615 = vunpack.c.l.b16 %v599
  %v616 = vunpack.c.l.b16 %v600
  %v617 = vpack.c.b16 %v610, %v609
  %v618 = vpack.c.b16 %v612, %v611
  %v619 = vpack.c.b16 %v614, %v613
  %v620 = vpack.c.b16 %v616, %v615
  %v626 = vsel %vm180, %v580, 0
  %v629 = vsel %vm180, %v581, 0
  %v632 = vsel %vm180, %v582, 0
  %v635 = vsel %vm180, %v583, 0
  %v638 = vsel %vm180, %v584, 0
  %v641 = vsel %vm180, %v585, 0
  %v644 = vsel %vm180, %v586, 0
  %v647 = vsel %vm180, %v587, 0
  %v650 = vsel %vm180, %v588, 0
  %v653 = vsel %vm180, %v589, 0
  %v656 = vsel %vm180, %v590, 0
  %v659 = vsel %vm180, %v591, 0
  %v662 = vsel %vm180, %v592, 0
  %664 = vmatprep.subr.bf16.mxu0 0
  %665 = vmatpush1.bf16.msra.mxu0 %v617
  %666 = vmatprep.subr.bf16.mxu0 0
  %667 = vmatpush1.bf16.msra.mxu0 %v618
  %668 = vmatprep.subr.bf16.mxu0 0
  %669 = vmatpush1.bf16.msra.mxu0 %v619
  %670 = vmatprep.subr.bf16.mxu0 0
  %671 = vmatpush1.bf16.msra.mxu0 %v620
  %672 = vmatprep.subr.bf16.mxu0 0
  %673 = vmatpush1.bf16.msra.mxu0 0
  %674 = vmatprep.subr.bf16.mxu0 0
  %675 = vmatpush1.bf16.msra.mxu0 0
  %676 = vmatprep.subr.bf16.mxu0 0
  %677 = vmatpush1.bf16.msra.mxu0 0
  %678 = vmatprep.subr.bf16.mxu0 0
  %679 = vmatpush1.bf16.msra.mxu0 0
  %680 = vmatprep.subr.bf16.mxu0 0
  %681 = vmatpush1.bf16.msra.mxu0 0
  %682 = vmatprep.subr.bf16.mxu0 0
  %683 = vmatpush1.bf16.msra.mxu0 0
  %684 = vmatprep.subr.bf16.mxu0 0
  %685 = vmatpush1.bf16.msra.mxu0 0
  %686 = vmatprep.subr.bf16.mxu0 0
  %687 = vmatpush1.bf16.msra.mxu0 0
  %688 = vmatprep.subr.bf16.mxu0 0
  %689 = vmatpush1.bf16.msra.mxu0 0
  %690 = vmatprep.subr.bf16.mxu0 0
  %691 = vmatpush1.bf16.msra.mxu0 0
  %692 = vmatprep.subr.bf16.mxu0 0
  %693 = vmatpush1.bf16.msra.mxu0 0
  %694 = vmatprep.subr.bf16.mxu0 0
  %695 = vmatpush1.bf16.msra.mxu0 0
  %696 = vmatprep.mubr.bf16.mxu0 0
  %697 = vmatmul.mubr.bf16.gmra.mrb[0].mxu0 %v626
  %v698 = vpop.f32.mrb[0].mxu0
  %v699 = vadd.f32 0.0, %v698
  %v700 = vpop.f32.mrb[0].mxu0
  %v701 = vpop.f32.mrb[0].mxu0
  %v702 = vadd.f32 0.0, %v701
  %v703 = vpop.f32.mrb[0].mxu0
  %704 = vmatprep.mubr.bf16.mxu0 0
  %705 = vmatmul.mubr.bf16.gmra.mrb[0].mxu0 %v629
  %v706 = vpop.f32.mrb[0].mxu0
  %v707 = vadd.f32 0.0, %v706
  %v708 = vpop.f32.mrb[0].mxu0
  %v709 = vpop.f32.mrb[0].mxu0
  %v710 = vadd.f32 0.0, %v709
  %v711 = vpop.f32.mrb[0].mxu0
  %712 = vmatprep.mubr.bf16.mxu0 0
  %713 = vmatmul.mubr.bf16.gmra.mrb[0].mxu0 %v632
  %v714 = vpop.f32.mrb[0].mxu0
  %v715 = vadd.f32 0.0, %v714
  %v716 = vpop.f32.mrb[0].mxu0
  %v717 = vpop.f32.mrb[0].mxu0
  %v718 = vadd.f32 0.0, %v717
  %v719 = vpop.f32.mrb[0].mxu0
  %720 = vmatprep.mubr.bf16.mxu0 0
  %721 = vmatmul.mubr.bf16.gmra.mrb[0].mxu0 %v635
  %v722 = vpop.f32.mrb[0].mxu0
  %v723 = vadd.f32 0.0, %v722
  %v724 = vpop.f32.mrb[0].mxu0
  %v725 = vpop.f32.mrb[0].mxu0
  %v726 = vadd.f32 0.0, %v725
  %v727 = vpop.f32.mrb[0].mxu0
  %728 = vmatprep.mubr.bf16.mxu0 0
  %729 = vmatmul.mubr.bf16.gmra.mrb[0].mxu0 %v638
  %v730 = vpop.f32.mrb[0].mxu0
  %v731 = vadd.f32 0.0, %v730
  %v732 = vpop.f32.mrb[0].mxu0
  %v733 = vpop.f32.mrb[0].mxu0
  %v734 = vadd.f32 0.0, %v733
  %v735 = vpop.f32.mrb[0].mxu0
  %736 = vmatprep.mubr.bf16.mxu0 0
  %737 = vmatmul.mubr.bf16.gmra.mrb[0].mxu0 %v641
  %v738 = vpop.f32.mrb[0].mxu0
  %v739 = vadd.f32 0.0, %v738
  %v740 = vpop.f32.mrb[0].mxu0
  %v741 = vpop.f32.mrb[0].mxu0
  %v742 = vadd.f32 0.0, %v741
  %v743 = vpop.f32.mrb[0].mxu0
  %744 = vmatprep.mubr.bf16.mxu0 0
  %745 = vmatmul.mubr.bf16.gmra.mrb[0].mxu0 %v644
  %v746 = vpop.f32.mrb[0].mxu0
  %v747 = vadd.f32 0.0, %v746
  %v748 = vpop.f32.mrb[0].mxu0
  %v749 = vpop.f32.mrb[0].mxu0
  %v750 = vadd.f32 0.0, %v749
  %v751 = vpop.f32.mrb[0].mxu0
  %752 = vmatprep.mubr.bf16.mxu0 0
  %753 = vmatmul.mubr.bf16.gmra.mrb[0].mxu0 %v647
  %v754 = vpop.f32.mrb[0].mxu0
  %v755 = vadd.f32 0.0, %v754
  %v756 = vpop.f32.mrb[0].mxu0
  %v757 = vpop.f32.mrb[0].mxu0
  %v758 = vadd.f32 0.0, %v757
  %v759 = vpop.f32.mrb[0].mxu0
  %760 = vmatprep.mubr.bf16.mxu0 0
  %761 = vmatmul.mubr.bf16.gmra.mrb[0].mxu0 %v650
  %v762 = vpop.f32.mrb[0].mxu0
  %v763 = vadd.f32 0.0, %v762
  %v764 = vpop.f32.mrb[0].mxu0
  %v765 = vpop.f32.mrb[0].mxu0
  %v766 = vadd.f32 0.0, %v765
  %v767 = vpop.f32.mrb[0].mxu0
  %768 = vmatprep.mubr.bf16.mxu0 0
  %769 = vmatmul.mubr.bf16.gmra.mrb[0].mxu0 %v653
  %v770 = vpop.f32.mrb[0].mxu0
  %v771 = vadd.f32 0.0, %v770
  %v772 = vpop.f32.mrb[0].mxu0
  %v773 = vpop.f32.mrb[0].mxu0
  %v774 = vadd.f32 0.0, %v773
  %v775 = vpop.f32.mrb[0].mxu0
  %776 = vmatprep.mubr.bf16.mxu0 0
  %777 = vmatmul.mubr.bf16.gmra.mrb[0].mxu0 %v656
  %v778 = vpop.f32.mrb[0].mxu0
  %v779 = vadd.f32 0.0, %v778
  %v780 = vpop.f32.mrb[0].mxu0
  %v781 = vpop.f32.mrb[0].mxu0
  %v782 = vadd.f32 0.0, %v781
  %v783 = vpop.f32.mrb[0].mxu0
  %784 = vmatprep.mubr.bf16.mxu0 0
  %785 = vmatmul.mubr.bf16.gmra.mrb[0].mxu0 %v659
  %v786 = vpop.f32.mrb[0].mxu0
  %v787 = vadd.f32 0.0, %v786
  %v788 = vpop.f32.mrb[0].mxu0
  %v789 = vpop.f32.mrb[0].mxu0
  %v790 = vadd.f32 0.0, %v789
  %v791 = vpop.f32.mrb[0].mxu0
  %792 = vmatprep.mubr.bf16.mxu0 0
  %793 = vmatmul.mubr.bf16.gmra.mrb[0].mxu0 %v662
  %v794 = vpop.f32.mrb[0].mxu0
  %v795 = vadd.f32 0.0, %v794
  %v796 = vpop.f32.mrb[0].mxu0
  %v797 = vpop.f32.mrb[0].mxu0
  %v798 = vpop.f32.mrb[0].mxu0
  %799 = vdwg.mxu0
  %v800 = vadd.f32 %v454, %v699
  %v801 = vadd.f32 %v457, %v702
  %v802 = vadd.f32 %v462, %v707
  %v803 = vadd.f32 %v465, %v710
  %v804 = vadd.f32 %v470, %v715
  %v805 = vadd.f32 %v473, %v718
  %v806 = vadd.f32 %v478, %v723
  %v807 = vadd.f32 %v481, %v726
  %v808 = vadd.f32 %v486, %v731
  %v809 = vadd.f32 %v489, %v734
  %v810 = vadd.f32 %v494, %v739
  %v811 = vadd.f32 %v497, %v742
  %v812 = vadd.f32 %v502, %v747
  %v813 = vadd.f32 %v505, %v750
  %v814 = vadd.f32 %v510, %v755
  %v815 = vadd.f32 %v513, %v758
  %v816 = vadd.f32 %v518, %v763
  %v817 = vadd.f32 %v521, %v766
  %v818 = vadd.f32 %v526, %v771
  %v819 = vadd.f32 %v529, %v774
  %v820 = vadd.f32 %v534, %v779
  %v821 = vadd.f32 %v537, %v782
  %v822 = vadd.f32 %v542, %v787
  %v823 = vadd.f32 %v545, %v790
  %v824 = vadd.f32 %v550, %v795
  %v825 = vld [vmem:[%s0 + $0xf] sm:$0xff]
  %v826 = vld [vmem:[%s0 + $0x17] sm:$0xff]
  %v827 = vld [vmem:[%s0 + $0x1f] sm:$0xff]
  %v828 = vld [vmem:[%s0 + $0x27] sm:$0xff]
  %v829 = vld [vmem:[%s0 + $0x2f] sm:$0xff]
  %v830 = vld [vmem:[%s0 + $0x37] sm:$0xff]
  %v831 = vld [vmem:[%s0 + $0x3f] sm:$0xff]
  %v832 = vld [vmem:[%s0 + $0x47] sm:$0xff]
  %v833 = vld [vmem:[%s0 + $0x4f] sm:$0xff]
  %v834 = vld [vmem:[%s0 + $0x57] sm:$0xff]
  %v835 = vld [vmem:[%s0 + $0x5f] sm:$0xff]
  %v836 = vld [vmem:[%s0 + $0x67] sm:$0xff]
  %v837 = vld [vmem:[%s0 + $0x6f] sm:$0xff]
  %v838 = vld [vmem:[%s0 + $0x77] sm:$0xff]
  %v839 = vld [vmem:[%s0 + $0x7f] sm:$0xff]
  %v840 = vld [vmem:[%s0 + $0x87] sm:$0xff]
  %v841 = vld [vmem:[%s0 + $0x8f] sm:$0xff]
  %v842 = vld [vmem:[%s0 + $0x97] sm:$0xff]
  %v843 = vld [vmem:[%s0 + $0x9f] sm:$0xff]
  %v844 = vld [vmem:[%s0 + $0xa7] sm:$0xff]
  %v845 = vld [vmem:[%s0 + $0xaf] sm:$0xff]
  %v846 = vld [vmem:[%s0 + $0xb7] sm:$0xff]
  %v847 = vld [vmem:[%s0 + $0xbf] sm:$0xff]
  %v848 = vld [vmem:[%s0 + $0xc7] sm:$0xff]
  %v849 = vld [vmem:[%s0 + $0xcf] sm:$0xff]
  %v850 = vpack.c.bf16 %v826, %v825
  %v851 = vpack.c.bf16 %v828, %v827
  %v852 = vpack.c.bf16 %v830, %v829
  %v853 = vpack.c.bf16 %v832, %v831
  %v854 = vpack.c.bf16 %v834, %v833
  %v855 = vpack.c.bf16 %v836, %v835
  %v856 = vpack.c.bf16 %v838, %v837
  %v857 = vpack.c.bf16 %v840, %v839
  %v858 = vpack.c.bf16 %v842, %v841
  %v859 = vpack.c.bf16 %v844, %v843
  %v860 = vpack.c.bf16 %v846, %v845
  %v861 = vpack.c.bf16 %v848, %v847
  %v862 = vpack.c.bf16 %v849, %v849
  %v863 = vld [vmem:[%s1 + $0x60] sm:$0xf]
  %v864 = vld [vmem:[%s1 + $0x64] sm:$0xf]
  %v865 = vld [vmem:[%s1 + $0x68] sm:$0xf]
  %v866 = vld [vmem:[%s1 + $0x6c] sm:$0xf]
  %v867 = vld [vmem:[%s1 + $0x70] sm:$0xf]
  %v868 = vld [vmem:[%s1 + $0x74] sm:$0xf]
  %v869 = vld [vmem:[%s1 + $0x78] sm:$0xf]
  %v870 = vld [vmem:[%s1 + $0x7c] sm:$0xf]
  %v879 = vunpack.c.l.b16 %v863
  %v880 = vunpack.c.l.b16 %v864
  %v881 = vunpack.c.l.b16 %v865
  %v882 = vunpack.c.l.b16 %v866
  %v883 = vunpack.c.l.b16 %v867
  %v884 = vunpack.c.l.b16 %v868
  %v885 = vunpack.c.l.b16 %v869
  %v886 = vunpack.c.l.b16 %v870
  %v887 = vpack.c.b16 %v880, %v879
  %v888 = vpack.c.b16 %v882, %v881
  %v889 = vpack.c.b16 %v884, %v883
  %v890 = vpack.c.b16 %v886, %v885
  %v896 = vsel %vm180, %v850, 0
  %v899 = vsel %vm180, %v851, 0
  %v902 = vsel %vm180, %v852, 0
  %v905 = vsel %vm180, %v853, 0
  %v908 = vsel %vm180, %v854, 0
  %v911 = vsel %vm180, %v855, 0
  %v914 = vsel %vm180, %v856, 0
  %v917 = vsel %vm180, %v857, 0
  %v920 = vsel %vm180, %v858, 0
  %v923 = vsel %vm180, %v859, 0
  %v926 = vsel %vm180, %v860, 0
  %v929 = vsel %vm180, %v861, 0
  %v932 = vsel %vm180, %v862, 0
  %934 = vmatprep.subr.bf16.mxu0 0
  %935 = vmatpush1.bf16.msra.mxu0 %v887
  %936 = vmatprep.subr.bf16.mxu0 0
  %937 = vmatpush1.bf16.msra.mxu0 %v888
  %938 = vmatprep.subr.bf16.mxu0 0
  %939 = vmatpush1.bf16.msra.mxu0 %v889
  %940 = vmatprep.subr.bf16.mxu0 0
  %941 = vmatpush1.bf16.msra.mxu0 %v890
  %942 = vmatprep.subr.bf16.mxu0 0
  %943 = vmatpush1.bf16.msra.mxu0 0
  %944 = vmatprep.subr.bf16.mxu0 0
  %945 = vmatpush1.bf16.msra.mxu0 0
  %946 = vmatprep.subr.bf16.mxu0 0
  %947 = vmatpush1.bf16.msra.mxu0 0
  %948 = vmatprep.subr.bf16.mxu0 0
  %949 = vmatpush1.bf16.msra.mxu0 0
  %950 = vmatprep.subr.bf16.mxu0 0
  %951 = vmatpush1.bf16.msra.mxu0 0
  %952 = vmatprep.subr.bf16.mxu0 0
  %953 = vmatpush1.bf16.msra.mxu0 0
  %954 = vmatprep.subr.bf16.mxu0 0
  %955 = vmatpush1.bf16.msra.mxu0 0
  %956 = vmatprep.subr.bf16.mxu0 0
  %957 = vmatpush1.bf16.msra.mxu0 0
  %958 = vmatprep.subr.bf16.mxu0 0
  %959 = vmatpush1.bf16.msra.mxu0 0
  %960 = vmatprep.subr.bf16.mxu0 0
  %961 = vmatpush1.bf16.msra.mxu0 0
  %962 = vmatprep.subr.bf16.mxu0 0
  %963 = vmatpush1.bf16.msra.mxu0 0
  %964 = vmatprep.subr.bf16.mxu0 0
  %965 = vmatpush1.bf16.msra.mxu0 0
  %966 = vmatprep.mubr.bf16.mxu0 0
  %967 = vmatmul.mubr.bf16.gmra.mrb[0].mxu0 %v896
  %v968 = vpop.f32.mrb[0].mxu0
  %v969 = vadd.f32 0.0, %v968
  %v970 = vpop.f32.mrb[0].mxu0
  %v971 = vpop.f32.mrb[0].mxu0
  %v972 = vadd.f32 0.0, %v971
  %v973 = vpop.f32.mrb[0].mxu0
  %974 = vmatprep.mubr.bf16.mxu0 0
  %975 = vmatmul.mubr.bf16.gmra.mrb[0].mxu0 %v899
  %v976 = vpop.f32.mrb[0].mxu0
  %v977 = vadd.f32 0.0, %v976
  %v978 = vpop.f32.mrb[0].mxu0
  %v979 = vpop.f32.mrb[0].mxu0
  %v980 = vadd.f32 0.0, %v979
  %v981 = vpop.f32.mrb[0].mxu0
  %982 = vmatprep.mubr.bf16.mxu0 0
  %983 = vmatmul.mubr.bf16.gmra.mrb[0].mxu0 %v902
  %v984 = vpop.f32.mrb[0].mxu0
  %v985 = vadd.f32 0.0, %v984
  %v986 = vpop.f32.mrb[0].mxu0
  %v987 = vpop.f32.mrb[0].mxu0
  %v988 = vadd.f32 0.0, %v987
  %v989 = vpop.f32.mrb[0].mxu0
  %990 = vmatprep.mubr.bf16.mxu0 0
  %991 = vmatmul.mubr.bf16.gmra.mrb[0].mxu0 %v905
  %v992 = vpop.f32.mrb[0].mxu0
  %v993 = vadd.f32 0.0, %v992
  %v994 = vpop.f32.mrb[0].mxu0
  %v995 = vpop.f32.mrb[0].mxu0
  %v996 = vadd.f32 0.0, %v995
  %v997 = vpop.f32.mrb[0].mxu0
  %998 = vmatprep.mubr.bf16.mxu0 0
  %999 = vmatmul.mubr.bf16.gmra.mrb[0].mxu0 %v908
  %v1000 = vpop.f32.mrb[0].mxu0
  %v1001 = vadd.f32 0.0, %v1000
  %v1002 = vpop.f32.mrb[0].mxu0
  %v1003 = vpop.f32.mrb[0].mxu0
  %v1004 = vadd.f32 0.0, %v1003
  %v1005 = vpop.f32.mrb[0].mxu0
  %1006 = vmatprep.mubr.bf16.mxu0 0
  %1007 = vmatmul.mubr.bf16.gmra.mrb[0].mxu0 %v911
  %v1008 = vpop.f32.mrb[0].mxu0
  %v1009 = vadd.f32 0.0, %v1008
  %v1010 = vpop.f32.mrb[0].mxu0
  %v1011 = vpop.f32.mrb[0].mxu0
  %v1012 = vadd.f32 0.0, %v1011
  %v1013 = vpop.f32.mrb[0].mxu0
  %1014 = vmatprep.mubr.bf16.mxu0 0
  %1015 = vmatmul.mubr.bf16.gmra.mrb[0].mxu0 %v914
  %v1016 = vpop.f32.mrb[0].mxu0
  %v1017 = vadd.f32 0.0, %v1016
  %v1018 = vpop.f32.mrb[0].mxu0
  %v1019 = vpop.f32.mrb[0].mxu0
  %v1020 = vadd.f32 0.0, %v1019
  %v1021 = vpop.f32.mrb[0].mxu0
  %1022 = vmatprep.mubr.bf16.mxu0 0
  %1023 = vmatmul.mubr.bf16.gmra.mrb[0].mxu0 %v917
  %v1024 = vpop.f32.mrb[0].mxu0
  %v1025 = vadd.f32 0.0, %v1024
  %v1026 = vpop.f32.mrb[0].mxu0
  %v1027 = vpop.f32.mrb[0].mxu0
  %v1028 = vadd.f32 0.0, %v1027
  %v1029 = vpop.f32.mrb[0].mxu0
  %1030 = vmatprep.mubr.bf16.mxu0 0
  %1031 = vmatmul.mubr.bf16.gmra.mrb[0].mxu0 %v920
  %v1032 = vpop.f32.mrb[0].mxu0
  %v1033 = vadd.f32 0.0, %v1032
  %v1034 = vpop.f32.mrb[0].mxu0
  %v1035 = vpop.f32.mrb[0].mxu0
  %v1036 = vadd.f32 0.0, %v1035
  %v1037 = vpop.f32.mrb[0].mxu0
  %1038 = vmatprep.mubr.bf16.mxu0 0
  %1039 = vmatmul.mubr.bf16.gmra.mrb[0].mxu0 %v923
  %v1040 = vpop.f32.mrb[0].mxu0
  %v1041 = vadd.f32 0.0, %v1040
  %v1042 = vpop.f32.mrb[0].mxu0
  %v1043 = vpop.f32.mrb[0].mxu0
  %v1044 = vadd.f32 0.0, %v1043
  %v1045 = vpop.f32.mrb[0].mxu0
  %1046 = vmatprep.mubr.bf16.mxu0 0
  %1047 = vmatmul.mubr.bf16.gmra.mrb[0].mxu0 %v926
  %v1048 = vpop.f32.mrb[0].mxu0
  %v1049 = vadd.f32 0.0, %v1048
  %v1050 = vpop.f32.mrb[0].mxu0
  %v1051 = vpop.f32.mrb[0].mxu0
  %v1052 = vadd.f32 0.0, %v1051
  %v1053 = vpop.f32.mrb[0].mxu0
  %1054 = vmatprep.mubr.bf16.mxu0 0
  %1055 = vmatmul.mubr.bf16.gmra.mrb[0].mxu0 %v929
  %v1056 = vpop.f32.mrb[0].mxu0
  %v1057 = vadd.f32 0.0, %v1056
  %v1058 = vpop.f32.mrb[0].mxu0
  %v1059 = vpop.f32.mrb[0].mxu0
  %v1060 = vadd.f32 0.0, %v1059
  %v1061 = vpop.f32.mrb[0].mxu0
  %1062 = vmatprep.mubr.bf16.mxu0 0
  %1063 = vmatmul.mubr.bf16.gmra.mrb[0].mxu0 %v932
  %v1064 = vpop.f32.mrb[0].mxu0
  %v1065 = vadd.f32 0.0, %v1064
  %v1066 = vpop.f32.mrb[0].mxu0
  %v1067 = vpop.f32.mrb[0].mxu0
  %v1068 = vpop.f32.mrb[0].mxu0
  %1069 = vdwg.mxu0
  %v1070 = vadd.f32 %v800, %v969
  %v1071 = vadd.f32 %v801, %v972
  %v1072 = vadd.f32 %v802, %v977
  %v1073 = vadd.f32 %v803, %v980
  %v1074 = vadd.f32 %v804, %v985
  %v1075 = vadd.f32 %v805, %v988
  %v1076 = vadd.f32 %v806, %v993
  %v1077 = vadd.f32 %v807, %v996
  %v1078 = vadd.f32 %v808, %v1001
  %v1079 = vadd.f32 %v809, %v1004
  %v1080 = vadd.f32 %v810, %v1009
  %v1081 = vadd.f32 %v811, %v1012
  %v1082 = vadd.f32 %v812, %v1017
  %v1083 = vadd.f32 %v813, %v1020
  %v1084 = vadd.f32 %v814, %v1025
  %v1085 = vadd.f32 %v815, %v1028
  %v1086 = vadd.f32 %v816, %v1033
  %v1087 = vadd.f32 %v817, %v1036
  %v1088 = vadd.f32 %v818, %v1041
  %v1089 = vadd.f32 %v819, %v1044
  %v1090 = vadd.f32 %v820, %v1049
  %v1091 = vadd.f32 %v821, %v1052
  %v1092 = vadd.f32 %v822, %v1057
  %v1093 = vadd.f32 %v823, %v1060
  %v1094 = vadd.f32 %v824, %v1065
  %v1095 = vld [vmem:[%s0 + $0x10] sm:$0xff]
  %v1096 = vld [vmem:[%s0 + $0x18] sm:$0xff]
  %v1097 = vld [vmem:[%s0 + $0x20] sm:$0xff]
  %v1098 = vld [vmem:[%s0 + $0x28] sm:$0xff]
  %v1099 = vld [vmem:[%s0 + $0x30] sm:$0xff]
  %v1100 = vld [vmem:[%s0 + $0x38] sm:$0xff]
  %v1101 = vld [vmem:[%s0 + $0x40] sm:$0xff]
  %v1102 = vld [vmem:[%s0 + $0x48] sm:$0xff]
  %v1103 = vld [vmem:[%s0 + $0x50] sm:$0xff]
  %v1104 = vld [vmem:[%s0 + $0x58] sm:$0xff]
  %v1105 = vld [vmem:[%s0 + $0x60] sm:$0xff]
  %v1106 = vld [vmem:[%s0 + $0x68] sm:$0xff]
  %v1107 = vld [vmem:[%s0 + $0x70] sm:$0xff]
  %v1108 = vld [vmem:[%s0 + $0x78] sm:$0xff]
  %v1109 = vld [vmem:[%s0 + $0x80] sm:$0xff]
  %v1110 = vld [vmem:[%s0 + $0x88] sm:$0xff]
  %v1111 = vld [vmem:[%s0 + $0x90] sm:$0xff]
  %v1112 = vld [vmem:[%s0 + $0x98] sm:$0xff]
  %v1113 = vld [vmem:[%s0 + $0xa0] sm:$0xff]
  %v1114 = vld [vmem:[%s0 + $0xa8] sm:$0xff]
  %v1115 = vld [vmem:[%s0 + $0xb0] sm:$0xff]
  %v1116 = vld [vmem:[%s0 + $0xb8] sm:$0xff]
  %v1117 = vld [vmem:[%s0 + $0xc0] sm:$0xff]
  %v1118 = vld [vmem:[%s0 + $0xc8] sm:$0xff]
  %v1119 = vld [vmem:[%s0 + $0xd0] sm:$0xff]
  %v1120 = vpack.c.bf16 %v1096, %v1095
  %v1121 = vpack.c.bf16 %v1098, %v1097
  %v1122 = vpack.c.bf16 %v1100, %v1099
  %v1123 = vpack.c.bf16 %v1102, %v1101
  %v1124 = vpack.c.bf16 %v1104, %v1103
  %v1125 = vpack.c.bf16 %v1106, %v1105
  %v1126 = vpack.c.bf16 %v1108, %v1107
  %v1127 = vpack.c.bf16 %v1110, %v1109
  %v1128 = vpack.c.bf16 %v1112, %v1111
  %v1129 = vpack.c.bf16 %v1114, %v1113
  %v1130 = vpack.c.bf16 %v1116, %v1115
  %v1131 = vpack.c.bf16 %v1118, %v1117
  %v1132 = vpack.c.bf16 %v1119, %v1119
  %v1133 = vld [vmem:[%s1 + $0x80] sm:$0xf]
  %v1134 = vld [vmem:[%s1 + $0x84] sm:$0xf]
  %v1135 = vld [vmem:[%s1 + $0x88] sm:$0xf]
  %v1136 = vld [vmem:[%s1 + $0x8c] sm:$0xf]
  %v1137 = vld [vmem:[%s1 + $0x90] sm:$0xf]
  %v1138 = vld [vmem:[%s1 + $0x94] sm:$0xf]
  %v1139 = vld [vmem:[%s1 + $0x98] sm:$0xf]
  %v1140 = vld [vmem:[%s1 + $0x9c] sm:$0xf]
  %v1149 = vunpack.c.l.b16 %v1133
  %v1150 = vunpack.c.l.b16 %v1134
  %v1151 = vunpack.c.l.b16 %v1135
  %v1152 = vunpack.c.l.b16 %v1136
  %v1153 = vunpack.c.l.b16 %v1137
  %v1154 = vunpack.c.l.b16 %v1138
  %v1155 = vunpack.c.l.b16 %v1139
  %v1156 = vunpack.c.l.b16 %v1140
  %v1157 = vpack.c.b16 %v1150, %v1149
  %v1158 = vpack.c.b16 %v1152, %v1151
  %v1159 = vpack.c.b16 %v1154, %v1153
  %v1160 = vpack.c.b16 %v1156, %v1155
  %v1166 = vsel %vm180, %v1120, 0
  %v1169 = vsel %vm180, %v1121, 0
  %v1172 = vsel %vm180, %v1122, 0
  %v1175 = vsel %vm180, %v1123, 0
  %v1178 = vsel %vm180, %v1124, 0
  %v1181 = vsel %vm180, %v1125, 0
  %v1184 = vsel %vm180, %v1126, 0
  %v1187 = vsel %vm180, %v1127, 0
  %v1190 = vsel %vm180, %v1128, 0
  %v1193 = vsel %vm180, %v1129, 0
  %v1196 = vsel %vm180, %v1130, 0
  %v1199 = vsel %vm180, %v1131, 0
  %v1202 = vsel %vm180, %v1132, 0
  %1204 = vmatprep.subr.bf16.mxu0 0
  %1205 = vmatpush1.bf16.msra.mxu0 %v1157
  %1206 = vmatprep.subr.bf16.mxu0 0
  %1207 = vmatpush1.bf16.msra.mxu0 %v1158
  %1208 = vmatprep.subr.bf16.mxu0 0
  %1209 = vmatpush1.bf16.msra.mxu0 %v1159
  %1210 = vmatprep.subr.bf16.mxu0 0
  %1211 = vmatpush1.bf16.msra.mxu0 %v1160
  %1212 = vmatprep.subr.bf16.mxu0 0
  %1213 = vmatpush1.bf16.msra.mxu0 0
  %1214 = vmatprep.subr.bf16.mxu0 0
  %1215 = vmatpush1.bf16.msra.mxu0 0
  %1216 = vmatprep.subr.bf16.mxu0 0
  %1217 = vmatpush1.bf16.msra.mxu0 0
  %1218 = vmatprep.subr.bf16.mxu0 0
  %1219 = vmatpush1.bf16.msra.mxu0 0
  %1220 = vmatprep.subr.bf16.mxu0 0
  %1221 = vmatpush1.bf16.msra.mxu0 0
  %1222 = vmatprep.subr.bf16.mxu0 0
  %1223 = vmatpush1.bf16.msra.mxu0 0
  %1224 = vmatprep.subr.bf16.mxu0 0
  %1225 = vmatpush1.bf16.msra.mxu0 0
  %1226 = vmatprep.subr.bf16.mxu0 0
  %1227 = vmatpush1.bf16.msra.mxu0 0
  %1228 = vmatprep.subr.bf16.mxu0 0
  %1229 = vmatpush1.bf16.msra.mxu0 0
  %1230 = vmatprep.subr.bf16.mxu0 0
  %1231 = vmatpush1.bf16.msra.mxu0 0
  %1232 = vmatprep.subr.bf16.mxu0 0
  %1233 = vmatpush1.bf16.msra.mxu0 0
  %1234 = vmatprep.subr.bf16.mxu0 0
  %1235 = vmatpush1.bf16.msra.mxu0 0
  %1236 = vmatprep.mubr.bf16.mxu0 0
  %1237 = vmatmul.mubr.bf16.gmra.mrb[0].mxu0 %v1166
  %v1238 = vpop.f32.mrb[0].mxu0
  %v1239 = vadd.f32 0.0, %v1238
  %v1240 = vpop.f32.mrb[0].mxu0
  %v1241 = vpop.f32.mrb[0].mxu0
  %v1242 = vadd.f32 0.0, %v1241
  %v1243 = vpop.f32.mrb[0].mxu0
  %1244 = vmatprep.mubr.bf16.mxu0 0
  %1245 = vmatmul.mubr.bf16.gmra.mrb[0].mxu0 %v1169
  %v1246 = vpop.f32.mrb[0].mxu0
  %v1247 = vadd.f32 0.0, %v1246
  %v1248 = vpop.f32.mrb[0].mxu0
  %v1249 = vpop.f32.mrb[0].mxu0
  %v1250 = vadd.f32 0.0, %v1249
  %v1251 = vpop.f32.mrb[0].mxu0
  %1252 = vmatprep.mubr.bf16.mxu0 0
  %1253 = vmatmul.mubr.bf16.gmra.mrb[0].mxu0 %v1172
  %v1254 = vpop.f32.mrb[0].mxu0
  %v1255 = vadd.f32 0.0, %v1254
  %v1256 = vpop.f32.mrb[0].mxu0
  %v1257 = vpop.f32.mrb[0].mxu0
  %v1258 = vadd.f32 0.0, %v1257
  %v1259 = vpop.f32.mrb[0].mxu0
  %1260 = vmatprep.mubr.bf16.mxu0 0
  %1261 = vmatmul.mubr.bf16.gmra.mrb[0].mxu0 %v1175
  %v1262 = vpop.f32.mrb[0].mxu0
  %v1263 = vadd.f32 0.0, %v1262
  %v1264 = vpop.f32.mrb[0].mxu0
  %v1265 = vpop.f32.mrb[0].mxu0
  %v1266 = vadd.f32 0.0, %v1265
  %v1267 = vpop.f32.mrb[0].mxu0
  %1268 = vmatprep.mubr.bf16.mxu0 0
  %1269 = vmatmul.mubr.bf16.gmra.mrb[0].mxu0 %v1178
  %v1270 = vpop.f32.mrb[0].mxu0
  %v1271 = vadd.f32 0.0, %v1270
  %v1272 = vpop.f32.mrb[0].mxu0
  %v1273 = vpop.f32.mrb[0].mxu0
  %v1274 = vadd.f32 0.0, %v1273
  %v1275 = vpop.f32.mrb[0].mxu0
  %1276 = vmatprep.mubr.bf16.mxu0 0
  %1277 = vmatmul.mubr.bf16.gmra.mrb[0].mxu0 %v1181
  %v1278 = vpop.f32.mrb[0].mxu0
  %v1279 = vadd.f32 0.0, %v1278
  %v1280 = vpop.f32.mrb[0].mxu0
  %v1281 = vpop.f32.mrb[0].mxu0
  %v1282 = vadd.f32 0.0, %v1281
  %v1283 = vpop.f32.mrb[0].mxu0
  %1284 = vmatprep.mubr.bf16.mxu0 0
  %1285 = vmatmul.mubr.bf16.gmra.mrb[0].mxu0 %v1184
  %v1286 = vpop.f32.mrb[0].mxu0
  %v1287 = vadd.f32 0.0, %v1286
  %v1288 = vpop.f32.mrb[0].mxu0
  %v1289 = vpop.f32.mrb[0].mxu0
  %v1290 = vadd.f32 0.0, %v1289
  %v1291 = vpop.f32.mrb[0].mxu0
  %1292 = vmatprep.mubr.bf16.mxu0 0
  %1293 = vmatmul.mubr.bf16.gmra.mrb[0].mxu0 %v1187
  %v1294 = vpop.f32.mrb[0].mxu0
  %v1295 = vadd.f32 0.0, %v1294
  %v1296 = vpop.f32.mrb[0].mxu0
  %v1297 = vpop.f32.mrb[0].mxu0
  %v1298 = vadd.f32 0.0, %v1297
  %v1299 = vpop.f32.mrb[0].mxu0
  %1300 = vmatprep.mubr.bf16.mxu0 0
  %1301 = vmatmul.mubr.bf16.gmra.mrb[0].mxu0 %v1190
  %v1302 = vpop.f32.mrb[0].mxu0
  %v1303 = vadd.f32 0.0, %v1302
  %v1304 = vpop.f32.mrb[0].mxu0
  %v1305 = vpop.f32.mrb[0].mxu0
  %v1306 = vadd.f32 0.0, %v1305
  %v1307 = vpop.f32.mrb[0].mxu0
  %1308 = vmatprep.mubr.bf16.mxu0 0
  %1309 = vmatmul.mubr.bf16.gmra.mrb[0].mxu0 %v1193
  %v1310 = vpop.f32.mrb[0].mxu0
  %v1311 = vadd.f32 0.0, %v1310
  %v1312 = vpop.f32.mrb[0].mxu0
  %v1313 = vpop.f32.mrb[0].mxu0
  %v1314 = vadd.f32 0.0, %v1313
  %v1315 = vpop.f32.mrb[0].mxu0
  %1316 = vmatprep.mubr.bf16.mxu0 0
  %1317 = vmatmul.mubr.bf16.gmra.mrb[0].mxu0 %v1196
  %v1318 = vpop.f32.mrb[0].mxu0
  %v1319 = vadd.f32 0.0, %v1318
  %v1320 = vpop.f32.mrb[0].mxu0
  %v1321 = vpop.f32.mrb[0].mxu0
  %v1322 = vadd.f32 0.0, %v1321
  %v1323 = vpop.f32.mrb[0].mxu0
  %1324 = vmatprep.mubr.bf16.mxu0 0
  %1325 = vmatmul.mubr.bf16.gmra.mrb[0].mxu0 %v1199
  %v1326 = vpop.f32.mrb[0].mxu0
  %v1327 = vadd.f32 0.0, %v1326
  %v1328 = vpop.f32.mrb[0].mxu0
  %v1329 = vpop.f32.mrb[0].mxu0
  %v1330 = vadd.f32 0.0, %v1329
  %v1331 = vpop.f32.mrb[0].mxu0
  %1332 = vmatprep.mubr.bf16.mxu0 0
  %1333 = vmatmul.mubr.bf16.gmra.mrb[0].mxu0 %v1202
  %v1334 = vpop.f32.mrb[0].mxu0
  %v1335 = vadd.f32 0.0, %v1334
  %v1336 = vpop.f32.mrb[0].mxu0
  %v1337 = vpop.f32.mrb[0].mxu0
  %v1338 = vpop.f32.mrb[0].mxu0
  %1339 = vdwg.mxu0
  %v1340 = vadd.f32 %v1070, %v1239
  %v1341 = vadd.f32 %v1071, %v1242
  %v1342 = vadd.f32 %v1072, %v1247
  %v1343 = vadd.f32 %v1073, %v1250
  %v1344 = vadd.f32 %v1074, %v1255
  %v1345 = vadd.f32 %v1075, %v1258
  %v1346 = vadd.f32 %v1076, %v1263
  %v1347 = vadd.f32 %v1077, %v1266
  %v1348 = vadd.f32 %v1078, %v1271
  %v1349 = vadd.f32 %v1079, %v1274
  %v1350 = vadd.f32 %v1080, %v1279
  %v1351 = vadd.f32 %v1081, %v1282
  %v1352 = vadd.f32 %v1082, %v1287
  %v1353 = vadd.f32 %v1083, %v1290
  %v1354 = vadd.f32 %v1084, %v1295
  %v1355 = vadd.f32 %v1085, %v1298
  %v1356 = vadd.f32 %v1086, %v1303
  %v1357 = vadd.f32 %v1087, %v1306
  %v1358 = vadd.f32 %v1088, %v1311
  %v1359 = vadd.f32 %v1089, %v1314
  %v1360 = vadd.f32 %v1090, %v1319
  %v1361 = vadd.f32 %v1091, %v1322
  %v1362 = vadd.f32 %v1092, %v1327
  %v1363 = vadd.f32 %v1093, %v1330
  %v1364 = vadd.f32 %v1094, %v1335
  %v1365 = vld [vmem:[%s0 + $0x11] sm:$0xff]
  %v1366 = vld [vmem:[%s0 + $0x19] sm:$0xff]
  %v1367 = vld [vmem:[%s0 + $0x21] sm:$0xff]
  %v1368 = vld [vmem:[%s0 + $0x29] sm:$0xff]
  %v1369 = vld [vmem:[%s0 + $0x31] sm:$0xff]
  %v1370 = vld [vmem:[%s0 + $0x39] sm:$0xff]
  %v1371 = vld [vmem:[%s0 + $0x41] sm:$0xff]
  %v1372 = vld [vmem:[%s0 + $0x49] sm:$0xff]
  %v1373 = vld [vmem:[%s0 + $0x51] sm:$0xff]
  %v1374 = vld [vmem:[%s0 + $0x59] sm:$0xff]
  %v1375 = vld [vmem:[%s0 + $0x61] sm:$0xff]
  %v1376 = vld [vmem:[%s0 + $0x69] sm:$0xff]
  %v1377 = vld [vmem:[%s0 + $0x71] sm:$0xff]
  %v1378 = vld [vmem:[%s0 + $0x79] sm:$0xff]
  %v1379 = vld [vmem:[%s0 + $0x81] sm:$0xff]
  %v1380 = vld [vmem:[%s0 + $0x89] sm:$0xff]
  %v1381 = vld [vmem:[%s0 + $0x91] sm:$0xff]
  %v1382 = vld [vmem:[%s0 + $0x99] sm:$0xff]
  %v1383 = vld [vmem:[%s0 + $0xa1] sm:$0xff]
  %v1384 = vld [vmem:[%s0 + $0xa9] sm:$0xff]
  %v1385 = vld [vmem:[%s0 + $0xb1] sm:$0xff]
  %v1386 = vld [vmem:[%s0 + $0xb9] sm:$0xff]
  %v1387 = vld [vmem:[%s0 + $0xc1] sm:$0xff]
  %v1388 = vld [vmem:[%s0 + $0xc9] sm:$0xff]
  %v1389 = vld [vmem:[%s0 + $0xd1] sm:$0xff]
  %v1390 = vpack.c.bf16 %v1366, %v1365
  %v1391 = vpack.c.bf16 %v1368, %v1367
  %v1392 = vpack.c.bf16 %v1370, %v1369
  %v1393 = vpack.c.bf16 %v1372, %v1371
  %v1394 = vpack.c.bf16 %v1374, %v1373
  %v1395 = vpack.c.bf16 %v1376, %v1375
  %v1396 = vpack.c.bf16 %v1378, %v1377
  %v1397 = vpack.c.bf16 %v1380, %v1379
  %v1398 = vpack.c.bf16 %v1382, %v1381
  %v1399 = vpack.c.bf16 %v1384, %v1383
  %v1400 = vpack.c.bf16 %v1386, %v1385
  %v1401 = vpack.c.bf16 %v1388, %v1387
  %v1402 = vpack.c.bf16 %v1389, %v1389
  %v1403 = vld [vmem:[%s1 + $0xa0] sm:$0xf]
  %v1404 = vld [vmem:[%s1 + $0xa4] sm:$0xf]
  %v1405 = vld [vmem:[%s1 + $0xa8] sm:$0xf]
  %v1406 = vld [vmem:[%s1 + $0xac] sm:$0xf]
  %v1407 = vld [vmem:[%s1 + $0xb0] sm:$0xf]
  %v1408 = vld [vmem:[%s1 + $0xb4] sm:$0xf]
  %v1409 = vld [vmem:[%s1 + $0xb8] sm:$0xf]
  %v1410 = vld [vmem:[%s1 + $0xbc] sm:$0xf]
  %v1419 = vunpack.c.l.b16 %v1403
  %v1420 = vunpack.c.l.b16 %v1404
  %v1421 = vunpack.c.l.b16 %v1405
  %v1422 = vunpack.c.l.b16 %v1406
  %v1423 = vunpack.c.l.b16 %v1407
  %v1424 = vunpack.c.l.b16 %v1408
  %v1425 = vunpack.c.l.b16 %v1409
  %v1426 = vunpack.c.l.b16 %v1410
  %v1427 = vpack.c.b16 %v1420, %v1419
  %v1428 = vpack.c.b16 %v1422, %v1421
  %v1429 = vpack.c.b16 %v1424, %v1423
  %v1430 = vpack.c.b16 %v1426, %v1425
  %v1436 = vsel %vm180, %v1390, 0
  %v1439 = vsel %vm180, %v1391, 0
  %v1442 = vsel %vm180, %v1392, 0
  %v1445 = vsel %vm180, %v1393, 0
  %v1448 = vsel %vm180, %v1394, 0
  %v1451 = vsel %vm180, %v1395, 0
  %v1454 = vsel %vm180, %v1396, 0
  %v1457 = vsel %vm180, %v1397, 0
  %v1460 = vsel %vm180, %v1398, 0
  %v1463 = vsel %vm180, %v1399, 0
  %v1466 = vsel %vm180, %v1400, 0
  %v1469 = vsel %vm180, %v1401, 0
  %v1472 = vsel %vm180, %v1402, 0
  %1474 = vmatprep.subr.bf16.mxu0 0
  %1475 = vmatpush1.bf16.msra.mxu0 %v1427
  %1476 = vmatprep.subr.bf16.mxu0 0
  %1477 = vmatpush1.bf16.msra.mxu0 %v1428
  %1478 = vmatprep.subr.bf16.mxu0 0
  %1479 = vmatpush1.bf16.msra.mxu0 %v1429
  %1480 = vmatprep.subr.bf16.mxu0 0
  %1481 = vmatpush1.bf16.msra.mxu0 %v1430
  %1482 = vmatprep.subr.bf16.mxu0 0
  %1483 = vmatpush1.bf16.msra.mxu0 0
  %1484 = vmatprep.subr.bf16.mxu0 0
  %1485 = vmatpush1.bf16.msra.mxu0 0
  %1486 = vmatprep.subr.bf16.mxu0 0
  %1487 = vmatpush1.bf16.msra.mxu0 0
  %1488 = vmatprep.subr.bf16.mxu0 0
  %1489 = vmatpush1.bf16.msra.mxu0 0
  %1490 = vmatprep.subr.bf16.mxu0 0
  %1491 = vmatpush1.bf16.msra.mxu0 0
  %1492 = vmatprep.subr.bf16.mxu0 0
  %1493 = vmatpush1.bf16.msra.mxu0 0
  %1494 = vmatprep.subr.bf16.mxu0 0
  %1495 = vmatpush1.bf16.msra.mxu0 0
  %1496 = vmatprep.subr.bf16.mxu0 0
  %1497 = vmatpush1.bf16.msra.mxu0 0
  %1498 = vmatprep.subr.bf16.mxu0 0
  %1499 = vmatpush1.bf16.msra.mxu0 0
  %1500 = vmatprep.subr.bf16.mxu0 0
  %1501 = vmatpush1.bf16.msra.mxu0 0
  %1502 = vmatprep.subr.bf16.mxu0 0
  %1503 = vmatpush1.bf16.msra.mxu0 0
  %1504 = vmatprep.subr.bf16.mxu0 0
  %1505 = vmatpush1.bf16.msra.mxu0 0
  %1506 = vmatprep.mubr.bf16.mxu0 0
  %1507 = vmatmul.mubr.bf16.gmra.mrb[0].mxu0 %v1436
  %v1508 = vpop.f32.mrb[0].mxu0
  %v1509 = vadd.f32 0.0, %v1508
  %v1510 = vpop.f32.mrb[0].mxu0
  %v1511 = vpop.f32.mrb[0].mxu0
  %v1512 = vadd.f32 0.0, %v1511
  %v1513 = vpop.f32.mrb[0].mxu0
  %1514 = vmatprep.mubr.bf16.mxu0 0
  %1515 = vmatmul.mubr.bf16.gmra.mrb[0].mxu0 %v1439
  %v1516 = vpop.f32.mrb[0].mxu0
  %v1517 = vadd.f32 0.0, %v1516
  %v1518 = vpop.f32.mrb[0].mxu0
  %v1519 = vpop.f32.mrb[0].mxu0
  %v1520 = vadd.f32 0.0, %v1519
  %v1521 = vpop.f32.mrb[0].mxu0
  %1522 = vmatprep.mubr.bf16.mxu0 0
  %1523 = vmatmul.mubr.bf16.gmra.mrb[0].mxu0 %v1442
  %v1524 = vpop.f32.mrb[0].mxu0
  %v1525 = vadd.f32 0.0, %v1524
  %v1526 = vpop.f32.mrb[0].mxu0
  %v1527 = vpop.f32.mrb[0].mxu0
  %v1528 = vadd.f32 0.0, %v1527
  %v1529 = vpop.f32.mrb[0].mxu0
  %1530 = vmatprep.mubr.bf16.mxu0 0
  %1531 = vmatmul.mubr.bf16.gmra.mrb[0].mxu0 %v1445
  %v1532 = vpop.f32.mrb[0].mxu0
  %v1533 = vadd.f32 0.0, %v1532
  %v1534 = vpop.f32.mrb[0].mxu0
  %v1535 = vpop.f32.mrb[0].mxu0
  %v1536 = vadd.f32 0.0, %v1535
  %v1537 = vpop.f32.mrb[0].mxu0
  %1538 = vmatprep.mubr.bf16.mxu0 0
  %1539 = vmatmul.mubr.bf16.gmra.mrb[0].mxu0 %v1448
  %v1540 = vpop.f32.mrb[0].mxu0
  %v1541 = vadd.f32 0.0, %v1540
  %v1542 = vpop.f32.mrb[0].mxu0
  %v1543 = vpop.f32.mrb[0].mxu0
  %v1544 = vadd.f32 0.0, %v1543
  %v1545 = vpop.f32.mrb[0].mxu0
  %1546 = vmatprep.mubr.bf16.mxu0 0
  %1547 = vmatmul.mubr.bf16.gmra.mrb[0].mxu0 %v1451
  %v1548 = vpop.f32.mrb[0].mxu0
  %v1549 = vadd.f32 0.0, %v1548
  %v1550 = vpop.f32.mrb[0].mxu0
  %v1551 = vpop.f32.mrb[0].mxu0
  %v1552 = vadd.f32 0.0, %v1551
  %v1553 = vpop.f32.mrb[0].mxu0
  %1554 = vmatprep.mubr.bf16.mxu0 0
  %1555 = vmatmul.mubr.bf16.gmra.mrb[0].mxu0 %v1454
  %v1556 = vpop.f32.mrb[0].mxu0
  %v1557 = vadd.f32 0.0, %v1556
  %v1558 = vpop.f32.mrb[0].mxu0
  %v1559 = vpop.f32.mrb[0].mxu0
  %v1560 = vadd.f32 0.0, %v1559
  %v1561 = vpop.f32.mrb[0].mxu0
  %1562 = vmatprep.mubr.bf16.mxu0 0
  %1563 = vmatmul.mubr.bf16.gmra.mrb[0].mxu0 %v1457
  %v1564 = vpop.f32.mrb[0].mxu0
  %v1565 = vadd.f32 0.0, %v1564
  %v1566 = vpop.f32.mrb[0].mxu0
  %v1567 = vpop.f32.mrb[0].mxu0
  %v1568 = vadd.f32 0.0, %v1567
  %v1569 = vpop.f32.mrb[0].mxu0
  %1570 = vmatprep.mubr.bf16.mxu0 0
  %1571 = vmatmul.mubr.bf16.gmra.mrb[0].mxu0 %v1460
  %v1572 = vpop.f32.mrb[0].mxu0
  %v1573 = vadd.f32 0.0, %v1572
  %v1574 = vpop.f32.mrb[0].mxu0
  %v1575 = vpop.f32.mrb[0].mxu0
  %v1576 = vadd.f32 0.0, %v1575
  %v1577 = vpop.f32.mrb[0].mxu0
  %1578 = vmatprep.mubr.bf16.mxu0 0
  %1579 = vmatmul.mubr.bf16.gmra.mrb[0].mxu0 %v1463
  %v1580 = vpop.f32.mrb[0].mxu0
  %v1581 = vadd.f32 0.0, %v1580
  %v1582 = vpop.f32.mrb[0].mxu0
  %v1583 = vpop.f32.mrb[0].mxu0
  %v1584 = vadd.f32 0.0, %v1583
  %v1585 = vpop.f32.mrb[0].mxu0
  %1586 = vmatprep.mubr.bf16.mxu0 0
  %1587 = vmatmul.mubr.bf16.gmra.mrb[0].mxu0 %v1466
  %v1588 = vpop.f32.mrb[0].mxu0
  %v1589 = vadd.f32 0.0, %v1588
  %v1590 = vpop.f32.mrb[0].mxu0
  %v1591 = vpop.f32.mrb[0].mxu0
  %v1592 = vadd.f32 0.0, %v1591
  %v1593 = vpop.f32.mrb[0].mxu0
  %1594 = vmatprep.mubr.bf16.mxu0 0
  %1595 = vmatmul.mubr.bf16.gmra.mrb[0].mxu0 %v1469
  %v1596 = vpop.f32.mrb[0].mxu0
  %v1597 = vadd.f32 0.0, %v1596
  %v1598 = vpop.f32.mrb[0].mxu0
  %v1599 = vpop.f32.mrb[0].mxu0
  %v1600 = vadd.f32 0.0, %v1599
  %v1601 = vpop.f32.mrb[0].mxu0
  %1602 = vmatprep.mubr.bf16.mxu0 0
  %1603 = vmatmul.mubr.bf16.gmra.mrb[0].mxu0 %v1472
  %v1604 = vpop.f32.mrb[0].mxu0
  %v1605 = vadd.f32 0.0, %v1604
  %v1606 = vpop.f32.mrb[0].mxu0
  %v1607 = vpop.f32.mrb[0].mxu0
  %v1608 = vpop.f32.mrb[0].mxu0
  %1609 = vdwg.mxu0
  %v1610 = vadd.f32 %v1340, %v1509
  %v1611 = vadd.f32 %v1341, %v1512
  %v1612 = vadd.f32 %v1342, %v1517
  %v1613 = vadd.f32 %v1343, %v1520
  %v1614 = vadd.f32 %v1344, %v1525
  %v1615 = vadd.f32 %v1345, %v1528
  %v1616 = vadd.f32 %v1346, %v1533
  %v1617 = vadd.f32 %v1347, %v1536
  %v1618 = vadd.f32 %v1348, %v1541
  %v1619 = vadd.f32 %v1349, %v1544
  %v1620 = vadd.f32 %v1350, %v1549
  %v1621 = vadd.f32 %v1351, %v1552
  %v1622 = vadd.f32 %v1352, %v1557
  %v1623 = vadd.f32 %v1353, %v1560
  %v1624 = vadd.f32 %v1354, %v1565
  %v1625 = vadd.f32 %v1355, %v1568
  %v1626 = vadd.f32 %v1356, %v1573
  %v1627 = vadd.f32 %v1357, %v1576
  %v1628 = vadd.f32 %v1358, %v1581
  %v1629 = vadd.f32 %v1359, %v1584
  %v1630 = vadd.f32 %v1360, %v1589
  %v1631 = vadd.f32 %v1361, %v1592
  %v1632 = vadd.f32 %v1362, %v1597
  %v1633 = vadd.f32 %v1363, %v1600
  %v1634 = vadd.f32 %v1364, %v1605
  %v1635 = vld [vmem:[%s0 + $0x19] sm:$0xff]
  %v1636 = vld [vmem:[%s0 + $0x21] sm:$0xff]
  %v1637 = vld [vmem:[%s0 + $0x29] sm:$0xff]
  %v1638 = vld [vmem:[%s0 + $0x31] sm:$0xff]
  %v1639 = vld [vmem:[%s0 + $0x39] sm:$0xff]
  %v1640 = vld [vmem:[%s0 + $0x41] sm:$0xff]
  %v1641 = vld [vmem:[%s0 + $0x49] sm:$0xff]
  %v1642 = vld [vmem:[%s0 + $0x51] sm:$0xff]
  %v1643 = vld [vmem:[%s0 + $0x59] sm:$0xff]
  %v1644 = vld [vmem:[%s0 + $0x61] sm:$0xff]
  %v1645 = vld [vmem:[%s0 + $0x69] sm:$0xff]
  %v1646 = vld [vmem:[%s0 + $0x71] sm:$0xff]
  %v1647 = vld [vmem:[%s0 + $0x79] sm:$0xff]
  %v1648 = vld [vmem:[%s0 + $0x81] sm:$0xff]
  %v1649 = vld [vmem:[%s0 + $0x89] sm:$0xff]
  %v1650 = vld [vmem:[%s0 + $0x91] sm:$0xff]
  %v1651 = vld [vmem:[%s0 + $0x99] sm:$0xff]
  %v1652 = vld [vmem:[%s0 + $0xa1] sm:$0xff]
  %v1653 = vld [vmem:[%s0 + $0xa9] sm:$0xff]
  %v1654 = vld [vmem:[%s0 + $0xb1] sm:$0xff]
  %v1655 = vld [vmem:[%s0 + $0xb9] sm:$0xff]
  %v1656 = vld [vmem:[%s0 + $0xc1] sm:$0xff]
  %v1657 = vld [vmem:[%s0 + $0xc9] sm:$0xff]
  %v1658 = vld [vmem:[%s0 + $0xd1] sm:$0xff]
  %v1659 = vld [vmem:[%s0 + $0xd9] sm:$0xff]
  %v1660 = vpack.c.bf16 %v1636, %v1635
  %v1661 = vpack.c.bf16 %v1638, %v1637
  %v1662 = vpack.c.bf16 %v1640, %v1639
  %v1663 = vpack.c.bf16 %v1642, %v1641
  %v1664 = vpack.c.bf16 %v1644, %v1643
  %v1665 = vpack.c.bf16 %v1646, %v1645
  %v1666 = vpack.c.bf16 %v1648, %v1647
  %v1667 = vpack.c.bf16 %v1650, %v1649
  %v1668 = vpack.c.bf16 %v1652, %v1651
  %v1669 = vpack.c.bf16 %v1654, %v1653
  %v1670 = vpack.c.bf16 %v1656, %v1655
  %v1671 = vpack.c.bf16 %v1658, %v1657
  %v1672 = vpack.c.bf16 %v1659, %v1659
  %v1673 = vld [vmem:[%s1 + $0xc0] sm:$0xf]
  %v1674 = vld [vmem:[%s1 + $0xc4] sm:$0xf]
  %v1675 = vld [vmem:[%s1 + $0xc8] sm:$0xf]
  %v1676 = vld [vmem:[%s1 + $0xcc] sm:$0xf]
  %v1677 = vld [vmem:[%s1 + $0xd0] sm:$0xf]
  %v1678 = vld [vmem:[%s1 + $0xd4] sm:$0xf]
  %v1679 = vld [vmem:[%s1 + $0xd8] sm:$0xf]
  %v1680 = vld [vmem:[%s1 + $0xdc] sm:$0xf]
  %v1689 = vunpack.c.l.b16 %v1673
  %v1690 = vunpack.c.l.b16 %v1674
  %v1691 = vunpack.c.l.b16 %v1675
  %v1692 = vunpack.c.l.b16 %v1676
  %v1693 = vunpack.c.l.b16 %v1677
  %v1694 = vunpack.c.l.b16 %v1678
  %v1695 = vunpack.c.l.b16 %v1679
  %v1696 = vunpack.c.l.b16 %v1680
  %v1697 = vpack.c.b16 %v1690, %v1689
  %v1698 = vpack.c.b16 %v1692, %v1691
  %v1699 = vpack.c.b16 %v1694, %v1693
  %v1700 = vpack.c.b16 %v1696, %v1695
  %v1706 = vsel %vm180, %v1660, 0
  %v1709 = vsel %vm180, %v1661, 0
  %v1712 = vsel %vm180, %v1662, 0
  %v1715 = vsel %vm180, %v1663, 0
  %v1718 = vsel %vm180, %v1664, 0
  %v1721 = vsel %vm180, %v1665, 0
  %v1724 = vsel %vm180, %v1666, 0
  %v1727 = vsel %vm180, %v1667, 0
  %v1730 = vsel %vm180, %v1668, 0
  %v1733 = vsel %vm180, %v1669, 0
  %v1736 = vsel %vm180, %v1670, 0
  %v1739 = vsel %vm180, %v1671, 0
  %v1742 = vsel %vm180, %v1672, 0
  %1744 = vmatprep.subr.bf16.mxu0 0
  %1745 = vmatpush1.bf16.msra.mxu0 %v1697
  %1746 = vmatprep.subr.bf16.mxu0 0
  %1747 = vmatpush1.bf16.msra.mxu0 %v1698
  %1748 = vmatprep.subr.bf16.mxu0 0
  %1749 = vmatpush1.bf16.msra.mxu0 %v1699
  %1750 = vmatprep.subr.bf16.mxu0 0
  %1751 = vmatpush1.bf16.msra.mxu0 %v1700
  %1752 = vmatprep.subr.bf16.mxu0 0
  %1753 = vmatpush1.bf16.msra.mxu0 0
  %1754 = vmatprep.subr.bf16.mxu0 0
  %1755 = vmatpush1.bf16.msra.mxu0 0
  %1756 = vmatprep.subr.bf16.mxu0 0
  %1757 = vmatpush1.bf16.msra.mxu0 0
  %1758 = vmatprep.subr.bf16.mxu0 0
  %1759 = vmatpush1.bf16.msra.mxu0 0
  %1760 = vmatprep.subr.bf16.mxu0 0
  %1761 = vmatpush1.bf16.msra.mxu0 0
  %1762 = vmatprep.subr.bf16.mxu0 0
  %1763 = vmatpush1.bf16.msra.mxu0 0
  %1764 = vmatprep.subr.bf16.mxu0 0
  %1765 = vmatpush1.bf16.msra.mxu0 0
  %1766 = vmatprep.subr.bf16.mxu0 0
  %1767 = vmatpush1.bf16.msra.mxu0 0
  %1768 = vmatprep.subr.bf16.mxu0 0
  %1769 = vmatpush1.bf16.msra.mxu0 0
  %1770 = vmatprep.subr.bf16.mxu0 0
  %1771 = vmatpush1.bf16.msra.mxu0 0
  %1772 = vmatprep.subr.bf16.mxu0 0
  %1773 = vmatpush1.bf16.msra.mxu0 0
  %1774 = vmatprep.subr.bf16.mxu0 0
  %1775 = vmatpush1.bf16.msra.mxu0 0
  %1776 = vmatprep.mubr.bf16.mxu0 0
  %1777 = vmatmul.mubr.bf16.gmra.mrb[0].mxu0 %v1706
  %v1778 = vpop.f32.mrb[0].mxu0
  %v1779 = vadd.f32 0.0, %v1778
  %v1780 = vpop.f32.mrb[0].mxu0
  %v1781 = vpop.f32.mrb[0].mxu0
  %v1782 = vadd.f32 0.0, %v1781
  %v1783 = vpop.f32.mrb[0].mxu0
  %1784 = vmatprep.mubr.bf16.mxu0 0
  %1785 = vmatmul.mubr.bf16.gmra.mrb[0].mxu0 %v1709
  %v1786 = vpop.f32.mrb[0].mxu0
  %v1787 = vadd.f32 0.0, %v1786
  %v1788 = vpop.f32.mrb[0].mxu0
  %v1789 = vpop.f32.mrb[0].mxu0
  %v1790 = vadd.f32 0.0, %v1789
  %v1791 = vpop.f32.mrb[0].mxu0
  %1792 = vmatprep.mubr.bf16.mxu0 0
  %1793 = vmatmul.mubr.bf16.gmra.mrb[0].mxu0 %v1712
  %v1794 = vpop.f32.mrb[0].mxu0
  %v1795 = vadd.f32 0.0, %v1794
  %v1796 = vpop.f32.mrb[0].mxu0
  %v1797 = vpop.f32.mrb[0].mxu0
  %v1798 = vadd.f32 0.0, %v1797
  %v1799 = vpop.f32.mrb[0].mxu0
  %1800 = vmatprep.mubr.bf16.mxu0 0
  %1801 = vmatmul.mubr.bf16.gmra.mrb[0].mxu0 %v1715
  %v1802 = vpop.f32.mrb[0].mxu0
  %v1803 = vadd.f32 0.0, %v1802
  %v1804 = vpop.f32.mrb[0].mxu0
  %v1805 = vpop.f32.mrb[0].mxu0
  %v1806 = vadd.f32 0.0, %v1805
  %v1807 = vpop.f32.mrb[0].mxu0
  %1808 = vmatprep.mubr.bf16.mxu0 0
  %1809 = vmatmul.mubr.bf16.gmra.mrb[0].mxu0 %v1718
  %v1810 = vpop.f32.mrb[0].mxu0
  %v1811 = vadd.f32 0.0, %v1810
  %v1812 = vpop.f32.mrb[0].mxu0
  %v1813 = vpop.f32.mrb[0].mxu0
  %v1814 = vadd.f32 0.0, %v1813
  %v1815 = vpop.f32.mrb[0].mxu0
  %1816 = vmatprep.mubr.bf16.mxu0 0
  %1817 = vmatmul.mubr.bf16.gmra.mrb[0].mxu0 %v1721
  %v1818 = vpop.f32.mrb[0].mxu0
  %v1819 = vadd.f32 0.0, %v1818
  %v1820 = vpop.f32.mrb[0].mxu0
  %v1821 = vpop.f32.mrb[0].mxu0
  %v1822 = vadd.f32 0.0, %v1821
  %v1823 = vpop.f32.mrb[0].mxu0
  %1824 = vmatprep.mubr.bf16.mxu0 0
  %1825 = vmatmul.mubr.bf16.gmra.mrb[0].mxu0 %v1724
  %v1826 = vpop.f32.mrb[0].mxu0
  %v1827 = vadd.f32 0.0, %v1826
  %v1828 = vpop.f32.mrb[0].mxu0
  %v1829 = vpop.f32.mrb[0].mxu0
  %v1830 = vadd.f32 0.0, %v1829
  %v1831 = vpop.f32.mrb[0].mxu0
  %1832 = vmatprep.mubr.bf16.mxu0 0
  %1833 = vmatmul.mubr.bf16.gmra.mrb[0].mxu0 %v1727
  %v1834 = vpop.f32.mrb[0].mxu0
  %v1835 = vadd.f32 0.0, %v1834
  %v1836 = vpop.f32.mrb[0].mxu0
  %v1837 = vpop.f32.mrb[0].mxu0
  %v1838 = vadd.f32 0.0, %v1837
  %v1839 = vpop.f32.mrb[0].mxu0
  %1840 = vmatprep.mubr.bf16.mxu0 0
  %1841 = vmatmul.mubr.bf16.gmra.mrb[0].mxu0 %v1730
  %v1842 = vpop.f32.mrb[0].mxu0
  %v1843 = vadd.f32 0.0, %v1842
  %v1844 = vpop.f32.mrb[0].mxu0
  %v1845 = vpop.f32.mrb[0].mxu0
  %v1846 = vadd.f32 0.0, %v1845
  %v1847 = vpop.f32.mrb[0].mxu0
  %1848 = vmatprep.mubr.bf16.mxu0 0
  %1849 = vmatmul.mubr.bf16.gmra.mrb[0].mxu0 %v1733
  %v1850 = vpop.f32.mrb[0].mxu0
  %v1851 = vadd.f32 0.0, %v1850
  %v1852 = vpop.f32.mrb[0].mxu0
  %v1853 = vpop.f32.mrb[0].mxu0
  %v1854 = vadd.f32 0.0, %v1853
  %v1855 = vpop.f32.mrb[0].mxu0
  %1856 = vmatprep.mubr.bf16.mxu0 0
  %1857 = vmatmul.mubr.bf16.gmra.mrb[0].mxu0 %v1736
  %v1858 = vpop.f32.mrb[0].mxu0
  %v1859 = vadd.f32 0.0, %v1858
  %v1860 = vpop.f32.mrb[0].mxu0
  %v1861 = vpop.f32.mrb[0].mxu0
  %v1862 = vadd.f32 0.0, %v1861
  %v1863 = vpop.f32.mrb[0].mxu0
  %1864 = vmatprep.mubr.bf16.mxu0 0
  %1865 = vmatmul.mubr.bf16.gmra.mrb[0].mxu0 %v1739
  %v1866 = vpop.f32.mrb[0].mxu0
  %v1867 = vadd.f32 0.0, %v1866
  %v1868 = vpop.f32.mrb[0].mxu0
  %v1869 = vpop.f32.mrb[0].mxu0
  %v1870 = vadd.f32 0.0, %v1869
  %v1871 = vpop.f32.mrb[0].mxu0
  %1872 = vmatprep.mubr.bf16.mxu0 0
  %1873 = vmatmul.mubr.bf16.gmra.mrb[0].mxu0 %v1742
  %v1874 = vpop.f32.mrb[0].mxu0
  %v1875 = vadd.f32 0.0, %v1874
  %v1876 = vpop.f32.mrb[0].mxu0
  %v1877 = vpop.f32.mrb[0].mxu0
  %v1878 = vpop.f32.mrb[0].mxu0
  %1879 = vdwg.mxu0
  %v1880 = vadd.f32 %v1610, %v1779
  %v1881 = vadd.f32 %v1611, %v1782
  %v1882 = vadd.f32 %v1612, %v1787
  %v1883 = vadd.f32 %v1613, %v1790
  %v1884 = vadd.f32 %v1614, %v1795
  %v1885 = vadd.f32 %v1615, %v1798
  %v1886 = vadd.f32 %v1616, %v1803
  %v1887 = vadd.f32 %v1617, %v1806
  %v1888 = vadd.f32 %v1618, %v1811
  %v1889 = vadd.f32 %v1619, %v1814
  %v1890 = vadd.f32 %v1620, %v1819
  %v1891 = vadd.f32 %v1621, %v1822
  %v1892 = vadd.f32 %v1622, %v1827
  %v1893 = vadd.f32 %v1623, %v1830
  %v1894 = vadd.f32 %v1624, %v1835
  %v1895 = vadd.f32 %v1625, %v1838
  %v1896 = vadd.f32 %v1626, %v1843
  %v1897 = vadd.f32 %v1627, %v1846
  %v1898 = vadd.f32 %v1628, %v1851
  %v1899 = vadd.f32 %v1629, %v1854
  %v1900 = vadd.f32 %v1630, %v1859
  %v1901 = vadd.f32 %v1631, %v1862
  %v1902 = vadd.f32 %v1632, %v1867
  %v1903 = vadd.f32 %v1633, %v1870
  %v1904 = vadd.f32 %v1634, %v1875
  %v1905 = vld [vmem:[%s0 + $0x1a] sm:$0xff]
  %v1906 = vld [vmem:[%s0 + $0x22] sm:$0xff]
  %v1907 = vld [vmem:[%s0 + $0x2a] sm:$0xff]
  %v1908 = vld [vmem:[%s0 + $0x32] sm:$0xff]
  %v1909 = vld [vmem:[%s0 + $0x3a] sm:$0xff]
  %v1910 = vld [vmem:[%s0 + $0x42] sm:$0xff]
  %v1911 = vld [vmem:[%s0 + $0x4a] sm:$0xff]
  %v1912 = vld [vmem:[%s0 + $0x52] sm:$0xff]
  %v1913 = vld [vmem:[%s0 + $0x5a] sm:$0xff]
  %v1914 = vld [vmem:[%s0 + $0x62] sm:$0xff]
  %v1915 = vld [vmem:[%s0 + $0x6a] sm:$0xff]
  %v1916 = vld [vmem:[%s0 + $0x72] sm:$0xff]
  %v1917 = vld [vmem:[%s0 + $0x7a] sm:$0xff]
  %v1918 = vld [vmem:[%s0 + $0x82] sm:$0xff]
  %v1919 = vld [vmem:[%s0 + $0x8a] sm:$0xff]
  %v1920 = vld [vmem:[%s0 + $0x92] sm:$0xff]
  %v1921 = vld [vmem:[%s0 + $0x9a] sm:$0xff]
  %v1922 = vld [vmem:[%s0 + $0xa2] sm:$0xff]
  %v1923 = vld [vmem:[%s0 + $0xaa] sm:$0xff]
  %v1924 = vld [vmem:[%s0 + $0xb2] sm:$0xff]
  %v1925 = vld [vmem:[%s0 + $0xba] sm:$0xff]
  %v1926 = vld [vmem:[%s0 + $0xc2] sm:$0xff]
  %v1927 = vld [vmem:[%s0 + $0xca] sm:$0xff]
  %v1928 = vld [vmem:[%s0 + $0xd2] sm:$0xff]
  %v1929 = vld [vmem:[%s0 + $0xda] sm:$0xff]
  %v1930 = vpack.c.bf16 %v1906, %v1905
  %v1931 = vpack.c.bf16 %v1908, %v1907
  %v1932 = vpack.c.bf16 %v1910, %v1909
  %v1933 = vpack.c.bf16 %v1912, %v1911
  %v1934 = vpack.c.bf16 %v1914, %v1913
  %v1935 = vpack.c.bf16 %v1916, %v1915
  %v1936 = vpack.c.bf16 %v1918, %v1917
  %v1937 = vpack.c.bf16 %v1920, %v1919
  %v1938 = vpack.c.bf16 %v1922, %v1921
  %v1939 = vpack.c.bf16 %v1924, %v1923
  %v1940 = vpack.c.bf16 %v1926, %v1925
  %v1941 = vpack.c.bf16 %v1928, %v1927
  %v1942 = vpack.c.bf16 %v1929, %v1929
  %v1943 = vld [vmem:[%s1 + $0xe0] sm:$0xf]
  %v1944 = vld [vmem:[%s1 + $0xe4] sm:$0xf]
  %v1945 = vld [vmem:[%s1 + $0xe8] sm:$0xf]
  %v1946 = vld [vmem:[%s1 + $0xec] sm:$0xf]
  %v1947 = vld [vmem:[%s1 + $0xf0] sm:$0xf]
  %v1948 = vld [vmem:[%s1 + $0xf4] sm:$0xf]
  %v1949 = vld [vmem:[%s1 + $0xf8] sm:$0xf]
  %v1950 = vld [vmem:[%s1 + $0xfc] sm:$0xf]
  %v1959 = vunpack.c.l.b16 %v1943
  %v1960 = vunpack.c.l.b16 %v1944
  %v1961 = vunpack.c.l.b16 %v1945
  %v1962 = vunpack.c.l.b16 %v1946
  %v1963 = vunpack.c.l.b16 %v1947
  %v1964 = vunpack.c.l.b16 %v1948
  %v1965 = vunpack.c.l.b16 %v1949
  %v1966 = vunpack.c.l.b16 %v1950
  %v1967 = vpack.c.b16 %v1960, %v1959
  %v1968 = vpack.c.b16 %v1962, %v1961
  %v1969 = vpack.c.b16 %v1964, %v1963
  %v1970 = vpack.c.b16 %v1966, %v1965
  %v1976 = vsel %vm180, %v1930, 0
  %v1979 = vsel %vm180, %v1931, 0
  %v1982 = vsel %vm180, %v1932, 0
  %v1985 = vsel %vm180, %v1933, 0
  %v1988 = vsel %vm180, %v1934, 0
  %v1991 = vsel %vm180, %v1935, 0
  %v1994 = vsel %vm180, %v1936, 0
  %v1997 = vsel %vm180, %v1937, 0
  %v2000 = vsel %vm180, %v1938, 0
  %v2003 = vsel %vm180, %v1939, 0
  %v2006 = vsel %vm180, %v1940, 0
  %v2009 = vsel %vm180, %v1941, 0
  %v2012 = vsel %vm180, %v1942, 0
  %2014 = vmatprep.subr.bf16.mxu0 0
  %2015 = vmatpush1.bf16.msra.mxu0 %v1967
  %2016 = vmatprep.subr.bf16.mxu0 0
  %2017 = vmatpush1.bf16.msra.mxu0 %v1968
  %2018 = vmatprep.subr.bf16.mxu0 0
  %2019 = vmatpush1.bf16.msra.mxu0 %v1969
  %2020 = vmatprep.subr.bf16.mxu0 0
  %2021 = vmatpush1.bf16.msra.mxu0 %v1970
  %2022 = vmatprep.subr.bf16.mxu0 0
  %2023 = vmatpush1.bf16.msra.mxu0 0
  %2024 = vmatprep.subr.bf16.mxu0 0
  %2025 = vmatpush1.bf16.msra.mxu0 0
  %2026 = vmatprep.subr.bf16.mxu0 0
  %2027 = vmatpush1.bf16.msra.mxu0 0
  %2028 = vmatprep.subr.bf16.mxu0 0
  %2029 = vmatpush1.bf16.msra.mxu0 0
  %2030 = vmatprep.subr.bf16.mxu0 0
  %2031 = vmatpush1.bf16.msra.mxu0 0
  %2032 = vmatprep.subr.bf16.mxu0 0
  %2033 = vmatpush1.bf16.msra.mxu0 0
  %2034 = vmatprep.subr.bf16.mxu0 0
  %2035 = vmatpush1.bf16.msra.mxu0 0
  %2036 = vmatprep.subr.bf16.mxu0 0
  %2037 = vmatpush1.bf16.msra.mxu0 0
  %2038 = vmatprep.subr.bf16.mxu0 0
  %2039 = vmatpush1.bf16.msra.mxu0 0
  %2040 = vmatprep.subr.bf16.mxu0 0
  %2041 = vmatpush1.bf16.msra.mxu0 0
  %2042 = vmatprep.subr.bf16.mxu0 0
  %2043 = vmatpush1.bf16.msra.mxu0 0
  %2044 = vmatprep.subr.bf16.mxu0 0
  %2045 = vmatpush1.bf16.msra.mxu0 0
  %2046 = vmatprep.mubr.bf16.mxu0 0
  %2047 = vmatmul.mubr.bf16.gmra.mrb[0].mxu0 %v1976
  %v2048 = vpop.f32.mrb[0].mxu0
  %v2049 = vadd.f32 0.0, %v2048
  %v2050 = vpop.f32.mrb[0].mxu0
  %v2051 = vpop.f32.mrb[0].mxu0
  %v2052 = vadd.f32 0.0, %v2051
  %v2053 = vpop.f32.mrb[0].mxu0
  %2054 = vmatprep.mubr.bf16.mxu0 0
  %2055 = vmatmul.mubr.bf16.gmra.mrb[0].mxu0 %v1979
  %v2056 = vpop.f32.mrb[0].mxu0
  %v2057 = vadd.f32 0.0, %v2056
  %v2058 = vpop.f32.mrb[0].mxu0
  %v2059 = vpop.f32.mrb[0].mxu0
  %v2060 = vadd.f32 0.0, %v2059
  %v2061 = vpop.f32.mrb[0].mxu0
  %2062 = vmatprep.mubr.bf16.mxu0 0
  %2063 = vmatmul.mubr.bf16.gmra.mrb[0].mxu0 %v1982
  %v2064 = vpop.f32.mrb[0].mxu0
  %v2065 = vadd.f32 0.0, %v2064
  %v2066 = vpop.f32.mrb[0].mxu0
  %v2067 = vpop.f32.mrb[0].mxu0
  %v2068 = vadd.f32 0.0, %v2067
  %v2069 = vpop.f32.mrb[0].mxu0
  %2070 = vmatprep.mubr.bf16.mxu0 0
  %2071 = vmatmul.mubr.bf16.gmra.mrb[0].mxu0 %v1985
  %v2072 = vpop.f32.mrb[0].mxu0
  %v2073 = vadd.f32 0.0, %v2072
  %v2074 = vpop.f32.mrb[0].mxu0
  %v2075 = vpop.f32.mrb[0].mxu0
  %v2076 = vadd.f32 0.0, %v2075
  %v2077 = vpop.f32.mrb[0].mxu0
  %2078 = vmatprep.mubr.bf16.mxu0 0
  %2079 = vmatmul.mubr.bf16.gmra.mrb[0].mxu0 %v1988
  %v2080 = vpop.f32.mrb[0].mxu0
  %v2081 = vadd.f32 0.0, %v2080
  %v2082 = vpop.f32.mrb[0].mxu0
  %v2083 = vpop.f32.mrb[0].mxu0
  %v2084 = vadd.f32 0.0, %v2083
  %v2085 = vpop.f32.mrb[0].mxu0
  %2086 = vmatprep.mubr.bf16.mxu0 0
  %2087 = vmatmul.mubr.bf16.gmra.mrb[0].mxu0 %v1991
  %v2088 = vpop.f32.mrb[0].mxu0
  %v2089 = vadd.f32 0.0, %v2088
  %v2090 = vpop.f32.mrb[0].mxu0
  %v2091 = vpop.f32.mrb[0].mxu0
  %v2092 = vadd.f32 0.0, %v2091
  %v2093 = vpop.f32.mrb[0].mxu0
  %2094 = vmatprep.mubr.bf16.mxu0 0
  %2095 = vmatmul.mubr.bf16.gmra.mrb[0].mxu0 %v1994
  %v2096 = vpop.f32.mrb[0].mxu0
  %v2097 = vadd.f32 0.0, %v2096
  %v2098 = vpop.f32.mrb[0].mxu0
  %v2099 = vpop.f32.mrb[0].mxu0
  %v2100 = vadd.f32 0.0, %v2099
  %v2101 = vpop.f32.mrb[0].mxu0
  %2102 = vmatprep.mubr.bf16.mxu0 0
  %2103 = vmatmul.mubr.bf16.gmra.mrb[0].mxu0 %v1997
  %v2104 = vpop.f32.mrb[0].mxu0
  %v2105 = vadd.f32 0.0, %v2104
  %v2106 = vpop.f32.mrb[0].mxu0
  %v2107 = vpop.f32.mrb[0].mxu0
  %v2108 = vadd.f32 0.0, %v2107
  %v2109 = vpop.f32.mrb[0].mxu0
  %2110 = vmatprep.mubr.bf16.mxu0 0
  %2111 = vmatmul.mubr.bf16.gmra.mrb[0].mxu0 %v2000
  %v2112 = vpop.f32.mrb[0].mxu0
  %v2113 = vadd.f32 0.0, %v2112
  %v2114 = vpop.f32.mrb[0].mxu0
  %v2115 = vpop.f32.mrb[0].mxu0
  %v2116 = vadd.f32 0.0, %v2115
  %v2117 = vpop.f32.mrb[0].mxu0
  %2118 = vmatprep.mubr.bf16.mxu0 0
  %2119 = vmatmul.mubr.bf16.gmra.mrb[0].mxu0 %v2003
  %v2120 = vpop.f32.mrb[0].mxu0
  %v2121 = vadd.f32 0.0, %v2120
  %v2122 = vpop.f32.mrb[0].mxu0
  %v2123 = vpop.f32.mrb[0].mxu0
  %v2124 = vadd.f32 0.0, %v2123
  %v2125 = vpop.f32.mrb[0].mxu0
  %2126 = vmatprep.mubr.bf16.mxu0 0
  %2127 = vmatmul.mubr.bf16.gmra.mrb[0].mxu0 %v2006
  %v2128 = vpop.f32.mrb[0].mxu0
  %v2129 = vadd.f32 0.0, %v2128
  %v2130 = vpop.f32.mrb[0].mxu0
  %v2131 = vpop.f32.mrb[0].mxu0
  %v2132 = vadd.f32 0.0, %v2131
  %v2133 = vpop.f32.mrb[0].mxu0
  %2134 = vmatprep.mubr.bf16.mxu0 0
  %2135 = vmatmul.mubr.bf16.gmra.mrb[0].mxu0 %v2009
  %v2136 = vpop.f32.mrb[0].mxu0
  %v2137 = vadd.f32 0.0, %v2136
  %v2138 = vpop.f32.mrb[0].mxu0
  %v2139 = vpop.f32.mrb[0].mxu0
  %v2140 = vadd.f32 0.0, %v2139
  %v2141 = vpop.f32.mrb[0].mxu0
  %2142 = vmatprep.mubr.bf16.mxu0 0
  %2143 = vmatmul.mubr.bf16.gmra.mrb[0].mxu0 %v2012
  %v2144 = vpop.f32.mrb[0].mxu0
  %v2145 = vadd.f32 0.0, %v2144
  %v2146 = vpop.f32.mrb[0].mxu0
  %v2147 = vpop.f32.mrb[0].mxu0
  %v2148 = vpop.f32.mrb[0].mxu0
  %2149 = vdwg.mxu0
  %v2150 = vadd.f32 %v1880, %v2049
  %v2151 = vadd.f32 %v1881, %v2052
  %v2152 = vadd.f32 %v1882, %v2057
  %v2153 = vadd.f32 %v1883, %v2060
  %v2154 = vadd.f32 %v1884, %v2065
  %v2155 = vadd.f32 %v1885, %v2068
  %v2156 = vadd.f32 %v1886, %v2073
  %v2157 = vadd.f32 %v1887, %v2076
  %v2158 = vadd.f32 %v1888, %v2081
  %v2159 = vadd.f32 %v1889, %v2084
  %v2160 = vadd.f32 %v1890, %v2089
  %v2161 = vadd.f32 %v1891, %v2092
  %v2162 = vadd.f32 %v1892, %v2097
  %v2163 = vadd.f32 %v1893, %v2100
  %v2164 = vadd.f32 %v1894, %v2105
  %v2165 = vadd.f32 %v1895, %v2108
  %v2166 = vadd.f32 %v1896, %v2113
  %v2167 = vadd.f32 %v1897, %v2116
  %v2168 = vadd.f32 %v1898, %v2121
  %v2169 = vadd.f32 %v1899, %v2124
  %v2170 = vadd.f32 %v1900, %v2129
  %v2171 = vadd.f32 %v1901, %v2132
  %v2172 = vadd.f32 %v1902, %v2137
  %v2173 = vadd.f32 %v1903, %v2140
  %v2174 = vadd.f32 %v1904, %v2145
  %v2175 = vld [vmem:[%s0 + $0x1b] sm:$0xff]
  %v2176 = vld [vmem:[%s0 + $0x23] sm:$0xff]
  %v2177 = vld [vmem:[%s0 + $0x2b] sm:$0xff]
  %v2178 = vld [vmem:[%s0 + $0x33] sm:$0xff]
  %v2179 = vld [vmem:[%s0 + $0x3b] sm:$0xff]
  %v2180 = vld [vmem:[%s0 + $0x43] sm:$0xff]
  %v2181 = vld [vmem:[%s0 + $0x4b] sm:$0xff]
  %v2182 = vld [vmem:[%s0 + $0x53] sm:$0xff]
  %v2183 = vld [vmem:[%s0 + $0x5b] sm:$0xff]
  %v2184 = vld [vmem:[%s0 + $0x63] sm:$0xff]
  %v2185 = vld [vmem:[%s0 + $0x6b] sm:$0xff]
  %v2186 = vld [vmem:[%s0 + $0x73] sm:$0xff]
  %v2187 = vld [vmem:[%s0 + $0x7b] sm:$0xff]
  %v2188 = vld [vmem:[%s0 + $0x83] sm:$0xff]
  %v2189 = vld [vmem:[%s0 + $0x8b] sm:$0xff]
  %v2190 = vld [vmem:[%s0 + $0x93] sm:$0xff]
  %v2191 = vld [vmem:[%s0 + $0x9b] sm:$0xff]
  %v2192 = vld [vmem:[%s0 + $0xa3] sm:$0xff]
  %v2193 = vld [vmem:[%s0 + $0xab] sm:$0xff]
  %v2194 = vld [vmem:[%s0 + $0xb3] sm:$0xff]
  %v2195 = vld [vmem:[%s0 + $0xbb] sm:$0xff]
  %v2196 = vld [vmem:[%s0 + $0xc3] sm:$0xff]
  %v2197 = vld [vmem:[%s0 + $0xcb] sm:$0xff]
  %v2198 = vld [vmem:[%s0 + $0xd3] sm:$0xff]
  %v2199 = vld [vmem:[%s0 + $0xdb] sm:$0xff]
  %v2200 = vpack.c.bf16 %v2176, %v2175
  %v2201 = vpack.c.bf16 %v2178, %v2177
  %v2202 = vpack.c.bf16 %v2180, %v2179
  %v2203 = vpack.c.bf16 %v2182, %v2181
  %v2204 = vpack.c.bf16 %v2184, %v2183
  %v2205 = vpack.c.bf16 %v2186, %v2185
  %v2206 = vpack.c.bf16 %v2188, %v2187
  %v2207 = vpack.c.bf16 %v2190, %v2189
  %v2208 = vpack.c.bf16 %v2192, %v2191
  %v2209 = vpack.c.bf16 %v2194, %v2193
  %v2210 = vpack.c.bf16 %v2196, %v2195
  %v2211 = vpack.c.bf16 %v2198, %v2197
  %v2212 = vpack.c.bf16 %v2199, %v2199
  %v2213 = vld [vmem:[%s1 + $0x100] sm:$0xf]
  %v2214 = vld [vmem:[%s1 + $0x104] sm:$0xf]
  %v2215 = vld [vmem:[%s1 + $0x108] sm:$0xf]
  %v2216 = vld [vmem:[%s1 + $0x10c] sm:$0xf]
  %v2217 = vld [vmem:[%s1 + $0x110] sm:$0xf]
  %v2218 = vld [vmem:[%s1 + $0x114] sm:$0xf]
  %v2219 = vld [vmem:[%s1 + $0x118] sm:$0xf]
  %v2220 = vld [vmem:[%s1 + $0x11c] sm:$0xf]
  %v2229 = vunpack.c.l.b16 %v2213
  %v2230 = vunpack.c.l.b16 %v2214
  %v2231 = vunpack.c.l.b16 %v2215
  %v2232 = vunpack.c.l.b16 %v2216
  %v2233 = vunpack.c.l.b16 %v2217
  %v2234 = vunpack.c.l.b16 %v2218
  %v2235 = vunpack.c.l.b16 %v2219
  %v2236 = vunpack.c.l.b16 %v2220
  %v2237 = vpack.c.b16 %v2230, %v2229
  %v2238 = vpack.c.b16 %v2232, %v2231
  %v2239 = vpack.c.b16 %v2234, %v2233
  %v2240 = vpack.c.b16 %v2236, %v2235
  %v2246 = vsel %vm180, %v2200, 0
  %v2249 = vsel %vm180, %v2201, 0
  %v2252 = vsel %vm180, %v2202, 0
  %v2255 = vsel %vm180, %v2203, 0
  %v2258 = vsel %vm180, %v2204, 0
  %v2261 = vsel %vm180, %v2205, 0
  %v2264 = vsel %vm180, %v2206, 0
  %v2267 = vsel %vm180, %v2207, 0
  %v2270 = vsel %vm180, %v2208, 0
  %v2273 = vsel %vm180, %v2209, 0
  %v2276 = vsel %vm180, %v2210, 0
  %v2279 = vsel %vm180, %v2211, 0
  %v2282 = vsel %vm180, %v2212, 0
  %2284 = vmatprep.subr.bf16.mxu0 0
  %2285 = vmatpush1.bf16.msra.mxu0 %v2237
  %2286 = vmatprep.subr.bf16.mxu0 0
  %2287 = vmatpush1.bf16.msra.mxu0 %v2238
  %2288 = vmatprep.subr.bf16.mxu0 0
  %2289 = vmatpush1.bf16.msra.mxu0 %v2239
  %2290 = vmatprep.subr.bf16.mxu0 0
  %2291 = vmatpush1.bf16.msra.mxu0 %v2240
  %2292 = vmatprep.subr.bf16.mxu0 0
  %2293 = vmatpush1.bf16.msra.mxu0 0
  %2294 = vmatprep.subr.bf16.mxu0 0
  %2295 = vmatpush1.bf16.msra.mxu0 0
  %2296 = vmatprep.subr.bf16.mxu0 0
  %2297 = vmatpush1.bf16.msra.mxu0 0
  %2298 = vmatprep.subr.bf16.mxu0 0
  %2299 = vmatpush1.bf16.msra.mxu0 0
  %2300 = vmatprep.subr.bf16.mxu0 0
  %2301 = vmatpush1.bf16.msra.mxu0 0
  %2302 = vmatprep.subr.bf16.mxu0 0
  %2303 = vmatpush1.bf16.msra.mxu0 0
  %2304 = vmatprep.subr.bf16.mxu0 0
  %2305 = vmatpush1.bf16.msra.mxu0 0
  %2306 = vmatprep.subr.bf16.mxu0 0
  %2307 = vmatpush1.bf16.msra.mxu0 0
  %2308 = vmatprep.subr.bf16.mxu0 0
  %2309 = vmatpush1.bf16.msra.mxu0 0
  %2310 = vmatprep.subr.bf16.mxu0 0
  %2311 = vmatpush1.bf16.msra.mxu0 0
  %2312 = vmatprep.subr.bf16.mxu0 0
  %2313 = vmatpush1.bf16.msra.mxu0 0
  %2314 = vmatprep.subr.bf16.mxu0 0
  %2315 = vmatpush1.bf16.msra.mxu0 0
  %2316 = vmatprep.mubr.bf16.mxu0 0
  %2317 = vmatmul.mubr.bf16.gmra.mrb[0].mxu0 %v2246
  %v2318 = vpop.f32.mrb[0].mxu0
  %v2319 = vadd.f32 0.0, %v2318
  %v2320 = vpop.f32.mrb[0].mxu0
  %v2321 = vpop.f32.mrb[0].mxu0
  %v2322 = vadd.f32 0.0, %v2321
  %v2323 = vpop.f32.mrb[0].mxu0
  %2324 = vmatprep.mubr.bf16.mxu0 0
  %2325 = vmatmul.mubr.bf16.gmra.mrb[0].mxu0 %v2249
  %v2326 = vpop.f32.mrb[0].mxu0
  %v2327 = vadd.f32 0.0, %v2326
  %v2328 = vpop.f32.mrb[0].mxu0
  %v2329 = vpop.f32.mrb[0].mxu0
  %v2330 = vadd.f32 0.0, %v2329
  %v2331 = vpop.f32.mrb[0].mxu0
  %2332 = vmatprep.mubr.bf16.mxu0 0
  %2333 = vmatmul.mubr.bf16.gmra.mrb[0].mxu0 %v2252
  %v2334 = vpop.f32.mrb[0].mxu0
  %v2335 = vadd.f32 0.0, %v2334
  %v2336 = vpop.f32.mrb[0].mxu0
  %v2337 = vpop.f32.mrb[0].mxu0
  %v2338 = vadd.f32 0.0, %v2337
  %v2339 = vpop.f32.mrb[0].mxu0
  %2340 = vmatprep.mubr.bf16.mxu0 0
  %2341 = vmatmul.mubr.bf16.gmra.mrb[0].mxu0 %v2255
  %v2342 = vpop.f32.mrb[0].mxu0
  %v2343 = vadd.f32 0.0, %v2342
  %v2344 = vpop.f32.mrb[0].mxu0
  %v2345 = vpop.f32.mrb[0].mxu0
  %v2346 = vadd.f32 0.0, %v2345
  %v2347 = vpop.f32.mrb[0].mxu0
  %2348 = vmatprep.mubr.bf16.mxu0 0
  %2349 = vmatmul.mubr.bf16.gmra.mrb[0].mxu0 %v2258
  %v2350 = vpop.f32.mrb[0].mxu0
  %v2351 = vadd.f32 0.0, %v2350
  %v2352 = vpop.f32.mrb[0].mxu0
  %v2353 = vpop.f32.mrb[0].mxu0
  %v2354 = vadd.f32 0.0, %v2353
  %v2355 = vpop.f32.mrb[0].mxu0
  %2356 = vmatprep.mubr.bf16.mxu0 0
  %2357 = vmatmul.mubr.bf16.gmra.mrb[0].mxu0 %v2261
  %v2358 = vpop.f32.mrb[0].mxu0
  %v2359 = vadd.f32 0.0, %v2358
  %v2360 = vpop.f32.mrb[0].mxu0
  %v2361 = vpop.f32.mrb[0].mxu0
  %v2362 = vadd.f32 0.0, %v2361
  %v2363 = vpop.f32.mrb[0].mxu0
  %2364 = vmatprep.mubr.bf16.mxu0 0
  %2365 = vmatmul.mubr.bf16.gmra.mrb[0].mxu0 %v2264
  %v2366 = vpop.f32.mrb[0].mxu0
  %v2367 = vadd.f32 0.0, %v2366
  %v2368 = vpop.f32.mrb[0].mxu0
  %v2369 = vpop.f32.mrb[0].mxu0
  %v2370 = vadd.f32 0.0, %v2369
  %v2371 = vpop.f32.mrb[0].mxu0
  %2372 = vmatprep.mubr.bf16.mxu0 0
  %2373 = vmatmul.mubr.bf16.gmra.mrb[0].mxu0 %v2267
  %v2374 = vpop.f32.mrb[0].mxu0
  %v2375 = vadd.f32 0.0, %v2374
  %v2376 = vpop.f32.mrb[0].mxu0
  %v2377 = vpop.f32.mrb[0].mxu0
  %v2378 = vadd.f32 0.0, %v2377
  %v2379 = vpop.f32.mrb[0].mxu0
  %2380 = vmatprep.mubr.bf16.mxu0 0
  %2381 = vmatmul.mubr.bf16.gmra.mrb[0].mxu0 %v2270
  %v2382 = vpop.f32.mrb[0].mxu0
  %v2383 = vadd.f32 0.0, %v2382
  %v2384 = vpop.f32.mrb[0].mxu0
  %v2385 = vpop.f32.mrb[0].mxu0
  %v2386 = vadd.f32 0.0, %v2385
  %v2387 = vpop.f32.mrb[0].mxu0
  %2388 = vmatprep.mubr.bf16.mxu0 0
  %2389 = vmatmul.mubr.bf16.gmra.mrb[0].mxu0 %v2273
  %v2390 = vpop.f32.mrb[0].mxu0
  %v2391 = vadd.f32 0.0, %v2390
  %v2392 = vpop.f32.mrb[0].mxu0
  %v2393 = vpop.f32.mrb[0].mxu0
  %v2394 = vadd.f32 0.0, %v2393
  %v2395 = vpop.f32.mrb[0].mxu0
  %2396 = vmatprep.mubr.bf16.mxu0 0
  %2397 = vmatmul.mubr.bf16.gmra.mrb[0].mxu0 %v2276
  %v2398 = vpop.f32.mrb[0].mxu0
  %v2399 = vadd.f32 0.0, %v2398
  %v2400 = vpop.f32.mrb[0].mxu0
  %v2401 = vpop.f32.mrb[0].mxu0
  %v2402 = vadd.f32 0.0, %v2401
  %v2403 = vpop.f32.mrb[0].mxu0
  %2404 = vmatprep.mubr.bf16.mxu0 0
  %2405 = vmatmul.mubr.bf16.gmra.mrb[0].mxu0 %v2279
  %v2406 = vpop.f32.mrb[0].mxu0
  %v2407 = vadd.f32 0.0, %v2406
  %v2408 = vpop.f32.mrb[0].mxu0
  %v2409 = vpop.f32.mrb[0].mxu0
  %v2410 = vadd.f32 0.0, %v2409
  %v2411 = vpop.f32.mrb[0].mxu0
  %2412 = vmatprep.mubr.bf16.mxu0 0
  %2413 = vmatmul.mubr.bf16.gmra.mrb[0].mxu0 %v2282
  %v2414 = vpop.f32.mrb[0].mxu0
  %v2415 = vadd.f32 0.0, %v2414
  %v2416 = vpop.f32.mrb[0].mxu0
  %v2417 = vpop.f32.mrb[0].mxu0
  %v2418 = vpop.f32.mrb[0].mxu0
  %2419 = vdwg.mxu0
  %v2420 = vadd.f32 %v2150, %v2319
  %v2421 = vadd.f32 %v2151, %v2322
  %v2422 = vadd.f32 %v2152, %v2327
  %v2423 = vadd.f32 %v2153, %v2330
  %v2424 = vadd.f32 %v2154, %v2335
  %v2425 = vadd.f32 %v2155, %v2338
  %v2426 = vadd.f32 %v2156, %v2343
  %v2427 = vadd.f32 %v2157, %v2346
  %v2428 = vadd.f32 %v2158, %v2351
  %v2429 = vadd.f32 %v2159, %v2354
  %v2430 = vadd.f32 %v2160, %v2359
  %v2431 = vadd.f32 %v2161, %v2362
  %v2432 = vadd.f32 %v2162, %v2367
  %v2433 = vadd.f32 %v2163, %v2370
  %v2434 = vadd.f32 %v2164, %v2375
  %v2435 = vadd.f32 %v2165, %v2378
  %v2436 = vadd.f32 %v2166, %v2383
  %v2437 = vadd.f32 %v2167, %v2386
  %v2438 = vadd.f32 %v2168, %v2391
  %v2439 = vadd.f32 %v2169, %v2394
  %v2440 = vadd.f32 %v2170, %v2399
  %v2441 = vadd.f32 %v2171, %v2402
  %v2442 = vadd.f32 %v2172, %v2407
  %v2443 = vadd.f32 %v2173, %v2410
  %v2444 = vadd.f32 %v2174, %v2415
  %2446 = vset.pattern.permute.xlu0 0
  %2447 = vperm.xlu0 %2446, %v39
  %v2448 = vpop.permute.xlu0 %2447
  %2451 = vset.pattern.permute.xlu0 0
  %2452 = vperm.xlu0 %2451, %v40
  %v2453 = vpop.permute.xlu0 %2452
  %2456 = vset.pattern.permute.xlu0 0
  %2457 = vperm.xlu0 %2456, %v41
  %v2458 = vpop.permute.xlu0 %2457
  %2461 = vset.pattern.permute.xlu0 0
  %2462 = vperm.xlu0 %2461, %v42
  %v2463 = vpop.permute.xlu0 %2462
  %2466 = vset.pattern.permute.xlu0 0
  %2467 = vperm.xlu0 %2466, %v43
  %v2468 = vpop.permute.xlu0 %2467
  %2471 = vset.pattern.permute.xlu0 0
  %2472 = vperm.xlu0 %2471, %v44
  %v2473 = vpop.permute.xlu0 %2472
  %2476 = vset.pattern.permute.xlu0 0
  %2477 = vperm.xlu0 %2476, %v45
  %v2478 = vpop.permute.xlu0 %2477
  %2481 = vset.pattern.permute.xlu0 0
  %2482 = vperm.xlu0 %2481, %v46
  %v2483 = vpop.permute.xlu0 %2482
  %2486 = vset.pattern.permute.xlu0 0
  %2487 = vperm.xlu0 %2486, %v47
  %v2488 = vpop.permute.xlu0 %2487
  %2491 = vset.pattern.permute.xlu0 0
  %2492 = vperm.xlu0 %2491, %v48
  %v2493 = vpop.permute.xlu0 %2492
  %2496 = vset.pattern.permute.xlu0 0
  %2497 = vperm.xlu0 %2496, %v49
  %v2498 = vpop.permute.xlu0 %2497
  %2501 = vset.pattern.permute.xlu0 0
  %2502 = vperm.xlu0 %2501, %v50
  %v2503 = vpop.permute.xlu0 %2502
  %2506 = vset.pattern.permute.xlu0 0
  %2507 = vperm.xlu0 %2506, %v51
  %v2508 = vpop.permute.xlu0 %2507
  %2511 = vset.pattern.permute.xlu0 0
  %2512 = vperm.xlu0 %2511, %v52
  %v2513 = vpop.permute.xlu0 %2512
  %2516 = vset.pattern.permute.xlu0 0
  %2517 = vperm.xlu0 %2516, %v53
  %v2518 = vpop.permute.xlu0 %2517
  %2521 = vset.pattern.permute.xlu0 0
  %2522 = vperm.xlu0 %2521, %v54
  %v2523 = vpop.permute.xlu0 %2522
  %2526 = vset.pattern.permute.xlu0 0
  %2527 = vperm.xlu0 %2526, %v55
  %v2528 = vpop.permute.xlu0 %2527
  %2531 = vset.pattern.permute.xlu0 0
  %2532 = vperm.xlu0 %2531, %v56
  %v2533 = vpop.permute.xlu0 %2532
  %2536 = vset.pattern.permute.xlu0 0
  %2537 = vperm.xlu0 %2536, %v57
  %v2538 = vpop.permute.xlu0 %2537
  %2541 = vset.pattern.permute.xlu0 0
  %2542 = vperm.xlu0 %2541, %v58
  %v2543 = vpop.permute.xlu0 %2542
  %2546 = vset.pattern.permute.xlu0 0
  %2547 = vperm.xlu0 %2546, %v59
  %v2548 = vpop.permute.xlu0 %2547
  %2551 = vset.pattern.permute.xlu0 0
  %2552 = vperm.xlu0 %2551, %v60
  %v2553 = vpop.permute.xlu0 %2552
  %2556 = vset.pattern.permute.xlu0 0
  %2557 = vperm.xlu0 %2556, %v61
  %v2558 = vpop.permute.xlu0 %2557
  %2561 = vset.pattern.permute.xlu0 0
  %2562 = vperm.xlu0 %2561, %v62
  %v2563 = vpop.permute.xlu0 %2562
  %2566 = vset.pattern.permute.xlu0 0
  %2567 = vperm.xlu0 %2566, %v63
  %v2568 = vpop.permute.xlu0 %2567
  %v2570 = vmul.f32 %v2420, %v2448
  %v2571 = vmul.f32 %v2421, %v2453
  %v2572 = vmul.f32 %v2422, %v2458
  %v2573 = vmul.f32 %v2423, %v2463
  %v2574 = vmul.f32 %v2424, %v2468
  %v2575 = vmul.f32 %v2425, %v2473
  %v2576 = vmul.f32 %v2426, %v2478
  %v2577 = vmul.f32 %v2427, %v2483
  %v2578 = vmul.f32 %v2428, %v2488
  %v2579 = vmul.f32 %v2429, %v2493
  %v2580 = vmul.f32 %v2430, %v2498
  %v2581 = vmul.f32 %v2431, %v2503
  %v2582 = vmul.f32 %v2432, %v2508
  %v2583 = vmul.f32 %v2433, %v2513
  %v2584 = vmul.f32 %v2434, %v2518
  %v2585 = vmul.f32 %v2435, %v2523
  %v2586 = vmul.f32 %v2436, %v2528
  %v2587 = vmul.f32 %v2437, %v2533
  %v2588 = vmul.f32 %v2438, %v2538
  %v2589 = vmul.f32 %v2439, %v2543
  %v2590 = vmul.f32 %v2440, %v2548
  %v2591 = vmul.f32 %v2441, %v2553
  %v2592 = vmul.f32 %v2442, %v2558
  %v2593 = vmul.f32 %v2443, %v2563
  %v2594 = vmul.f32 %v2444, %v2568
  %v2595 = vadd.f32 %v2570, %v2571
  %v2596 = vadd.f32 %v2595, %v2572
  %v2597 = vadd.f32 %v2596, %v2573
  %v2598 = vadd.f32 %v2597, %v2574
  %v2599 = vadd.f32 %v2598, %v2575
  %v2600 = vadd.f32 %v2599, %v2576
  %v2601 = vadd.f32 %v2600, %v2577
  %v2602 = vadd.f32 %v2601, %v2578
  %v2603 = vadd.f32 %v2602, %v2579
  %v2604 = vadd.f32 %v2603, %v2580
  %v2605 = vadd.f32 %v2604, %v2581
  %v2606 = vadd.f32 %v2605, %v2582
  %v2607 = vadd.f32 %v2606, %v2583
  %v2608 = vadd.f32 %v2607, %v2584
  %v2609 = vadd.f32 %v2608, %v2585
  %v2610 = vadd.f32 %v2609, %v2586
  %v2611 = vadd.f32 %v2610, %v2587
  %v2612 = vadd.f32 %v2611, %v2588
  %v2613 = vadd.f32 %v2612, %v2589
  %v2614 = vadd.f32 %v2613, %v2590
  %v2615 = vadd.f32 %v2614, %v2591
  %v2616 = vadd.f32 %v2615, %v2592
  %v2617 = vadd.f32 %v2616, %v2593
  %v2618 = vadd.f32 %v2617, %v2594
  %v2619 = vrot.slane %v2618, 4
  %v2620 = vadd.f32 %v2618, %v2619
  %v2621 = vrot.slane %v2620, 2
  %v2622 = vadd.f32 %v2620, %v2621
  %v2623 = vrot.slane %v2622, 1
  %v2624 = vadd.f32 %v2622, %v2623
  %v2625 = vmul.f32 %v2624, 0.0078125
  %v2626 = vsub.f32 %v2570, %v2625
  %v2627 = vsub.f32 %v2571, %v2625
  %v2628 = vsub.f32 %v2572, %v2625
  %v2629 = vsub.f32 %v2573, %v2625
  %v2630 = vsub.f32 %v2574, %v2625
  %v2631 = vsub.f32 %v2575, %v2625
  %v2632 = vsub.f32 %v2576, %v2625
  %v2633 = vsub.f32 %v2577, %v2625
  %v2634 = vsub.f32 %v2578, %v2625
  %v2635 = vsub.f32 %v2579, %v2625
  %v2636 = vsub.f32 %v2580, %v2625
  %v2637 = vsub.f32 %v2581, %v2625
  %v2638 = vsub.f32 %v2582, %v2625
  %v2639 = vsub.f32 %v2583, %v2625
  %v2640 = vsub.f32 %v2584, %v2625
  %v2641 = vsub.f32 %v2585, %v2625
  %v2642 = vsub.f32 %v2586, %v2625
  %v2643 = vsub.f32 %v2587, %v2625
  %v2644 = vsub.f32 %v2588, %v2625
  %v2645 = vsub.f32 %v2589, %v2625
  %v2646 = vsub.f32 %v2590, %v2625
  %v2647 = vsub.f32 %v2591, %v2625
  %v2648 = vsub.f32 %v2592, %v2625
  %v2649 = vsub.f32 %v2593, %v2625
  %v2650 = vsub.f32 %v2594, %v2625
  %v2651 = vmul.f32 %v2626, %v2448
  %v2652 = vmul.f32 %v2627, %v2453
  %v2653 = vmul.f32 %v2628, %v2458
  %v2654 = vmul.f32 %v2629, %v2463
  %v2655 = vmul.f32 %v2630, %v2468
  %v2656 = vmul.f32 %v2631, %v2473
  %v2657 = vmul.f32 %v2632, %v2478
  %v2658 = vmul.f32 %v2633, %v2483
  %v2659 = vmul.f32 %v2634, %v2488
  %v2660 = vmul.f32 %v2635, %v2493
  %v2661 = vmul.f32 %v2636, %v2498
  %v2662 = vmul.f32 %v2637, %v2503
  %v2663 = vmul.f32 %v2638, %v2508
  %v2664 = vmul.f32 %v2639, %v2513
  %v2665 = vmul.f32 %v2640, %v2518
  %v2666 = vmul.f32 %v2641, %v2523
  %v2667 = vmul.f32 %v2642, %v2528
  %v2668 = vmul.f32 %v2643, %v2533
  %v2669 = vmul.f32 %v2644, %v2538
  %v2670 = vmul.f32 %v2645, %v2543
  %v2671 = vmul.f32 %v2646, %v2548
  %v2672 = vmul.f32 %v2647, %v2553
  %v2673 = vmul.f32 %v2648, %v2558
  %v2674 = vmul.f32 %v2649, %v2563
  %v2675 = vmul.f32 %v2650, %v2568
  %v2676 = vmul.f32 %v2651, %v2651
  %v2677 = vmul.f32 %v2652, %v2652
  %v2678 = vmul.f32 %v2653, %v2653
  %v2679 = vmul.f32 %v2654, %v2654
  %v2680 = vmul.f32 %v2655, %v2655
  %v2681 = vmul.f32 %v2656, %v2656
  %v2682 = vmul.f32 %v2657, %v2657
  %v2683 = vmul.f32 %v2658, %v2658
  %v2684 = vmul.f32 %v2659, %v2659
  %v2685 = vmul.f32 %v2660, %v2660
  %v2686 = vmul.f32 %v2661, %v2661
  %v2687 = vmul.f32 %v2662, %v2662
  %v2688 = vmul.f32 %v2663, %v2663
  %v2689 = vmul.f32 %v2664, %v2664
  %v2690 = vmul.f32 %v2665, %v2665
  %v2691 = vmul.f32 %v2666, %v2666
  %v2692 = vmul.f32 %v2667, %v2667
  %v2693 = vmul.f32 %v2668, %v2668
  %v2694 = vmul.f32 %v2669, %v2669
  %v2695 = vmul.f32 %v2670, %v2670
  %v2696 = vmul.f32 %v2671, %v2671
  %v2697 = vmul.f32 %v2672, %v2672
  %v2698 = vmul.f32 %v2673, %v2673
  %v2699 = vmul.f32 %v2674, %v2674
  %v2700 = vmul.f32 %v2675, %v2675
  %v2701 = vadd.f32 %v2676, %v2677
  %v2702 = vadd.f32 %v2701, %v2678
  %v2703 = vadd.f32 %v2702, %v2679
  %v2704 = vadd.f32 %v2703, %v2680
  %v2705 = vadd.f32 %v2704, %v2681
  %v2706 = vadd.f32 %v2705, %v2682
  %v2707 = vadd.f32 %v2706, %v2683
  %v2708 = vadd.f32 %v2707, %v2684
  %v2709 = vadd.f32 %v2708, %v2685
  %v2710 = vadd.f32 %v2709, %v2686
  %v2711 = vadd.f32 %v2710, %v2687
  %v2712 = vadd.f32 %v2711, %v2688
  %v2713 = vadd.f32 %v2712, %v2689
  %v2714 = vadd.f32 %v2713, %v2690
  %v2715 = vadd.f32 %v2714, %v2691
  %v2716 = vadd.f32 %v2715, %v2692
  %v2717 = vadd.f32 %v2716, %v2693
  %v2718 = vadd.f32 %v2717, %v2694
  %v2719 = vadd.f32 %v2718, %v2695
  %v2720 = vadd.f32 %v2719, %v2696
  %v2721 = vadd.f32 %v2720, %v2697
  %v2722 = vadd.f32 %v2721, %v2698
  %v2723 = vadd.f32 %v2722, %v2699
  %v2724 = vadd.f32 %v2723, %v2700
  %v2725 = vrot.slane %v2724, 4
  %v2726 = vadd.f32 %v2724, %v2725
  %v2727 = vrot.slane %v2726, 2
  %v2728 = vadd.f32 %v2726, %v2727
  %v2729 = vrot.slane %v2728, 1
  %v2730 = vadd.f32 %v2728, %v2729
  %v2731 = vmul.f32 %v2730, 0.0078125
  %v2732 = vld [vmem:[%s2] sm:$0x1]
  %v2733 = vadd.f32 %v2731, 1e-05
  %v2734 = vrsqrt.pop %v2733
  %v2735 = vmul.f32 %v2732, %v2734
  %v2737 = vlaneseq
  %v2738 = vshrl.u32 %v2737, 7
  %v2739 = vsub.s32 0, %v2738
  %v2740 = vrot.slane %v2735, %v2739
  %v2742 = vmul.f32 %v2651, %v2740
  %v2743 = vmul.f32 %v2652, %v2740
  %v2744 = vmul.f32 %v2653, %v2740
  %v2745 = vmul.f32 %v2654, %v2740
  %v2746 = vmul.f32 %v2655, %v2740
  %v2747 = vmul.f32 %v2656, %v2740
  %v2748 = vmul.f32 %v2657, %v2740
  %v2749 = vmul.f32 %v2658, %v2740
  %v2750 = vmul.f32 %v2659, %v2740
  %v2751 = vmul.f32 %v2660, %v2740
  %v2752 = vmul.f32 %v2661, %v2740
  %v2753 = vmul.f32 %v2662, %v2740
  %v2754 = vmul.f32 %v2663, %v2740
  %v2755 = vmul.f32 %v2664, %v2740
  %v2756 = vmul.f32 %v2665, %v2740
  %v2757 = vmul.f32 %v2666, %v2740
  %v2758 = vmul.f32 %v2667, %v2740
  %v2759 = vmul.f32 %v2668, %v2740
  %v2760 = vmul.f32 %v2669, %v2740
  %v2761 = vmul.f32 %v2670, %v2740
  %v2762 = vmul.f32 %v2671, %v2740
  %v2763 = vmul.f32 %v2672, %v2740
  %v2764 = vmul.f32 %v2673, %v2740
  %v2765 = vmul.f32 %v2674, %v2740
  %v2766 = vmul.f32 %v2675, %v2740
  %v2767 = vld [vmem:[%s3] sm:$0x1]
  %v2769 = vlaneseq
  %v2770 = vshrl.u32 %v2769, 7
  %v2771 = vsub.s32 0, %v2770
  %v2772 = vrot.slane %v2767, %v2771
  %v2774 = vadd.f32 %v2742, %v2772
  %v2775 = vadd.f32 %v2743, %v2772
  %v2776 = vadd.f32 %v2744, %v2772
  %v2777 = vadd.f32 %v2745, %v2772
  %v2778 = vadd.f32 %v2746, %v2772
  %v2779 = vadd.f32 %v2747, %v2772
  %v2780 = vadd.f32 %v2748, %v2772
  %v2781 = vadd.f32 %v2749, %v2772
  %v2782 = vadd.f32 %v2750, %v2772
  %v2783 = vadd.f32 %v2751, %v2772
  %v2784 = vadd.f32 %v2752, %v2772
  %v2785 = vadd.f32 %v2753, %v2772
  %v2786 = vadd.f32 %v2754, %v2772
  %v2787 = vadd.f32 %v2755, %v2772
  %v2788 = vadd.f32 %v2756, %v2772
  %v2789 = vadd.f32 %v2757, %v2772
  %v2790 = vadd.f32 %v2758, %v2772
  %v2791 = vadd.f32 %v2759, %v2772
  %v2792 = vadd.f32 %v2760, %v2772
  %v2793 = vadd.f32 %v2761, %v2772
  %v2794 = vadd.f32 %v2762, %v2772
  %v2795 = vadd.f32 %v2763, %v2772
  %v2796 = vadd.f32 %v2764, %v2772
  %v2797 = vadd.f32 %v2765, %v2772
  %v2798 = vadd.f32 %v2766, %v2772
  %v2799 = vmul.f32 %v2774, %v2448
  %v2800 = vmul.f32 %v2775, %v2453
  %v2801 = vmul.f32 %v2776, %v2458
  %v2802 = vmul.f32 %v2777, %v2463
  %v2803 = vmul.f32 %v2778, %v2468
  %v2804 = vmul.f32 %v2779, %v2473
  %v2805 = vmul.f32 %v2780, %v2478
  %v2806 = vmul.f32 %v2781, %v2483
  %v2807 = vmul.f32 %v2782, %v2488
  %v2808 = vmul.f32 %v2783, %v2493
  %v2809 = vmul.f32 %v2784, %v2498
  %v2810 = vmul.f32 %v2785, %v2503
  %v2811 = vmul.f32 %v2786, %v2508
  %v2812 = vmul.f32 %v2787, %v2513
  %v2813 = vmul.f32 %v2788, %v2518
  %v2814 = vmul.f32 %v2789, %v2523
  %v2815 = vmul.f32 %v2790, %v2528
  %v2816 = vmul.f32 %v2791, %v2533
  %v2817 = vmul.f32 %v2792, %v2538
  %v2818 = vmul.f32 %v2793, %v2543
  %v2819 = vmul.f32 %v2794, %v2548
  %v2820 = vmul.f32 %v2795, %v2553
  %v2821 = vmul.f32 %v2796, %v2558
  %v2822 = vmul.f32 %v2797, %v2563
  %v2823 = vmul.f32 %v2798, %v2568
  %v2824 = vmax.f32 %v2799, 0.0
  %v2825 = vmax.f32 %v2800, 0.0
  %v2826 = vmax.f32 %v2801, 0.0
  %v2827 = vmax.f32 %v2802, 0.0
  %v2828 = vmax.f32 %v2803, 0.0
  %v2829 = vmax.f32 %v2804, 0.0
  %v2830 = vmax.f32 %v2805, 0.0
  %v2831 = vmax.f32 %v2806, 0.0
  %v2832 = vmax.f32 %v2807, 0.0
  %v2833 = vmax.f32 %v2808, 0.0
  %v2834 = vmax.f32 %v2809, 0.0
  %v2835 = vmax.f32 %v2810, 0.0
  %v2836 = vmax.f32 %v2811, 0.0
  %v2837 = vmax.f32 %v2812, 0.0
  %v2838 = vmax.f32 %v2813, 0.0
  %v2839 = vmax.f32 %v2814, 0.0
  %v2840 = vmax.f32 %v2815, 0.0
  %v2841 = vmax.f32 %v2816, 0.0
  %v2842 = vmax.f32 %v2817, 0.0
  %v2843 = vmax.f32 %v2818, 0.0
  %v2844 = vmax.f32 %v2819, 0.0
  %v2845 = vmax.f32 %v2820, 0.0
  %v2846 = vmax.f32 %v2821, 0.0
  %v2847 = vmax.f32 %v2822, 0.0
  %v2848 = vmax.f32 %v2823, 0.0
  %2849 = vst [vmem:[#allocation2] sm:$0xff] 0.0
  %2850 = vst [vmem:[#allocation2 + $0x8] sm:$0xff] 0.0
  %2851 = vst [vmem:[#allocation2 + $0x10] sm:$0xff] 0.0
  %2852 = vst [vmem:[#allocation2 + $0x18] sm:$0xff] 0.0
  %2853 = vst [vmem:[#allocation2 + $0x20] sm:$0xff] 0.0
  %2854 = vst [vmem:[#allocation2 + $0x28] sm:$0xff] 0.0
  %2855 = vst [vmem:[#allocation2 + $0x30] sm:$0xff] 0.0
  %2856 = vst [vmem:[#allocation2 + $0x38] sm:$0xff] 0.0
  %2857 = vst [vmem:[#allocation2 + $0x40] sm:$0xff] 0.0
  %2858 = vst [vmem:[#allocation2 + $0x48] sm:$0xff] 0.0
  %2859 = vst [vmem:[#allocation2 + $0x50] sm:$0xff] 0.0
  %2860 = vst [vmem:[#allocation2 + $0x58] sm:$0xff] 0.0
  %2861 = vst [vmem:[#allocation2 + $0x60] sm:$0xff] 0.0
  %2862 = vst [vmem:[#allocation2 + $0x68] sm:$0xff] 0.0
  %2863 = vst [vmem:[#allocation2 + $0x70] sm:$0xff] 0.0
  %2864 = vst [vmem:[#allocation2 + $0x78] sm:$0xff] 0.0
  %2865 = vst [vmem:[#allocation2 + $0x80] sm:$0xff] 0.0
  %2866 = vst [vmem:[#allocation2 + $0x88] sm:$0xff] 0.0
  %2867 = vst [vmem:[#allocation2 + $0x90] sm:$0xff] 0.0
  %2868 = vst [vmem:[#allocation2 + $0x98] sm:$0xff] 0.0
  %2869 = vst [vmem:[#allocation2 + $0xa0] sm:$0xff] 0.0
  %2870 = vst [vmem:[#allocation2 + $0xa8] sm:$0xff] 0.0
  %2871 = vst [vmem:[#allocation2 + $0xb0] sm:$0xff] 0.0
  %2872 = vst [vmem:[#allocation2 + $0xb8] sm:$0xff] 0.0
  %2873 = vst [vmem:[#allocation2 + $0xc0] sm:$0xff] 0.0
  %2874 = vst [vmem:[#allocation2 + $0xc8] sm:$0xff] 0.0
  %2875 = vst [vmem:[#allocation2 + $0xd0] sm:$0xff] 0.0
  %2876 = vst [vmem:[#allocation2 + $0xd8] sm:$0xff] 0.0
  %2877 = vst [vmem:[#allocation2 + $0xe0] sm:$0xff] 0.0
  %2878 = vst [vmem:[#allocation2 + $0x10] sm:$0xff] %v2824
  %2879 = vst [vmem:[#allocation2 + $0x18] sm:$0xff] %v2825
  %2880 = vst [vmem:[#allocation2 + $0x20] sm:$0xff] %v2826
  %2881 = vst [vmem:[#allocation2 + $0x28] sm:$0xff] %v2827
  %2882 = vst [vmem:[#allocation2 + $0x30] sm:$0xff] %v2828
  %2883 = vst [vmem:[#allocation2 + $0x38] sm:$0xff] %v2829
  %2884 = vst [vmem:[#allocation2 + $0x40] sm:$0xff] %v2830
  %2885 = vst [vmem:[#allocation2 + $0x48] sm:$0xff] %v2831
  %2886 = vst [vmem:[#allocation2 + $0x50] sm:$0xff] %v2832
  %2887 = vst [vmem:[#allocation2 + $0x58] sm:$0xff] %v2833
  %2888 = vst [vmem:[#allocation2 + $0x60] sm:$0xff] %v2834
  %2889 = vst [vmem:[#allocation2 + $0x68] sm:$0xff] %v2835
  %2890 = vst [vmem:[#allocation2 + $0x70] sm:$0xff] %v2836
  %2891 = vst [vmem:[#allocation2 + $0x78] sm:$0xff] %v2837
  %2892 = vst [vmem:[#allocation2 + $0x80] sm:$0xff] %v2838
  %2893 = vst [vmem:[#allocation2 + $0x88] sm:$0xff] %v2839
  %2894 = vst [vmem:[#allocation2 + $0x90] sm:$0xff] %v2840
  %2895 = vst [vmem:[#allocation2 + $0x98] sm:$0xff] %v2841
  %2896 = vst [vmem:[#allocation2 + $0xa0] sm:$0xff] %v2842
  %2897 = vst [vmem:[#allocation2 + $0xa8] sm:$0xff] %v2843
  %2898 = vst [vmem:[#allocation2 + $0xb0] sm:$0xff] %v2844
  %2899 = vst [vmem:[#allocation2 + $0xb8] sm:$0xff] %v2845
  %2900 = vst [vmem:[#allocation2 + $0xc0] sm:$0xff] %v2846
  %2901 = vst [vmem:[#allocation2 + $0xc8] sm:$0xff] %v2847
  %2902 = vst [vmem:[#allocation2 + $0xd0] sm:$0xff] %v2848
  %v2903 = vld [vmem:[%s0 + $0x10] sm:$0xff]
  %v2904 = vld [vmem:[%s0 + $0x18] sm:$0xff]
  %v2905 = vld [vmem:[%s0 + $0x20] sm:$0xff]
  %v2906 = vld [vmem:[%s0 + $0x28] sm:$0xff]
  %v2907 = vld [vmem:[%s0 + $0x30] sm:$0xff]
  %v2908 = vld [vmem:[%s0 + $0x38] sm:$0xff]
  %v2909 = vld [vmem:[%s0 + $0x40] sm:$0xff]
  %v2910 = vld [vmem:[%s0 + $0x48] sm:$0xff]
  %v2911 = vld [vmem:[%s0 + $0x50] sm:$0xff]
  %v2912 = vld [vmem:[%s0 + $0x58] sm:$0xff]
  %v2913 = vld [vmem:[%s0 + $0x60] sm:$0xff]
  %v2914 = vld [vmem:[%s0 + $0x68] sm:$0xff]
  %v2915 = vld [vmem:[%s0 + $0x70] sm:$0xff]
  %v2916 = vld [vmem:[%s0 + $0x78] sm:$0xff]
  %v2917 = vld [vmem:[%s0 + $0x80] sm:$0xff]
  %v2918 = vld [vmem:[%s0 + $0x88] sm:$0xff]
  %v2919 = vld [vmem:[%s0 + $0x90] sm:$0xff]
  %v2920 = vld [vmem:[%s0 + $0x98] sm:$0xff]
  %v2921 = vld [vmem:[%s0 + $0xa0] sm:$0xff]
  %v2922 = vld [vmem:[%s0 + $0xa8] sm:$0xff]
  %v2923 = vld [vmem:[%s0 + $0xb0] sm:$0xff]
  %v2924 = vld [vmem:[%s0 + $0xb8] sm:$0xff]
  %v2925 = vld [vmem:[%s0 + $0xc0] sm:$0xff]
  %v2926 = vld [vmem:[%s0 + $0xc8] sm:$0xff]
  %v2927 = vld [vmem:[%s0 + $0xd0] sm:$0xff]
  %v2928 = vpack.c.bf16 %v2904, %v2903
  %v2929 = vpack.c.bf16 %v2906, %v2905
  %v2930 = vpack.c.bf16 %v2908, %v2907
  %v2931 = vpack.c.bf16 %v2910, %v2909
  %v2932 = vpack.c.bf16 %v2912, %v2911
  %v2933 = vpack.c.bf16 %v2914, %v2913
  %v2934 = vpack.c.bf16 %v2916, %v2915
  %v2935 = vpack.c.bf16 %v2918, %v2917
  %v2936 = vpack.c.bf16 %v2920, %v2919
  %v2937 = vpack.c.bf16 %v2922, %v2921
  %v2938 = vpack.c.bf16 %v2924, %v2923
  %v2939 = vpack.c.bf16 %v2926, %v2925
  %v2940 = vpack.c.bf16 %v2927, %v2927
  %v2941 = vld [vmem:[%s7] sm:$0xf]
  %v2942 = vld [vmem:[%s7 + $0x4] sm:$0xf]
  %v2943 = vld [vmem:[%s7 + $0x8] sm:$0xf]
  %v2944 = vld [vmem:[%s7 + $0xc] sm:$0xf]
  %v2945 = vld [vmem:[%s7 + $0x10] sm:$0xf]
  %v2946 = vld [vmem:[%s7 + $0x14] sm:$0xf]
  %v2947 = vld [vmem:[%s7 + $0x18] sm:$0xf]
  %v2948 = vld [vmem:[%s7 + $0x1c] sm:$0xf]
  %v2957 = vunpack.c.l.b16 %v2941
  %v2958 = vunpack.c.l.b16 %v2942
  %v2959 = vunpack.c.l.b16 %v2943
  %v2960 = vunpack.c.l.b16 %v2944
  %v2961 = vunpack.c.l.b16 %v2945
  %v2962 = vunpack.c.l.b16 %v2946
  %v2963 = vunpack.c.l.b16 %v2947
  %v2964 = vunpack.c.l.b16 %v2948
  %v2965 = vpack.c.b16 %v2958, %v2957
  %v2966 = vpack.c.b16 %v2960, %v2959
  %v2967 = vpack.c.b16 %v2962, %v2961
  %v2968 = vpack.c.b16 %v2964, %v2963
  %v2974 = vsel %vm180, %v2928, 0
  %v2977 = vsel %vm180, %v2929, 0
  %v2980 = vsel %vm180, %v2930, 0
  %v2983 = vsel %vm180, %v2931, 0
  %v2986 = vsel %vm180, %v2932, 0
  %v2989 = vsel %vm180, %v2933, 0
  %v2992 = vsel %vm180, %v2934, 0
  %v2995 = vsel %vm180, %v2935, 0
  %v2998 = vsel %vm180, %v2936, 0
  %v3001 = vsel %vm180, %v2937, 0
  %v3004 = vsel %vm180, %v2938, 0
  %v3007 = vsel %vm180, %v2939, 0
  %v3010 = vsel %vm180, %v2940, 0
  %3012 = vmatprep.subr.bf16.mxu0 0
  %3013 = vmatpush1.bf16.msra.mxu0 %v2965
  %3014 = vmatprep.subr.bf16.mxu0 0
  %3015 = vmatpush1.bf16.msra.mxu0 %v2966
  %3016 = vmatprep.subr.bf16.mxu0 0
  %3017 = vmatpush1.bf16.msra.mxu0 %v2967
  %3018 = vmatprep.subr.bf16.mxu0 0
  %3019 = vmatpush1.bf16.msra.mxu0 %v2968
  %3020 = vmatprep.subr.bf16.mxu0 0
  %3021 = vmatpush1.bf16.msra.mxu0 0
  %3022 = vmatprep.subr.bf16.mxu0 0
  %3023 = vmatpush1.bf16.msra.mxu0 0
  %3024 = vmatprep.subr.bf16.mxu0 0
  %3025 = vmatpush1.bf16.msra.mxu0 0
  %3026 = vmatprep.subr.bf16.mxu0 0
  %3027 = vmatpush1.bf16.msra.mxu0 0
  %3028 = vmatprep.subr.bf16.mxu0 0
  %3029 = vmatpush1.bf16.msra.mxu0 0
  %3030 = vmatprep.subr.bf16.mxu0 0
  %3031 = vmatpush1.bf16.msra.mxu0 0
  %3032 = vmatprep.subr.bf16.mxu0 0
  %3033 = vmatpush1.bf16.msra.mxu0 0
  %3034 = vmatprep.subr.bf16.mxu0 0
  %3035 = vmatpush1.bf16.msra.mxu0 0
  %3036 = vmatprep.subr.bf16.mxu0 0
  %3037 = vmatpush1.bf16.msra.mxu0 0
  %3038 = vmatprep.subr.bf16.mxu0 0
  %3039 = vmatpush1.bf16.msra.mxu0 0
  %3040 = vmatprep.subr.bf16.mxu0 0
  %3041 = vmatpush1.bf16.msra.mxu0 0
  %3042 = vmatprep.subr.bf16.mxu0 0
  %3043 = vmatpush1.bf16.msra.mxu0 0
  %3044 = vmatprep.mubr.bf16.mxu0 0
  %3045 = vmatmul.mubr.bf16.gmra.mrb[0].mxu0 %v2974
  %v3046 = vpop.f32.mrb[0].mxu0
  %v3047 = vadd.f32 0.0, %v3046
  %v3048 = vpop.f32.mrb[0].mxu0
  %v3049 = vpop.f32.mrb[0].mxu0
  %v3050 = vadd.f32 0.0, %v3049
  %v3051 = vpop.f32.mrb[0].mxu0
  %3052 = vmatprep.mubr.bf16.mxu0 0
  %3053 = vmatmul.mubr.bf16.gmra.mrb[0].mxu0 %v2977
  %v3054 = vpop.f32.mrb[0].mxu0
  %v3055 = vadd.f32 0.0, %v3054
  %v3056 = vpop.f32.mrb[0].mxu0
  %v3057 = vpop.f32.mrb[0].mxu0
  %v3058 = vadd.f32 0.0, %v3057
  %v3059 = vpop.f32.mrb[0].mxu0
  %3060 = vmatprep.mubr.bf16.mxu0 0
  %3061 = vmatmul.mubr.bf16.gmra.mrb[0].mxu0 %v2980
  %v3062 = vpop.f32.mrb[0].mxu0
  %v3063 = vadd.f32 0.0, %v3062
  %v3064 = vpop.f32.mrb[0].mxu0
  %v3065 = vpop.f32.mrb[0].mxu0
  %v3066 = vadd.f32 0.0, %v3065
  %v3067 = vpop.f32.mrb[0].mxu0
  %3068 = vmatprep.mubr.bf16.mxu0 0
  %3069 = vmatmul.mubr.bf16.gmra.mrb[0].mxu0 %v2983
  %v3070 = vpop.f32.mrb[0].mxu0
  %v3071 = vadd.f32 0.0, %v3070
  %v3072 = vpop.f32.mrb[0].mxu0
  %v3073 = vpop.f32.mrb[0].mxu0
  %v3074 = vadd.f32 0.0, %v3073
  %v3075 = vpop.f32.mrb[0].mxu0
  %3076 = vmatprep.mubr.bf16.mxu0 0
  %3077 = vmatmul.mubr.bf16.gmra.mrb[0].mxu0 %v2986
  %v3078 = vpop.f32.mrb[0].mxu0
  %v3079 = vadd.f32 0.0, %v3078
  %v3080 = vpop.f32.mrb[0].mxu0
  %v3081 = vpop.f32.mrb[0].mxu0
  %v3082 = vadd.f32 0.0, %v3081
  %v3083 = vpop.f32.mrb[0].mxu0
  %3084 = vmatprep.mubr.bf16.mxu0 0
  %3085 = vmatmul.mubr.bf16.gmra.mrb[0].mxu0 %v2989
  %v3086 = vpop.f32.mrb[0].mxu0
  %v3087 = vadd.f32 0.0, %v3086
  %v3088 = vpop.f32.mrb[0].mxu0
  %v3089 = vpop.f32.mrb[0].mxu0
  %v3090 = vadd.f32 0.0, %v3089
  %v3091 = vpop.f32.mrb[0].mxu0
  %3092 = vmatprep.mubr.bf16.mxu0 0
  %3093 = vmatmul.mubr.bf16.gmra.mrb[0].mxu0 %v2992
  %v3094 = vpop.f32.mrb[0].mxu0
  %v3095 = vadd.f32 0.0, %v3094
  %v3096 = vpop.f32.mrb[0].mxu0
  %v3097 = vpop.f32.mrb[0].mxu0
  %v3098 = vadd.f32 0.0, %v3097
  %v3099 = vpop.f32.mrb[0].mxu0
  %3100 = vmatprep.mubr.bf16.mxu0 0
  %3101 = vmatmul.mubr.bf16.gmra.mrb[0].mxu0 %v2995
  %v3102 = vpop.f32.mrb[0].mxu0
  %v3103 = vadd.f32 0.0, %v3102
  %v3104 = vpop.f32.mrb[0].mxu0
  %v3105 = vpop.f32.mrb[0].mxu0
  %v3106 = vadd.f32 0.0, %v3105
  %v3107 = vpop.f32.mrb[0].mxu0
  %3108 = vmatprep.mubr.bf16.mxu0 0
  %3109 = vmatmul.mubr.bf16.gmra.mrb[0].mxu0 %v2998
  %v3110 = vpop.f32.mrb[0].mxu0
  %v3111 = vadd.f32 0.0, %v3110
  %v3112 = vpop.f32.mrb[0].mxu0
  %v3113 = vpop.f32.mrb[0].mxu0
  %v3114 = vadd.f32 0.0, %v3113
  %v3115 = vpop.f32.mrb[0].mxu0
  %3116 = vmatprep.mubr.bf16.mxu0 0
  %3117 = vmatmul.mubr.bf16.gmra.mrb[0].mxu0 %v3001
  %v3118 = vpop.f32.mrb[0].mxu0
  %v3119 = vadd.f32 0.0, %v3118
  %v3120 = vpop.f32.mrb[0].mxu0
  %v3121 = vpop.f32.mrb[0].mxu0
  %v3122 = vadd.f32 0.0, %v3121
  %v3123 = vpop.f32.mrb[0].mxu0
  %3124 = vmatprep.mubr.bf16.mxu0 0
  %3125 = vmatmul.mubr.bf16.gmra.mrb[0].mxu0 %v3004
  %v3126 = vpop.f32.mrb[0].mxu0
  %v3127 = vadd.f32 0.0, %v3126
  %v3128 = vpop.f32.mrb[0].mxu0
  %v3129 = vpop.f32.mrb[0].mxu0
  %v3130 = vadd.f32 0.0, %v3129
  %v3131 = vpop.f32.mrb[0].mxu0
  %3132 = vmatprep.mubr.bf16.mxu0 0
  %3133 = vmatmul.mubr.bf16.gmra.mrb[0].mxu0 %v3007
  %v3134 = vpop.f32.mrb[0].mxu0
  %v3135 = vadd.f32 0.0, %v3134
  %v3136 = vpop.f32.mrb[0].mxu0
  %v3137 = vpop.f32.mrb[0].mxu0
  %v3138 = vadd.f32 0.0, %v3137
  %v3139 = vpop.f32.mrb[0].mxu0
  %3140 = vmatprep.mubr.bf16.mxu0 0
  %3141 = vmatmul.mubr.bf16.gmra.mrb[0].mxu0 %v3010
  %v3142 = vpop.f32.mrb[0].mxu0
  %v3143 = vadd.f32 0.0, %v3142
  %v3144 = vpop.f32.mrb[0].mxu0
  %v3145 = vpop.f32.mrb[0].mxu0
  %v3146 = vpop.f32.mrb[0].mxu0
  %3147 = vdwg.mxu0
  %v3148 = vmul.f32 %v3047, %v2448
  %v3149 = vmul.f32 %v3050, %v2453
  %v3150 = vmul.f32 %v3055, %v2458
  %v3151 = vmul.f32 %v3058, %v2463
  %v3152 = vmul.f32 %v3063, %v2468
  %v3153 = vmul.f32 %v3066, %v2473
  %v3154 = vmul.f32 %v3071, %v2478
  %v3155 = vmul.f32 %v3074, %v2483
  %v3156 = vmul.f32 %v3079, %v2488
  %v3157 = vmul.f32 %v3082, %v2493
  %v3158 = vmul.f32 %v3087, %v2498
  %v3159 = vmul.f32 %v3090, %v2503
  %v3160 = vmul.f32 %v3095, %v2508
  %v3161 = vmul.f32 %v3098, %v2513
  %v3162 = vmul.f32 %v3103, %v2518
  %v3163 = vmul.f32 %v3106, %v2523
  %v3164 = vmul.f32 %v3111, %v2528
  %v3165 = vmul.f32 %v3114, %v2533
  %v3166 = vmul.f32 %v3119, %v2538
  %v3167 = vmul.f32 %v3122, %v2543
  %v3168 = vmul.f32 %v3127, %v2548
  %v3169 = vmul.f32 %v3130, %v2553
  %v3170 = vmul.f32 %v3135, %v2558
  %v3171 = vmul.f32 %v3138, %v2563
  %v3172 = vmul.f32 %v3143, %v2568
  %v3173 = vadd.f32 %v3148, %v3149
  %v3174 = vadd.f32 %v3173, %v3150
  %v3175 = vadd.f32 %v3174, %v3151
  %v3176 = vadd.f32 %v3175, %v3152
  %v3177 = vadd.f32 %v3176, %v3153
  %v3178 = vadd.f32 %v3177, %v3154
  %v3179 = vadd.f32 %v3178, %v3155
  %v3180 = vadd.f32 %v3179, %v3156
  %v3181 = vadd.f32 %v3180, %v3157
  %v3182 = vadd.f32 %v3181, %v3158
  %v3183 = vadd.f32 %v3182, %v3159
  %v3184 = vadd.f32 %v3183, %v3160
  %v3185 = vadd.f32 %v3184, %v3161
  %v3186 = vadd.f32 %v3185, %v3162
  %v3187 = vadd.f32 %v3186, %v3163
  %v3188 = vadd.f32 %v3187, %v3164
  %v3189 = vadd.f32 %v3188, %v3165
  %v3190 = vadd.f32 %v3189, %v3166
  %v3191 = vadd.f32 %v3190, %v3167
  %v3192 = vadd.f32 %v3191, %v3168
  %v3193 = vadd.f32 %v3192, %v3169
  %v3194 = vadd.f32 %v3193, %v3170
  %v3195 = vadd.f32 %v3194, %v3171
  %v3196 = vadd.f32 %v3195, %v3172
  %v3197 = vrot.slane %v3196, 4
  %v3198 = vadd.f32 %v3196, %v3197
  %v3199 = vrot.slane %v3198, 2
  %v3200 = vadd.f32 %v3198, %v3199
  %v3201 = vrot.slane %v3200, 1
  %v3202 = vadd.f32 %v3200, %v3201
  %v3203 = vmul.f32 %v3202, 0.0078125
  %v3204 = vsub.f32 %v3148, %v3203
  %v3205 = vsub.f32 %v3149, %v3203
  %v3206 = vsub.f32 %v3150, %v3203
  %v3207 = vsub.f32 %v3151, %v3203
  %v3208 = vsub.f32 %v3152, %v3203
  %v3209 = vsub.f32 %v3153, %v3203
  %v3210 = vsub.f32 %v3154, %v3203
  %v3211 = vsub.f32 %v3155, %v3203
  %v3212 = vsub.f32 %v3156, %v3203
  %v3213 = vsub.f32 %v3157, %v3203
  %v3214 = vsub.f32 %v3158, %v3203
  %v3215 = vsub.f32 %v3159, %v3203
  %v3216 = vsub.f32 %v3160, %v3203
  %v3217 = vsub.f32 %v3161, %v3203
  %v3218 = vsub.f32 %v3162, %v3203
  %v3219 = vsub.f32 %v3163, %v3203
  %v3220 = vsub.f32 %v3164, %v3203
  %v3221 = vsub.f32 %v3165, %v3203
  %v3222 = vsub.f32 %v3166, %v3203
  %v3223 = vsub.f32 %v3167, %v3203
  %v3224 = vsub.f32 %v3168, %v3203
  %v3225 = vsub.f32 %v3169, %v3203
  %v3226 = vsub.f32 %v3170, %v3203
  %v3227 = vsub.f32 %v3171, %v3203
  %v3228 = vsub.f32 %v3172, %v3203
  %v3229 = vmul.f32 %v3204, %v2448
  %v3230 = vmul.f32 %v3205, %v2453
  %v3231 = vmul.f32 %v3206, %v2458
  %v3232 = vmul.f32 %v3207, %v2463
  %v3233 = vmul.f32 %v3208, %v2468
  %v3234 = vmul.f32 %v3209, %v2473
  %v3235 = vmul.f32 %v3210, %v2478
  %v3236 = vmul.f32 %v3211, %v2483
  %v3237 = vmul.f32 %v3212, %v2488
  %v3238 = vmul.f32 %v3213, %v2493
  %v3239 = vmul.f32 %v3214, %v2498
  %v3240 = vmul.f32 %v3215, %v2503
  %v3241 = vmul.f32 %v3216, %v2508
  %v3242 = vmul.f32 %v3217, %v2513
  %v3243 = vmul.f32 %v3218, %v2518
  %v3244 = vmul.f32 %v3219, %v2523
  %v3245 = vmul.f32 %v3220, %v2528
  %v3246 = vmul.f32 %v3221, %v2533
  %v3247 = vmul.f32 %v3222, %v2538
  %v3248 = vmul.f32 %v3223, %v2543
  %v3249 = vmul.f32 %v3224, %v2548
  %v3250 = vmul.f32 %v3225, %v2553
  %v3251 = vmul.f32 %v3226, %v2558
  %v3252 = vmul.f32 %v3227, %v2563
  %v3253 = vmul.f32 %v3228, %v2568
  %v3254 = vmul.f32 %v3229, %v3229
  %v3255 = vmul.f32 %v3230, %v3230
  %v3256 = vmul.f32 %v3231, %v3231
  %v3257 = vmul.f32 %v3232, %v3232
  %v3258 = vmul.f32 %v3233, %v3233
  %v3259 = vmul.f32 %v3234, %v3234
  %v3260 = vmul.f32 %v3235, %v3235
  %v3261 = vmul.f32 %v3236, %v3236
  %v3262 = vmul.f32 %v3237, %v3237
  %v3263 = vmul.f32 %v3238, %v3238
  %v3264 = vmul.f32 %v3239, %v3239
  %v3265 = vmul.f32 %v3240, %v3240
  %v3266 = vmul.f32 %v3241, %v3241
  %v3267 = vmul.f32 %v3242, %v3242
  %v3268 = vmul.f32 %v3243, %v3243
  %v3269 = vmul.f32 %v3244, %v3244
  %v3270 = vmul.f32 %v3245, %v3245
  %v3271 = vmul.f32 %v3246, %v3246
  %v3272 = vmul.f32 %v3247, %v3247
  %v3273 = vmul.f32 %v3248, %v3248
  %v3274 = vmul.f32 %v3249, %v3249
  %v3275 = vmul.f32 %v3250, %v3250
  %v3276 = vmul.f32 %v3251, %v3251
  %v3277 = vmul.f32 %v3252, %v3252
  %v3278 = vmul.f32 %v3253, %v3253
  %v3279 = vadd.f32 %v3254, %v3255
  %v3280 = vadd.f32 %v3279, %v3256
  %v3281 = vadd.f32 %v3280, %v3257
  %v3282 = vadd.f32 %v3281, %v3258
  %v3283 = vadd.f32 %v3282, %v3259
  %v3284 = vadd.f32 %v3283, %v3260
  %v3285 = vadd.f32 %v3284, %v3261
  %v3286 = vadd.f32 %v3285, %v3262
  %v3287 = vadd.f32 %v3286, %v3263
  %v3288 = vadd.f32 %v3287, %v3264
  %v3289 = vadd.f32 %v3288, %v3265
  %v3290 = vadd.f32 %v3289, %v3266
  %v3291 = vadd.f32 %v3290, %v3267
  %v3292 = vadd.f32 %v3291, %v3268
  %v3293 = vadd.f32 %v3292, %v3269
  %v3294 = vadd.f32 %v3293, %v3270
  %v3295 = vadd.f32 %v3294, %v3271
  %v3296 = vadd.f32 %v3295, %v3272
  %v3297 = vadd.f32 %v3296, %v3273
  %v3298 = vadd.f32 %v3297, %v3274
  %v3299 = vadd.f32 %v3298, %v3275
  %v3300 = vadd.f32 %v3299, %v3276
  %v3301 = vadd.f32 %v3300, %v3277
  %v3302 = vadd.f32 %v3301, %v3278
  %v3303 = vrot.slane %v3302, 4
  %v3304 = vadd.f32 %v3302, %v3303
  %v3305 = vrot.slane %v3304, 2
  %v3306 = vadd.f32 %v3304, %v3305
  %v3307 = vrot.slane %v3306, 1
  %v3308 = vadd.f32 %v3306, %v3307
  %v3309 = vmul.f32 %v3308, 0.0078125
  %v3310 = vld [vmem:[%s8] sm:$0x1]
  %v3311 = vadd.f32 %v3309, 1e-05
  %v3312 = vrsqrt.pop %v3311
  %v3313 = vmul.f32 %v3310, %v3312
  %v3315 = vlaneseq
  %v3316 = vshrl.u32 %v3315, 7
  %v3317 = vsub.s32 0, %v3316
  %v3318 = vrot.slane %v3313, %v3317
  %v3320 = vmul.f32 %v3229, %v3318
  %v3321 = vmul.f32 %v3230, %v3318
  %v3322 = vmul.f32 %v3231, %v3318
  %v3323 = vmul.f32 %v3232, %v3318
  %v3324 = vmul.f32 %v3233, %v3318
  %v3325 = vmul.f32 %v3234, %v3318
  %v3326 = vmul.f32 %v3235, %v3318
  %v3327 = vmul.f32 %v3236, %v3318
  %v3328 = vmul.f32 %v3237, %v3318
  %v3329 = vmul.f32 %v3238, %v3318
  %v3330 = vmul.f32 %v3239, %v3318
  %v3331 = vmul.f32 %v3240, %v3318
  %v3332 = vmul.f32 %v3241, %v3318
  %v3333 = vmul.f32 %v3242, %v3318
  %v3334 = vmul.f32 %v3243, %v3318
  %v3335 = vmul.f32 %v3244, %v3318
  %v3336 = vmul.f32 %v3245, %v3318
  %v3337 = vmul.f32 %v3246, %v3318
  %v3338 = vmul.f32 %v3247, %v3318
  %v3339 = vmul.f32 %v3248, %v3318
  %v3340 = vmul.f32 %v3249, %v3318
  %v3341 = vmul.f32 %v3250, %v3318
  %v3342 = vmul.f32 %v3251, %v3318
  %v3343 = vmul.f32 %v3252, %v3318
  %v3344 = vmul.f32 %v3253, %v3318
  %v3345 = vld [vmem:[%s9] sm:$0x1]
  %v3347 = vlaneseq
  %v3348 = vshrl.u32 %v3347, 7
  %v3349 = vsub.s32 0, %v3348
  %v3350 = vrot.slane %v3345, %v3349
  %v3352 = vadd.f32 %v3320, %v3350
  %v3353 = vadd.f32 %v3321, %v3350
  %v3354 = vadd.f32 %v3322, %v3350
  %v3355 = vadd.f32 %v3323, %v3350
  %v3356 = vadd.f32 %v3324, %v3350
  %v3357 = vadd.f32 %v3325, %v3350
  %v3358 = vadd.f32 %v3326, %v3350
  %v3359 = vadd.f32 %v3327, %v3350
  %v3360 = vadd.f32 %v3328, %v3350
  %v3361 = vadd.f32 %v3329, %v3350
  %v3362 = vadd.f32 %v3330, %v3350
  %v3363 = vadd.f32 %v3331, %v3350
  %v3364 = vadd.f32 %v3332, %v3350
  %v3365 = vadd.f32 %v3333, %v3350
  %v3366 = vadd.f32 %v3334, %v3350
  %v3367 = vadd.f32 %v3335, %v3350
  %v3368 = vadd.f32 %v3336, %v3350
  %v3369 = vadd.f32 %v3337, %v3350
  %v3370 = vadd.f32 %v3338, %v3350
  %v3371 = vadd.f32 %v3339, %v3350
  %v3372 = vadd.f32 %v3340, %v3350
  %v3373 = vadd.f32 %v3341, %v3350
  %v3374 = vadd.f32 %v3342, %v3350
  %v3375 = vadd.f32 %v3343, %v3350
  %v3376 = vadd.f32 %v3344, %v3350
  %v3377 = vmul.f32 %v3352, %v2448
  %v3378 = vmul.f32 %v3353, %v2453
  %v3379 = vmul.f32 %v3354, %v2458
  %v3380 = vmul.f32 %v3355, %v2463
  %v3381 = vmul.f32 %v3356, %v2468
  %v3382 = vmul.f32 %v3357, %v2473
  %v3383 = vmul.f32 %v3358, %v2478
  %v3384 = vmul.f32 %v3359, %v2483
  %v3385 = vmul.f32 %v3360, %v2488
  %v3386 = vmul.f32 %v3361, %v2493
  %v3387 = vmul.f32 %v3362, %v2498
  %v3388 = vmul.f32 %v3363, %v2503
  %v3389 = vmul.f32 %v3364, %v2508
  %v3390 = vmul.f32 %v3365, %v2513
  %v3391 = vmul.f32 %v3366, %v2518
  %v3392 = vmul.f32 %v3367, %v2523
  %v3393 = vmul.f32 %v3368, %v2528
  %v3394 = vmul.f32 %v3369, %v2533
  %v3395 = vmul.f32 %v3370, %v2538
  %v3396 = vmul.f32 %v3371, %v2543
  %v3397 = vmul.f32 %v3372, %v2548
  %v3398 = vmul.f32 %v3373, %v2553
  %v3399 = vmul.f32 %v3374, %v2558
  %v3400 = vmul.f32 %v3375, %v2563
  %v3401 = vmul.f32 %v3376, %v2568
  %v3402 = vld [vmem:[#allocation2 + $0x5] sm:$0xff]
  %v3403 = vld [vmem:[#allocation2 + $0xd] sm:$0xff]
  %v3404 = vld [vmem:[#allocation2 + $0x15] sm:$0xff]
  %v3405 = vld [vmem:[#allocation2 + $0x1d] sm:$0xff]
  %v3406 = vld [vmem:[#allocation2 + $0x25] sm:$0xff]
  %v3407 = vld [vmem:[#allocation2 + $0x2d] sm:$0xff]
  %v3408 = vld [vmem:[#allocation2 + $0x35] sm:$0xff]
  %v3409 = vld [vmem:[#allocation2 + $0x3d] sm:$0xff]
  %v3410 = vld [vmem:[#allocation2 + $0x45] sm:$0xff]
  %v3411 = vld [vmem:[#allocation2 + $0x4d] sm:$0xff]
  %v3412 = vld [vmem:[#allocation2 + $0x55] sm:$0xff]
  %v3413 = vld [vmem:[#allocation2 + $0x5d] sm:$0xff]
  %v3414 = vld [vmem:[#allocation2 + $0x65] sm:$0xff]
  %v3415 = vld [vmem:[#allocation2 + $0x6d] sm:$0xff]
  %v3416 = vld [vmem:[#allocation2 + $0x75] sm:$0xff]
  %v3417 = vld [vmem:[#allocation2 + $0x7d] sm:$0xff]
  %v3418 = vld [vmem:[#allocation2 + $0x85] sm:$0xff]
  %v3419 = vld [vmem:[#allocation2 + $0x8d] sm:$0xff]
  %v3420 = vld [vmem:[#allocation2 + $0x95] sm:$0xff]
  %v3421 = vld [vmem:[#allocation2 + $0x9d] sm:$0xff]
  %v3422 = vld [vmem:[#allocation2 + $0xa5] sm:$0xff]
  %v3423 = vld [vmem:[#allocation2 + $0xad] sm:$0xff]
  %v3424 = vld [vmem:[#allocation2 + $0xb5] sm:$0xff]
  %v3425 = vld [vmem:[#allocation2 + $0xbd] sm:$0xff]
  %v3426 = vld [vmem:[#allocation2 + $0xc5] sm:$0xff]
  %v3427 = vpack.c.bf16 %v3403, %v3402
  %v3428 = vpack.c.bf16 %v3405, %v3404
  %v3429 = vpack.c.bf16 %v3407, %v3406
  %v3430 = vpack.c.bf16 %v3409, %v3408
  %v3431 = vpack.c.bf16 %v3411, %v3410
  %v3432 = vpack.c.bf16 %v3413, %v3412
  %v3433 = vpack.c.bf16 %v3415, %v3414
  %v3434 = vpack.c.bf16 %v3417, %v3416
  %v3435 = vpack.c.bf16 %v3419, %v3418
  %v3436 = vpack.c.bf16 %v3421, %v3420
  %v3437 = vpack.c.bf16 %v3423, %v3422
  %v3438 = vpack.c.bf16 %v3425, %v3424
  %v3439 = vpack.c.bf16 %v3426, %v3426
  %v3440 = vld [vmem:[%s4] sm:$0xf]
  %v3441 = vld [vmem:[%s4 + $0x4] sm:$0xf]
  %v3442 = vld [vmem:[#allocation2 + $0x6] sm:$0xff]
  %v3443 = vld [vmem:[#allocation2 + $0xe] sm:$0xff]
  %v3444 = vld [vmem:[#allocation2 + $0x16] sm:$0xff]
  %v3445 = vld [vmem:[#allocation2 + $0x1e] sm:$0xff]
  %v3446 = vld [vmem:[#allocation2 + $0x26] sm:$0xff]
  %v3447 = vld [vmem:[#allocation2 + $0x2e] sm:$0xff]
  %v3448 = vld [vmem:[#allocation2 + $0x36] sm:$0xff]
  %v3449 = vld [vmem:[#allocation2 + $0x3e] sm:$0xff]
  %v3450 = vld [vmem:[#allocation2 + $0x46] sm:$0xff]
  %v3451 = vld [vmem:[#allocation2 + $0x4e] sm:$0xff]
  %v3452 = vld [vmem:[#allocation2 + $0x56] sm:$0xff]
  %v3453 = vld [vmem:[#allocation2 + $0x5e] sm:$0xff]
  %v3454 = vld [vmem:[#allocation2 + $0x66] sm:$0xff]
  %v3455 = vld [vmem:[#allocation2 + $0x6e] sm:$0xff]
  %v3456 = vld [vmem:[#allocation2 + $0x76] sm:$0xff]
  %v3457 = vld [vmem:[#allocation2 + $0x7e] sm:$0xff]
  %v3458 = vld [vmem:[#allocation2 + $0x86] sm:$0xff]
  %v3459 = vld [vmem:[#allocation2 + $0x8e] sm:$0xff]
  %v3460 = vld [vmem:[#allocation2 + $0x96] sm:$0xff]
  %v3461 = vld [vmem:[#allocation2 + $0x9e] sm:$0xff]
  %v3462 = vld [vmem:[#allocation2 + $0xa6] sm:$0xff]
  %v3463 = vld [vmem:[#allocation2 + $0xae] sm:$0xff]
  %v3464 = vld [vmem:[#allocation2 + $0xb6] sm:$0xff]
  %v3465 = vld [vmem:[#allocation2 + $0xbe] sm:$0xff]
  %v3466 = vld [vmem:[#allocation2 + $0xc6] sm:$0xff]
  %v3467 = vpack.c.bf16 %v3443, %v3442
  %v3468 = vpack.c.bf16 %v3445, %v3444
  %v3469 = vpack.c.bf16 %v3447, %v3446
  %v3470 = vpack.c.bf16 %v3449, %v3448
  %v3471 = vpack.c.bf16 %v3451, %v3450
  %v3472 = vpack.c.bf16 %v3453, %v3452
  %v3473 = vpack.c.bf16 %v3455, %v3454
  %v3474 = vpack.c.bf16 %v3457, %v3456
  %v3475 = vpack.c.bf16 %v3459, %v3458
  %v3476 = vpack.c.bf16 %v3461, %v3460
  %v3477 = vpack.c.bf16 %v3463, %v3462
  %v3478 = vpack.c.bf16 %v3465, %v3464
  %v3479 = vpack.c.bf16 %v3466, %v3466
  %v3480 = vld [vmem:[%s4 + $0x8] sm:$0xf]
  %v3481 = vld [vmem:[%s4 + $0xc] sm:$0xf]
  %v3484 = vunpack.c.l.b16 %v3480
  %v3485 = vunpack.c.l.b16 %v3481
  %v3486 = vpack.c.b16 %v3485, %v3484
  %vm3488 = vcmask 130048
  %v3490 = vsel %vm3488, %v3467, 0
  %v3493 = vsel %vm3488, %v3468, 0
  %v3496 = vsel %vm3488, %v3469, 0
  %v3499 = vsel %vm3488, %v3470, 0
  %v3502 = vsel %vm3488, %v3471, 0
  %v3505 = vsel %vm3488, %v3472, 0
  %v3508 = vsel %vm3488, %v3473, 0
  %v3511 = vsel %vm3488, %v3474, 0
  %v3514 = vsel %vm3488, %v3475, 0
  %v3517 = vsel %vm3488, %v3476, 0
  %v3520 = vsel %vm3488, %v3477, 0
  %v3523 = vsel %vm3488, %v3478, 0
  %v3526 = vsel %vm3488, %v3479, 0
  %3528 = vmatprep.subr.bf16.mxu0 0
  %3529 = vmatpush1.bf16.msra.mxu0 %v3486
  %3530 = vmatprep.subr.bf16.mxu0 0
  %3531 = vmatpush1.bf16.msra.mxu0 0
  %3532 = vmatprep.subr.bf16.mxu0 0
  %3533 = vmatpush1.bf16.msra.mxu0 0
  %3534 = vmatprep.subr.bf16.mxu0 0
  %3535 = vmatpush1.bf16.msra.mxu0 0
  %3536 = vmatprep.subr.bf16.mxu0 0
  %3537 = vmatpush1.bf16.msra.mxu0 0
  %3538 = vmatprep.subr.bf16.mxu0 0
  %3539 = vmatpush1.bf16.msra.mxu0 0
  %3540 = vmatprep.subr.bf16.mxu0 0
  %3541 = vmatpush1.bf16.msra.mxu0 0
  %3542 = vmatprep.subr.bf16.mxu0 0
  %3543 = vmatpush1.bf16.msra.mxu0 0
  %3544 = vmatprep.subr.bf16.mxu0 0
  %3545 = vmatpush1.bf16.msra.mxu0 0
  %3546 = vmatprep.subr.bf16.mxu0 0
  %3547 = vmatpush1.bf16.msra.mxu0 0
  %3548 = vmatprep.subr.bf16.mxu0 0
  %3549 = vmatpush1.bf16.msra.mxu0 0
  %3550 = vmatprep.subr.bf16.mxu0 0
  %3551 = vmatpush1.bf16.msra.mxu0 0
  %3552 = vmatprep.subr.bf16.mxu0 0
  %3553 = vmatpush1.bf16.msra.mxu0 0
  %3554 = vmatprep.subr.bf16.mxu0 0
  %3555 = vmatpush1.bf16.msra.mxu0 0
  %3556 = vmatprep.subr.bf16.mxu0 0
  %3557 = vmatpush1.bf16.msra.mxu0 0
  %3558 = vmatprep.subr.bf16.mxu0 0
  %3559 = vmatpush1.bf16.msra.mxu0 0
  %3560 = vmatprep.mubr.bf16.mxu0 0
  %3561 = vmatmul.mubr.bf16.gmra.mrb[0].mxu0 %v3490
  %v3562 = vpop.f32.mrb[0].mxu0
  %v3563 = vadd.f32 0.0, %v3562
  %v3564 = vpop.f32.mrb[0].mxu0
  %v3565 = vpop.f32.mrb[0].mxu0
  %v3566 = vadd.f32 0.0, %v3565
  %v3567 = vpop.f32.mrb[0].mxu0
  %3568 = vmatprep.mubr.bf16.mxu0 0
  %3569 = vmatmul.mubr.bf16.gmra.mrb[0].mxu0 %v3493
  %v3570 = vpop.f32.mrb[0].mxu0
  %v3571 = vadd.f32 0.0, %v3570
  %v3572 = vpop.f32.mrb[0].mxu0
  %v3573 = vpop.f32.mrb[0].mxu0
  %v3574 = vadd.f32 0.0, %v3573
  %v3575 = vpop.f32.mrb[0].mxu0
  %3576 = vmatprep.mubr.bf16.mxu0 0
  %3577 = vmatmul.mubr.bf16.gmra.mrb[0].mxu0 %v3496
  %v3578 = vpop.f32.mrb[0].mxu0
  %v3579 = vadd.f32 0.0, %v3578
  %v3580 = vpop.f32.mrb[0].mxu0
  %v3581 = vpop.f32.mrb[0].mxu0
  %v3582 = vadd.f32 0.0, %v3581
  %v3583 = vpop.f32.mrb[0].mxu0
  %3584 = vmatprep.mubr.bf16.mxu0 0
  %3585 = vmatmul.mubr.bf16.gmra.mrb[0].mxu0 %v3499
  %v3586 = vpop.f32.mrb[0].mxu0
  %v3587 = vadd.f32 0.0, %v3586
  %v3588 = vpop.f32.mrb[0].mxu0
  %v3589 = vpop.f32.mrb[0].mxu0
  %v3590 = vadd.f32 0.0, %v3589
  %v3591 = vpop.f32.mrb[0].mxu0
  %3592 = vmatprep.mubr.bf16.mxu0 0
  %3593 = vmatmul.mubr.bf16.gmra.mrb[0].mxu0 %v3502
  %v3594 = vpop.f32.mrb[0].mxu0
  %v3595 = vadd.f32 0.0, %v3594
  %v3596 = vpop.f32.mrb[0].mxu0
  %v3597 = vpop.f32.mrb[0].mxu0
  %v3598 = vadd.f32 0.0, %v3597
  %v3599 = vpop.f32.mrb[0].mxu0
  %3600 = vmatprep.mubr.bf16.mxu0 0
  %3601 = vmatmul.mubr.bf16.gmra.mrb[0].mxu0 %v3505
  %v3602 = vpop.f32.mrb[0].mxu0
  %v3603 = vadd.f32 0.0, %v3602
  %v3604 = vpop.f32.mrb[0].mxu0
  %v3605 = vpop.f32.mrb[0].mxu0
  %v3606 = vadd.f32 0.0, %v3605
  %v3607 = vpop.f32.mrb[0].mxu0
  %3608 = vmatprep.mubr.bf16.mxu0 0
  %3609 = vmatmul.mubr.bf16.gmra.mrb[0].mxu0 %v3508
  %v3610 = vpop.f32.mrb[0].mxu0
  %v3611 = vadd.f32 0.0, %v3610
  %v3612 = vpop.f32.mrb[0].mxu0
  %v3613 = vpop.f32.mrb[0].mxu0
  %v3614 = vadd.f32 0.0, %v3613
  %v3615 = vpop.f32.mrb[0].mxu0
  %3616 = vmatprep.mubr.bf16.mxu0 0
  %3617 = vmatmul.mubr.bf16.gmra.mrb[0].mxu0 %v3511
  %v3618 = vpop.f32.mrb[0].mxu0
  %v3619 = vadd.f32 0.0, %v3618
  %v3620 = vpop.f32.mrb[0].mxu0
  %v3621 = vpop.f32.mrb[0].mxu0
  %v3622 = vadd.f32 0.0, %v3621
  %v3623 = vpop.f32.mrb[0].mxu0
  %3624 = vmatprep.mubr.bf16.mxu0 0
  %3625 = vmatmul.mubr.bf16.gmra.mrb[0].mxu0 %v3514
  %v3626 = vpop.f32.mrb[0].mxu0
  %v3627 = vadd.f32 0.0, %v3626
  %v3628 = vpop.f32.mrb[0].mxu0
  %v3629 = vpop.f32.mrb[0].mxu0
  %v3630 = vadd.f32 0.0, %v3629
  %v3631 = vpop.f32.mrb[0].mxu0
  %3632 = vmatprep.mubr.bf16.mxu0 0
  %3633 = vmatmul.mubr.bf16.gmra.mrb[0].mxu0 %v3517
  %v3634 = vpop.f32.mrb[0].mxu0
  %v3635 = vadd.f32 0.0, %v3634
  %v3636 = vpop.f32.mrb[0].mxu0
  %v3637 = vpop.f32.mrb[0].mxu0
  %v3638 = vadd.f32 0.0, %v3637
  %v3639 = vpop.f32.mrb[0].mxu0
  %3640 = vmatprep.mubr.bf16.mxu0 0
  %3641 = vmatmul.mubr.bf16.gmra.mrb[0].mxu0 %v3520
  %v3642 = vpop.f32.mrb[0].mxu0
  %v3643 = vadd.f32 0.0, %v3642
  %v3644 = vpop.f32.mrb[0].mxu0
  %v3645 = vpop.f32.mrb[0].mxu0
  %v3646 = vadd.f32 0.0, %v3645
  %v3647 = vpop.f32.mrb[0].mxu0
  %3648 = vmatprep.mubr.bf16.mxu0 0
  %3649 = vmatmul.mubr.bf16.gmra.mrb[0].mxu0 %v3523
  %v3650 = vpop.f32.mrb[0].mxu0
  %v3651 = vadd.f32 0.0, %v3650
  %v3652 = vpop.f32.mrb[0].mxu0
  %v3653 = vpop.f32.mrb[0].mxu0
  %v3654 = vadd.f32 0.0, %v3653
  %v3655 = vpop.f32.mrb[0].mxu0
  %3656 = vmatprep.mubr.bf16.mxu0 0
  %3657 = vmatmul.mubr.bf16.gmra.mrb[0].mxu0 %v3526
  %v3658 = vpop.f32.mrb[0].mxu0
  %v3659 = vadd.f32 0.0, %v3658
  %v3660 = vpop.f32.mrb[0].mxu0
  %v3661 = vpop.f32.mrb[0].mxu0
  %v3662 = vpop.f32.mrb[0].mxu0
  %3663 = vdwg.mxu0
  %v3666 = vunpack.c.l.b16 %v3440
  %v3667 = vunpack.c.l.b16 %v3441
  %v3668 = vpack.c.b16 %v3667, %v3666
  %v3671 = vsel %vm3488, %v3427, 0
  %v3674 = vsel %vm3488, %v3428, 0
  %v3677 = vsel %vm3488, %v3429, 0
  %v3680 = vsel %vm3488, %v3430, 0
  %v3683 = vsel %vm3488, %v3431, 0
  %v3686 = vsel %vm3488, %v3432, 0
  %v3689 = vsel %vm3488, %v3433, 0
  %v3692 = vsel %vm3488, %v3434, 0
  %v3695 = vsel %vm3488, %v3435, 0
  %v3698 = vsel %vm3488, %v3436, 0
  %v3701 = vsel %vm3488, %v3437, 0
  %v3704 = vsel %vm3488, %v3438, 0
  %v3707 = vsel %vm3488, %v3439, 0
  %3709 = vmatprep.subr.bf16.mxu0 0
  %3710 = vmatpush1.bf16.msra.mxu0 %v3668
  %3711 = vmatprep.subr.bf16.mxu0 0
  %3712 = vmatpush1.bf16.msra.mxu0 0
  %3713 = vmatprep.subr.bf16.mxu0 0
  %3714 = vmatpush1.bf16.msra.mxu0 0
  %3715 = vmatprep.subr.bf16.mxu0 0
  %3716 = vmatpush1.bf16.msra.mxu0 0
  %3717 = vmatprep.subr.bf16.mxu0 0
  %3718 = vmatpush1.bf16.msra.mxu0 0
  %3719 = vmatprep.subr.bf16.mxu0 0
  %3720 = vmatpush1.bf16.msra.mxu0 0
  %3721 = vmatprep.subr.bf16.mxu0 0
  %3722 = vmatpush1.bf16.msra.mxu0 0
  %3723 = vmatprep.subr.bf16.mxu0 0
  %3724 = vmatpush1.bf16.msra.mxu0 0
  %3725 = vmatprep.subr.bf16.mxu0 0
  %3726 = vmatpush1.bf16.msra.mxu0 0
  %3727 = vmatprep.subr.bf16.mxu0 0
  %3728 = vmatpush1.bf16.msra.mxu0 0
  %3729 = vmatprep.subr.bf16.mxu0 0
  %3730 = vmatpush1.bf16.msra.mxu0 0
  %3731 = vmatprep.subr.bf16.mxu0 0
  %3732 = vmatpush1.bf16.msra.mxu0 0
  %3733 = vmatprep.subr.bf16.mxu0 0
  %3734 = vmatpush1.bf16.msra.mxu0 0
  %3735 = vmatprep.subr.bf16.mxu0 0
  %3736 = vmatpush1.bf16.msra.mxu0 0
  %3737 = vmatprep.subr.bf16.mxu0 0
  %3738 = vmatpush1.bf16.msra.mxu0 0
  %3739 = vmatprep.subr.bf16.mxu0 0
  %3740 = vmatpush1.bf16.msra.mxu0 0
  %3741 = vmatprep.mubr.bf16.mxu0 0
  %3742 = vmatmul.mubr.bf16.gmra.mrb[0].mxu0 %v3671
  %v3743 = vpop.f32.mrb[0].mxu0
  %v3744 = vadd.f32 %v3563, %v3743
  %v3745 = vpop.f32.mrb[0].mxu0
  %v3746 = vpop.f32.mrb[0].mxu0
  %v3747 = vadd.f32 %v3566, %v3746
  %v3748 = vpop.f32.mrb[0].mxu0
  %3749 = vmatprep.mubr.bf16.mxu0 0
  %3750 = vmatmul.mubr.bf16.gmra.mrb[0].mxu0 %v3674
  %v3751 = vpop.f32.mrb[0].mxu0
  %v3752 = vadd.f32 %v3571, %v3751
  %v3753 = vpop.f32.mrb[0].mxu0
  %v3754 = vpop.f32.mrb[0].mxu0
  %v3755 = vadd.f32 %v3574, %v3754
  %v3756 = vpop.f32.mrb[0].mxu0
  %3757 = vmatprep.mubr.bf16.mxu0 0
  %3758 = vmatmul.mubr.bf16.gmra.mrb[0].mxu0 %v3677
  %v3759 = vpop.f32.mrb[0].mxu0
  %v3760 = vadd.f32 %v3579, %v3759
  %v3761 = vpop.f32.mrb[0].mxu0
  %v3762 = vpop.f32.mrb[0].mxu0
  %v3763 = vadd.f32 %v3582, %v3762
  %v3764 = vpop.f32.mrb[0].mxu0
  %3765 = vmatprep.mubr.bf16.mxu0 0
  %3766 = vmatmul.mubr.bf16.gmra.mrb[0].mxu0 %v3680
  %v3767 = vpop.f32.mrb[0].mxu0
  %v3768 = vadd.f32 %v3587, %v3767
  %v3769 = vpop.f32.mrb[0].mxu0
  %v3770 = vpop.f32.mrb[0].mxu0
  %v3771 = vadd.f32 %v3590, %v3770
  %v3772 = vpop.f32.mrb[0].mxu0
  %3773 = vmatprep.mubr.bf16.mxu0 0
  %3774 = vmatmul.mubr.bf16.gmra.mrb[0].mxu0 %v3683
  %v3775 = vpop.f32.mrb[0].mxu0
  %v3776 = vadd.f32 %v3595, %v3775
  %v3777 = vpop.f32.mrb[0].mxu0
  %v3778 = vpop.f32.mrb[0].mxu0
  %v3779 = vadd.f32 %v3598, %v3778
  %v3780 = vpop.f32.mrb[0].mxu0
  %3781 = vmatprep.mubr.bf16.mxu0 0
  %3782 = vmatmul.mubr.bf16.gmra.mrb[0].mxu0 %v3686
  %v3783 = vpop.f32.mrb[0].mxu0
  %v3784 = vadd.f32 %v3603, %v3783
  %v3785 = vpop.f32.mrb[0].mxu0
  %v3786 = vpop.f32.mrb[0].mxu0
  %v3787 = vadd.f32 %v3606, %v3786
  %v3788 = vpop.f32.mrb[0].mxu0
  %3789 = vmatprep.mubr.bf16.mxu0 0
  %3790 = vmatmul.mubr.bf16.gmra.mrb[0].mxu0 %v3689
  %v3791 = vpop.f32.mrb[0].mxu0
  %v3792 = vadd.f32 %v3611, %v3791
  %v3793 = vpop.f32.mrb[0].mxu0
  %v3794 = vpop.f32.mrb[0].mxu0
  %v3795 = vadd.f32 %v3614, %v3794
  %v3796 = vpop.f32.mrb[0].mxu0
  %3797 = vmatprep.mubr.bf16.mxu0 0
  %3798 = vmatmul.mubr.bf16.gmra.mrb[0].mxu0 %v3692
  %v3799 = vpop.f32.mrb[0].mxu0
  %v3800 = vadd.f32 %v3619, %v3799
  %v3801 = vpop.f32.mrb[0].mxu0
  %v3802 = vpop.f32.mrb[0].mxu0
  %v3803 = vadd.f32 %v3622, %v3802
  %v3804 = vpop.f32.mrb[0].mxu0
  %3805 = vmatprep.mubr.bf16.mxu0 0
  %3806 = vmatmul.mubr.bf16.gmra.mrb[0].mxu0 %v3695
  %v3807 = vpop.f32.mrb[0].mxu0
  %v3808 = vadd.f32 %v3627, %v3807
  %v3809 = vpop.f32.mrb[0].mxu0
  %v3810 = vpop.f32.mrb[0].mxu0
  %v3811 = vadd.f32 %v3630, %v3810
  %v3812 = vpop.f32.mrb[0].mxu0
  %3813 = vmatprep.mubr.bf16.mxu0 0
  %3814 = vmatmul.mubr.bf16.gmra.mrb[0].mxu0 %v3698
  %v3815 = vpop.f32.mrb[0].mxu0
  %v3816 = vadd.f32 %v3635, %v3815
  %v3817 = vpop.f32.mrb[0].mxu0
  %v3818 = vpop.f32.mrb[0].mxu0
  %v3819 = vadd.f32 %v3638, %v3818
  %v3820 = vpop.f32.mrb[0].mxu0
  %3821 = vmatprep.mubr.bf16.mxu0 0
  %3822 = vmatmul.mubr.bf16.gmra.mrb[0].mxu0 %v3701
  %v3823 = vpop.f32.mrb[0].mxu0
  %v3824 = vadd.f32 %v3643, %v3823
  %v3825 = vpop.f32.mrb[0].mxu0
  %v3826 = vpop.f32.mrb[0].mxu0
  %v3827 = vadd.f32 %v3646, %v3826
  %v3828 = vpop.f32.mrb[0].mxu0
  %3829 = vmatprep.mubr.bf16.mxu0 0
  %3830 = vmatmul.mubr.bf16.gmra.mrb[0].mxu0 %v3704
  %v3831 = vpop.f32.mrb[0].mxu0
  %v3832 = vadd.f32 %v3651, %v3831
  %v3833 = vpop.f32.mrb[0].mxu0
  %v3834 = vpop.f32.mrb[0].mxu0
  %v3835 = vadd.f32 %v3654, %v3834
  %v3836 = vpop.f32.mrb[0].mxu0
  %3837 = vmatprep.mubr.bf16.mxu0 0
  %3838 = vmatmul.mubr.bf16.gmra.mrb[0].mxu0 %v3707
  %v3839 = vpop.f32.mrb[0].mxu0
  %v3840 = vadd.f32 %v3659, %v3839
  %v3841 = vpop.f32.mrb[0].mxu0
  %v3842 = vpop.f32.mrb[0].mxu0
  %v3843 = vpop.f32.mrb[0].mxu0
  %3844 = vdwg.mxu0
  %v3845 = vld [vmem:[#allocation2 + $0x7] sm:$0xff]
  %v3846 = vld [vmem:[#allocation2 + $0xf] sm:$0xff]
  %v3847 = vld [vmem:[#allocation2 + $0x17] sm:$0xff]
  %v3848 = vld [vmem:[#allocation2 + $0x1f] sm:$0xff]
  %v3849 = vld [vmem:[#allocation2 + $0x27] sm:$0xff]
  %v3850 = vld [vmem:[#allocation2 + $0x2f] sm:$0xff]
  %v3851 = vld [vmem:[#allocation2 + $0x37] sm:$0xff]
  %v3852 = vld [vmem:[#allocation2 + $0x3f] sm:$0xff]
  %v3853 = vld [vmem:[#allocation2 + $0x47] sm:$0xff]
  %v3854 = vld [vmem:[#allocation2 + $0x4f] sm:$0xff]
  %v3855 = vld [vmem:[#allocation2 + $0x57] sm:$0xff]
  %v3856 = vld [vmem:[#allocation2 + $0x5f] sm:$0xff]
  %v3857 = vld [vmem:[#allocation2 + $0x67] sm:$0xff]
  %v3858 = vld [vmem:[#allocation2 + $0x6f] sm:$0xff]
  %v3859 = vld [vmem:[#allocation2 + $0x77] sm:$0xff]
  %v3860 = vld [vmem:[#allocation2 + $0x7f] sm:$0xff]
  %v3861 = vld [vmem:[#allocation2 + $0x87] sm:$0xff]
  %v3862 = vld [vmem:[#allocation2 + $0x8f] sm:$0xff]
  %v3863 = vld [vmem:[#allocation2 + $0x97] sm:$0xff]
  %v3864 = vld [vmem:[#allocation2 + $0x9f] sm:$0xff]
  %v3865 = vld [vmem:[#allocation2 + $0xa7] sm:$0xff]
  %v3866 = vld [vmem:[#allocation2 + $0xaf] sm:$0xff]
  %v3867 = vld [vmem:[#allocation2 + $0xb7] sm:$0xff]
  %v3868 = vld [vmem:[#allocation2 + $0xbf] sm:$0xff]
  %v3869 = vld [vmem:[#allocation2 + $0xc7] sm:$0xff]
  %v3870 = vpack.c.bf16 %v3846, %v3845
  %v3871 = vpack.c.bf16 %v3848, %v3847
  %v3872 = vpack.c.bf16 %v3850, %v3849
  %v3873 = vpack.c.bf16 %v3852, %v3851
  %v3874 = vpack.c.bf16 %v3854, %v3853
  %v3875 = vpack.c.bf16 %v3856, %v3855
  %v3876 = vpack.c.bf16 %v3858, %v3857
  %v3877 = vpack.c.bf16 %v3860, %v3859
  %v3878 = vpack.c.bf16 %v3862, %v3861
  %v3879 = vpack.c.bf16 %v3864, %v3863
  %v3880 = vpack.c.bf16 %v3866, %v3865
  %v3881 = vpack.c.bf16 %v3868, %v3867
  %v3882 = vpack.c.bf16 %v3869, %v3869
  %v3883 = vld [vmem:[%s4 + $0x10] sm:$0xf]
  %v3884 = vld [vmem:[%s4 + $0x14] sm:$0xf]
  %v3887 = vunpack.c.l.b16 %v3883
  %v3888 = vunpack.c.l.b16 %v3884
  %v3889 = vpack.c.b16 %v3888, %v3887
  %v3892 = vsel %vm3488, %v3870, 0
  %v3895 = vsel %vm3488, %v3871, 0
  %v3898 = vsel %vm3488, %v3872, 0
  %v3901 = vsel %vm3488, %v3873, 0
  %v3904 = vsel %vm3488, %v3874, 0
  %v3907 = vsel %vm3488, %v3875, 0
  %v3910 = vsel %vm3488, %v3876, 0
  %v3913 = vsel %vm3488, %v3877, 0
  %v3916 = vsel %vm3488, %v3878, 0
  %v3919 = vsel %vm3488, %v3879, 0
  %v3922 = vsel %vm3488, %v3880, 0
  %v3925 = vsel %vm3488, %v3881, 0
  %v3928 = vsel %vm3488, %v3882, 0
  %3930 = vmatprep.subr.bf16.mxu0 0
  %3931 = vmatpush1.bf16.msra.mxu0 %v3889
  %3932 = vmatprep.subr.bf16.mxu0 0
  %3933 = vmatpush1.bf16.msra.mxu0 0
  %3934 = vmatprep.subr.bf16.mxu0 0
  %3935 = vmatpush1.bf16.msra.mxu0 0
  %3936 = vmatprep.subr.bf16.mxu0 0
  %3937 = vmatpush1.bf16.msra.mxu0 0
  %3938 = vmatprep.subr.bf16.mxu0 0
  %3939 = vmatpush1.bf16.msra.mxu0 0
  %3940 = vmatprep.subr.bf16.mxu0 0
  %3941 = vmatpush1.bf16.msra.mxu0 0
  %3942 = vmatprep.subr.bf16.mxu0 0
  %3943 = vmatpush1.bf16.msra.mxu0 0
  %3944 = vmatprep.subr.bf16.mxu0 0
  %3945 = vmatpush1.bf16.msra.mxu0 0
  %3946 = vmatprep.subr.bf16.mxu0 0
  %3947 = vmatpush1.bf16.msra.mxu0 0
  %3948 = vmatprep.subr.bf16.mxu0 0
  %3949 = vmatpush1.bf16.msra.mxu0 0
  %3950 = vmatprep.subr.bf16.mxu0 0
  %3951 = vmatpush1.bf16.msra.mxu0 0
  %3952 = vmatprep.subr.bf16.mxu0 0
  %3953 = vmatpush1.bf16.msra.mxu0 0
  %3954 = vmatprep.subr.bf16.mxu0 0
  %3955 = vmatpush1.bf16.msra.mxu0 0
  %3956 = vmatprep.subr.bf16.mxu0 0
  %3957 = vmatpush1.bf16.msra.mxu0 0
  %3958 = vmatprep.subr.bf16.mxu0 0
  %3959 = vmatpush1.bf16.msra.mxu0 0
  %3960 = vmatprep.subr.bf16.mxu0 0
  %3961 = vmatpush1.bf16.msra.mxu0 0
  %3962 = vmatprep.mubr.bf16.mxu0 0
  %3963 = vmatmul.mubr.bf16.gmra.mrb[0].mxu0 %v3892
  %v3964 = vpop.f32.mrb[0].mxu0
  %v3965 = vadd.f32 0.0, %v3964
  %v3966 = vpop.f32.mrb[0].mxu0
  %v3967 = vpop.f32.mrb[0].mxu0
  %v3968 = vadd.f32 0.0, %v3967
  %v3969 = vpop.f32.mrb[0].mxu0
  %3970 = vmatprep.mubr.bf16.mxu0 0
  %3971 = vmatmul.mubr.bf16.gmra.mrb[0].mxu0 %v3895
  %v3972 = vpop.f32.mrb[0].mxu0
  %v3973 = vadd.f32 0.0, %v3972
  %v3974 = vpop.f32.mrb[0].mxu0
  %v3975 = vpop.f32.mrb[0].mxu0
  %v3976 = vadd.f32 0.0, %v3975
  %v3977 = vpop.f32.mrb[0].mxu0
  %3978 = vmatprep.mubr.bf16.mxu0 0
  %3979 = vmatmul.mubr.bf16.gmra.mrb[0].mxu0 %v3898
  %v3980 = vpop.f32.mrb[0].mxu0
  %v3981 = vadd.f32 0.0, %v3980
  %v3982 = vpop.f32.mrb[0].mxu0
  %v3983 = vpop.f32.mrb[0].mxu0
  %v3984 = vadd.f32 0.0, %v3983
  %v3985 = vpop.f32.mrb[0].mxu0
  %3986 = vmatprep.mubr.bf16.mxu0 0
  %3987 = vmatmul.mubr.bf16.gmra.mrb[0].mxu0 %v3901
  %v3988 = vpop.f32.mrb[0].mxu0
  %v3989 = vadd.f32 0.0, %v3988
  %v3990 = vpop.f32.mrb[0].mxu0
  %v3991 = vpop.f32.mrb[0].mxu0
  %v3992 = vadd.f32 0.0, %v3991
  %v3993 = vpop.f32.mrb[0].mxu0
  %3994 = vmatprep.mubr.bf16.mxu0 0
  %3995 = vmatmul.mubr.bf16.gmra.mrb[0].mxu0 %v3904
  %v3996 = vpop.f32.mrb[0].mxu0
  %v3997 = vadd.f32 0.0, %v3996
  %v3998 = vpop.f32.mrb[0].mxu0
  %v3999 = vpop.f32.mrb[0].mxu0
  %v4000 = vadd.f32 0.0, %v3999
  %v4001 = vpop.f32.mrb[0].mxu0
  %4002 = vmatprep.mubr.bf16.mxu0 0
  %4003 = vmatmul.mubr.bf16.gmra.mrb[0].mxu0 %v3907
  %v4004 = vpop.f32.mrb[0].mxu0
  %v4005 = vadd.f32 0.0, %v4004
  %v4006 = vpop.f32.mrb[0].mxu0
  %v4007 = vpop.f32.mrb[0].mxu0
  %v4008 = vadd.f32 0.0, %v4007
  %v4009 = vpop.f32.mrb[0].mxu0
  %4010 = vmatprep.mubr.bf16.mxu0 0
  %4011 = vmatmul.mubr.bf16.gmra.mrb[0].mxu0 %v3910
  %v4012 = vpop.f32.mrb[0].mxu0
  %v4013 = vadd.f32 0.0, %v4012
  %v4014 = vpop.f32.mrb[0].mxu0
  %v4015 = vpop.f32.mrb[0].mxu0
  %v4016 = vadd.f32 0.0, %v4015
  %v4017 = vpop.f32.mrb[0].mxu0
  %4018 = vmatprep.mubr.bf16.mxu0 0
  %4019 = vmatmul.mubr.bf16.gmra.mrb[0].mxu0 %v3913
  %v4020 = vpop.f32.mrb[0].mxu0
  %v4021 = vadd.f32 0.0, %v4020
  %v4022 = vpop.f32.mrb[0].mxu0
  %v4023 = vpop.f32.mrb[0].mxu0
  %v4024 = vadd.f32 0.0, %v4023
  %v4025 = vpop.f32.mrb[0].mxu0
  %4026 = vmatprep.mubr.bf16.mxu0 0
  %4027 = vmatmul.mubr.bf16.gmra.mrb[0].mxu0 %v3916
  %v4028 = vpop.f32.mrb[0].mxu0
  %v4029 = vadd.f32 0.0, %v4028
  %v4030 = vpop.f32.mrb[0].mxu0
  %v4031 = vpop.f32.mrb[0].mxu0
  %v4032 = vadd.f32 0.0, %v4031
  %v4033 = vpop.f32.mrb[0].mxu0
  %4034 = vmatprep.mubr.bf16.mxu0 0
  %4035 = vmatmul.mubr.bf16.gmra.mrb[0].mxu0 %v3919
  %v4036 = vpop.f32.mrb[0].mxu0
  %v4037 = vadd.f32 0.0, %v4036
  %v4038 = vpop.f32.mrb[0].mxu0
  %v4039 = vpop.f32.mrb[0].mxu0
  %v4040 = vadd.f32 0.0, %v4039
  %v4041 = vpop.f32.mrb[0].mxu0
  %4042 = vmatprep.mubr.bf16.mxu0 0
  %4043 = vmatmul.mubr.bf16.gmra.mrb[0].mxu0 %v3922
  %v4044 = vpop.f32.mrb[0].mxu0
  %v4045 = vadd.f32 0.0, %v4044
  %v4046 = vpop.f32.mrb[0].mxu0
  %v4047 = vpop.f32.mrb[0].mxu0
  %v4048 = vadd.f32 0.0, %v4047
  %v4049 = vpop.f32.mrb[0].mxu0
  %4050 = vmatprep.mubr.bf16.mxu0 0
  %4051 = vmatmul.mubr.bf16.gmra.mrb[0].mxu0 %v3925
  %v4052 = vpop.f32.mrb[0].mxu0
  %v4053 = vadd.f32 0.0, %v4052
  %v4054 = vpop.f32.mrb[0].mxu0
  %v4055 = vpop.f32.mrb[0].mxu0
  %v4056 = vadd.f32 0.0, %v4055
  %v4057 = vpop.f32.mrb[0].mxu0
  %4058 = vmatprep.mubr.bf16.mxu0 0
  %4059 = vmatmul.mubr.bf16.gmra.mrb[0].mxu0 %v3928
  %v4060 = vpop.f32.mrb[0].mxu0
  %v4061 = vadd.f32 0.0, %v4060
  %v4062 = vpop.f32.mrb[0].mxu0
  %v4063 = vpop.f32.mrb[0].mxu0
  %v4064 = vpop.f32.mrb[0].mxu0
  %4065 = vdwg.mxu0
  %v4066 = vadd.f32 %v3744, %v3965
  %v4067 = vadd.f32 %v3747, %v3968
  %v4068 = vadd.f32 %v3752, %v3973
  %v4069 = vadd.f32 %v3755, %v3976
  %v4070 = vadd.f32 %v3760, %v3981
  %v4071 = vadd.f32 %v3763, %v3984
  %v4072 = vadd.f32 %v3768, %v3989
  %v4073 = vadd.f32 %v3771, %v3992
  %v4074 = vadd.f32 %v3776, %v3997
  %v4075 = vadd.f32 %v3779, %v4000
  %v4076 = vadd.f32 %v3784, %v4005
  %v4077 = vadd.f32 %v3787, %v4008
  %v4078 = vadd.f32 %v3792, %v4013
  %v4079 = vadd.f32 %v3795, %v4016
  %v4080 = vadd.f32 %v3800, %v4021
  %v4081 = vadd.f32 %v3803, %v4024
  %v4082 = vadd.f32 %v3808, %v4029
  %v4083 = vadd.f32 %v3811, %v4032
  %v4084 = vadd.f32 %v3816, %v4037
  %v4085 = vadd.f32 %v3819, %v4040
  %v4086 = vadd.f32 %v3824, %v4045
  %v4087 = vadd.f32 %v3827, %v4048
  %v4088 = vadd.f32 %v3832, %v4053
  %v4089 = vadd.f32 %v3835, %v4056
  %v4090 = vadd.f32 %v3840, %v4061
  %v4091 = vld [vmem:[#allocation2 + $0xf] sm:$0xff]
  %v4092 = vld [vmem:[#allocation2 + $0x17] sm:$0xff]
  %v4093 = vld [vmem:[#allocation2 + $0x1f] sm:$0xff]
  %v4094 = vld [vmem:[#allocation2 + $0x27] sm:$0xff]
  %v4095 = vld [vmem:[#allocation2 + $0x2f] sm:$0xff]
  %v4096 = vld [vmem:[#allocation2 + $0x37] sm:$0xff]
  %v4097 = vld [vmem:[#allocation2 + $0x3f] sm:$0xff]
  %v4098 = vld [vmem:[#allocation2 + $0x47] sm:$0xff]
  %v4099 = vld [vmem:[#allocation2 + $0x4f] sm:$0xff]
  %v4100 = vld [vmem:[#allocation2 + $0x57] sm:$0xff]
  %v4101 = vld [vmem:[#allocation2 + $0x5f] sm:$0xff]
  %v4102 = vld [vmem:[#allocation2 + $0x67] sm:$0xff]
  %v4103 = vld [vmem:[#allocation2 + $0x6f] sm:$0xff]
  %v4104 = vld [vmem:[#allocation2 + $0x77] sm:$0xff]
  %v4105 = vld [vmem:[#allocation2 + $0x7f] sm:$0xff]
  %v4106 = vld [vmem:[#allocation2 + $0x87] sm:$0xff]
  %v4107 = vld [vmem:[#allocation2 + $0x8f] sm:$0xff]
  %v4108 = vld [vmem:[#allocation2 + $0x97] sm:$0xff]
  %v4109 = vld [vmem:[#allocation2 + $0x9f] sm:$0xff]
  %v4110 = vld [vmem:[#allocation2 + $0xa7] sm:$0xff]
  %v4111 = vld [vmem:[#allocation2 + $0xaf] sm:$0xff]
  %v4112 = vld [vmem:[#allocation2 + $0xb7] sm:$0xff]
  %v4113 = vld [vmem:[#allocation2 + $0xbf] sm:$0xff]
  %v4114 = vld [vmem:[#allocation2 + $0xc7] sm:$0xff]
  %v4115 = vld [vmem:[#allocation2 + $0xcf] sm:$0xff]
  %v4116 = vpack.c.bf16 %v4092, %v4091
  %v4117 = vpack.c.bf16 %v4094, %v4093
  %v4118 = vpack.c.bf16 %v4096, %v4095
  %v4119 = vpack.c.bf16 %v4098, %v4097
  %v4120 = vpack.c.bf16 %v4100, %v4099
  %v4121 = vpack.c.bf16 %v4102, %v4101
  %v4122 = vpack.c.bf16 %v4104, %v4103
  %v4123 = vpack.c.bf16 %v4106, %v4105
  %v4124 = vpack.c.bf16 %v4108, %v4107
  %v4125 = vpack.c.bf16 %v4110, %v4109
  %v4126 = vpack.c.bf16 %v4112, %v4111
  %v4127 = vpack.c.bf16 %v4114, %v4113
  %v4128 = vpack.c.bf16 %v4115, %v4115
  %v4129 = vld [vmem:[%s4 + $0x18] sm:$0xf]
  %v4130 = vld [vmem:[%s4 + $0x1c] sm:$0xf]
  %v4133 = vunpack.c.l.b16 %v4129
  %v4134 = vunpack.c.l.b16 %v4130
  %v4135 = vpack.c.b16 %v4134, %v4133
  %v4138 = vsel %vm3488, %v4116, 0
  %v4141 = vsel %vm3488, %v4117, 0
  %v4144 = vsel %vm3488, %v4118, 0
  %v4147 = vsel %vm3488, %v4119, 0
  %v4150 = vsel %vm3488, %v4120, 0
  %v4153 = vsel %vm3488, %v4121, 0
  %v4156 = vsel %vm3488, %v4122, 0
  %v4159 = vsel %vm3488, %v4123, 0
  %v4162 = vsel %vm3488, %v4124, 0
  %v4165 = vsel %vm3488, %v4125, 0
  %v4168 = vsel %vm3488, %v4126, 0
  %v4171 = vsel %vm3488, %v4127, 0
  %v4174 = vsel %vm3488, %v4128, 0
  %4176 = vmatprep.subr.bf16.mxu0 0
  %4177 = vmatpush1.bf16.msra.mxu0 %v4135
  %4178 = vmatprep.subr.bf16.mxu0 0
  %4179 = vmatpush1.bf16.msra.mxu0 0
  %4180 = vmatprep.subr.bf16.mxu0 0
  %4181 = vmatpush1.bf16.msra.mxu0 0
  %4182 = vmatprep.subr.bf16.mxu0 0
  %4183 = vmatpush1.bf16.msra.mxu0 0
  %4184 = vmatprep.subr.bf16.mxu0 0
  %4185 = vmatpush1.bf16.msra.mxu0 0
  %4186 = vmatprep.subr.bf16.mxu0 0
  %4187 = vmatpush1.bf16.msra.mxu0 0
  %4188 = vmatprep.subr.bf16.mxu0 0
  %4189 = vmatpush1.bf16.msra.mxu0 0
  %4190 = vmatprep.subr.bf16.mxu0 0
  %4191 = vmatpush1.bf16.msra.mxu0 0
  %4192 = vmatprep.subr.bf16.mxu0 0
  %4193 = vmatpush1.bf16.msra.mxu0 0
  %4194 = vmatprep.subr.bf16.mxu0 0
  %4195 = vmatpush1.bf16.msra.mxu0 0
  %4196 = vmatprep.subr.bf16.mxu0 0
  %4197 = vmatpush1.bf16.msra.mxu0 0
  %4198 = vmatprep.subr.bf16.mxu0 0
  %4199 = vmatpush1.bf16.msra.mxu0 0
  %4200 = vmatprep.subr.bf16.mxu0 0
  %4201 = vmatpush1.bf16.msra.mxu0 0
  %4202 = vmatprep.subr.bf16.mxu0 0
  %4203 = vmatpush1.bf16.msra.mxu0 0
  %4204 = vmatprep.subr.bf16.mxu0 0
  %4205 = vmatpush1.bf16.msra.mxu0 0
  %4206 = vmatprep.subr.bf16.mxu0 0
  %4207 = vmatpush1.bf16.msra.mxu0 0
  %4208 = vmatprep.mubr.bf16.mxu0 0
  %4209 = vmatmul.mubr.bf16.gmra.mrb[0].mxu0 %v4138
  %v4210 = vpop.f32.mrb[0].mxu0
  %v4211 = vadd.f32 0.0, %v4210
  %v4212 = vpop.f32.mrb[0].mxu0
  %v4213 = vpop.f32.mrb[0].mxu0
  %v4214 = vadd.f32 0.0, %v4213
  %v4215 = vpop.f32.mrb[0].mxu0
  %4216 = vmatprep.mubr.bf16.mxu0 0
  %4217 = vmatmul.mubr.bf16.gmra.mrb[0].mxu0 %v4141
  %v4218 = vpop.f32.mrb[0].mxu0
  %v4219 = vadd.f32 0.0, %v4218
  %v4220 = vpop.f32.mrb[0].mxu0
  %v4221 = vpop.f32.mrb[0].mxu0
  %v4222 = vadd.f32 0.0, %v4221
  %v4223 = vpop.f32.mrb[0].mxu0
  %4224 = vmatprep.mubr.bf16.mxu0 0
  %4225 = vmatmul.mubr.bf16.gmra.mrb[0].mxu0 %v4144
  %v4226 = vpop.f32.mrb[0].mxu0
  %v4227 = vadd.f32 0.0, %v4226
  %v4228 = vpop.f32.mrb[0].mxu0
  %v4229 = vpop.f32.mrb[0].mxu0
  %v4230 = vadd.f32 0.0, %v4229
  %v4231 = vpop.f32.mrb[0].mxu0
  %4232 = vmatprep.mubr.bf16.mxu0 0
  %4233 = vmatmul.mubr.bf16.gmra.mrb[0].mxu0 %v4147
  %v4234 = vpop.f32.mrb[0].mxu0
  %v4235 = vadd.f32 0.0, %v4234
  %v4236 = vpop.f32.mrb[0].mxu0
  %v4237 = vpop.f32.mrb[0].mxu0
  %v4238 = vadd.f32 0.0, %v4237
  %v4239 = vpop.f32.mrb[0].mxu0
  %4240 = vmatprep.mubr.bf16.mxu0 0
  %4241 = vmatmul.mubr.bf16.gmra.mrb[0].mxu0 %v4150
  %v4242 = vpop.f32.mrb[0].mxu0
  %v4243 = vadd.f32 0.0, %v4242
  %v4244 = vpop.f32.mrb[0].mxu0
  %v4245 = vpop.f32.mrb[0].mxu0
  %v4246 = vadd.f32 0.0, %v4245
  %v4247 = vpop.f32.mrb[0].mxu0
  %4248 = vmatprep.mubr.bf16.mxu0 0
  %4249 = vmatmul.mubr.bf16.gmra.mrb[0].mxu0 %v4153
  %v4250 = vpop.f32.mrb[0].mxu0
  %v4251 = vadd.f32 0.0, %v4250
  %v4252 = vpop.f32.mrb[0].mxu0
  %v4253 = vpop.f32.mrb[0].mxu0
  %v4254 = vadd.f32 0.0, %v4253
  %v4255 = vpop.f32.mrb[0].mxu0
  %4256 = vmatprep.mubr.bf16.mxu0 0
  %4257 = vmatmul.mubr.bf16.gmra.mrb[0].mxu0 %v4156
  %v4258 = vpop.f32.mrb[0].mxu0
  %v4259 = vadd.f32 0.0, %v4258
  %v4260 = vpop.f32.mrb[0].mxu0
  %v4261 = vpop.f32.mrb[0].mxu0
  %v4262 = vadd.f32 0.0, %v4261
  %v4263 = vpop.f32.mrb[0].mxu0
  %4264 = vmatprep.mubr.bf16.mxu0 0
  %4265 = vmatmul.mubr.bf16.gmra.mrb[0].mxu0 %v4159
  %v4266 = vpop.f32.mrb[0].mxu0
  %v4267 = vadd.f32 0.0, %v4266
  %v4268 = vpop.f32.mrb[0].mxu0
  %v4269 = vpop.f32.mrb[0].mxu0
  %v4270 = vadd.f32 0.0, %v4269
  %v4271 = vpop.f32.mrb[0].mxu0
  %4272 = vmatprep.mubr.bf16.mxu0 0
  %4273 = vmatmul.mubr.bf16.gmra.mrb[0].mxu0 %v4162
  %v4274 = vpop.f32.mrb[0].mxu0
  %v4275 = vadd.f32 0.0, %v4274
  %v4276 = vpop.f32.mrb[0].mxu0
  %v4277 = vpop.f32.mrb[0].mxu0
  %v4278 = vadd.f32 0.0, %v4277
  %v4279 = vpop.f32.mrb[0].mxu0
  %4280 = vmatprep.mubr.bf16.mxu0 0
  %4281 = vmatmul.mubr.bf16.gmra.mrb[0].mxu0 %v4165
  %v4282 = vpop.f32.mrb[0].mxu0
  %v4283 = vadd.f32 0.0, %v4282
  %v4284 = vpop.f32.mrb[0].mxu0
  %v4285 = vpop.f32.mrb[0].mxu0
  %v4286 = vadd.f32 0.0, %v4285
  %v4287 = vpop.f32.mrb[0].mxu0
  %4288 = vmatprep.mubr.bf16.mxu0 0
  %4289 = vmatmul.mubr.bf16.gmra.mrb[0].mxu0 %v4168
  %v4290 = vpop.f32.mrb[0].mxu0
  %v4291 = vadd.f32 0.0, %v4290
  %v4292 = vpop.f32.mrb[0].mxu0
  %v4293 = vpop.f32.mrb[0].mxu0
  %v4294 = vadd.f32 0.0, %v4293
  %v4295 = vpop.f32.mrb[0].mxu0
  %4296 = vmatprep.mubr.bf16.mxu0 0
  %4297 = vmatmul.mubr.bf16.gmra.mrb[0].mxu0 %v4171
  %v4298 = vpop.f32.mrb[0].mxu0
  %v4299 = vadd.f32 0.0, %v4298
  %v4300 = vpop.f32.mrb[0].mxu0
  %v4301 = vpop.f32.mrb[0].mxu0
  %v4302 = vadd.f32 0.0, %v4301
  %v4303 = vpop.f32.mrb[0].mxu0
  %4304 = vmatprep.mubr.bf16.mxu0 0
  %4305 = vmatmul.mubr.bf16.gmra.mrb[0].mxu0 %v4174
  %v4306 = vpop.f32.mrb[0].mxu0
  %v4307 = vadd.f32 0.0, %v4306
  %v4308 = vpop.f32.mrb[0].mxu0
  %v4309 = vpop.f32.mrb[0].mxu0
  %v4310 = vpop.f32.mrb[0].mxu0
  %4311 = vdwg.mxu0
  %v4312 = vadd.f32 %v4066, %v4211
  %v4313 = vadd.f32 %v4067, %v4214
  %v4314 = vadd.f32 %v4068, %v4219
  %v4315 = vadd.f32 %v4069, %v4222
  %v4316 = vadd.f32 %v4070, %v4227
  %v4317 = vadd.f32 %v4071, %v4230
  %v4318 = vadd.f32 %v4072, %v4235
  %v4319 = vadd.f32 %v4073, %v4238
  %v4320 = vadd.f32 %v4074, %v4243
  %v4321 = vadd.f32 %v4075, %v4246
  %v4322 = vadd.f32 %v4076, %v4251
  %v4323 = vadd.f32 %v4077, %v4254
  %v4324 = vadd.f32 %v4078, %v4259
  %v4325 = vadd.f32 %v4079, %v4262
  %v4326 = vadd.f32 %v4080, %v4267
  %v4327 = vadd.f32 %v4081, %v4270
  %v4328 = vadd.f32 %v4082, %v4275
  %v4329 = vadd.f32 %v4083, %v4278
  %v4330 = vadd.f32 %v4084, %v4283
  %v4331 = vadd.f32 %v4085, %v4286
  %v4332 = vadd.f32 %v4086, %v4291
  %v4333 = vadd.f32 %v4087, %v4294
  %v4334 = vadd.f32 %v4088, %v4299
  %v4335 = vadd.f32 %v4089, %v4302
  %v4336 = vadd.f32 %v4090, %v4307
  %v4337 = vld [vmem:[#allocation2 + $0x10] sm:$0xff]
  %v4338 = vld [vmem:[#allocation2 + $0x18] sm:$0xff]
  %v4339 = vld [vmem:[#allocation2 + $0x20] sm:$0xff]
  %v4340 = vld [vmem:[#allocation2 + $0x28] sm:$0xff]
  %v4341 = vld [vmem:[#allocation2 + $0x30] sm:$0xff]
  %v4342 = vld [vmem:[#allocation2 + $0x38] sm:$0xff]
  %v4343 = vld [vmem:[#allocation2 + $0x40] sm:$0xff]
  %v4344 = vld [vmem:[#allocation2 + $0x48] sm:$0xff]
  %v4345 = vld [vmem:[#allocation2 + $0x50] sm:$0xff]
  %v4346 = vld [vmem:[#allocation2 + $0x58] sm:$0xff]
  %v4347 = vld [vmem:[#allocation2 + $0x60] sm:$0xff]
  %v4348 = vld [vmem:[#allocation2 + $0x68] sm:$0xff]
  %v4349 = vld [vmem:[#allocation2 + $0x70] sm:$0xff]
  %v4350 = vld [vmem:[#allocation2 + $0x78] sm:$0xff]
  %v4351 = vld [vmem:[#allocation2 + $0x80] sm:$0xff]
  %v4352 = vld [vmem:[#allocation2 + $0x88] sm:$0xff]
  %v4353 = vld [vmem:[#allocation2 + $0x90] sm:$0xff]
  %v4354 = vld [vmem:[#allocation2 + $0x98] sm:$0xff]
  %v4355 = vld [vmem:[#allocation2 + $0xa0] sm:$0xff]
  %v4356 = vld [vmem:[#allocation2 + $0xa8] sm:$0xff]
  %v4357 = vld [vmem:[#allocation2 + $0xb0] sm:$0xff]
  %v4358 = vld [vmem:[#allocation2 + $0xb8] sm:$0xff]
  %v4359 = vld [vmem:[#allocation2 + $0xc0] sm:$0xff]
  %v4360 = vld [vmem:[#allocation2 + $0xc8] sm:$0xff]
  %v4361 = vld [vmem:[#allocation2 + $0xd0] sm:$0xff]
  %v4362 = vpack.c.bf16 %v4338, %v4337
  %v4363 = vpack.c.bf16 %v4340, %v4339
  %v4364 = vpack.c.bf16 %v4342, %v4341
  %v4365 = vpack.c.bf16 %v4344, %v4343
  %v4366 = vpack.c.bf16 %v4346, %v4345
  %v4367 = vpack.c.bf16 %v4348, %v4347
  %v4368 = vpack.c.bf16 %v4350, %v4349
  %v4369 = vpack.c.bf16 %v4352, %v4351
  %v4370 = vpack.c.bf16 %v4354, %v4353
  %v4371 = vpack.c.bf16 %v4356, %v4355
  %v4372 = vpack.c.bf16 %v4358, %v4357
  %v4373 = vpack.c.bf16 %v4360, %v4359
  %v4374 = vpack.c.bf16 %v4361, %v4361
  %v4375 = vld [vmem:[%s4 + $0x20] sm:$0xf]
  %v4376 = vld [vmem:[%s4 + $0x24] sm:$0xf]
  %v4379 = vunpack.c.l.b16 %v4375
  %v4380 = vunpack.c.l.b16 %v4376
  %v4381 = vpack.c.b16 %v4380, %v4379
  %v4384 = vsel %vm3488, %v4362, 0
  %v4387 = vsel %vm3488, %v4363, 0
  %v4390 = vsel %vm3488, %v4364, 0
  %v4393 = vsel %vm3488, %v4365, 0
  %v4396 = vsel %vm3488, %v4366, 0
  %v4399 = vsel %vm3488, %v4367, 0
  %v4402 = vsel %vm3488, %v4368, 0
  %v4405 = vsel %vm3488, %v4369, 0
  %v4408 = vsel %vm3488, %v4370, 0
  %v4411 = vsel %vm3488, %v4371, 0
  %v4414 = vsel %vm3488, %v4372, 0
  %v4417 = vsel %vm3488, %v4373, 0
  %v4420 = vsel %vm3488, %v4374, 0
  %4422 = vmatprep.subr.bf16.mxu0 0
  %4423 = vmatpush1.bf16.msra.mxu0 %v4381
  %4424 = vmatprep.subr.bf16.mxu0 0
  %4425 = vmatpush1.bf16.msra.mxu0 0
  %4426 = vmatprep.subr.bf16.mxu0 0
  %4427 = vmatpush1.bf16.msra.mxu0 0
  %4428 = vmatprep.subr.bf16.mxu0 0
  %4429 = vmatpush1.bf16.msra.mxu0 0
  %4430 = vmatprep.subr.bf16.mxu0 0
  %4431 = vmatpush1.bf16.msra.mxu0 0
  %4432 = vmatprep.subr.bf16.mxu0 0
  %4433 = vmatpush1.bf16.msra.mxu0 0
  %4434 = vmatprep.subr.bf16.mxu0 0
  %4435 = vmatpush1.bf16.msra.mxu0 0
  %4436 = vmatprep.subr.bf16.mxu0 0
  %4437 = vmatpush1.bf16.msra.mxu0 0
  %4438 = vmatprep.subr.bf16.mxu0 0
  %4439 = vmatpush1.bf16.msra.mxu0 0
  %4440 = vmatprep.subr.bf16.mxu0 0
  %4441 = vmatpush1.bf16.msra.mxu0 0
  %4442 = vmatprep.subr.bf16.mxu0 0
  %4443 = vmatpush1.bf16.msra.mxu0 0
  %4444 = vmatprep.subr.bf16.mxu0 0
  %4445 = vmatpush1.bf16.msra.mxu0 0
  %4446 = vmatprep.subr.bf16.mxu0 0
  %4447 = vmatpush1.bf16.msra.mxu0 0
  %4448 = vmatprep.subr.bf16.mxu0 0
  %4449 = vmatpush1.bf16.msra.mxu0 0
  %4450 = vmatprep.subr.bf16.mxu0 0
  %4451 = vmatpush1.bf16.msra.mxu0 0
  %4452 = vmatprep.subr.bf16.mxu0 0
  %4453 = vmatpush1.bf16.msra.mxu0 0
  %4454 = vmatprep.mubr.bf16.mxu0 0
  %4455 = vmatmul.mubr.bf16.gmra.mrb[0].mxu0 %v4384
  %v4456 = vpop.f32.mrb[0].mxu0
  %v4457 = vadd.f32 0.0, %v4456
  %v4458 = vpop.f32.mrb[0].mxu0
  %v4459 = vpop.f32.mrb[0].mxu0
  %v4460 = vadd.f32 0.0, %v4459
  %v4461 = vpop.f32.mrb[0].mxu0
  %4462 = vmatprep.mubr.bf16.mxu0 0
  %4463 = vmatmul.mubr.bf16.gmra.mrb[0].mxu0 %v4387
  %v4464 = vpop.f32.mrb[0].mxu0
  %v4465 = vadd.f32 0.0, %v4464
  %v4466 = vpop.f32.mrb[0].mxu0
  %v4467 = vpop.f32.mrb[0].mxu0
  %v4468 = vadd.f32 0.0, %v4467
  %v4469 = vpop.f32.mrb[0].mxu0
  %4470 = vmatprep.mubr.bf16.mxu0 0
  %4471 = vmatmul.mubr.bf16.gmra.mrb[0].mxu0 %v4390
  %v4472 = vpop.f32.mrb[0].mxu0
  %v4473 = vadd.f32 0.0, %v4472
  %v4474 = vpop.f32.mrb[0].mxu0
  %v4475 = vpop.f32.mrb[0].mxu0
  %v4476 = vadd.f32 0.0, %v4475
  %v4477 = vpop.f32.mrb[0].mxu0
  %4478 = vmatprep.mubr.bf16.mxu0 0
  %4479 = vmatmul.mubr.bf16.gmra.mrb[0].mxu0 %v4393
  %v4480 = vpop.f32.mrb[0].mxu0
  %v4481 = vadd.f32 0.0, %v4480
  %v4482 = vpop.f32.mrb[0].mxu0
  %v4483 = vpop.f32.mrb[0].mxu0
  %v4484 = vadd.f32 0.0, %v4483
  %v4485 = vpop.f32.mrb[0].mxu0
  %4486 = vmatprep.mubr.bf16.mxu0 0
  %4487 = vmatmul.mubr.bf16.gmra.mrb[0].mxu0 %v4396
  %v4488 = vpop.f32.mrb[0].mxu0
  %v4489 = vadd.f32 0.0, %v4488
  %v4490 = vpop.f32.mrb[0].mxu0
  %v4491 = vpop.f32.mrb[0].mxu0
  %v4492 = vadd.f32 0.0, %v4491
  %v4493 = vpop.f32.mrb[0].mxu0
  %4494 = vmatprep.mubr.bf16.mxu0 0
  %4495 = vmatmul.mubr.bf16.gmra.mrb[0].mxu0 %v4399
  %v4496 = vpop.f32.mrb[0].mxu0
  %v4497 = vadd.f32 0.0, %v4496
  %v4498 = vpop.f32.mrb[0].mxu0
  %v4499 = vpop.f32.mrb[0].mxu0
  %v4500 = vadd.f32 0.0, %v4499
  %v4501 = vpop.f32.mrb[0].mxu0
  %4502 = vmatprep.mubr.bf16.mxu0 0
  %4503 = vmatmul.mubr.bf16.gmra.mrb[0].mxu0 %v4402
  %v4504 = vpop.f32.mrb[0].mxu0
  %v4505 = vadd.f32 0.0, %v4504
  %v4506 = vpop.f32.mrb[0].mxu0
  %v4507 = vpop.f32.mrb[0].mxu0
  %v4508 = vadd.f32 0.0, %v4507
  %v4509 = vpop.f32.mrb[0].mxu0
  %4510 = vmatprep.mubr.bf16.mxu0 0
  %4511 = vmatmul.mubr.bf16.gmra.mrb[0].mxu0 %v4405
  %v4512 = vpop.f32.mrb[0].mxu0
  %v4513 = vadd.f32 0.0, %v4512
  %v4514 = vpop.f32.mrb[0].mxu0
  %v4515 = vpop.f32.mrb[0].mxu0
  %v4516 = vadd.f32 0.0, %v4515
  %v4517 = vpop.f32.mrb[0].mxu0
  %4518 = vmatprep.mubr.bf16.mxu0 0
  %4519 = vmatmul.mubr.bf16.gmra.mrb[0].mxu0 %v4408
  %v4520 = vpop.f32.mrb[0].mxu0
  %v4521 = vadd.f32 0.0, %v4520
  %v4522 = vpop.f32.mrb[0].mxu0
  %v4523 = vpop.f32.mrb[0].mxu0
  %v4524 = vadd.f32 0.0, %v4523
  %v4525 = vpop.f32.mrb[0].mxu0
  %4526 = vmatprep.mubr.bf16.mxu0 0
  %4527 = vmatmul.mubr.bf16.gmra.mrb[0].mxu0 %v4411
  %v4528 = vpop.f32.mrb[0].mxu0
  %v4529 = vadd.f32 0.0, %v4528
  %v4530 = vpop.f32.mrb[0].mxu0
  %v4531 = vpop.f32.mrb[0].mxu0
  %v4532 = vadd.f32 0.0, %v4531
  %v4533 = vpop.f32.mrb[0].mxu0
  %4534 = vmatprep.mubr.bf16.mxu0 0
  %4535 = vmatmul.mubr.bf16.gmra.mrb[0].mxu0 %v4414
  %v4536 = vpop.f32.mrb[0].mxu0
  %v4537 = vadd.f32 0.0, %v4536
  %v4538 = vpop.f32.mrb[0].mxu0
  %v4539 = vpop.f32.mrb[0].mxu0
  %v4540 = vadd.f32 0.0, %v4539
  %v4541 = vpop.f32.mrb[0].mxu0
  %4542 = vmatprep.mubr.bf16.mxu0 0
  %4543 = vmatmul.mubr.bf16.gmra.mrb[0].mxu0 %v4417
  %v4544 = vpop.f32.mrb[0].mxu0
  %v4545 = vadd.f32 0.0, %v4544
  %v4546 = vpop.f32.mrb[0].mxu0
  %v4547 = vpop.f32.mrb[0].mxu0
  %v4548 = vadd.f32 0.0, %v4547
  %v4549 = vpop.f32.mrb[0].mxu0
  %4550 = vmatprep.mubr.bf16.mxu0 0
  %4551 = vmatmul.mubr.bf16.gmra.mrb[0].mxu0 %v4420
  %v4552 = vpop.f32.mrb[0].mxu0
  %v4553 = vadd.f32 0.0, %v4552
  %v4554 = vpop.f32.mrb[0].mxu0
  %v4555 = vpop.f32.mrb[0].mxu0
  %v4556 = vpop.f32.mrb[0].mxu0
  %4557 = vdwg.mxu0
  %v4558 = vadd.f32 %v4312, %v4457
  %v4559 = vadd.f32 %v4313, %v4460
  %v4560 = vadd.f32 %v4314, %v4465
  %v4561 = vadd.f32 %v4315, %v4468
  %v4562 = vadd.f32 %v4316, %v4473
  %v4563 = vadd.f32 %v4317, %v4476
  %v4564 = vadd.f32 %v4318, %v4481
  %v4565 = vadd.f32 %v4319, %v4484
  %v4566 = vadd.f32 %v4320, %v4489
  %v4567 = vadd.f32 %v4321, %v4492
  %v4568 = vadd.f32 %v4322, %v4497
  %v4569 = vadd.f32 %v4323, %v4500
  %v4570 = vadd.f32 %v4324, %v4505
  %v4571 = vadd.f32 %v4325, %v4508
  %v4572 = vadd.f32 %v4326, %v4513
  %v4573 = vadd.f32 %v4327, %v4516
  %v4574 = vadd.f32 %v4328, %v4521
  %v4575 = vadd.f32 %v4329, %v4524
  %v4576 = vadd.f32 %v4330, %v4529
  %v4577 = vadd.f32 %v4331, %v4532
  %v4578 = vadd.f32 %v4332, %v4537
  %v4579 = vadd.f32 %v4333, %v4540
  %v4580 = vadd.f32 %v4334, %v4545
  %v4581 = vadd.f32 %v4335, %v4548
  %v4582 = vadd.f32 %v4336, %v4553
  %v4583 = vld [vmem:[#allocation2 + $0x11] sm:$0xff]
  %v4584 = vld [vmem:[#allocation2 + $0x19] sm:$0xff]
  %v4585 = vld [vmem:[#allocation2 + $0x21] sm:$0xff]
  %v4586 = vld [vmem:[#allocation2 + $0x29] sm:$0xff]
  %v4587 = vld [vmem:[#allocation2 + $0x31] sm:$0xff]
  %v4588 = vld [vmem:[#allocation2 + $0x39] sm:$0xff]
  %v4589 = vld [vmem:[#allocation2 + $0x41] sm:$0xff]
  %v4590 = vld [vmem:[#allocation2 + $0x49] sm:$0xff]
  %v4591 = vld [vmem:[#allocation2 + $0x51] sm:$0xff]
  %v4592 = vld [vmem:[#allocation2 + $0x59] sm:$0xff]
  %v4593 = vld [vmem:[#allocation2 + $0x61] sm:$0xff]
  %v4594 = vld [vmem:[#allocation2 + $0x69] sm:$0xff]
  %v4595 = vld [vmem:[#allocation2 + $0x71] sm:$0xff]
  %v4596 = vld [vmem:[#allocation2 + $0x79] sm:$0xff]
  %v4597 = vld [vmem:[#allocation2 + $0x81] sm:$0xff]
  %v4598 = vld [vmem:[#allocation2 + $0x89] sm:$0xff]
  %v4599 = vld [vmem:[#allocation2 + $0x91] sm:$0xff]
  %v4600 = vld [vmem:[#allocation2 + $0x99] sm:$0xff]
  %v4601 = vld [vmem:[#allocation2 + $0xa1] sm:$0xff]
  %v4602 = vld [vmem:[#allocation2 + $0xa9] sm:$0xff]
  %v4603 = vld [vmem:[#allocation2 + $0xb1] sm:$0xff]
  %v4604 = vld [vmem:[#allocation2 + $0xb9] sm:$0xff]
  %v4605 = vld [vmem:[#allocation2 + $0xc1] sm:$0xff]
  %v4606 = vld [vmem:[#allocation2 + $0xc9] sm:$0xff]
  %v4607 = vld [vmem:[#allocation2 + $0xd1] sm:$0xff]
  %v4608 = vpack.c.bf16 %v4584, %v4583
  %v4609 = vpack.c.bf16 %v4586, %v4585
  %v4610 = vpack.c.bf16 %v4588, %v4587
  %v4611 = vpack.c.bf16 %v4590, %v4589
  %v4612 = vpack.c.bf16 %v4592, %v4591
  %v4613 = vpack.c.bf16 %v4594, %v4593
  %v4614 = vpack.c.bf16 %v4596, %v4595
  %v4615 = vpack.c.bf16 %v4598, %v4597
  %v4616 = vpack.c.bf16 %v4600, %v4599
  %v4617 = vpack.c.bf16 %v4602, %v4601
  %v4618 = vpack.c.bf16 %v4604, %v4603
  %v4619 = vpack.c.bf16 %v4606, %v4605
  %v4620 = vpack.c.bf16 %v4607, %v4607
  %v4621 = vld [vmem:[%s4 + $0x28] sm:$0xf]
  %v4622 = vld [vmem:[%s4 + $0x2c] sm:$0xf]
  %v4625 = vunpack.c.l.b16 %v4621
  %v4626 = vunpack.c.l.b16 %v4622
  %v4627 = vpack.c.b16 %v4626, %v4625
  %v4630 = vsel %vm3488, %v4608, 0
  %v4633 = vsel %vm3488, %v4609, 0
  %v4636 = vsel %vm3488, %v4610, 0
  %v4639 = vsel %vm3488, %v4611, 0
  %v4642 = vsel %vm3488, %v4612, 0
  %v4645 = vsel %vm3488, %v4613, 0
  %v4648 = vsel %vm3488, %v4614, 0
  %v4651 = vsel %vm3488, %v4615, 0
  %v4654 = vsel %vm3488, %v4616, 0
  %v4657 = vsel %vm3488, %v4617, 0
  %v4660 = vsel %vm3488, %v4618, 0
  %v4663 = vsel %vm3488, %v4619, 0
  %v4666 = vsel %vm3488, %v4620, 0
  %4668 = vmatprep.subr.bf16.mxu0 0
  %4669 = vmatpush1.bf16.msra.mxu0 %v4627
  %4670 = vmatprep.subr.bf16.mxu0 0
  %4671 = vmatpush1.bf16.msra.mxu0 0
  %4672 = vmatprep.subr.bf16.mxu0 0
  %4673 = vmatpush1.bf16.msra.mxu0 0
  %4674 = vmatprep.subr.bf16.mxu0 0
  %4675 = vmatpush1.bf16.msra.mxu0 0
  %4676 = vmatprep.subr.bf16.mxu0 0
  %4677 = vmatpush1.bf16.msra.mxu0 0
  %4678 = vmatprep.subr.bf16.mxu0 0
  %4679 = vmatpush1.bf16.msra.mxu0 0
  %4680 = vmatprep.subr.bf16.mxu0 0
  %4681 = vmatpush1.bf16.msra.mxu0 0
  %4682 = vmatprep.subr.bf16.mxu0 0
  %4683 = vmatpush1.bf16.msra.mxu0 0
  %4684 = vmatprep.subr.bf16.mxu0 0
  %4685 = vmatpush1.bf16.msra.mxu0 0
  %4686 = vmatprep.subr.bf16.mxu0 0
  %4687 = vmatpush1.bf16.msra.mxu0 0
  %4688 = vmatprep.subr.bf16.mxu0 0
  %4689 = vmatpush1.bf16.msra.mxu0 0
  %4690 = vmatprep.subr.bf16.mxu0 0
  %4691 = vmatpush1.bf16.msra.mxu0 0
  %4692 = vmatprep.subr.bf16.mxu0 0
  %4693 = vmatpush1.bf16.msra.mxu0 0
  %4694 = vmatprep.subr.bf16.mxu0 0
  %4695 = vmatpush1.bf16.msra.mxu0 0
  %4696 = vmatprep.subr.bf16.mxu0 0
  %4697 = vmatpush1.bf16.msra.mxu0 0
  %4698 = vmatprep.subr.bf16.mxu0 0
  %4699 = vmatpush1.bf16.msra.mxu0 0
  %4700 = vmatprep.mubr.bf16.mxu0 0
  %4701 = vmatmul.mubr.bf16.gmra.mrb[0].mxu0 %v4630
  %v4702 = vpop.f32.mrb[0].mxu0
  %v4703 = vadd.f32 0.0, %v4702
  %v4704 = vpop.f32.mrb[0].mxu0
  %v4705 = vpop.f32.mrb[0].mxu0
  %v4706 = vadd.f32 0.0, %v4705
  %v4707 = vpop.f32.mrb[0].mxu0
  %4708 = vmatprep.mubr.bf16.mxu0 0
  %4709 = vmatmul.mubr.bf16.gmra.mrb[0].mxu0 %v4633
  %v4710 = vpop.f32.mrb[0].mxu0
  %v4711 = vadd.f32 0.0, %v4710
  %v4712 = vpop.f32.mrb[0].mxu0
  %v4713 = vpop.f32.mrb[0].mxu0
  %v4714 = vadd.f32 0.0, %v4713
  %v4715 = vpop.f32.mrb[0].mxu0
  %4716 = vmatprep.mubr.bf16.mxu0 0
  %4717 = vmatmul.mubr.bf16.gmra.mrb[0].mxu0 %v4636
  %v4718 = vpop.f32.mrb[0].mxu0
  %v4719 = vadd.f32 0.0, %v4718
  %v4720 = vpop.f32.mrb[0].mxu0
  %v4721 = vpop.f32.mrb[0].mxu0
  %v4722 = vadd.f32 0.0, %v4721
  %v4723 = vpop.f32.mrb[0].mxu0
  %4724 = vmatprep.mubr.bf16.mxu0 0
  %4725 = vmatmul.mubr.bf16.gmra.mrb[0].mxu0 %v4639
  %v4726 = vpop.f32.mrb[0].mxu0
  %v4727 = vadd.f32 0.0, %v4726
  %v4728 = vpop.f32.mrb[0].mxu0
  %v4729 = vpop.f32.mrb[0].mxu0
  %v4730 = vadd.f32 0.0, %v4729
  %v4731 = vpop.f32.mrb[0].mxu0
  %4732 = vmatprep.mubr.bf16.mxu0 0
  %4733 = vmatmul.mubr.bf16.gmra.mrb[0].mxu0 %v4642
  %v4734 = vpop.f32.mrb[0].mxu0
  %v4735 = vadd.f32 0.0, %v4734
  %v4736 = vpop.f32.mrb[0].mxu0
  %v4737 = vpop.f32.mrb[0].mxu0
  %v4738 = vadd.f32 0.0, %v4737
  %v4739 = vpop.f32.mrb[0].mxu0
  %4740 = vmatprep.mubr.bf16.mxu0 0
  %4741 = vmatmul.mubr.bf16.gmra.mrb[0].mxu0 %v4645
  %v4742 = vpop.f32.mrb[0].mxu0
  %v4743 = vadd.f32 0.0, %v4742
  %v4744 = vpop.f32.mrb[0].mxu0
  %v4745 = vpop.f32.mrb[0].mxu0
  %v4746 = vadd.f32 0.0, %v4745
  %v4747 = vpop.f32.mrb[0].mxu0
  %4748 = vmatprep.mubr.bf16.mxu0 0
  %4749 = vmatmul.mubr.bf16.gmra.mrb[0].mxu0 %v4648
  %v4750 = vpop.f32.mrb[0].mxu0
  %v4751 = vadd.f32 0.0, %v4750
  %v4752 = vpop.f32.mrb[0].mxu0
  %v4753 = vpop.f32.mrb[0].mxu0
  %v4754 = vadd.f32 0.0, %v4753
  %v4755 = vpop.f32.mrb[0].mxu0
  %4756 = vmatprep.mubr.bf16.mxu0 0
  %4757 = vmatmul.mubr.bf16.gmra.mrb[0].mxu0 %v4651
  %v4758 = vpop.f32.mrb[0].mxu0
  %v4759 = vadd.f32 0.0, %v4758
  %v4760 = vpop.f32.mrb[0].mxu0
  %v4761 = vpop.f32.mrb[0].mxu0
  %v4762 = vadd.f32 0.0, %v4761
  %v4763 = vpop.f32.mrb[0].mxu0
  %4764 = vmatprep.mubr.bf16.mxu0 0
  %4765 = vmatmul.mubr.bf16.gmra.mrb[0].mxu0 %v4654
  %v4766 = vpop.f32.mrb[0].mxu0
  %v4767 = vadd.f32 0.0, %v4766
  %v4768 = vpop.f32.mrb[0].mxu0
  %v4769 = vpop.f32.mrb[0].mxu0
  %v4770 = vadd.f32 0.0, %v4769
  %v4771 = vpop.f32.mrb[0].mxu0
  %4772 = vmatprep.mubr.bf16.mxu0 0
  %4773 = vmatmul.mubr.bf16.gmra.mrb[0].mxu0 %v4657
  %v4774 = vpop.f32.mrb[0].mxu0
  %v4775 = vadd.f32 0.0, %v4774
  %v4776 = vpop.f32.mrb[0].mxu0
  %v4777 = vpop.f32.mrb[0].mxu0
  %v4778 = vadd.f32 0.0, %v4777
  %v4779 = vpop.f32.mrb[0].mxu0
  %4780 = vmatprep.mubr.bf16.mxu0 0
  %4781 = vmatmul.mubr.bf16.gmra.mrb[0].mxu0 %v4660
  %v4782 = vpop.f32.mrb[0].mxu0
  %v4783 = vadd.f32 0.0, %v4782
  %v4784 = vpop.f32.mrb[0].mxu0
  %v4785 = vpop.f32.mrb[0].mxu0
  %v4786 = vadd.f32 0.0, %v4785
  %v4787 = vpop.f32.mrb[0].mxu0
  %4788 = vmatprep.mubr.bf16.mxu0 0
  %4789 = vmatmul.mubr.bf16.gmra.mrb[0].mxu0 %v4663
  %v4790 = vpop.f32.mrb[0].mxu0
  %v4791 = vadd.f32 0.0, %v4790
  %v4792 = vpop.f32.mrb[0].mxu0
  %v4793 = vpop.f32.mrb[0].mxu0
  %v4794 = vadd.f32 0.0, %v4793
  %v4795 = vpop.f32.mrb[0].mxu0
  %4796 = vmatprep.mubr.bf16.mxu0 0
  %4797 = vmatmul.mubr.bf16.gmra.mrb[0].mxu0 %v4666
  %v4798 = vpop.f32.mrb[0].mxu0
  %v4799 = vadd.f32 0.0, %v4798
  %v4800 = vpop.f32.mrb[0].mxu0
  %v4801 = vpop.f32.mrb[0].mxu0
  %v4802 = vpop.f32.mrb[0].mxu0
  %4803 = vdwg.mxu0
  %v4804 = vadd.f32 %v4558, %v4703
  %v4805 = vadd.f32 %v4559, %v4706
  %v4806 = vadd.f32 %v4560, %v4711
  %v4807 = vadd.f32 %v4561, %v4714
  %v4808 = vadd.f32 %v4562, %v4719
  %v4809 = vadd.f32 %v4563, %v4722
  %v4810 = vadd.f32 %v4564, %v4727
  %v4811 = vadd.f32 %v4565, %v4730
  %v4812 = vadd.f32 %v4566, %v4735
  %v4813 = vadd.f32 %v4567, %v4738
  %v4814 = vadd.f32 %v4568, %v4743
  %v4815 = vadd.f32 %v4569, %v4746
  %v4816 = vadd.f32 %v4570, %v4751
  %v4817 = vadd.f32 %v4571, %v4754
  %v4818 = vadd.f32 %v4572, %v4759
  %v4819 = vadd.f32 %v4573, %v4762
  %v4820 = vadd.f32 %v4574, %v4767
  %v4821 = vadd.f32 %v4575, %v4770
  %v4822 = vadd.f32 %v4576, %v4775
  %v4823 = vadd.f32 %v4577, %v4778
  %v4824 = vadd.f32 %v4578, %v4783
  %v4825 = vadd.f32 %v4579, %v4786
  %v4826 = vadd.f32 %v4580, %v4791
  %v4827 = vadd.f32 %v4581, %v4794
  %v4828 = vadd.f32 %v4582, %v4799
  %v4829 = vld [vmem:[#allocation2 + $0x19] sm:$0xff]
  %v4830 = vld [vmem:[#allocation2 + $0x21] sm:$0xff]
  %v4831 = vld [vmem:[#allocation2 + $0x29] sm:$0xff]
  %v4832 = vld [vmem:[#allocation2 + $0x31] sm:$0xff]
  %v4833 = vld [vmem:[#allocation2 + $0x39] sm:$0xff]
  %v4834 = vld [vmem:[#allocation2 + $0x41] sm:$0xff]
  %v4835 = vld [vmem:[#allocation2 + $0x49] sm:$0xff]
  %v4836 = vld [vmem:[#allocation2 + $0x51] sm:$0xff]
  %v4837 = vld [vmem:[#allocation2 + $0x59] sm:$0xff]
  %v4838 = vld [vmem:[#allocation2 + $0x61] sm:$0xff]
  %v4839 = vld [vmem:[#allocation2 + $0x69] sm:$0xff]
  %v4840 = vld [vmem:[#allocation2 + $0x71] sm:$0xff]
  %v4841 = vld [vmem:[#allocation2 + $0x79] sm:$0xff]
  %v4842 = vld [vmem:[#allocation2 + $0x81] sm:$0xff]
  %v4843 = vld [vmem:[#allocation2 + $0x89] sm:$0xff]
  %v4844 = vld [vmem:[#allocation2 + $0x91] sm:$0xff]
  %v4845 = vld [vmem:[#allocation2 + $0x99] sm:$0xff]
  %v4846 = vld [vmem:[#allocation2 + $0xa1] sm:$0xff]
  %v4847 = vld [vmem:[#allocation2 + $0xa9] sm:$0xff]
  %v4848 = vld [vmem:[#allocation2 + $0xb1] sm:$0xff]
  %v4849 = vld [vmem:[#allocation2 + $0xb9] sm:$0xff]
  %v4850 = vld [vmem:[#allocation2 + $0xc1] sm:$0xff]
  %v4851 = vld [vmem:[#allocation2 + $0xc9] sm:$0xff]
  %v4852 = vld [vmem:[#allocation2 + $0xd1] sm:$0xff]
  %v4853 = vld [vmem:[#allocation2 + $0xd9] sm:$0xff]
  %v4854 = vpack.c.bf16 %v4830, %v4829
  %v4855 = vpack.c.bf16 %v4832, %v4831
  %v4856 = vpack.c.bf16 %v4834, %v4833
  %v4857 = vpack.c.bf16 %v4836, %v4835
  %v4858 = vpack.c.bf16 %v4838, %v4837
  %v4859 = vpack.c.bf16 %v4840, %v4839
  %v4860 = vpack.c.bf16 %v4842, %v4841
  %v4861 = vpack.c.bf16 %v4844, %v4843
  %v4862 = vpack.c.bf16 %v4846, %v4845
  %v4863 = vpack.c.bf16 %v4848, %v4847
  %v4864 = vpack.c.bf16 %v4850, %v4849
  %v4865 = vpack.c.bf16 %v4852, %v4851
  %v4866 = vpack.c.bf16 %v4853, %v4853
  %v4867 = vld [vmem:[%s4 + $0x30] sm:$0xf]
  %v4868 = vld [vmem:[%s4 + $0x34] sm:$0xf]
  %v4871 = vunpack.c.l.b16 %v4867
  %v4872 = vunpack.c.l.b16 %v4868
  %v4873 = vpack.c.b16 %v4872, %v4871
  %v4876 = vsel %vm3488, %v4854, 0
  %v4879 = vsel %vm3488, %v4855, 0
  %v4882 = vsel %vm3488, %v4856, 0
  %v4885 = vsel %vm3488, %v4857, 0
  %v4888 = vsel %vm3488, %v4858, 0
  %v4891 = vsel %vm3488, %v4859, 0
  %v4894 = vsel %vm3488, %v4860, 0
  %v4897 = vsel %vm3488, %v4861, 0
  %v4900 = vsel %vm3488, %v4862, 0
  %v4903 = vsel %vm3488, %v4863, 0
  %v4906 = vsel %vm3488, %v4864, 0
  %v4909 = vsel %vm3488, %v4865, 0
  %v4912 = vsel %vm3488, %v4866, 0
  %4914 = vmatprep.subr.bf16.mxu0 0
  %4915 = vmatpush1.bf16.msra.mxu0 %v4873
  %4916 = vmatprep.subr.bf16.mxu0 0
  %4917 = vmatpush1.bf16.msra.mxu0 0
  %4918 = vmatprep.subr.bf16.mxu0 0
  %4919 = vmatpush1.bf16.msra.mxu0 0
  %4920 = vmatprep.subr.bf16.mxu0 0
  %4921 = vmatpush1.bf16.msra.mxu0 0
  %4922 = vmatprep.subr.bf16.mxu0 0
  %4923 = vmatpush1.bf16.msra.mxu0 0
  %4924 = vmatprep.subr.bf16.mxu0 0
  %4925 = vmatpush1.bf16.msra.mxu0 0
  %4926 = vmatprep.subr.bf16.mxu0 0
  %4927 = vmatpush1.bf16.msra.mxu0 0
  %4928 = vmatprep.subr.bf16.mxu0 0
  %4929 = vmatpush1.bf16.msra.mxu0 0
  %4930 = vmatprep.subr.bf16.mxu0 0
  %4931 = vmatpush1.bf16.msra.mxu0 0
  %4932 = vmatprep.subr.bf16.mxu0 0
  %4933 = vmatpush1.bf16.msra.mxu0 0
  %4934 = vmatprep.subr.bf16.mxu0 0
  %4935 = vmatpush1.bf16.msra.mxu0 0
  %4936 = vmatprep.subr.bf16.mxu0 0
  %4937 = vmatpush1.bf16.msra.mxu0 0
  %4938 = vmatprep.subr.bf16.mxu0 0
  %4939 = vmatpush1.bf16.msra.mxu0 0
  %4940 = vmatprep.subr.bf16.mxu0 0
  %4941 = vmatpush1.bf16.msra.mxu0 0
  %4942 = vmatprep.subr.bf16.mxu0 0
  %4943 = vmatpush1.bf16.msra.mxu0 0
  %4944 = vmatprep.subr.bf16.mxu0 0
  %4945 = vmatpush1.bf16.msra.mxu0 0
  %4946 = vmatprep.mubr.bf16.mxu0 0
  %4947 = vmatmul.mubr.bf16.gmra.mrb[0].mxu0 %v4876
  %v4948 = vpop.f32.mrb[0].mxu0
  %v4949 = vadd.f32 0.0, %v4948
  %v4950 = vpop.f32.mrb[0].mxu0
  %v4951 = vpop.f32.mrb[0].mxu0
  %v4952 = vadd.f32 0.0, %v4951
  %v4953 = vpop.f32.mrb[0].mxu0
  %4954 = vmatprep.mubr.bf16.mxu0 0
  %4955 = vmatmul.mubr.bf16.gmra.mrb[0].mxu0 %v4879
  %v4956 = vpop.f32.mrb[0].mxu0
  %v4957 = vadd.f32 0.0, %v4956
  %v4958 = vpop.f32.mrb[0].mxu0
  %v4959 = vpop.f32.mrb[0].mxu0
  %v4960 = vadd.f32 0.0, %v4959
  %v4961 = vpop.f32.mrb[0].mxu0
  %4962 = vmatprep.mubr.bf16.mxu0 0
  %4963 = vmatmul.mubr.bf16.gmra.mrb[0].mxu0 %v4882
  %v4964 = vpop.f32.mrb[0].mxu0
  %v4965 = vadd.f32 0.0, %v4964
  %v4966 = vpop.f32.mrb[0].mxu0
  %v4967 = vpop.f32.mrb[0].mxu0
  %v4968 = vadd.f32 0.0, %v4967
  %v4969 = vpop.f32.mrb[0].mxu0
  %4970 = vmatprep.mubr.bf16.mxu0 0
  %4971 = vmatmul.mubr.bf16.gmra.mrb[0].mxu0 %v4885
  %v4972 = vpop.f32.mrb[0].mxu0
  %v4973 = vadd.f32 0.0, %v4972
  %v4974 = vpop.f32.mrb[0].mxu0
  %v4975 = vpop.f32.mrb[0].mxu0
  %v4976 = vadd.f32 0.0, %v4975
  %v4977 = vpop.f32.mrb[0].mxu0
  %4978 = vmatprep.mubr.bf16.mxu0 0
  %4979 = vmatmul.mubr.bf16.gmra.mrb[0].mxu0 %v4888
  %v4980 = vpop.f32.mrb[0].mxu0
  %v4981 = vadd.f32 0.0, %v4980
  %v4982 = vpop.f32.mrb[0].mxu0
  %v4983 = vpop.f32.mrb[0].mxu0
  %v4984 = vadd.f32 0.0, %v4983
  %v4985 = vpop.f32.mrb[0].mxu0
  %4986 = vmatprep.mubr.bf16.mxu0 0
  %4987 = vmatmul.mubr.bf16.gmra.mrb[0].mxu0 %v4891
  %v4988 = vpop.f32.mrb[0].mxu0
  %v4989 = vadd.f32 0.0, %v4988
  %v4990 = vpop.f32.mrb[0].mxu0
  %v4991 = vpop.f32.mrb[0].mxu0
  %v4992 = vadd.f32 0.0, %v4991
  %v4993 = vpop.f32.mrb[0].mxu0
  %4994 = vmatprep.mubr.bf16.mxu0 0
  %4995 = vmatmul.mubr.bf16.gmra.mrb[0].mxu0 %v4894
  %v4996 = vpop.f32.mrb[0].mxu0
  %v4997 = vadd.f32 0.0, %v4996
  %v4998 = vpop.f32.mrb[0].mxu0
  %v4999 = vpop.f32.mrb[0].mxu0
  %v5000 = vadd.f32 0.0, %v4999
  %v5001 = vpop.f32.mrb[0].mxu0
  %5002 = vmatprep.mubr.bf16.mxu0 0
  %5003 = vmatmul.mubr.bf16.gmra.mrb[0].mxu0 %v4897
  %v5004 = vpop.f32.mrb[0].mxu0
  %v5005 = vadd.f32 0.0, %v5004
  %v5006 = vpop.f32.mrb[0].mxu0
  %v5007 = vpop.f32.mrb[0].mxu0
  %v5008 = vadd.f32 0.0, %v5007
  %v5009 = vpop.f32.mrb[0].mxu0
  %5010 = vmatprep.mubr.bf16.mxu0 0
  %5011 = vmatmul.mubr.bf16.gmra.mrb[0].mxu0 %v4900
  %v5012 = vpop.f32.mrb[0].mxu0
  %v5013 = vadd.f32 0.0, %v5012
  %v5014 = vpop.f32.mrb[0].mxu0
  %v5015 = vpop.f32.mrb[0].mxu0
  %v5016 = vadd.f32 0.0, %v5015
  %v5017 = vpop.f32.mrb[0].mxu0
  %5018 = vmatprep.mubr.bf16.mxu0 0
  %5019 = vmatmul.mubr.bf16.gmra.mrb[0].mxu0 %v4903
  %v5020 = vpop.f32.mrb[0].mxu0
  %v5021 = vadd.f32 0.0, %v5020
  %v5022 = vpop.f32.mrb[0].mxu0
  %v5023 = vpop.f32.mrb[0].mxu0
  %v5024 = vadd.f32 0.0, %v5023
  %v5025 = vpop.f32.mrb[0].mxu0
  %5026 = vmatprep.mubr.bf16.mxu0 0
  %5027 = vmatmul.mubr.bf16.gmra.mrb[0].mxu0 %v4906
  %v5028 = vpop.f32.mrb[0].mxu0
  %v5029 = vadd.f32 0.0, %v5028
  %v5030 = vpop.f32.mrb[0].mxu0
  %v5031 = vpop.f32.mrb[0].mxu0
  %v5032 = vadd.f32 0.0, %v5031
  %v5033 = vpop.f32.mrb[0].mxu0
  %5034 = vmatprep.mubr.bf16.mxu0 0
  %5035 = vmatmul.mubr.bf16.gmra.mrb[0].mxu0 %v4909
  %v5036 = vpop.f32.mrb[0].mxu0
  %v5037 = vadd.f32 0.0, %v5036
  %v5038 = vpop.f32.mrb[0].mxu0
  %v5039 = vpop.f32.mrb[0].mxu0
  %v5040 = vadd.f32 0.0, %v5039
  %v5041 = vpop.f32.mrb[0].mxu0
  %5042 = vmatprep.mubr.bf16.mxu0 0
  %5043 = vmatmul.mubr.bf16.gmra.mrb[0].mxu0 %v4912
  %v5044 = vpop.f32.mrb[0].mxu0
  %v5045 = vadd.f32 0.0, %v5044
  %v5046 = vpop.f32.mrb[0].mxu0
  %v5047 = vpop.f32.mrb[0].mxu0
  %v5048 = vpop.f32.mrb[0].mxu0
  %5049 = vdwg.mxu0
  %v5050 = vadd.f32 %v4804, %v4949
  %v5051 = vadd.f32 %v4805, %v4952
  %v5052 = vadd.f32 %v4806, %v4957
  %v5053 = vadd.f32 %v4807, %v4960
  %v5054 = vadd.f32 %v4808, %v4965
  %v5055 = vadd.f32 %v4809, %v4968
  %v5056 = vadd.f32 %v4810, %v4973
  %v5057 = vadd.f32 %v4811, %v4976
  %v5058 = vadd.f32 %v4812, %v4981
  %v5059 = vadd.f32 %v4813, %v4984
  %v5060 = vadd.f32 %v4814, %v4989
  %v5061 = vadd.f32 %v4815, %v4992
  %v5062 = vadd.f32 %v4816, %v4997
  %v5063 = vadd.f32 %v4817, %v5000
  %v5064 = vadd.f32 %v4818, %v5005
  %v5065 = vadd.f32 %v4819, %v5008
  %v5066 = vadd.f32 %v4820, %v5013
  %v5067 = vadd.f32 %v4821, %v5016
  %v5068 = vadd.f32 %v4822, %v5021
  %v5069 = vadd.f32 %v4823, %v5024
  %v5070 = vadd.f32 %v4824, %v5029
  %v5071 = vadd.f32 %v4825, %v5032
  %v5072 = vadd.f32 %v4826, %v5037
  %v5073 = vadd.f32 %v4827, %v5040
  %v5074 = vadd.f32 %v4828, %v5045
  %v5075 = vld [vmem:[#allocation2 + $0x1a] sm:$0xff]
  %v5076 = vld [vmem:[#allocation2 + $0x22] sm:$0xff]
  %v5077 = vld [vmem:[#allocation2 + $0x2a] sm:$0xff]
  %v5078 = vld [vmem:[#allocation2 + $0x32] sm:$0xff]
  %v5079 = vld [vmem:[#allocation2 + $0x3a] sm:$0xff]
  %v5080 = vld [vmem:[#allocation2 + $0x42] sm:$0xff]
  %v5081 = vld [vmem:[#allocation2 + $0x4a] sm:$0xff]
  %v5082 = vld [vmem:[#allocation2 + $0x52] sm:$0xff]
  %v5083 = vld [vmem:[#allocation2 + $0x5a] sm:$0xff]
  %v5084 = vld [vmem:[#allocation2 + $0x62] sm:$0xff]
  %v5085 = vld [vmem:[#allocation2 + $0x6a] sm:$0xff]
  %v5086 = vld [vmem:[#allocation2 + $0x72] sm:$0xff]
  %v5087 = vld [vmem:[#allocation2 + $0x7a] sm:$0xff]
  %v5088 = vld [vmem:[#allocation2 + $0x82] sm:$0xff]
  %v5089 = vld [vmem:[#allocation2 + $0x8a] sm:$0xff]
  %v5090 = vld [vmem:[#allocation2 + $0x92] sm:$0xff]
  %v5091 = vld [vmem:[#allocation2 + $0x9a] sm:$0xff]
  %v5092 = vld [vmem:[#allocation2 + $0xa2] sm:$0xff]
  %v5093 = vld [vmem:[#allocation2 + $0xaa] sm:$0xff]
  %v5094 = vld [vmem:[#allocation2 + $0xb2] sm:$0xff]
  %v5095 = vld [vmem:[#allocation2 + $0xba] sm:$0xff]
  %v5096 = vld [vmem:[#allocation2 + $0xc2] sm:$0xff]
  %v5097 = vld [vmem:[#allocation2 + $0xca] sm:$0xff]
  %v5098 = vld [vmem:[#allocation2 + $0xd2] sm:$0xff]
  %v5099 = vld [vmem:[#allocation2 + $0xda] sm:$0xff]
  %v5100 = vpack.c.bf16 %v5076, %v5075
  %v5101 = vpack.c.bf16 %v5078, %v5077
  %v5102 = vpack.c.bf16 %v5080, %v5079
  %v5103 = vpack.c.bf16 %v5082, %v5081
  %v5104 = vpack.c.bf16 %v5084, %v5083
  %v5105 = vpack.c.bf16 %v5086, %v5085
  %v5106 = vpack.c.bf16 %v5088, %v5087
  %v5107 = vpack.c.bf16 %v5090, %v5089
  %v5108 = vpack.c.bf16 %v5092, %v5091
  %v5109 = vpack.c.bf16 %v5094, %v5093
  %v5110 = vpack.c.bf16 %v5096, %v5095
  %v5111 = vpack.c.bf16 %v5098, %v5097
  %v5112 = vpack.c.bf16 %v5099, %v5099
  %v5113 = vld [vmem:[%s4 + $0x38] sm:$0xf]
  %v5114 = vld [vmem:[%s4 + $0x3c] sm:$0xf]
  %v5117 = vunpack.c.l.b16 %v5113
  %v5118 = vunpack.c.l.b16 %v5114
  %v5119 = vpack.c.b16 %v5118, %v5117
  %v5122 = vsel %vm3488, %v5100, 0
  %v5125 = vsel %vm3488, %v5101, 0
  %v5128 = vsel %vm3488, %v5102, 0
  %v5131 = vsel %vm3488, %v5103, 0
  %v5134 = vsel %vm3488, %v5104, 0
  %v5137 = vsel %vm3488, %v5105, 0
  %v5140 = vsel %vm3488, %v5106, 0
  %v5143 = vsel %vm3488, %v5107, 0
  %v5146 = vsel %vm3488, %v5108, 0
  %v5149 = vsel %vm3488, %v5109, 0
  %v5152 = vsel %vm3488, %v5110, 0
  %v5155 = vsel %vm3488, %v5111, 0
  %v5158 = vsel %vm3488, %v5112, 0
  %5160 = vmatprep.subr.bf16.mxu0 0
  %5161 = vmatpush1.bf16.msra.mxu0 %v5119
  %5162 = vmatprep.subr.bf16.mxu0 0
  %5163 = vmatpush1.bf16.msra.mxu0 0
  %5164 = vmatprep.subr.bf16.mxu0 0
  %5165 = vmatpush1.bf16.msra.mxu0 0
  %5166 = vmatprep.subr.bf16.mxu0 0
  %5167 = vmatpush1.bf16.msra.mxu0 0
  %5168 = vmatprep.subr.bf16.mxu0 0
  %5169 = vmatpush1.bf16.msra.mxu0 0
  %5170 = vmatprep.subr.bf16.mxu0 0
  %5171 = vmatpush1.bf16.msra.mxu0 0
  %5172 = vmatprep.subr.bf16.mxu0 0
  %5173 = vmatpush1.bf16.msra.mxu0 0
  %5174 = vmatprep.subr.bf16.mxu0 0
  %5175 = vmatpush1.bf16.msra.mxu0 0
  %5176 = vmatprep.subr.bf16.mxu0 0
  %5177 = vmatpush1.bf16.msra.mxu0 0
  %5178 = vmatprep.subr.bf16.mxu0 0
  %5179 = vmatpush1.bf16.msra.mxu0 0
  %5180 = vmatprep.subr.bf16.mxu0 0
  %5181 = vmatpush1.bf16.msra.mxu0 0
  %5182 = vmatprep.subr.bf16.mxu0 0
  %5183 = vmatpush1.bf16.msra.mxu0 0
  %5184 = vmatprep.subr.bf16.mxu0 0
  %5185 = vmatpush1.bf16.msra.mxu0 0
  %5186 = vmatprep.subr.bf16.mxu0 0
  %5187 = vmatpush1.bf16.msra.mxu0 0
  %5188 = vmatprep.subr.bf16.mxu0 0
  %5189 = vmatpush1.bf16.msra.mxu0 0
  %5190 = vmatprep.subr.bf16.mxu0 0
  %5191 = vmatpush1.bf16.msra.mxu0 0
  %5192 = vmatprep.mubr.bf16.mxu0 0
  %5193 = vmatmul.mubr.bf16.gmra.mrb[0].mxu0 %v5122
  %v5194 = vpop.f32.mrb[0].mxu0
  %v5195 = vadd.f32 0.0, %v5194
  %v5196 = vpop.f32.mrb[0].mxu0
  %v5197 = vpop.f32.mrb[0].mxu0
  %v5198 = vadd.f32 0.0, %v5197
  %v5199 = vpop.f32.mrb[0].mxu0
  %5200 = vmatprep.mubr.bf16.mxu0 0
  %5201 = vmatmul.mubr.bf16.gmra.mrb[0].mxu0 %v5125
  %v5202 = vpop.f32.mrb[0].mxu0
  %v5203 = vadd.f32 0.0, %v5202
  %v5204 = vpop.f32.mrb[0].mxu0
  %v5205 = vpop.f32.mrb[0].mxu0
  %v5206 = vadd.f32 0.0, %v5205
  %v5207 = vpop.f32.mrb[0].mxu0
  %5208 = vmatprep.mubr.bf16.mxu0 0
  %5209 = vmatmul.mubr.bf16.gmra.mrb[0].mxu0 %v5128
  %v5210 = vpop.f32.mrb[0].mxu0
  %v5211 = vadd.f32 0.0, %v5210
  %v5212 = vpop.f32.mrb[0].mxu0
  %v5213 = vpop.f32.mrb[0].mxu0
  %v5214 = vadd.f32 0.0, %v5213
  %v5215 = vpop.f32.mrb[0].mxu0
  %5216 = vmatprep.mubr.bf16.mxu0 0
  %5217 = vmatmul.mubr.bf16.gmra.mrb[0].mxu0 %v5131
  %v5218 = vpop.f32.mrb[0].mxu0
  %v5219 = vadd.f32 0.0, %v5218
  %v5220 = vpop.f32.mrb[0].mxu0
  %v5221 = vpop.f32.mrb[0].mxu0
  %v5222 = vadd.f32 0.0, %v5221
  %v5223 = vpop.f32.mrb[0].mxu0
  %5224 = vmatprep.mubr.bf16.mxu0 0
  %5225 = vmatmul.mubr.bf16.gmra.mrb[0].mxu0 %v5134
  %v5226 = vpop.f32.mrb[0].mxu0
  %v5227 = vadd.f32 0.0, %v5226
  %v5228 = vpop.f32.mrb[0].mxu0
  %v5229 = vpop.f32.mrb[0].mxu0
  %v5230 = vadd.f32 0.0, %v5229
  %v5231 = vpop.f32.mrb[0].mxu0
  %5232 = vmatprep.mubr.bf16.mxu0 0
  %5233 = vmatmul.mubr.bf16.gmra.mrb[0].mxu0 %v5137
  %v5234 = vpop.f32.mrb[0].mxu0
  %v5235 = vadd.f32 0.0, %v5234
  %v5236 = vpop.f32.mrb[0].mxu0
  %v5237 = vpop.f32.mrb[0].mxu0
  %v5238 = vadd.f32 0.0, %v5237
  %v5239 = vpop.f32.mrb[0].mxu0
  %5240 = vmatprep.mubr.bf16.mxu0 0
  %5241 = vmatmul.mubr.bf16.gmra.mrb[0].mxu0 %v5140
  %v5242 = vpop.f32.mrb[0].mxu0
  %v5243 = vadd.f32 0.0, %v5242
  %v5244 = vpop.f32.mrb[0].mxu0
  %v5245 = vpop.f32.mrb[0].mxu0
  %v5246 = vadd.f32 0.0, %v5245
  %v5247 = vpop.f32.mrb[0].mxu0
  %5248 = vmatprep.mubr.bf16.mxu0 0
  %5249 = vmatmul.mubr.bf16.gmra.mrb[0].mxu0 %v5143
  %v5250 = vpop.f32.mrb[0].mxu0
  %v5251 = vadd.f32 0.0, %v5250
  %v5252 = vpop.f32.mrb[0].mxu0
  %v5253 = vpop.f32.mrb[0].mxu0
  %v5254 = vadd.f32 0.0, %v5253
  %v5255 = vpop.f32.mrb[0].mxu0
  %5256 = vmatprep.mubr.bf16.mxu0 0
  %5257 = vmatmul.mubr.bf16.gmra.mrb[0].mxu0 %v5146
  %v5258 = vpop.f32.mrb[0].mxu0
  %v5259 = vadd.f32 0.0, %v5258
  %v5260 = vpop.f32.mrb[0].mxu0
  %v5261 = vpop.f32.mrb[0].mxu0
  %v5262 = vadd.f32 0.0, %v5261
  %v5263 = vpop.f32.mrb[0].mxu0
  %5264 = vmatprep.mubr.bf16.mxu0 0
  %5265 = vmatmul.mubr.bf16.gmra.mrb[0].mxu0 %v5149
  %v5266 = vpop.f32.mrb[0].mxu0
  %v5267 = vadd.f32 0.0, %v5266
  %v5268 = vpop.f32.mrb[0].mxu0
  %v5269 = vpop.f32.mrb[0].mxu0
  %v5270 = vadd.f32 0.0, %v5269
  %v5271 = vpop.f32.mrb[0].mxu0
  %5272 = vmatprep.mubr.bf16.mxu0 0
  %5273 = vmatmul.mubr.bf16.gmra.mrb[0].mxu0 %v5152
  %v5274 = vpop.f32.mrb[0].mxu0
  %v5275 = vadd.f32 0.0, %v5274
  %v5276 = vpop.f32.mrb[0].mxu0
  %v5277 = vpop.f32.mrb[0].mxu0
  %v5278 = vadd.f32 0.0, %v5277
  %v5279 = vpop.f32.mrb[0].mxu0
  %5280 = vmatprep.mubr.bf16.mxu0 0
  %5281 = vmatmul.mubr.bf16.gmra.mrb[0].mxu0 %v5155
  %v5282 = vpop.f32.mrb[0].mxu0
  %v5283 = vadd.f32 0.0, %v5282
  %v5284 = vpop.f32.mrb[0].mxu0
  %v5285 = vpop.f32.mrb[0].mxu0
  %v5286 = vadd.f32 0.0, %v5285
  %v5287 = vpop.f32.mrb[0].mxu0
  %5288 = vmatprep.mubr.bf16.mxu0 0
  %5289 = vmatmul.mubr.bf16.gmra.mrb[0].mxu0 %v5158
  %v5290 = vpop.f32.mrb[0].mxu0
  %v5291 = vadd.f32 0.0, %v5290
  %v5292 = vpop.f32.mrb[0].mxu0
  %v5293 = vpop.f32.mrb[0].mxu0
  %v5294 = vpop.f32.mrb[0].mxu0
  %5295 = vdwg.mxu0
  %v5296 = vadd.f32 %v5050, %v5195
  %v5297 = vadd.f32 %v5051, %v5198
  %v5298 = vadd.f32 %v5052, %v5203
  %v5299 = vadd.f32 %v5053, %v5206
  %v5300 = vadd.f32 %v5054, %v5211
  %v5301 = vadd.f32 %v5055, %v5214
  %v5302 = vadd.f32 %v5056, %v5219
  %v5303 = vadd.f32 %v5057, %v5222
  %v5304 = vadd.f32 %v5058, %v5227
  %v5305 = vadd.f32 %v5059, %v5230
  %v5306 = vadd.f32 %v5060, %v5235
  %v5307 = vadd.f32 %v5061, %v5238
  %v5308 = vadd.f32 %v5062, %v5243
  %v5309 = vadd.f32 %v5063, %v5246
  %v5310 = vadd.f32 %v5064, %v5251
  %v5311 = vadd.f32 %v5065, %v5254
  %v5312 = vadd.f32 %v5066, %v5259
  %v5313 = vadd.f32 %v5067, %v5262
  %v5314 = vadd.f32 %v5068, %v5267
  %v5315 = vadd.f32 %v5069, %v5270
  %v5316 = vadd.f32 %v5070, %v5275
  %v5317 = vadd.f32 %v5071, %v5278
  %v5318 = vadd.f32 %v5072, %v5283
  %v5319 = vadd.f32 %v5073, %v5286
  %v5320 = vadd.f32 %v5074, %v5291
  %v5321 = vld [vmem:[#allocation2 + $0x1b] sm:$0xff]
  %v5322 = vld [vmem:[#allocation2 + $0x23] sm:$0xff]
  %v5323 = vld [vmem:[#allocation2 + $0x2b] sm:$0xff]
  %v5324 = vld [vmem:[#allocation2 + $0x33] sm:$0xff]
  %v5325 = vld [vmem:[#allocation2 + $0x3b] sm:$0xff]
  %v5326 = vld [vmem:[#allocation2 + $0x43] sm:$0xff]
  %v5327 = vld [vmem:[#allocation2 + $0x4b] sm:$0xff]
  %v5328 = vld [vmem:[#allocation2 + $0x53] sm:$0xff]
  %v5329 = vld [vmem:[#allocation2 + $0x5b] sm:$0xff]
  %v5330 = vld [vmem:[#allocation2 + $0x63] sm:$0xff]
  %v5331 = vld [vmem:[#allocation2 + $0x6b] sm:$0xff]
  %v5332 = vld [vmem:[#allocation2 + $0x73] sm:$0xff]
  %v5333 = vld [vmem:[#allocation2 + $0x7b] sm:$0xff]
  %v5334 = vld [vmem:[#allocation2 + $0x83] sm:$0xff]
  %v5335 = vld [vmem:[#allocation2 + $0x8b] sm:$0xff]
  %v5336 = vld [vmem:[#allocation2 + $0x93] sm:$0xff]
  %v5337 = vld [vmem:[#allocation2 + $0x9b] sm:$0xff]
  %v5338 = vld [vmem:[#allocation2 + $0xa3] sm:$0xff]
  %v5339 = vld [vmem:[#allocation2 + $0xab] sm:$0xff]
  %v5340 = vld [vmem:[#allocation2 + $0xb3] sm:$0xff]
  %v5341 = vld [vmem:[#allocation2 + $0xbb] sm:$0xff]
  %v5342 = vld [vmem:[#allocation2 + $0xc3] sm:$0xff]
  %v5343 = vld [vmem:[#allocation2 + $0xcb] sm:$0xff]
  %v5344 = vld [vmem:[#allocation2 + $0xd3] sm:$0xff]
  %v5345 = vld [vmem:[#allocation2 + $0xdb] sm:$0xff]
  %v5346 = vpack.c.bf16 %v5322, %v5321
  %v5347 = vpack.c.bf16 %v5324, %v5323
  %v5348 = vpack.c.bf16 %v5326, %v5325
  %v5349 = vpack.c.bf16 %v5328, %v5327
  %v5350 = vpack.c.bf16 %v5330, %v5329
  %v5351 = vpack.c.bf16 %v5332, %v5331
  %v5352 = vpack.c.bf16 %v5334, %v5333
  %v5353 = vpack.c.bf16 %v5336, %v5335
  %v5354 = vpack.c.bf16 %v5338, %v5337
  %v5355 = vpack.c.bf16 %v5340, %v5339
  %v5356 = vpack.c.bf16 %v5342, %v5341
  %v5357 = vpack.c.bf16 %v5344, %v5343
  %v5358 = vpack.c.bf16 %v5345, %v5345
  %v5359 = vld [vmem:[%s4 + $0x40] sm:$0xf]
  %v5360 = vld [vmem:[%s4 + $0x44] sm:$0xf]
  %v5363 = vunpack.c.l.b16 %v5359
  %v5364 = vunpack.c.l.b16 %v5360
  %v5365 = vpack.c.b16 %v5364, %v5363
  %v5368 = vsel %vm3488, %v5346, 0
  %v5371 = vsel %vm3488, %v5347, 0
  %v5374 = vsel %vm3488, %v5348, 0
  %v5377 = vsel %vm3488, %v5349, 0
  %v5380 = vsel %vm3488, %v5350, 0
  %v5383 = vsel %vm3488, %v5351, 0
  %v5386 = vsel %vm3488, %v5352, 0
  %v5389 = vsel %vm3488, %v5353, 0
  %v5392 = vsel %vm3488, %v5354, 0
  %v5395 = vsel %vm3488, %v5355, 0
  %v5398 = vsel %vm3488, %v5356, 0
  %v5401 = vsel %vm3488, %v5357, 0
  %v5404 = vsel %vm3488, %v5358, 0
  %5406 = vmatprep.subr.bf16.mxu0 0
  %5407 = vmatpush1.bf16.msra.mxu0 %v5365
  %5408 = vmatprep.subr.bf16.mxu0 0
  %5409 = vmatpush1.bf16.msra.mxu0 0
  %5410 = vmatprep.subr.bf16.mxu0 0
  %5411 = vmatpush1.bf16.msra.mxu0 0
  %5412 = vmatprep.subr.bf16.mxu0 0
  %5413 = vmatpush1.bf16.msra.mxu0 0
  %5414 = vmatprep.subr.bf16.mxu0 0
  %5415 = vmatpush1.bf16.msra.mxu0 0
  %5416 = vmatprep.subr.bf16.mxu0 0
  %5417 = vmatpush1.bf16.msra.mxu0 0
  %5418 = vmatprep.subr.bf16.mxu0 0
  %5419 = vmatpush1.bf16.msra.mxu0 0
  %5420 = vmatprep.subr.bf16.mxu0 0
  %5421 = vmatpush1.bf16.msra.mxu0 0
  %5422 = vmatprep.subr.bf16.mxu0 0
  %5423 = vmatpush1.bf16.msra.mxu0 0
  %5424 = vmatprep.subr.bf16.mxu0 0
  %5425 = vmatpush1.bf16.msra.mxu0 0
  %5426 = vmatprep.subr.bf16.mxu0 0
  %5427 = vmatpush1.bf16.msra.mxu0 0
  %5428 = vmatprep.subr.bf16.mxu0 0
  %5429 = vmatpush1.bf16.msra.mxu0 0
  %5430 = vmatprep.subr.bf16.mxu0 0
  %5431 = vmatpush1.bf16.msra.mxu0 0
  %5432 = vmatprep.subr.bf16.mxu0 0
  %5433 = vmatpush1.bf16.msra.mxu0 0
  %5434 = vmatprep.subr.bf16.mxu0 0
  %5435 = vmatpush1.bf16.msra.mxu0 0
  %5436 = vmatprep.subr.bf16.mxu0 0
  %5437 = vmatpush1.bf16.msra.mxu0 0
  %5438 = vmatprep.mubr.bf16.mxu0 0
  %5439 = vmatmul.mubr.bf16.gmra.mrb[0].mxu0 %v5368
  %v5440 = vpop.f32.mrb[0].mxu0
  %v5441 = vadd.f32 0.0, %v5440
  %v5442 = vpop.f32.mrb[0].mxu0
  %v5443 = vpop.f32.mrb[0].mxu0
  %v5444 = vadd.f32 0.0, %v5443
  %v5445 = vpop.f32.mrb[0].mxu0
  %5446 = vmatprep.mubr.bf16.mxu0 0
  %5447 = vmatmul.mubr.bf16.gmra.mrb[0].mxu0 %v5371
  %v5448 = vpop.f32.mrb[0].mxu0
  %v5449 = vadd.f32 0.0, %v5448
  %v5450 = vpop.f32.mrb[0].mxu0
  %v5451 = vpop.f32.mrb[0].mxu0
  %v5452 = vadd.f32 0.0, %v5451
  %v5453 = vpop.f32.mrb[0].mxu0
  %5454 = vmatprep.mubr.bf16.mxu0 0
  %5455 = vmatmul.mubr.bf16.gmra.mrb[0].mxu0 %v5374
  %v5456 = vpop.f32.mrb[0].mxu0
  %v5457 = vadd.f32 0.0, %v5456
  %v5458 = vpop.f32.mrb[0].mxu0
  %v5459 = vpop.f32.mrb[0].mxu0
  %v5460 = vadd.f32 0.0, %v5459
  %v5461 = vpop.f32.mrb[0].mxu0
  %5462 = vmatprep.mubr.bf16.mxu0 0
  %5463 = vmatmul.mubr.bf16.gmra.mrb[0].mxu0 %v5377
  %v5464 = vpop.f32.mrb[0].mxu0
  %v5465 = vadd.f32 0.0, %v5464
  %v5466 = vpop.f32.mrb[0].mxu0
  %v5467 = vpop.f32.mrb[0].mxu0
  %v5468 = vadd.f32 0.0, %v5467
  %v5469 = vpop.f32.mrb[0].mxu0
  %5470 = vmatprep.mubr.bf16.mxu0 0
  %5471 = vmatmul.mubr.bf16.gmra.mrb[0].mxu0 %v5380
  %v5472 = vpop.f32.mrb[0].mxu0
  %v5473 = vadd.f32 0.0, %v5472
  %v5474 = vpop.f32.mrb[0].mxu0
  %v5475 = vpop.f32.mrb[0].mxu0
  %v5476 = vadd.f32 0.0, %v5475
  %v5477 = vpop.f32.mrb[0].mxu0
  %5478 = vmatprep.mubr.bf16.mxu0 0
  %5479 = vmatmul.mubr.bf16.gmra.mrb[0].mxu0 %v5383
  %v5480 = vpop.f32.mrb[0].mxu0
  %v5481 = vadd.f32 0.0, %v5480
  %v5482 = vpop.f32.mrb[0].mxu0
  %v5483 = vpop.f32.mrb[0].mxu0
  %v5484 = vadd.f32 0.0, %v5483
  %v5485 = vpop.f32.mrb[0].mxu0
  %5486 = vmatprep.mubr.bf16.mxu0 0
  %5487 = vmatmul.mubr.bf16.gmra.mrb[0].mxu0 %v5386
  %v5488 = vpop.f32.mrb[0].mxu0
  %v5489 = vadd.f32 0.0, %v5488
  %v5490 = vpop.f32.mrb[0].mxu0
  %v5491 = vpop.f32.mrb[0].mxu0
  %v5492 = vadd.f32 0.0, %v5491
  %v5493 = vpop.f32.mrb[0].mxu0
  %5494 = vmatprep.mubr.bf16.mxu0 0
  %5495 = vmatmul.mubr.bf16.gmra.mrb[0].mxu0 %v5389
  %v5496 = vpop.f32.mrb[0].mxu0
  %v5497 = vadd.f32 0.0, %v5496
  %v5498 = vpop.f32.mrb[0].mxu0
  %v5499 = vpop.f32.mrb[0].mxu0
  %v5500 = vadd.f32 0.0, %v5499
  %v5501 = vpop.f32.mrb[0].mxu0
  %5502 = vmatprep.mubr.bf16.mxu0 0
  %5503 = vmatmul.mubr.bf16.gmra.mrb[0].mxu0 %v5392
  %v5504 = vpop.f32.mrb[0].mxu0
  %v5505 = vadd.f32 0.0, %v5504
  %v5506 = vpop.f32.mrb[0].mxu0
  %v5507 = vpop.f32.mrb[0].mxu0
  %v5508 = vadd.f32 0.0, %v5507
  %v5509 = vpop.f32.mrb[0].mxu0
  %5510 = vmatprep.mubr.bf16.mxu0 0
  %5511 = vmatmul.mubr.bf16.gmra.mrb[0].mxu0 %v5395
  %v5512 = vpop.f32.mrb[0].mxu0
  %v5513 = vadd.f32 0.0, %v5512
  %v5514 = vpop.f32.mrb[0].mxu0
  %v5515 = vpop.f32.mrb[0].mxu0
  %v5516 = vadd.f32 0.0, %v5515
  %v5517 = vpop.f32.mrb[0].mxu0
  %5518 = vmatprep.mubr.bf16.mxu0 0
  %5519 = vmatmul.mubr.bf16.gmra.mrb[0].mxu0 %v5398
  %v5520 = vpop.f32.mrb[0].mxu0
  %v5521 = vadd.f32 0.0, %v5520
  %v5522 = vpop.f32.mrb[0].mxu0
  %v5523 = vpop.f32.mrb[0].mxu0
  %v5524 = vadd.f32 0.0, %v5523
  %v5525 = vpop.f32.mrb[0].mxu0
  %5526 = vmatprep.mubr.bf16.mxu0 0
  %5527 = vmatmul.mubr.bf16.gmra.mrb[0].mxu0 %v5401
  %v5528 = vpop.f32.mrb[0].mxu0
  %v5529 = vadd.f32 0.0, %v5528
  %v5530 = vpop.f32.mrb[0].mxu0
  %v5531 = vpop.f32.mrb[0].mxu0
  %v5532 = vadd.f32 0.0, %v5531
  %v5533 = vpop.f32.mrb[0].mxu0
  %5534 = vmatprep.mubr.bf16.mxu0 0
  %5535 = vmatmul.mubr.bf16.gmra.mrb[0].mxu0 %v5404
  %v5536 = vpop.f32.mrb[0].mxu0
  %v5537 = vadd.f32 0.0, %v5536
  %v5538 = vpop.f32.mrb[0].mxu0
  %v5539 = vpop.f32.mrb[0].mxu0
  %v5540 = vpop.f32.mrb[0].mxu0
  %5541 = vdwg.mxu0
  %v5542 = vadd.f32 %v5296, %v5441
  %v5543 = vadd.f32 %v5297, %v5444
  %v5544 = vadd.f32 %v5298, %v5449
  %v5545 = vadd.f32 %v5299, %v5452
  %v5546 = vadd.f32 %v5300, %v5457
  %v5547 = vadd.f32 %v5301, %v5460
  %v5548 = vadd.f32 %v5302, %v5465
  %v5549 = vadd.f32 %v5303, %v5468
  %v5550 = vadd.f32 %v5304, %v5473
  %v5551 = vadd.f32 %v5305, %v5476
  %v5552 = vadd.f32 %v5306, %v5481
  %v5553 = vadd.f32 %v5307, %v5484
  %v5554 = vadd.f32 %v5308, %v5489
  %v5555 = vadd.f32 %v5309, %v5492
  %v5556 = vadd.f32 %v5310, %v5497
  %v5557 = vadd.f32 %v5311, %v5500
  %v5558 = vadd.f32 %v5312, %v5505
  %v5559 = vadd.f32 %v5313, %v5508
  %v5560 = vadd.f32 %v5314, %v5513
  %v5561 = vadd.f32 %v5315, %v5516
  %v5562 = vadd.f32 %v5316, %v5521
  %v5563 = vadd.f32 %v5317, %v5524
  %v5564 = vadd.f32 %v5318, %v5529
  %v5565 = vadd.f32 %v5319, %v5532
  %v5566 = vadd.f32 %v5320, %v5537
  %v5567 = vmul.f32 %v5542, %v2448
  %v5568 = vmul.f32 %v5543, %v2453
  %v5569 = vmul.f32 %v5544, %v2458
  %v5570 = vmul.f32 %v5545, %v2463
  %v5571 = vmul.f32 %v5546, %v2468
  %v5572 = vmul.f32 %v5547, %v2473
  %v5573 = vmul.f32 %v5548, %v2478
  %v5574 = vmul.f32 %v5549, %v2483
  %v5575 = vmul.f32 %v5550, %v2488
  %v5576 = vmul.f32 %v5551, %v2493
  %v5577 = vmul.f32 %v5552, %v2498
  %v5578 = vmul.f32 %v5553, %v2503
  %v5579 = vmul.f32 %v5554, %v2508
  %v5580 = vmul.f32 %v5555, %v2513
  %v5581 = vmul.f32 %v5556, %v2518
  %v5582 = vmul.f32 %v5557, %v2523
  %v5583 = vmul.f32 %v5558, %v2528
  %v5584 = vmul.f32 %v5559, %v2533
  %v5585 = vmul.f32 %v5560, %v2538
  %v5586 = vmul.f32 %v5561, %v2543
  %v5587 = vmul.f32 %v5562, %v2548
  %v5588 = vmul.f32 %v5563, %v2553
  %v5589 = vmul.f32 %v5564, %v2558
  %v5590 = vmul.f32 %v5565, %v2563
  %v5591 = vmul.f32 %v5566, %v2568
  %v5592 = vadd.f32 %v5567, %v5568
  %v5593 = vadd.f32 %v5592, %v5569
  %v5594 = vadd.f32 %v5593, %v5570
  %v5595 = vadd.f32 %v5594, %v5571
  %v5596 = vadd.f32 %v5595, %v5572
  %v5597 = vadd.f32 %v5596, %v5573
  %v5598 = vadd.f32 %v5597, %v5574
  %v5599 = vadd.f32 %v5598, %v5575
  %v5600 = vadd.f32 %v5599, %v5576
  %v5601 = vadd.f32 %v5600, %v5577
  %v5602 = vadd.f32 %v5601, %v5578
  %v5603 = vadd.f32 %v5602, %v5579
  %v5604 = vadd.f32 %v5603, %v5580
  %v5605 = vadd.f32 %v5604, %v5581
  %v5606 = vadd.f32 %v5605, %v5582
  %v5607 = vadd.f32 %v5606, %v5583
  %v5608 = vadd.f32 %v5607, %v5584
  %v5609 = vadd.f32 %v5608, %v5585
  %v5610 = vadd.f32 %v5609, %v5586
  %v5611 = vadd.f32 %v5610, %v5587
  %v5612 = vadd.f32 %v5611, %v5588
  %v5613 = vadd.f32 %v5612, %v5589
  %v5614 = vadd.f32 %v5613, %v5590
  %v5615 = vadd.f32 %v5614, %v5591
  %v5616 = vrot.slane %v5615, 4
  %v5617 = vadd.f32 %v5615, %v5616
  %v5618 = vrot.slane %v5617, 2
  %v5619 = vadd.f32 %v5617, %v5618
  %v5620 = vrot.slane %v5619, 1
  %v5621 = vadd.f32 %v5619, %v5620
  %v5622 = vmul.f32 %v5621, 0.0078125
  %v5623 = vsub.f32 %v5567, %v5622
  %v5624 = vsub.f32 %v5568, %v5622
  %v5625 = vsub.f32 %v5569, %v5622
  %v5626 = vsub.f32 %v5570, %v5622
  %v5627 = vsub.f32 %v5571, %v5622
  %v5628 = vsub.f32 %v5572, %v5622
  %v5629 = vsub.f32 %v5573, %v5622
  %v5630 = vsub.f32 %v5574, %v5622
  %v5631 = vsub.f32 %v5575, %v5622
  %v5632 = vsub.f32 %v5576, %v5622
  %v5633 = vsub.f32 %v5577, %v5622
  %v5634 = vsub.f32 %v5578, %v5622
  %v5635 = vsub.f32 %v5579, %v5622
  %v5636 = vsub.f32 %v5580, %v5622
  %v5637 = vsub.f32 %v5581, %v5622
  %v5638 = vsub.f32 %v5582, %v5622
  %v5639 = vsub.f32 %v5583, %v5622
  %v5640 = vsub.f32 %v5584, %v5622
  %v5641 = vsub.f32 %v5585, %v5622
  %v5642 = vsub.f32 %v5586, %v5622
  %v5643 = vsub.f32 %v5587, %v5622
  %v5644 = vsub.f32 %v5588, %v5622
  %v5645 = vsub.f32 %v5589, %v5622
  %v5646 = vsub.f32 %v5590, %v5622
  %v5647 = vsub.f32 %v5591, %v5622
  %v5648 = vmul.f32 %v5623, %v2448
  %v5649 = vmul.f32 %v5624, %v2453
  %v5650 = vmul.f32 %v5625, %v2458
  %v5651 = vmul.f32 %v5626, %v2463
  %v5652 = vmul.f32 %v5627, %v2468
  %v5653 = vmul.f32 %v5628, %v2473
  %v5654 = vmul.f32 %v5629, %v2478
  %v5655 = vmul.f32 %v5630, %v2483
  %v5656 = vmul.f32 %v5631, %v2488
  %v5657 = vmul.f32 %v5632, %v2493
  %v5658 = vmul.f32 %v5633, %v2498
  %v5659 = vmul.f32 %v5634, %v2503
  %v5660 = vmul.f32 %v5635, %v2508
  %v5661 = vmul.f32 %v5636, %v2513
  %v5662 = vmul.f32 %v5637, %v2518
  %v5663 = vmul.f32 %v5638, %v2523
  %v5664 = vmul.f32 %v5639, %v2528
  %v5665 = vmul.f32 %v5640, %v2533
  %v5666 = vmul.f32 %v5641, %v2538
  %v5667 = vmul.f32 %v5642, %v2543
  %v5668 = vmul.f32 %v5643, %v2548
  %v5669 = vmul.f32 %v5644, %v2553
  %v5670 = vmul.f32 %v5645, %v2558
  %v5671 = vmul.f32 %v5646, %v2563
  %v5672 = vmul.f32 %v5647, %v2568
  %v5673 = vmul.f32 %v5648, %v5648
  %v5674 = vmul.f32 %v5649, %v5649
  %v5675 = vmul.f32 %v5650, %v5650
  %v5676 = vmul.f32 %v5651, %v5651
  %v5677 = vmul.f32 %v5652, %v5652
  %v5678 = vmul.f32 %v5653, %v5653
  %v5679 = vmul.f32 %v5654, %v5654
  %v5680 = vmul.f32 %v5655, %v5655
  %v5681 = vmul.f32 %v5656, %v5656
  %v5682 = vmul.f32 %v5657, %v5657
  %v5683 = vmul.f32 %v5658, %v5658
  %v5684 = vmul.f32 %v5659, %v5659
  %v5685 = vmul.f32 %v5660, %v5660
  %v5686 = vmul.f32 %v5661, %v5661
  %v5687 = vmul.f32 %v5662, %v5662
  %v5688 = vmul.f32 %v5663, %v5663
  %v5689 = vmul.f32 %v5664, %v5664
  %v5690 = vmul.f32 %v5665, %v5665
  %v5691 = vmul.f32 %v5666, %v5666
  %v5692 = vmul.f32 %v5667, %v5667
  %v5693 = vmul.f32 %v5668, %v5668
  %v5694 = vmul.f32 %v5669, %v5669
  %v5695 = vmul.f32 %v5670, %v5670
  %v5696 = vmul.f32 %v5671, %v5671
  %v5697 = vmul.f32 %v5672, %v5672
  %v5698 = vadd.f32 %v5673, %v5674
  %v5699 = vadd.f32 %v5698, %v5675
  %v5700 = vadd.f32 %v5699, %v5676
  %v5701 = vadd.f32 %v5700, %v5677
  %v5702 = vadd.f32 %v5701, %v5678
  %v5703 = vadd.f32 %v5702, %v5679
  %v5704 = vadd.f32 %v5703, %v5680
  %v5705 = vadd.f32 %v5704, %v5681
  %v5706 = vadd.f32 %v5705, %v5682
  %v5707 = vadd.f32 %v5706, %v5683
  %v5708 = vadd.f32 %v5707, %v5684
  %v5709 = vadd.f32 %v5708, %v5685
  %v5710 = vadd.f32 %v5709, %v5686
  %v5711 = vadd.f32 %v5710, %v5687
  %v5712 = vadd.f32 %v5711, %v5688
  %v5713 = vadd.f32 %v5712, %v5689
  %v5714 = vadd.f32 %v5713, %v5690
  %v5715 = vadd.f32 %v5714, %v5691
  %v5716 = vadd.f32 %v5715, %v5692
  %v5717 = vadd.f32 %v5716, %v5693
  %v5718 = vadd.f32 %v5717, %v5694
  %v5719 = vadd.f32 %v5718, %v5695
  %v5720 = vadd.f32 %v5719, %v5696
  %v5721 = vadd.f32 %v5720, %v5697
  %v5722 = vrot.slane %v5721, 4
  %v5723 = vadd.f32 %v5721, %v5722
  %v5724 = vrot.slane %v5723, 2
  %v5725 = vadd.f32 %v5723, %v5724
  %v5726 = vrot.slane %v5725, 1
  %v5727 = vadd.f32 %v5725, %v5726
  %v5728 = vmul.f32 %v5727, 0.0078125
  %v5729 = vld [vmem:[%s5] sm:$0x1]
  %v5730 = vadd.f32 %v5728, 1e-05
  %v5731 = vrsqrt.pop %v5730
  %v5732 = vmul.f32 %v5729, %v5731
  %v5734 = vlaneseq
  %v5735 = vshrl.u32 %v5734, 7
  %v5736 = vsub.s32 0, %v5735
  %v5737 = vrot.slane %v5732, %v5736
  %v5739 = vmul.f32 %v5648, %v5737
  %v5740 = vmul.f32 %v5649, %v5737
  %v5741 = vmul.f32 %v5650, %v5737
  %v5742 = vmul.f32 %v5651, %v5737
  %v5743 = vmul.f32 %v5652, %v5737
  %v5744 = vmul.f32 %v5653, %v5737
  %v5745 = vmul.f32 %v5654, %v5737
  %v5746 = vmul.f32 %v5655, %v5737
  %v5747 = vmul.f32 %v5656, %v5737
  %v5748 = vmul.f32 %v5657, %v5737
  %v5749 = vmul.f32 %v5658, %v5737
  %v5750 = vmul.f32 %v5659, %v5737
  %v5751 = vmul.f32 %v5660, %v5737
  %v5752 = vmul.f32 %v5661, %v5737
  %v5753 = vmul.f32 %v5662, %v5737
  %v5754 = vmul.f32 %v5663, %v5737
  %v5755 = vmul.f32 %v5664, %v5737
  %v5756 = vmul.f32 %v5665, %v5737
  %v5757 = vmul.f32 %v5666, %v5737
  %v5758 = vmul.f32 %v5667, %v5737
  %v5759 = vmul.f32 %v5668, %v5737
  %v5760 = vmul.f32 %v5669, %v5737
  %v5761 = vmul.f32 %v5670, %v5737
  %v5762 = vmul.f32 %v5671, %v5737
  %v5763 = vmul.f32 %v5672, %v5737
  %v5764 = vld [vmem:[%s6] sm:$0x1]
  %v5766 = vlaneseq
  %v5767 = vshrl.u32 %v5766, 7
  %v5768 = vsub.s32 0, %v5767
  %v5769 = vrot.slane %v5764, %v5768
  %v5771 = vadd.f32 %v5739, %v5769
  %v5772 = vadd.f32 %v5740, %v5769
  %v5773 = vadd.f32 %v5741, %v5769
  %v5774 = vadd.f32 %v5742, %v5769
  %v5775 = vadd.f32 %v5743, %v5769
  %v5776 = vadd.f32 %v5744, %v5769
  %v5777 = vadd.f32 %v5745, %v5769
  %v5778 = vadd.f32 %v5746, %v5769
  %v5779 = vadd.f32 %v5747, %v5769
  %v5780 = vadd.f32 %v5748, %v5769
  %v5781 = vadd.f32 %v5749, %v5769
  %v5782 = vadd.f32 %v5750, %v5769
  %v5783 = vadd.f32 %v5751, %v5769
  %v5784 = vadd.f32 %v5752, %v5769
  %v5785 = vadd.f32 %v5753, %v5769
  %v5786 = vadd.f32 %v5754, %v5769
  %v5787 = vadd.f32 %v5755, %v5769
  %v5788 = vadd.f32 %v5756, %v5769
  %v5789 = vadd.f32 %v5757, %v5769
  %v5790 = vadd.f32 %v5758, %v5769
  %v5791 = vadd.f32 %v5759, %v5769
  %v5792 = vadd.f32 %v5760, %v5769
  %v5793 = vadd.f32 %v5761, %v5769
  %v5794 = vadd.f32 %v5762, %v5769
  %v5795 = vadd.f32 %v5763, %v5769
  %v5796 = vmul.f32 %v5771, %v2448
  %v5797 = vmul.f32 %v5772, %v2453
  %v5798 = vmul.f32 %v5773, %v2458
  %v5799 = vmul.f32 %v5774, %v2463
  %v5800 = vmul.f32 %v5775, %v2468
  %v5801 = vmul.f32 %v5776, %v2473
  %v5802 = vmul.f32 %v5777, %v2478
  %v5803 = vmul.f32 %v5778, %v2483
  %v5804 = vmul.f32 %v5779, %v2488
  %v5805 = vmul.f32 %v5780, %v2493
  %v5806 = vmul.f32 %v5781, %v2498
  %v5807 = vmul.f32 %v5782, %v2503
  %v5808 = vmul.f32 %v5783, %v2508
  %v5809 = vmul.f32 %v5784, %v2513
  %v5810 = vmul.f32 %v5785, %v2518
  %v5811 = vmul.f32 %v5786, %v2523
  %v5812 = vmul.f32 %v5787, %v2528
  %v5813 = vmul.f32 %v5788, %v2533
  %v5814 = vmul.f32 %v5789, %v2538
  %v5815 = vmul.f32 %v5790, %v2543
  %v5816 = vmul.f32 %v5791, %v2548
  %v5817 = vmul.f32 %v5792, %v2553
  %v5818 = vmul.f32 %v5793, %v2558
  %v5819 = vmul.f32 %v5794, %v2563
  %v5820 = vmul.f32 %v5795, %v2568
  %v5821 = vadd.f32 %v5796, %v3377
  %v5822 = vadd.f32 %v5797, %v3378
  %v5823 = vadd.f32 %v5798, %v3379
  %v5824 = vadd.f32 %v5799, %v3380
  %v5825 = vadd.f32 %v5800, %v3381
  %v5826 = vadd.f32 %v5801, %v3382
  %v5827 = vadd.f32 %v5802, %v3383
  %v5828 = vadd.f32 %v5803, %v3384
  %v5829 = vadd.f32 %v5804, %v3385
  %v5830 = vadd.f32 %v5805, %v3386
  %v5831 = vadd.f32 %v5806, %v3387
  %v5832 = vadd.f32 %v5807, %v3388
  %v5833 = vadd.f32 %v5808, %v3389
  %v5834 = vadd.f32 %v5809, %v3390
  %v5835 = vadd.f32 %v5810, %v3391
  %v5836 = vadd.f32 %v5811, %v3392
  %v5837 = vadd.f32 %v5812, %v3393
  %v5838 = vadd.f32 %v5813, %v3394
  %v5839 = vadd.f32 %v5814, %v3395
  %v5840 = vadd.f32 %v5815, %v3396
  %v5841 = vadd.f32 %v5816, %v3397
  %v5842 = vadd.f32 %v5817, %v3398
  %v5843 = vadd.f32 %v5818, %v3399
  %v5844 = vadd.f32 %v5819, %v3400
  %v5845 = vadd.f32 %v5820, %v3401
  %v5846 = vmax.f32 %v5821, 0.0
  %v5847 = vmax.f32 %v5822, 0.0
  %v5848 = vmax.f32 %v5823, 0.0
  %v5849 = vmax.f32 %v5824, 0.0
  %v5850 = vmax.f32 %v5825, 0.0
  %v5851 = vmax.f32 %v5826, 0.0
  %v5852 = vmax.f32 %v5827, 0.0
  %v5853 = vmax.f32 %v5828, 0.0
  %v5854 = vmax.f32 %v5829, 0.0
  %v5855 = vmax.f32 %v5830, 0.0
  %v5856 = vmax.f32 %v5831, 0.0
  %v5857 = vmax.f32 %v5832, 0.0
  %v5858 = vmax.f32 %v5833, 0.0
  %v5859 = vmax.f32 %v5834, 0.0
  %v5860 = vmax.f32 %v5835, 0.0
  %v5861 = vmax.f32 %v5836, 0.0
  %v5862 = vmax.f32 %v5837, 0.0
  %v5863 = vmax.f32 %v5838, 0.0
  %v5864 = vmax.f32 %v5839, 0.0
  %v5865 = vmax.f32 %v5840, 0.0
  %v5866 = vmax.f32 %v5841, 0.0
  %v5867 = vmax.f32 %v5842, 0.0
  %v5868 = vmax.f32 %v5843, 0.0
  %v5869 = vmax.f32 %v5844, 0.0
  %v5870 = vmax.f32 %v5845, 0.0
  %5871 = vst [vmem:[%s11] sm:$0xff] 0.0
  %5872 = vst [vmem:[%s11 + $0x8] sm:$0xff] 0.0
  %5873 = vst [vmem:[%s11 + $0x10] sm:$0xff] 0.0
  %5874 = vst [vmem:[%s11 + $0x18] sm:$0xff] 0.0
  %5875 = vst [vmem:[%s11 + $0x20] sm:$0xff] 0.0
  %5876 = vst [vmem:[%s11 + $0x28] sm:$0xff] 0.0
  %5877 = vst [vmem:[%s11 + $0x30] sm:$0xff] 0.0
  %5878 = vst [vmem:[%s11 + $0x38] sm:$0xff] 0.0
  %5879 = vst [vmem:[%s11 + $0x40] sm:$0xff] 0.0
  %5880 = vst [vmem:[%s11 + $0x48] sm:$0xff] 0.0
  %5881 = vst [vmem:[%s11 + $0x50] sm:$0xff] 0.0
  %5882 = vst [vmem:[%s11 + $0x58] sm:$0xff] 0.0
  %5883 = vst [vmem:[%s11 + $0x60] sm:$0xff] 0.0
  %5884 = vst [vmem:[%s11 + $0x68] sm:$0xff] 0.0
  %5885 = vst [vmem:[%s11 + $0x70] sm:$0xff] 0.0
  %5886 = vst [vmem:[%s11 + $0x78] sm:$0xff] 0.0
  %5887 = vst [vmem:[%s11 + $0x80] sm:$0xff] 0.0
  %5888 = vst [vmem:[%s11 + $0x88] sm:$0xff] 0.0
  %5889 = vst [vmem:[%s11 + $0x90] sm:$0xff] 0.0
  %5890 = vst [vmem:[%s11 + $0x98] sm:$0xff] 0.0
  %5891 = vst [vmem:[%s11 + $0xa0] sm:$0xff] 0.0
  %5892 = vst [vmem:[%s11 + $0xa8] sm:$0xff] 0.0
  %5893 = vst [vmem:[%s11 + $0xb0] sm:$0xff] 0.0
  %5894 = vst [vmem:[%s11 + $0xb8] sm:$0xff] 0.0
  %5895 = vst [vmem:[%s11 + $0xc0] sm:$0xff] 0.0
  %5896 = vst [vmem:[%s11 + $0xc8] sm:$0xff] 0.0
  %5897 = vst [vmem:[%s11 + $0xd0] sm:$0xff] 0.0
  %5898 = vst [vmem:[%s11 + $0xd8] sm:$0xff] 0.0
  %5899 = vst [vmem:[%s11 + $0xe0] sm:$0xff] 0.0
  %5900 = vst [vmem:[%s11 + $0x10] sm:$0xff] %v5846
  %5901 = vst [vmem:[%s11 + $0x18] sm:$0xff] %v5847
  %5902 = vst [vmem:[%s11 + $0x20] sm:$0xff] %v5848
  %5903 = vst [vmem:[%s11 + $0x28] sm:$0xff] %v5849
  %5904 = vst [vmem:[%s11 + $0x30] sm:$0xff] %v5850
  %5905 = vst [vmem:[%s11 + $0x38] sm:$0xff] %v5851
  %5906 = vst [vmem:[%s11 + $0x40] sm:$0xff] %v5852
  %5907 = vst [vmem:[%s11 + $0x48] sm:$0xff] %v5853
  %5908 = vst [vmem:[%s11 + $0x50] sm:$0xff] %v5854
  %5909 = vst [vmem:[%s11 + $0x58] sm:$0xff] %v5855
  %5910 = vst [vmem:[%s11 + $0x60] sm:$0xff] %v5856
  %5911 = vst [vmem:[%s11 + $0x68] sm:$0xff] %v5857
  %5912 = vst [vmem:[%s11 + $0x70] sm:$0xff] %v5858
  %5913 = vst [vmem:[%s11 + $0x78] sm:$0xff] %v5859
  %5914 = vst [vmem:[%s11 + $0x80] sm:$0xff] %v5860
  %5915 = vst [vmem:[%s11 + $0x88] sm:$0xff] %v5861
  %5916 = vst [vmem:[%s11 + $0x90] sm:$0xff] %v5862
  %5917 = vst [vmem:[%s11 + $0x98] sm:$0xff] %v5863
  %5918 = vst [vmem:[%s11 + $0xa0] sm:$0xff] %v5864
  %5919 = vst [vmem:[%s11 + $0xa8] sm:$0xff] %v5865
  %5920 = vst [vmem:[%s11 + $0xb0] sm:$0xff] %v5866
  %5921 = vst [vmem:[%s11 + $0xb8] sm:$0xff] %v5867
  %5922 = vst [vmem:[%s11 + $0xc0] sm:$0xff] %v5868
  %5923 = vst [vmem:[%s11 + $0xc8] sm:$0xff] %v5869
  %5924 = vst [vmem:[%s11 + $0xd0] sm:$0xff] %v5870
  // Predicated region
  $region46: #{resnet_vision_forward.6} parent=0 // pred_check
    _
  $region47: #{resnet_vision_forward.6} parent=0 // pred_check_branch
    %5926 = sbr.rel (0) target = $region49
  $region48: #{resnet_vision_forward.6} parent=0 // pred_region
    _
  $region49: #{resnet_vision_forward.6} parent=0 // pred_fallthru
    _
  // Predicated region
  $region50: #{resnet_vision_forward.6} parent=0 // pred_check
    _
  $region51: #{resnet_vision_forward.6} parent=0 // pred_check_branch
    %5928 = sbr.rel (0) target = $region53
  $region52: #{resnet_vision_forward.6} parent=0 // pred_region
    _
  $region53: #{resnet_vision_forward.6} parent=0 // pred_fallthru
    _

// kernel: resnet_vision_forward.7
$region0: #{resnet_vision_forward.7}
  #allocation0 [shape = 'u32[]', space=smem, size = 0x4, offset = 0x4, fixed_abs, tag = 'smem constant byte address 0x4 - core index']
  #allocation1 [shape = 'u32[144,128]{1,0:T(1,128)}', space=vmem, size = 0x12000, scoped, tag = 'internal scratch']
  #allocation2 [shape = 'f32[232,128]{1,0:T(8,128)}', space=vmem, size = 0x1d000, scoped, tag = 'scratch operand']
  %s0 = inlined_call_operand.vmem [shape: f32[232,128], index: 0, kind: input, shape index: {}]
  %s1 = inlined_call_operand.vmem [shape: bf16[144,128], index: 1, kind: input, shape index: {}]
  %s2 = inlined_call_operand.vmem [shape: f32[1,128], index: 2, kind: input, shape index: {}]
  %s3 = inlined_call_operand.vmem [shape: f32[1,128], index: 3, kind: input, shape index: {}]
  %s4 = inlined_call_operand.vmem [shape: bf16[144,128], index: 4, kind: input, shape index: {}]
  %s5 = inlined_call_operand.vmem [shape: f32[1,128], index: 5, kind: input, shape index: {}]
  %s6 = inlined_call_operand.vmem [shape: f32[1,128], index: 6, kind: input, shape index: {}]
  %s7 = inlined_call_operand.vmem [shape: f32[200,1], index: 7, kind: input, shape index: {}]
  %s8 = inlined_call_operand.vmem [shape: f32[232,128], index: 8, kind: output, shape index: {}]
  %s9 = sld [smem:[#allocation0]]
  $region42: #{resnet_vision_forward.7} parent=0
    _
  %s11 = ssub.s32 1, %s9
  %s12 = scalar_select 0, %s11, %s9
  // Predicated region
  $region2: #{resnet_vision_forward.7} parent=0 // pred_check
    _
  $region3: #{resnet_vision_forward.7} parent=0 // pred_check_branch
    %14 = sbr.rel (0) target = $region5
  $region4: #{resnet_vision_forward.7} parent=0 // pred_region
    _
  $region5: #{resnet_vision_forward.7} parent=0 // pred_fallthru
    _
  // Predicated region
  $region6: #{resnet_vision_forward.7} parent=0 // pred_check
    _
  $region7: #{resnet_vision_forward.7} parent=0 // pred_check_branch
    %16 = sbr.rel (0) target = $region9
  $region8: #{resnet_vision_forward.7} parent=0 // pred_region
    _
  $region9: #{resnet_vision_forward.7} parent=0 // pred_fallthru
    _
  // Predicated region
  $region10: #{resnet_vision_forward.7} parent=0 // pred_check
    _
  $region11: #{resnet_vision_forward.7} parent=0 // pred_check_branch
    %18 = sbr.rel (0) target = $region13
  $region12: #{resnet_vision_forward.7} parent=0 // pred_region
    _
  $region13: #{resnet_vision_forward.7} parent=0 // pred_fallthru
    _
  // Predicated region
  $region14: #{resnet_vision_forward.7} parent=0 // pred_check
    _
  $region15: #{resnet_vision_forward.7} parent=0 // pred_check_branch
    %20 = sbr.rel (0) target = $region17
  $region16: #{resnet_vision_forward.7} parent=0 // pred_region
    _
  $region17: #{resnet_vision_forward.7} parent=0 // pred_fallthru
    _
  // Predicated region
  $region18: #{resnet_vision_forward.7} parent=0 // pred_check
    _
  $region19: #{resnet_vision_forward.7} parent=0 // pred_check_branch
    %22 = sbr.rel (0) target = $region21
  $region20: #{resnet_vision_forward.7} parent=0 // pred_region
    _
  $region21: #{resnet_vision_forward.7} parent=0 // pred_fallthru
    _
  // Predicated region
  $region22: #{resnet_vision_forward.7} parent=0 // pred_check
    _
  $region23: #{resnet_vision_forward.7} parent=0 // pred_check_branch
    %24 = sbr.rel (0) target = $region25
  $region24: #{resnet_vision_forward.7} parent=0 // pred_region
    _
  $region25: #{resnet_vision_forward.7} parent=0 // pred_fallthru
    _
  // Predicated region
  $region26: #{resnet_vision_forward.7} parent=0 // pred_check
    _
  $region27: #{resnet_vision_forward.7} parent=0 // pred_check_branch
    %26 = sbr.rel (0) target = $region29
  $region28: #{resnet_vision_forward.7} parent=0 // pred_region
    _
  $region29: #{resnet_vision_forward.7} parent=0 // pred_fallthru
    _
  // Predicated region
  $region30: #{resnet_vision_forward.7} parent=0 // pred_check
    _
  $region31: #{resnet_vision_forward.7} parent=0 // pred_check_branch
    %28 = sbr.rel (0) target = $region33
  $region32: #{resnet_vision_forward.7} parent=0 // pred_region
    _
  $region33: #{resnet_vision_forward.7} parent=0 // pred_fallthru
    _
  %v30 = vld [vmem:[%s7] sm:$0xff]
  %v31 = vld [vmem:[%s7 + $0x8] sm:$0xff]
  %v32 = vld [vmem:[%s7 + $0x10] sm:$0xff]
  %v33 = vld [vmem:[%s7 + $0x18] sm:$0xff]
  %v34 = vld [vmem:[%s7 + $0x20] sm:$0xff]
  %v35 = vld [vmem:[%s7 + $0x28] sm:$0xff]
  %v36 = vld [vmem:[%s7 + $0x30] sm:$0xff]
  %v37 = vld [vmem:[%s7 + $0x38] sm:$0xff]
  %v38 = vld [vmem:[%s7 + $0x40] sm:$0xff]
  %v39 = vld [vmem:[%s7 + $0x48] sm:$0xff]
  %v40 = vld [vmem:[%s7 + $0x50] sm:$0xff]
  %v41 = vld [vmem:[%s7 + $0x58] sm:$0xff]
  %v42 = vld [vmem:[%s7 + $0x60] sm:$0xff]
  %v43 = vld [vmem:[%s7 + $0x68] sm:$0xff]
  %v44 = vld [vmem:[%s7 + $0x70] sm:$0xff]
  %v45 = vld [vmem:[%s7 + $0x78] sm:$0xff]
  %v46 = vld [vmem:[%s7 + $0x80] sm:$0xff]
  %v47 = vld [vmem:[%s7 + $0x88] sm:$0xff]
  %v48 = vld [vmem:[%s7 + $0x90] sm:$0xff]
  %v49 = vld [vmem:[%s7 + $0x98] sm:$0xff]
  %v50 = vld [vmem:[%s7 + $0xa0] sm:$0xff]
  %v51 = vld [vmem:[%s7 + $0xa8] sm:$0xff]
  %v52 = vld [vmem:[%s7 + $0xb0] sm:$0xff]
  %v53 = vld [vmem:[%s7 + $0xb8] sm:$0xff]
  %v54 = vld [vmem:[%s7 + $0xc0] sm:$0xff]
  %v55 = vld [vmem:[%s0 + $0x5] sm:$0xff]
  %v56 = vld [vmem:[%s0 + $0xd] sm:$0xff]
  %v57 = vld [vmem:[%s0 + $0x15] sm:$0xff]
  %v58 = vld [vmem:[%s0 + $0x1d] sm:$0xff]
  %v59 = vld [vmem:[%s0 + $0x25] sm:$0xff]
  %v60 = vld [vmem:[%s0 + $0x2d] sm:$0xff]
  %v61 = vld [vmem:[%s0 + $0x35] sm:$0xff]
  %v62 = vld [vmem:[%s0 + $0x3d] sm:$0xff]
  %v63 = vld [vmem:[%s0 + $0x45] sm:$0xff]
  %v64 = vld [vmem:[%s0 + $0x4d] sm:$0xff]
  %v65 = vld [vmem:[%s0 + $0x55] sm:$0xff]
  %v66 = vld [vmem:[%s0 + $0x5d] sm:$0xff]
  %v67 = vld [vmem:[%s0 + $0x65] sm:$0xff]
  %v68 = vld [vmem:[%s0 + $0x6d] sm:$0xff]
  %v69 = vld [vmem:[%s0 + $0x75] sm:$0xff]
  %v70 = vld [vmem:[%s0 + $0x7d] sm:$0xff]
  %v71 = vld [vmem:[%s0 + $0x85] sm:$0xff]
  %v72 = vld [vmem:[%s0 + $0x8d] sm:$0xff]
  %v73 = vld [vmem:[%s0 + $0x95] sm:$0xff]
  %v74 = vld [vmem:[%s0 + $0x9d] sm:$0xff]
  %v75 = vld [vmem:[%s0 + $0xa5] sm:$0xff]
  %v76 = vld [vmem:[%s0 + $0xad] sm:$0xff]
  %v77 = vld [vmem:[%s0 + $0xb5] sm:$0xff]
  %v78 = vld [vmem:[%s0 + $0xbd] sm:$0xff]
  %v79 = vld [vmem:[%s0 + $0xc5] sm:$0xff]
  %v80 = vpack.c.bf16 %v56, %v55
  %v81 = vpack.c.bf16 %v58, %v57
  %v82 = vpack.c.bf16 %v60, %v59
  %v83 = vpack.c.bf16 %v62, %v61
  %v84 = vpack.c.bf16 %v64, %v63
  %v85 = vpack.c.bf16 %v66, %v65
  %v86 = vpack.c.bf16 %v68, %v67
  %v87 = vpack.c.bf16 %v70, %v69
  %v88 = vpack.c.bf16 %v72, %v71
  %v89 = vpack.c.bf16 %v74, %v73
  %v90 = vpack.c.bf16 %v76, %v75
  %v91 = vpack.c.bf16 %v78, %v77
  %v92 = vpack.c.bf16 %v79, %v79
  %v93 = vld [vmem:[%s1] sm:$0xf]
  %v94 = vld [vmem:[%s1 + $0x4] sm:$0xf]
  %v95 = vld [vmem:[%s0 + $0x6] sm:$0xff]
  %v96 = vld [vmem:[%s0 + $0xe] sm:$0xff]
  %v97 = vld [vmem:[%s0 + $0x16] sm:$0xff]
  %v98 = vld [vmem:[%s0 + $0x1e] sm:$0xff]
  %v99 = vld [vmem:[%s0 + $0x26] sm:$0xff]
  %v100 = vld [vmem:[%s0 + $0x2e] sm:$0xff]
  %v101 = vld [vmem:[%s0 + $0x36] sm:$0xff]
  %v102 = vld [vmem:[%s0 + $0x3e] sm:$0xff]
  %v103 = vld [vmem:[%s0 + $0x46] sm:$0xff]
  %v104 = vld [vmem:[%s0 + $0x4e] sm:$0xff]
  %v105 = vld [vmem:[%s0 + $0x56] sm:$0xff]
  %v106 = vld [vmem:[%s0 + $0x5e] sm:$0xff]
  %v107 = vld [vmem:[%s0 + $0x66] sm:$0xff]
  %v108 = vld [vmem:[%s0 + $0x6e] sm:$0xff]
  %v109 = vld [vmem:[%s0 + $0x76] sm:$0xff]
  %v110 = vld [vmem:[%s0 + $0x7e] sm:$0xff]
  %v111 = vld [vmem:[%s0 + $0x86] sm:$0xff]
  %v112 = vld [vmem:[%s0 + $0x8e] sm:$0xff]
  %v113 = vld [vmem:[%s0 + $0x96] sm:$0xff]
  %v114 = vld [vmem:[%s0 + $0x9e] sm:$0xff]
  %v115 = vld [vmem:[%s0 + $0xa6] sm:$0xff]
  %v116 = vld [vmem:[%s0 + $0xae] sm:$0xff]
  %v117 = vld [vmem:[%s0 + $0xb6] sm:$0xff]
  %v118 = vld [vmem:[%s0 + $0xbe] sm:$0xff]
  %v119 = vld [vmem:[%s0 + $0xc6] sm:$0xff]
  %v120 = vpack.c.bf16 %v96, %v95
  %v121 = vpack.c.bf16 %v98, %v97
  %v122 = vpack.c.bf16 %v100, %v99
  %v123 = vpack.c.bf16 %v102, %v101
  %v124 = vpack.c.bf16 %v104, %v103
  %v125 = vpack.c.bf16 %v106, %v105
  %v126 = vpack.c.bf16 %v108, %v107
  %v127 = vpack.c.bf16 %v110, %v109
  %v128 = vpack.c.bf16 %v112, %v111
  %v129 = vpack.c.bf16 %v114, %v113
  %v130 = vpack.c.bf16 %v116, %v115
  %v131 = vpack.c.bf16 %v118, %v117
  %v132 = vpack.c.bf16 %v119, %v119
  %v133 = vld [vmem:[%s1 + $0x8] sm:$0xf]
  %v134 = vld [vmem:[%s1 + $0xc] sm:$0xf]
  %v137 = vunpack.c.l.b16 %v133
  %v138 = vunpack.c.l.b16 %v134
  %v139 = vpack.c.b16 %v138, %v137
  %vm141 = vcmask 130048
  %v143 = vsel %vm141, %v120, 0
  %v146 = vsel %vm141, %v121, 0
  %v149 = vsel %vm141, %v122, 0
  %v152 = vsel %vm141, %v123, 0
  %v155 = vsel %vm141, %v124, 0
  %v158 = vsel %vm141, %v125, 0
  %v161 = vsel %vm141, %v126, 0
  %v164 = vsel %vm141, %v127, 0
  %v167 = vsel %vm141, %v128, 0
  %v170 = vsel %vm141, %v129, 0
  %v173 = vsel %vm141, %v130, 0
  %v176 = vsel %vm141, %v131, 0
  %v179 = vsel %vm141, %v132, 0
  %181 = vmatprep.subr.bf16.mxu0 0
  %182 = vmatpush1.bf16.msra.mxu0 %v139
  %183 = vmatprep.subr.bf16.mxu0 0
  %184 = vmatpush1.bf16.msra.mxu0 0
  %185 = vmatprep.subr.bf16.mxu0 0
  %186 = vmatpush1.bf16.msra.mxu0 0
  %187 = vmatprep.subr.bf16.mxu0 0
  %188 = vmatpush1.bf16.msra.mxu0 0
  %189 = vmatprep.subr.bf16.mxu0 0
  %190 = vmatpush1.bf16.msra.mxu0 0
  %191 = vmatprep.subr.bf16.mxu0 0
  %192 = vmatpush1.bf16.msra.mxu0 0
  %193 = vmatprep.subr.bf16.mxu0 0
  %194 = vmatpush1.bf16.msra.mxu0 0
  %195 = vmatprep.subr.bf16.mxu0 0
  %196 = vmatpush1.bf16.msra.mxu0 0
  %197 = vmatprep.subr.bf16.mxu0 0
  %198 = vmatpush1.bf16.msra.mxu0 0
  %199 = vmatprep.subr.bf16.mxu0 0
  %200 = vmatpush1.bf16.msra.mxu0 0
  %201 = vmatprep.subr.bf16.mxu0 0
  %202 = vmatpush1.bf16.msra.mxu0 0
  %203 = vmatprep.subr.bf16.mxu0 0
  %204 = vmatpush1.bf16.msra.mxu0 0
  %205 = vmatprep.subr.bf16.mxu0 0
  %206 = vmatpush1.bf16.msra.mxu0 0
  %207 = vmatprep.subr.bf16.mxu0 0
  %208 = vmatpush1.bf16.msra.mxu0 0
  %209 = vmatprep.subr.bf16.mxu0 0
  %210 = vmatpush1.bf16.msra.mxu0 0
  %211 = vmatprep.subr.bf16.mxu0 0
  %212 = vmatpush1.bf16.msra.mxu0 0
  %213 = vmatprep.mubr.bf16.mxu0 0
  %214 = vmatmul.mubr.bf16.gmra.mrb[0].mxu0 %v143
  %v215 = vpop.f32.mrb[0].mxu0
  %v216 = vadd.f32 0.0, %v215
  %v217 = vpop.f32.mrb[0].mxu0
  %v218 = vpop.f32.mrb[0].mxu0
  %v219 = vadd.f32 0.0, %v218
  %v220 = vpop.f32.mrb[0].mxu0
  %221 = vmatprep.mubr.bf16.mxu0 0
  %222 = vmatmul.mubr.bf16.gmra.mrb[0].mxu0 %v146
  %v223 = vpop.f32.mrb[0].mxu0
  %v224 = vadd.f32 0.0, %v223
  %v225 = vpop.f32.mrb[0].mxu0
  %v226 = vpop.f32.mrb[0].mxu0
  %v227 = vadd.f32 0.0, %v226
  %v228 = vpop.f32.mrb[0].mxu0
  %229 = vmatprep.mubr.bf16.mxu0 0
  %230 = vmatmul.mubr.bf16.gmra.mrb[0].mxu0 %v149
  %v231 = vpop.f32.mrb[0].mxu0
  %v232 = vadd.f32 0.0, %v231
  %v233 = vpop.f32.mrb[0].mxu0
  %v234 = vpop.f32.mrb[0].mxu0
  %v235 = vadd.f32 0.0, %v234
  %v236 = vpop.f32.mrb[0].mxu0
  %237 = vmatprep.mubr.bf16.mxu0 0
  %238 = vmatmul.mubr.bf16.gmra.mrb[0].mxu0 %v152
  %v239 = vpop.f32.mrb[0].mxu0
  %v240 = vadd.f32 0.0, %v239
  %v241 = vpop.f32.mrb[0].mxu0
  %v242 = vpop.f32.mrb[0].mxu0
  %v243 = vadd.f32 0.0, %v242
  %v244 = vpop.f32.mrb[0].mxu0
  %245 = vmatprep.mubr.bf16.mxu0 0
  %246 = vmatmul.mubr.bf16.gmra.mrb[0].mxu0 %v155
  %v247 = vpop.f32.mrb[0].mxu0
  %v248 = vadd.f32 0.0, %v247
  %v249 = vpop.f32.mrb[0].mxu0
  %v250 = vpop.f32.mrb[0].mxu0
  %v251 = vadd.f32 0.0, %v250
  %v252 = vpop.f32.mrb[0].mxu0
  %253 = vmatprep.mubr.bf16.mxu0 0
  %254 = vmatmul.mubr.bf16.gmra.mrb[0].mxu0 %v158
  %v255 = vpop.f32.mrb[0].mxu0
  %v256 = vadd.f32 0.0, %v255
  %v257 = vpop.f32.mrb[0].mxu0
  %v258 = vpop.f32.mrb[0].mxu0
  %v259 = vadd.f32 0.0, %v258
  %v260 = vpop.f32.mrb[0].mxu0
  %261 = vmatprep.mubr.bf16.mxu0 0
  %262 = vmatmul.mubr.bf16.gmra.mrb[0].mxu0 %v161
  %v263 = vpop.f32.mrb[0].mxu0
  %v264 = vadd.f32 0.0, %v263
  %v265 = vpop.f32.mrb[0].mxu0
  %v266 = vpop.f32.mrb[0].mxu0
  %v267 = vadd.f32 0.0, %v266
  %v268 = vpop.f32.mrb[0].mxu0
  %269 = vmatprep.mubr.bf16.mxu0 0
  %270 = vmatmul.mubr.bf16.gmra.mrb[0].mxu0 %v164
  %v271 = vpop.f32.mrb[0].mxu0
  %v272 = vadd.f32 0.0, %v271
  %v273 = vpop.f32.mrb[0].mxu0
  %v274 = vpop.f32.mrb[0].mxu0
  %v275 = vadd.f32 0.0, %v274
  %v276 = vpop.f32.mrb[0].mxu0
  %277 = vmatprep.mubr.bf16.mxu0 0
  %278 = vmatmul.mubr.bf16.gmra.mrb[0].mxu0 %v167
  %v279 = vpop.f32.mrb[0].mxu0
  %v280 = vadd.f32 0.0, %v279
  %v281 = vpop.f32.mrb[0].mxu0
  %v282 = vpop.f32.mrb[0].mxu0
  %v283 = vadd.f32 0.0, %v282
  %v284 = vpop.f32.mrb[0].mxu0
  %285 = vmatprep.mubr.bf16.mxu0 0
  %286 = vmatmul.mubr.bf16.gmra.mrb[0].mxu0 %v170
  %v287 = vpop.f32.mrb[0].mxu0
  %v288 = vadd.f32 0.0, %v287
  %v289 = vpop.f32.mrb[0].mxu0
  %v290 = vpop.f32.mrb[0].mxu0
  %v291 = vadd.f32 0.0, %v290
  %v292 = vpop.f32.mrb[0].mxu0
  %293 = vmatprep.mubr.bf16.mxu0 0
  %294 = vmatmul.mubr.bf16.gmra.mrb[0].mxu0 %v173
  %v295 = vpop.f32.mrb[0].mxu0
  %v296 = vadd.f32 0.0, %v295
  %v297 = vpop.f32.mrb[0].mxu0
  %v298 = vpop.f32.mrb[0].mxu0
  %v299 = vadd.f32 0.0, %v298
  %v300 = vpop.f32.mrb[0].mxu0
  %301 = vmatprep.mubr.bf16.mxu0 0
  %302 = vmatmul.mubr.bf16.gmra.mrb[0].mxu0 %v176
  %v303 = vpop.f32.mrb[0].mxu0
  %v304 = vadd.f32 0.0, %v303
  %v305 = vpop.f32.mrb[0].mxu0
  %v306 = vpop.f32.mrb[0].mxu0
  %v307 = vadd.f32 0.0, %v306
  %v308 = vpop.f32.mrb[0].mxu0
  %309 = vmatprep.mubr.bf16.mxu0 0
  %310 = vmatmul.mubr.bf16.gmra.mrb[0].mxu0 %v179
  %v311 = vpop.f32.mrb[0].mxu0
  %v312 = vadd.f32 0.0, %v311
  %v313 = vpop.f32.mrb[0].mxu0
  %v314 = vpop.f32.mrb[0].mxu0
  %v315 = vpop.f32.mrb[0].mxu0
  %316 = vdwg.mxu0
  %v319 = vunpack.c.l.b16 %v93
  %v320 = vunpack.c.l.b16 %v94
  %v321 = vpack.c.b16 %v320, %v319
  %v324 = vsel %vm141, %v80, 0
  %v327 = vsel %vm141, %v81, 0
  %v330 = vsel %vm141, %v82, 0
  %v333 = vsel %vm141, %v83, 0
  %v336 = vsel %vm141, %v84, 0
  %v339 = vsel %vm141, %v85, 0
  %v342 = vsel %vm141, %v86, 0
  %v345 = vsel %vm141, %v87, 0
  %v348 = vsel %vm141, %v88, 0
  %v351 = vsel %vm141, %v89, 0
  %v354 = vsel %vm141, %v90, 0
  %v357 = vsel %vm141, %v91, 0
  %v360 = vsel %vm141, %v92, 0
  %362 = vmatprep.subr.bf16.mxu0 0
  %363 = vmatpush1.bf16.msra.mxu0 %v321
  %364 = vmatprep.subr.bf16.mxu0 0
  %365 = vmatpush1.bf16.msra.mxu0 0
  %366 = vmatprep.subr.bf16.mxu0 0
  %367 = vmatpush1.bf16.msra.mxu0 0
  %368 = vmatprep.subr.bf16.mxu0 0
  %369 = vmatpush1.bf16.msra.mxu0 0
  %370 = vmatprep.subr.bf16.mxu0 0
  %371 = vmatpush1.bf16.msra.mxu0 0
  %372 = vmatprep.subr.bf16.mxu0 0
  %373 = vmatpush1.bf16.msra.mxu0 0
  %374 = vmatprep.subr.bf16.mxu0 0
  %375 = vmatpush1.bf16.msra.mxu0 0
  %376 = vmatprep.subr.bf16.mxu0 0
  %377 = vmatpush1.bf16.msra.mxu0 0
  %378 = vmatprep.subr.bf16.mxu0 0
  %379 = vmatpush1.bf16.msra.mxu0 0
  %380 = vmatprep.subr.bf16.mxu0 0
  %381 = vmatpush1.bf16.msra.mxu0 0
  %382 = vmatprep.subr.bf16.mxu0 0
  %383 = vmatpush1.bf16.msra.mxu0 0
  %384 = vmatprep.subr.bf16.mxu0 0
  %385 = vmatpush1.bf16.msra.mxu0 0
  %386 = vmatprep.subr.bf16.mxu0 0
  %387 = vmatpush1.bf16.msra.mxu0 0
  %388 = vmatprep.subr.bf16.mxu0 0
  %389 = vmatpush1.bf16.msra.mxu0 0
  %390 = vmatprep.subr.bf16.mxu0 0
  %391 = vmatpush1.bf16.msra.mxu0 0
  %392 = vmatprep.subr.bf16.mxu0 0
  %393 = vmatpush1.bf16.msra.mxu0 0
  %394 = vmatprep.mubr.bf16.mxu0 0
  %395 = vmatmul.mubr.bf16.gmra.mrb[0].mxu0 %v324
  %v396 = vpop.f32.mrb[0].mxu0
  %v397 = vadd.f32 %v216, %v396
  %v398 = vpop.f32.mrb[0].mxu0
  %v399 = vpop.f32.mrb[0].mxu0
  %v400 = vadd.f32 %v219, %v399
  %v401 = vpop.f32.mrb[0].mxu0
  %402 = vmatprep.mubr.bf16.mxu0 0
  %403 = vmatmul.mubr.bf16.gmra.mrb[0].mxu0 %v327
  %v404 = vpop.f32.mrb[0].mxu0
  %v405 = vadd.f32 %v224, %v404
  %v406 = vpop.f32.mrb[0].mxu0
  %v407 = vpop.f32.mrb[0].mxu0
  %v408 = vadd.f32 %v227, %v407
  %v409 = vpop.f32.mrb[0].mxu0
  %410 = vmatprep.mubr.bf16.mxu0 0
  %411 = vmatmul.mubr.bf16.gmra.mrb[0].mxu0 %v330
  %v412 = vpop.f32.mrb[0].mxu0
  %v413 = vadd.f32 %v232, %v412
  %v414 = vpop.f32.mrb[0].mxu0
  %v415 = vpop.f32.mrb[0].mxu0
  %v416 = vadd.f32 %v235, %v415
  %v417 = vpop.f32.mrb[0].mxu0
  %418 = vmatprep.mubr.bf16.mxu0 0
  %419 = vmatmul.mubr.bf16.gmra.mrb[0].mxu0 %v333
  %v420 = vpop.f32.mrb[0].mxu0
  %v421 = vadd.f32 %v240, %v420
  %v422 = vpop.f32.mrb[0].mxu0
  %v423 = vpop.f32.mrb[0].mxu0
  %v424 = vadd.f32 %v243, %v423
  %v425 = vpop.f32.mrb[0].mxu0
  %426 = vmatprep.mubr.bf16.mxu0 0
  %427 = vmatmul.mubr.bf16.gmra.mrb[0].mxu0 %v336
  %v428 = vpop.f32.mrb[0].mxu0
  %v429 = vadd.f32 %v248, %v428
  %v430 = vpop.f32.mrb[0].mxu0
  %v431 = vpop.f32.mrb[0].mxu0
  %v432 = vadd.f32 %v251, %v431
  %v433 = vpop.f32.mrb[0].mxu0
  %434 = vmatprep.mubr.bf16.mxu0 0
  %435 = vmatmul.mubr.bf16.gmra.mrb[0].mxu0 %v339
  %v436 = vpop.f32.mrb[0].mxu0
  %v437 = vadd.f32 %v256, %v436
  %v438 = vpop.f32.mrb[0].mxu0
  %v439 = vpop.f32.mrb[0].mxu0
  %v440 = vadd.f32 %v259, %v439
  %v441 = vpop.f32.mrb[0].mxu0
  %442 = vmatprep.mubr.bf16.mxu0 0
  %443 = vmatmul.mubr.bf16.gmra.mrb[0].mxu0 %v342
  %v444 = vpop.f32.mrb[0].mxu0
  %v445 = vadd.f32 %v264, %v444
  %v446 = vpop.f32.mrb[0].mxu0
  %v447 = vpop.f32.mrb[0].mxu0
  %v448 = vadd.f32 %v267, %v447
  %v449 = vpop.f32.mrb[0].mxu0
  %450 = vmatprep.mubr.bf16.mxu0 0
  %451 = vmatmul.mubr.bf16.gmra.mrb[0].mxu0 %v345
  %v452 = vpop.f32.mrb[0].mxu0
  %v453 = vadd.f32 %v272, %v452
  %v454 = vpop.f32.mrb[0].mxu0
  %v455 = vpop.f32.mrb[0].mxu0
  %v456 = vadd.f32 %v275, %v455
  %v457 = vpop.f32.mrb[0].mxu0
  %458 = vmatprep.mubr.bf16.mxu0 0
  %459 = vmatmul.mubr.bf16.gmra.mrb[0].mxu0 %v348
  %v460 = vpop.f32.mrb[0].mxu0
  %v461 = vadd.f32 %v280, %v460
  %v462 = vpop.f32.mrb[0].mxu0
  %v463 = vpop.f32.mrb[0].mxu0
  %v464 = vadd.f32 %v283, %v463
  %v465 = vpop.f32.mrb[0].mxu0
  %466 = vmatprep.mubr.bf16.mxu0 0
  %467 = vmatmul.mubr.bf16.gmra.mrb[0].mxu0 %v351
  %v468 = vpop.f32.mrb[0].mxu0
  %v469 = vadd.f32 %v288, %v468
  %v470 = vpop.f32.mrb[0].mxu0
  %v471 = vpop.f32.mrb[0].mxu0
  %v472 = vadd.f32 %v291, %v471
  %v473 = vpop.f32.mrb[0].mxu0
  %474 = vmatprep.mubr.bf16.mxu0 0
  %475 = vmatmul.mubr.bf16.gmra.mrb[0].mxu0 %v354
  %v476 = vpop.f32.mrb[0].mxu0
  %v477 = vadd.f32 %v296, %v476
  %v478 = vpop.f32.mrb[0].mxu0
  %v479 = vpop.f32.mrb[0].mxu0
  %v480 = vadd.f32 %v299, %v479
  %v481 = vpop.f32.mrb[0].mxu0
  %482 = vmatprep.mubr.bf16.mxu0 0
  %483 = vmatmul.mubr.bf16.gmra.mrb[0].mxu0 %v357
  %v484 = vpop.f32.mrb[0].mxu0
  %v485 = vadd.f32 %v304, %v484
  %v486 = vpop.f32.mrb[0].mxu0
  %v487 = vpop.f32.mrb[0].mxu0
  %v488 = vadd.f32 %v307, %v487
  %v489 = vpop.f32.mrb[0].mxu0
  %490 = vmatprep.mubr.bf16.mxu0 0
  %491 = vmatmul.mubr.bf16.gmra.mrb[0].mxu0 %v360
  %v492 = vpop.f32.mrb[0].mxu0
  %v493 = vadd.f32 %v312, %v492
  %v494 = vpop.f32.mrb[0].mxu0
  %v495 = vpop.f32.mrb[0].mxu0
  %v496 = vpop.f32.mrb[0].mxu0
  %497 = vdwg.mxu0
  %v498 = vld [vmem:[%s0 + $0x7] sm:$0xff]
  %v499 = vld [vmem:[%s0 + $0xf] sm:$0xff]
  %v500 = vld [vmem:[%s0 + $0x17] sm:$0xff]
  %v501 = vld [vmem:[%s0 + $0x1f] sm:$0xff]
  %v502 = vld [vmem:[%s0 + $0x27] sm:$0xff]
  %v503 = vld [vmem:[%s0 + $0x2f] sm:$0xff]
  %v504 = vld [vmem:[%s0 + $0x37] sm:$0xff]
  %v505 = vld [vmem:[%s0 + $0x3f] sm:$0xff]
  %v506 = vld [vmem:[%s0 + $0x47] sm:$0xff]
  %v507 = vld [vmem:[%s0 + $0x4f] sm:$0xff]
  %v508 = vld [vmem:[%s0 + $0x57] sm:$0xff]
  %v509 = vld [vmem:[%s0 + $0x5f] sm:$0xff]
  %v510 = vld [vmem:[%s0 + $0x67] sm:$0xff]
  %v511 = vld [vmem:[%s0 + $0x6f] sm:$0xff]
  %v512 = vld [vmem:[%s0 + $0x77] sm:$0xff]
  %v513 = vld [vmem:[%s0 + $0x7f] sm:$0xff]
  %v514 = vld [vmem:[%s0 + $0x87] sm:$0xff]
  %v515 = vld [vmem:[%s0 + $0x8f] sm:$0xff]
  %v516 = vld [vmem:[%s0 + $0x97] sm:$0xff]
  %v517 = vld [vmem:[%s0 + $0x9f] sm:$0xff]
  %v518 = vld [vmem:[%s0 + $0xa7] sm:$0xff]
  %v519 = vld [vmem:[%s0 + $0xaf] sm:$0xff]
  %v520 = vld [vmem:[%s0 + $0xb7] sm:$0xff]
  %v521 = vld [vmem:[%s0 + $0xbf] sm:$0xff]
  %v522 = vld [vmem:[%s0 + $0xc7] sm:$0xff]
  %v523 = vpack.c.bf16 %v499, %v498
  %v524 = vpack.c.bf16 %v501, %v500
  %v525 = vpack.c.bf16 %v503, %v502
  %v526 = vpack.c.bf16 %v505, %v504
  %v527 = vpack.c.bf16 %v507, %v506
  %v528 = vpack.c.bf16 %v509, %v508
  %v529 = vpack.c.bf16 %v511, %v510
  %v530 = vpack.c.bf16 %v513, %v512
  %v531 = vpack.c.bf16 %v515, %v514
  %v532 = vpack.c.bf16 %v517, %v516
  %v533 = vpack.c.bf16 %v519, %v518
  %v534 = vpack.c.bf16 %v521, %v520
  %v535 = vpack.c.bf16 %v522, %v522
  %v536 = vld [vmem:[%s1 + $0x10] sm:$0xf]
  %v537 = vld [vmem:[%s1 + $0x14] sm:$0xf]
  %v540 = vunpack.c.l.b16 %v536
  %v541 = vunpack.c.l.b16 %v537
  %v542 = vpack.c.b16 %v541, %v540
  %v545 = vsel %vm141, %v523, 0
  %v548 = vsel %vm141, %v524, 0
  %v551 = vsel %vm141, %v525, 0
  %v554 = vsel %vm141, %v526, 0
  %v557 = vsel %vm141, %v527, 0
  %v560 = vsel %vm141, %v528, 0
  %v563 = vsel %vm141, %v529, 0
  %v566 = vsel %vm141, %v530, 0
  %v569 = vsel %vm141, %v531, 0
  %v572 = vsel %vm141, %v532, 0
  %v575 = vsel %vm141, %v533, 0
  %v578 = vsel %vm141, %v534, 0
  %v581 = vsel %vm141, %v535, 0
  %583 = vmatprep.subr.bf16.mxu0 0
  %584 = vmatpush1.bf16.msra.mxu0 %v542
  %585 = vmatprep.subr.bf16.mxu0 0
  %586 = vmatpush1.bf16.msra.mxu0 0
  %587 = vmatprep.subr.bf16.mxu0 0
  %588 = vmatpush1.bf16.msra.mxu0 0
  %589 = vmatprep.subr.bf16.mxu0 0
  %590 = vmatpush1.bf16.msra.mxu0 0
  %591 = vmatprep.subr.bf16.mxu0 0
  %592 = vmatpush1.bf16.msra.mxu0 0
  %593 = vmatprep.subr.bf16.mxu0 0
  %594 = vmatpush1.bf16.msra.mxu0 0
  %595 = vmatprep.subr.bf16.mxu0 0
  %596 = vmatpush1.bf16.msra.mxu0 0
  %597 = vmatprep.subr.bf16.mxu0 0
  %598 = vmatpush1.bf16.msra.mxu0 0
  %599 = vmatprep.subr.bf16.mxu0 0
  %600 = vmatpush1.bf16.msra.mxu0 0
  %601 = vmatprep.subr.bf16.mxu0 0
  %602 = vmatpush1.bf16.msra.mxu0 0
  %603 = vmatprep.subr.bf16.mxu0 0
  %604 = vmatpush1.bf16.msra.mxu0 0
  %605 = vmatprep.subr.bf16.mxu0 0
  %606 = vmatpush1.bf16.msra.mxu0 0
  %607 = vmatprep.subr.bf16.mxu0 0
  %608 = vmatpush1.bf16.msra.mxu0 0
  %609 = vmatprep.subr.bf16.mxu0 0
  %610 = vmatpush1.bf16.msra.mxu0 0
  %611 = vmatprep.subr.bf16.mxu0 0
  %612 = vmatpush1.bf16.msra.mxu0 0
  %613 = vmatprep.subr.bf16.mxu0 0
  %614 = vmatpush1.bf16.msra.mxu0 0
  %615 = vmatprep.mubr.bf16.mxu0 0
  %616 = vmatmul.mubr.bf16.gmra.mrb[0].mxu0 %v545
  %v617 = vpop.f32.mrb[0].mxu0
  %v618 = vadd.f32 0.0, %v617
  %v619 = vpop.f32.mrb[0].mxu0
  %v620 = vpop.f32.mrb[0].mxu0
  %v621 = vadd.f32 0.0, %v620
  %v622 = vpop.f32.mrb[0].mxu0
  %623 = vmatprep.mubr.bf16.mxu0 0
  %624 = vmatmul.mubr.bf16.gmra.mrb[0].mxu0 %v548
  %v625 = vpop.f32.mrb[0].mxu0
  %v626 = vadd.f32 0.0, %v625
  %v627 = vpop.f32.mrb[0].mxu0
  %v628 = vpop.f32.mrb[0].mxu0
  %v629 = vadd.f32 0.0, %v628
  %v630 = vpop.f32.mrb[0].mxu0
  %631 = vmatprep.mubr.bf16.mxu0 0
  %632 = vmatmul.mubr.bf16.gmra.mrb[0].mxu0 %v551
  %v633 = vpop.f32.mrb[0].mxu0
  %v634 = vadd.f32 0.0, %v633
  %v635 = vpop.f32.mrb[0].mxu0
  %v636 = vpop.f32.mrb[0].mxu0
  %v637 = vadd.f32 0.0, %v636
  %v638 = vpop.f32.mrb[0].mxu0
  %639 = vmatprep.mubr.bf16.mxu0 0
  %640 = vmatmul.mubr.bf16.gmra.mrb[0].mxu0 %v554
  %v641 = vpop.f32.mrb[0].mxu0
  %v642 = vadd.f32 0.0, %v641
  %v643 = vpop.f32.mrb[0].mxu0
  %v644 = vpop.f32.mrb[0].mxu0
  %v645 = vadd.f32 0.0, %v644
  %v646 = vpop.f32.mrb[0].mxu0
  %647 = vmatprep.mubr.bf16.mxu0 0
  %648 = vmatmul.mubr.bf16.gmra.mrb[0].mxu0 %v557
  %v649 = vpop.f32.mrb[0].mxu0
  %v650 = vadd.f32 0.0, %v649
  %v651 = vpop.f32.mrb[0].mxu0
  %v652 = vpop.f32.mrb[0].mxu0
  %v653 = vadd.f32 0.0, %v652
  %v654 = vpop.f32.mrb[0].mxu0
  %655 = vmatprep.mubr.bf16.mxu0 0
  %656 = vmatmul.mubr.bf16.gmra.mrb[0].mxu0 %v560
  %v657 = vpop.f32.mrb[0].mxu0
  %v658 = vadd.f32 0.0, %v657
  %v659 = vpop.f32.mrb[0].mxu0
  %v660 = vpop.f32.mrb[0].mxu0
  %v661 = vadd.f32 0.0, %v660
  %v662 = vpop.f32.mrb[0].mxu0
  %663 = vmatprep.mubr.bf16.mxu0 0
  %664 = vmatmul.mubr.bf16.gmra.mrb[0].mxu0 %v563
  %v665 = vpop.f32.mrb[0].mxu0
  %v666 = vadd.f32 0.0, %v665
  %v667 = vpop.f32.mrb[0].mxu0
  %v668 = vpop.f32.mrb[0].mxu0
  %v669 = vadd.f32 0.0, %v668
  %v670 = vpop.f32.mrb[0].mxu0
  %671 = vmatprep.mubr.bf16.mxu0 0
  %672 = vmatmul.mubr.bf16.gmra.mrb[0].mxu0 %v566
  %v673 = vpop.f32.mrb[0].mxu0
  %v674 = vadd.f32 0.0, %v673
  %v675 = vpop.f32.mrb[0].mxu0
  %v676 = vpop.f32.mrb[0].mxu0
  %v677 = vadd.f32 0.0, %v676
  %v678 = vpop.f32.mrb[0].mxu0
  %679 = vmatprep.mubr.bf16.mxu0 0
  %680 = vmatmul.mubr.bf16.gmra.mrb[0].mxu0 %v569
  %v681 = vpop.f32.mrb[0].mxu0
  %v682 = vadd.f32 0.0, %v681
  %v683 = vpop.f32.mrb[0].mxu0
  %v684 = vpop.f32.mrb[0].mxu0
  %v685 = vadd.f32 0.0, %v684
  %v686 = vpop.f32.mrb[0].mxu0
  %687 = vmatprep.mubr.bf16.mxu0 0
  %688 = vmatmul.mubr.bf16.gmra.mrb[0].mxu0 %v572
  %v689 = vpop.f32.mrb[0].mxu0
  %v690 = vadd.f32 0.0, %v689
  %v691 = vpop.f32.mrb[0].mxu0
  %v692 = vpop.f32.mrb[0].mxu0
  %v693 = vadd.f32 0.0, %v692
  %v694 = vpop.f32.mrb[0].mxu0
  %695 = vmatprep.mubr.bf16.mxu0 0
  %696 = vmatmul.mubr.bf16.gmra.mrb[0].mxu0 %v575
  %v697 = vpop.f32.mrb[0].mxu0
  %v698 = vadd.f32 0.0, %v697
  %v699 = vpop.f32.mrb[0].mxu0
  %v700 = vpop.f32.mrb[0].mxu0
  %v701 = vadd.f32 0.0, %v700
  %v702 = vpop.f32.mrb[0].mxu0
  %703 = vmatprep.mubr.bf16.mxu0 0
  %704 = vmatmul.mubr.bf16.gmra.mrb[0].mxu0 %v578
  %v705 = vpop.f32.mrb[0].mxu0
  %v706 = vadd.f32 0.0, %v705
  %v707 = vpop.f32.mrb[0].mxu0
  %v708 = vpop.f32.mrb[0].mxu0
  %v709 = vadd.f32 0.0, %v708
  %v710 = vpop.f32.mrb[0].mxu0
  %711 = vmatprep.mubr.bf16.mxu0 0
  %712 = vmatmul.mubr.bf16.gmra.mrb[0].mxu0 %v581
  %v713 = vpop.f32.mrb[0].mxu0
  %v714 = vadd.f32 0.0, %v713
  %v715 = vpop.f32.mrb[0].mxu0
  %v716 = vpop.f32.mrb[0].mxu0
  %v717 = vpop.f32.mrb[0].mxu0
  %718 = vdwg.mxu0
  %v719 = vadd.f32 %v397, %v618
  %v720 = vadd.f32 %v400, %v621
  %v721 = vadd.f32 %v405, %v626
  %v722 = vadd.f32 %v408, %v629
  %v723 = vadd.f32 %v413, %v634
  %v724 = vadd.f32 %v416, %v637
  %v725 = vadd.f32 %v421, %v642
  %v726 = vadd.f32 %v424, %v645
  %v727 = vadd.f32 %v429, %v650
  %v728 = vadd.f32 %v432, %v653
  %v729 = vadd.f32 %v437, %v658
  %v730 = vadd.f32 %v440, %v661
  %v731 = vadd.f32 %v445, %v666
  %v732 = vadd.f32 %v448, %v669
  %v733 = vadd.f32 %v453, %v674
  %v734 = vadd.f32 %v456, %v677
  %v735 = vadd.f32 %v461, %v682
  %v736 = vadd.f32 %v464, %v685
  %v737 = vadd.f32 %v469, %v690
  %v738 = vadd.f32 %v472, %v693
  %v739 = vadd.f32 %v477, %v698
  %v740 = vadd.f32 %v480, %v701
  %v741 = vadd.f32 %v485, %v706
  %v742 = vadd.f32 %v488, %v709
  %v743 = vadd.f32 %v493, %v714
  %v744 = vld [vmem:[%s0 + $0xf] sm:$0xff]
  %v745 = vld [vmem:[%s0 + $0x17] sm:$0xff]
  %v746 = vld [vmem:[%s0 + $0x1f] sm:$0xff]
  %v747 = vld [vmem:[%s0 + $0x27] sm:$0xff]
  %v748 = vld [vmem:[%s0 + $0x2f] sm:$0xff]
  %v749 = vld [vmem:[%s0 + $0x37] sm:$0xff]
  %v750 = vld [vmem:[%s0 + $0x3f] sm:$0xff]
  %v751 = vld [vmem:[%s0 + $0x47] sm:$0xff]
  %v752 = vld [vmem:[%s0 + $0x4f] sm:$0xff]
  %v753 = vld [vmem:[%s0 + $0x57] sm:$0xff]
  %v754 = vld [vmem:[%s0 + $0x5f] sm:$0xff]
  %v755 = vld [vmem:[%s0 + $0x67] sm:$0xff]
  %v756 = vld [vmem:[%s0 + $0x6f] sm:$0xff]
  %v757 = vld [vmem:[%s0 + $0x77] sm:$0xff]
  %v758 = vld [vmem:[%s0 + $0x7f] sm:$0xff]
  %v759 = vld [vmem:[%s0 + $0x87] sm:$0xff]
  %v760 = vld [vmem:[%s0 + $0x8f] sm:$0xff]
  %v761 = vld [vmem:[%s0 + $0x97] sm:$0xff]
  %v762 = vld [vmem:[%s0 + $0x9f] sm:$0xff]
  %v763 = vld [vmem:[%s0 + $0xa7] sm:$0xff]
  %v764 = vld [vmem:[%s0 + $0xaf] sm:$0xff]
  %v765 = vld [vmem:[%s0 + $0xb7] sm:$0xff]
  %v766 = vld [vmem:[%s0 + $0xbf] sm:$0xff]
  %v767 = vld [vmem:[%s0 + $0xc7] sm:$0xff]
  %v768 = vld [vmem:[%s0 + $0xcf] sm:$0xff]
  %v769 = vpack.c.bf16 %v745, %v744
  %v770 = vpack.c.bf16 %v747, %v746
  %v771 = vpack.c.bf16 %v749, %v748
  %v772 = vpack.c.bf16 %v751, %v750
  %v773 = vpack.c.bf16 %v753, %v752
  %v774 = vpack.c.bf16 %v755, %v754
  %v775 = vpack.c.bf16 %v757, %v756
  %v776 = vpack.c.bf16 %v759, %v758
  %v777 = vpack.c.bf16 %v761, %v760
  %v778 = vpack.c.bf16 %v763, %v762
  %v779 = vpack.c.bf16 %v765, %v764
  %v780 = vpack.c.bf16 %v767, %v766
  %v781 = vpack.c.bf16 %v768, %v768
  %v782 = vld [vmem:[%s1 + $0x18] sm:$0xf]
  %v783 = vld [vmem:[%s1 + $0x1c] sm:$0xf]
  %v786 = vunpack.c.l.b16 %v782
  %v787 = vunpack.c.l.b16 %v783
  %v788 = vpack.c.b16 %v787, %v786
  %v791 = vsel %vm141, %v769, 0
  %v794 = vsel %vm141, %v770, 0
  %v797 = vsel %vm141, %v771, 0
  %v800 = vsel %vm141, %v772, 0
  %v803 = vsel %vm141, %v773, 0
  %v806 = vsel %vm141, %v774, 0
  %v809 = vsel %vm141, %v775, 0
  %v812 = vsel %vm141, %v776, 0
  %v815 = vsel %vm141, %v777, 0
  %v818 = vsel %vm141, %v778, 0
  %v821 = vsel %vm141, %v779, 0
  %v824 = vsel %vm141, %v780, 0
  %v827 = vsel %vm141, %v781, 0
  %829 = vmatprep.subr.bf16.mxu0 0
  %830 = vmatpush1.bf16.msra.mxu0 %v788
  %831 = vmatprep.subr.bf16.mxu0 0
  %832 = vmatpush1.bf16.msra.mxu0 0
  %833 = vmatprep.subr.bf16.mxu0 0
  %834 = vmatpush1.bf16.msra.mxu0 0
  %835 = vmatprep.subr.bf16.mxu0 0
  %836 = vmatpush1.bf16.msra.mxu0 0
  %837 = vmatprep.subr.bf16.mxu0 0
  %838 = vmatpush1.bf16.msra.mxu0 0
  %839 = vmatprep.subr.bf16.mxu0 0
  %840 = vmatpush1.bf16.msra.mxu0 0
  %841 = vmatprep.subr.bf16.mxu0 0
  %842 = vmatpush1.bf16.msra.mxu0 0
  %843 = vmatprep.subr.bf16.mxu0 0
  %844 = vmatpush1.bf16.msra.mxu0 0
  %845 = vmatprep.subr.bf16.mxu0 0
  %846 = vmatpush1.bf16.msra.mxu0 0
  %847 = vmatprep.subr.bf16.mxu0 0
  %848 = vmatpush1.bf16.msra.mxu0 0
  %849 = vmatprep.subr.bf16.mxu0 0
  %850 = vmatpush1.bf16.msra.mxu0 0
  %851 = vmatprep.subr.bf16.mxu0 0
  %852 = vmatpush1.bf16.msra.mxu0 0
  %853 = vmatprep.subr.bf16.mxu0 0
  %854 = vmatpush1.bf16.msra.mxu0 0
  %855 = vmatprep.subr.bf16.mxu0 0
  %856 = vmatpush1.bf16.msra.mxu0 0
  %857 = vmatprep.subr.bf16.mxu0 0
  %858 = vmatpush1.bf16.msra.mxu0 0
  %859 = vmatprep.subr.bf16.mxu0 0
  %860 = vmatpush1.bf16.msra.mxu0 0
  %861 = vmatprep.mubr.bf16.mxu0 0
  %862 = vmatmul.mubr.bf16.gmra.mrb[0].mxu0 %v791
  %v863 = vpop.f32.mrb[0].mxu0
  %v864 = vadd.f32 0.0, %v863
  %v865 = vpop.f32.mrb[0].mxu0
  %v866 = vpop.f32.mrb[0].mxu0
  %v867 = vadd.f32 0.0, %v866
  %v868 = vpop.f32.mrb[0].mxu0
  %869 = vmatprep.mubr.bf16.mxu0 0
  %870 = vmatmul.mubr.bf16.gmra.mrb[0].mxu0 %v794
  %v871 = vpop.f32.mrb[0].mxu0
  %v872 = vadd.f32 0.0, %v871
  %v873 = vpop.f32.mrb[0].mxu0
  %v874 = vpop.f32.mrb[0].mxu0
  %v875 = vadd.f32 0.0, %v874
  %v876 = vpop.f32.mrb[0].mxu0
  %877 = vmatprep.mubr.bf16.mxu0 0
  %878 = vmatmul.mubr.bf16.gmra.mrb[0].mxu0 %v797
  %v879 = vpop.f32.mrb[0].mxu0
  %v880 = vadd.f32 0.0, %v879
  %v881 = vpop.f32.mrb[0].mxu0
  %v882 = vpop.f32.mrb[0].mxu0
  %v883 = vadd.f32 0.0, %v882
  %v884 = vpop.f32.mrb[0].mxu0
  %885 = vmatprep.mubr.bf16.mxu0 0
  %886 = vmatmul.mubr.bf16.gmra.mrb[0].mxu0 %v800
  %v887 = vpop.f32.mrb[0].mxu0
  %v888 = vadd.f32 0.0, %v887
  %v889 = vpop.f32.mrb[0].mxu0
  %v890 = vpop.f32.mrb[0].mxu0
  %v891 = vadd.f32 0.0, %v890
  %v892 = vpop.f32.mrb[0].mxu0
  %893 = vmatprep.mubr.bf16.mxu0 0
  %894 = vmatmul.mubr.bf16.gmra.mrb[0].mxu0 %v803
  %v895 = vpop.f32.mrb[0].mxu0
  %v896 = vadd.f32 0.0, %v895
  %v897 = vpop.f32.mrb[0].mxu0
  %v898 = vpop.f32.mrb[0].mxu0
  %v899 = vadd.f32 0.0, %v898
  %v900 = vpop.f32.mrb[0].mxu0
  %901 = vmatprep.mubr.bf16.mxu0 0
  %902 = vmatmul.mubr.bf16.gmra.mrb[0].mxu0 %v806
  %v903 = vpop.f32.mrb[0].mxu0
  %v904 = vadd.f32 0.0, %v903
  %v905 = vpop.f32.mrb[0].mxu0
  %v906 = vpop.f32.mrb[0].mxu0
  %v907 = vadd.f32 0.0, %v906
  %v908 = vpop.f32.mrb[0].mxu0
  %909 = vmatprep.mubr.bf16.mxu0 0
  %910 = vmatmul.mubr.bf16.gmra.mrb[0].mxu0 %v809
  %v911 = vpop.f32.mrb[0].mxu0
  %v912 = vadd.f32 0.0, %v911
  %v913 = vpop.f32.mrb[0].mxu0
  %v914 = vpop.f32.mrb[0].mxu0
  %v915 = vadd.f32 0.0, %v914
  %v916 = vpop.f32.mrb[0].mxu0
  %917 = vmatprep.mubr.bf16.mxu0 0
  %918 = vmatmul.mubr.bf16.gmra.mrb[0].mxu0 %v812
  %v919 = vpop.f32.mrb[0].mxu0
  %v920 = vadd.f32 0.0, %v919
  %v921 = vpop.f32.mrb[0].mxu0
  %v922 = vpop.f32.mrb[0].mxu0
  %v923 = vadd.f32 0.0, %v922
  %v924 = vpop.f32.mrb[0].mxu0
  %925 = vmatprep.mubr.bf16.mxu0 0
  %926 = vmatmul.mubr.bf16.gmra.mrb[0].mxu0 %v815
  %v927 = vpop.f32.mrb[0].mxu0
  %v928 = vadd.f32 0.0, %v927
  %v929 = vpop.f32.mrb[0].mxu0
  %v930 = vpop.f32.mrb[0].mxu0
  %v931 = vadd.f32 0.0, %v930
  %v932 = vpop.f32.mrb[0].mxu0
  %933 = vmatprep.mubr.bf16.mxu0 0
  %934 = vmatmul.mubr.bf16.gmra.mrb[0].mxu0 %v818
  %v935 = vpop.f32.mrb[0].mxu0
  %v936 = vadd.f32 0.0, %v935
  %v937 = vpop.f32.mrb[0].mxu0
  %v938 = vpop.f32.mrb[0].mxu0
  %v939 = vadd.f32 0.0, %v938
  %v940 = vpop.f32.mrb[0].mxu0
  %941 = vmatprep.mubr.bf16.mxu0 0
  %942 = vmatmul.mubr.bf16.gmra.mrb[0].mxu0 %v821
  %v943 = vpop.f32.mrb[0].mxu0
  %v944 = vadd.f32 0.0, %v943
  %v945 = vpop.f32.mrb[0].mxu0
  %v946 = vpop.f32.mrb[0].mxu0
  %v947 = vadd.f32 0.0, %v946
  %v948 = vpop.f32.mrb[0].mxu0
  %949 = vmatprep.mubr.bf16.mxu0 0
  %950 = vmatmul.mubr.bf16.gmra.mrb[0].mxu0 %v824
  %v951 = vpop.f32.mrb[0].mxu0
  %v952 = vadd.f32 0.0, %v951
  %v953 = vpop.f32.mrb[0].mxu0
  %v954 = vpop.f32.mrb[0].mxu0
  %v955 = vadd.f32 0.0, %v954
  %v956 = vpop.f32.mrb[0].mxu0
  %957 = vmatprep.mubr.bf16.mxu0 0
  %958 = vmatmul.mubr.bf16.gmra.mrb[0].mxu0 %v827
  %v959 = vpop.f32.mrb[0].mxu0
  %v960 = vadd.f32 0.0, %v959
  %v961 = vpop.f32.mrb[0].mxu0
  %v962 = vpop.f32.mrb[0].mxu0
  %v963 = vpop.f32.mrb[0].mxu0
  %964 = vdwg.mxu0
  %v965 = vadd.f32 %v719, %v864
  %v966 = vadd.f32 %v720, %v867
  %v967 = vadd.f32 %v721, %v872
  %v968 = vadd.f32 %v722, %v875
  %v969 = vadd.f32 %v723, %v880
  %v970 = vadd.f32 %v724, %v883
  %v971 = vadd.f32 %v725, %v888
  %v972 = vadd.f32 %v726, %v891
  %v973 = vadd.f32 %v727, %v896
  %v974 = vadd.f32 %v728, %v899
  %v975 = vadd.f32 %v729, %v904
  %v976 = vadd.f32 %v730, %v907
  %v977 = vadd.f32 %v731, %v912
  %v978 = vadd.f32 %v732, %v915
  %v979 = vadd.f32 %v733, %v920
  %v980 = vadd.f32 %v734, %v923
  %v981 = vadd.f32 %v735, %v928
  %v982 = vadd.f32 %v736, %v931
  %v983 = vadd.f32 %v737, %v936
  %v984 = vadd.f32 %v738, %v939
  %v985 = vadd.f32 %v739, %v944
  %v986 = vadd.f32 %v740, %v947
  %v987 = vadd.f32 %v741, %v952
  %v988 = vadd.f32 %v742, %v955
  %v989 = vadd.f32 %v743, %v960
  %v990 = vld [vmem:[%s0 + $0x10] sm:$0xff]
  %v991 = vld [vmem:[%s0 + $0x18] sm:$0xff]
  %v992 = vld [vmem:[%s0 + $0x20] sm:$0xff]
  %v993 = vld [vmem:[%s0 + $0x28] sm:$0xff]
  %v994 = vld [vmem:[%s0 + $0x30] sm:$0xff]
  %v995 = vld [vmem:[%s0 + $0x38] sm:$0xff]
  %v996 = vld [vmem:[%s0 + $0x40] sm:$0xff]
  %v997 = vld [vmem:[%s0 + $0x48] sm:$0xff]
  %v998 = vld [vmem:[%s0 + $0x50] sm:$0xff]
  %v999 = vld [vmem:[%s0 + $0x58] sm:$0xff]
  %v1000 = vld [vmem:[%s0 + $0x60] sm:$0xff]
  %v1001 = vld [vmem:[%s0 + $0x68] sm:$0xff]
  %v1002 = vld [vmem:[%s0 + $0x70] sm:$0xff]
  %v1003 = vld [vmem:[%s0 + $0x78] sm:$0xff]
  %v1004 = vld [vmem:[%s0 + $0x80] sm:$0xff]
  %v1005 = vld [vmem:[%s0 + $0x88] sm:$0xff]
  %v1006 = vld [vmem:[%s0 + $0x90] sm:$0xff]
  %v1007 = vld [vmem:[%s0 + $0x98] sm:$0xff]
  %v1008 = vld [vmem:[%s0 + $0xa0] sm:$0xff]
  %v1009 = vld [vmem:[%s0 + $0xa8] sm:$0xff]
  %v1010 = vld [vmem:[%s0 + $0xb0] sm:$0xff]
  %v1011 = vld [vmem:[%s0 + $0xb8] sm:$0xff]
  %v1012 = vld [vmem:[%s0 + $0xc0] sm:$0xff]
  %v1013 = vld [vmem:[%s0 + $0xc8] sm:$0xff]
  %v1014 = vld [vmem:[%s0 + $0xd0] sm:$0xff]
  %v1015 = vpack.c.bf16 %v991, %v990
  %v1016 = vpack.c.bf16 %v993, %v992
  %v1017 = vpack.c.bf16 %v995, %v994
  %v1018 = vpack.c.bf16 %v997, %v996
  %v1019 = vpack.c.bf16 %v999, %v998
  %v1020 = vpack.c.bf16 %v1001, %v1000
  %v1021 = vpack.c.bf16 %v1003, %v1002
  %v1022 = vpack.c.bf16 %v1005, %v1004
  %v1023 = vpack.c.bf16 %v1007, %v1006
  %v1024 = vpack.c.bf16 %v1009, %v1008
  %v1025 = vpack.c.bf16 %v1011, %v1010
  %v1026 = vpack.c.bf16 %v1013, %v1012
  %v1027 = vpack.c.bf16 %v1014, %v1014
  %v1028 = vld [vmem:[%s1 + $0x20] sm:$0xf]
  %v1029 = vld [vmem:[%s1 + $0x24] sm:$0xf]
  %v1032 = vunpack.c.l.b16 %v1028
  %v1033 = vunpack.c.l.b16 %v1029
  %v1034 = vpack.c.b16 %v1033, %v1032
  %v1037 = vsel %vm141, %v1015, 0
  %v1040 = vsel %vm141, %v1016, 0
  %v1043 = vsel %vm141, %v1017, 0
  %v1046 = vsel %vm141, %v1018, 0
  %v1049 = vsel %vm141, %v1019, 0
  %v1052 = vsel %vm141, %v1020, 0
  %v1055 = vsel %vm141, %v1021, 0
  %v1058 = vsel %vm141, %v1022, 0
  %v1061 = vsel %vm141, %v1023, 0
  %v1064 = vsel %vm141, %v1024, 0
  %v1067 = vsel %vm141, %v1025, 0
  %v1070 = vsel %vm141, %v1026, 0
  %v1073 = vsel %vm141, %v1027, 0
  %1075 = vmatprep.subr.bf16.mxu0 0
  %1076 = vmatpush1.bf16.msra.mxu0 %v1034
  %1077 = vmatprep.subr.bf16.mxu0 0
  %1078 = vmatpush1.bf16.msra.mxu0 0
  %1079 = vmatprep.subr.bf16.mxu0 0
  %1080 = vmatpush1.bf16.msra.mxu0 0
  %1081 = vmatprep.subr.bf16.mxu0 0
  %1082 = vmatpush1.bf16.msra.mxu0 0
  %1083 = vmatprep.subr.bf16.mxu0 0
  %1084 = vmatpush1.bf16.msra.mxu0 0
  %1085 = vmatprep.subr.bf16.mxu0 0
  %1086 = vmatpush1.bf16.msra.mxu0 0
  %1087 = vmatprep.subr.bf16.mxu0 0
  %1088 = vmatpush1.bf16.msra.mxu0 0
  %1089 = vmatprep.subr.bf16.mxu0 0
  %1090 = vmatpush1.bf16.msra.mxu0 0
  %1091 = vmatprep.subr.bf16.mxu0 0
  %1092 = vmatpush1.bf16.msra.mxu0 0
  %1093 = vmatprep.subr.bf16.mxu0 0
  %1094 = vmatpush1.bf16.msra.mxu0 0
  %1095 = vmatprep.subr.bf16.mxu0 0
  %1096 = vmatpush1.bf16.msra.mxu0 0
  %1097 = vmatprep.subr.bf16.mxu0 0
  %1098 = vmatpush1.bf16.msra.mxu0 0
  %1099 = vmatprep.subr.bf16.mxu0 0
  %1100 = vmatpush1.bf16.msra.mxu0 0
  %1101 = vmatprep.subr.bf16.mxu0 0
  %1102 = vmatpush1.bf16.msra.mxu0 0
  %1103 = vmatprep.subr.bf16.mxu0 0
  %1104 = vmatpush1.bf16.msra.mxu0 0
  %1105 = vmatprep.subr.bf16.mxu0 0
  %1106 = vmatpush1.bf16.msra.mxu0 0
  %1107 = vmatprep.mubr.bf16.mxu0 0
  %1108 = vmatmul.mubr.bf16.gmra.mrb[0].mxu0 %v1037
  %v1109 = vpop.f32.mrb[0].mxu0
  %v1110 = vadd.f32 0.0, %v1109
  %v1111 = vpop.f32.mrb[0].mxu0
  %v1112 = vpop.f32.mrb[0].mxu0
  %v1113 = vadd.f32 0.0, %v1112
  %v1114 = vpop.f32.mrb[0].mxu0
  %1115 = vmatprep.mubr.bf16.mxu0 0
  %1116 = vmatmul.mubr.bf16.gmra.mrb[0].mxu0 %v1040
  %v1117 = vpop.f32.mrb[0].mxu0
  %v1118 = vadd.f32 0.0, %v1117
  %v1119 = vpop.f32.mrb[0].mxu0
  %v1120 = vpop.f32.mrb[0].mxu0
  %v1121 = vadd.f32 0.0, %v1120
  %v1122 = vpop.f32.mrb[0].mxu0
  %1123 = vmatprep.mubr.bf16.mxu0 0
  %1124 = vmatmul.mubr.bf16.gmra.mrb[0].mxu0 %v1043
  %v1125 = vpop.f32.mrb[0].mxu0
  %v1126 = vadd.f32 0.0, %v1125
  %v1127 = vpop.f32.mrb[0].mxu0
  %v1128 = vpop.f32.mrb[0].mxu0
  %v1129 = vadd.f32 0.0, %v1128
  %v1130 = vpop.f32.mrb[0].mxu0
  %1131 = vmatprep.mubr.bf16.mxu0 0
  %1132 = vmatmul.mubr.bf16.gmra.mrb[0].mxu0 %v1046
  %v1133 = vpop.f32.mrb[0].mxu0
  %v1134 = vadd.f32 0.0, %v1133
  %v1135 = vpop.f32.mrb[0].mxu0
  %v1136 = vpop.f32.mrb[0].mxu0
  %v1137 = vadd.f32 0.0, %v1136
  %v1138 = vpop.f32.mrb[0].mxu0
  %1139 = vmatprep.mubr.bf16.mxu0 0
  %1140 = vmatmul.mubr.bf16.gmra.mrb[0].mxu0 %v1049
  %v1141 = vpop.f32.mrb[0].mxu0
  %v1142 = vadd.f32 0.0, %v1141
  %v1143 = vpop.f32.mrb[0].mxu0
  %v1144 = vpop.f32.mrb[0].mxu0
  %v1145 = vadd.f32 0.0, %v1144
  %v1146 = vpop.f32.mrb[0].mxu0
  %1147 = vmatprep.mubr.bf16.mxu0 0
  %1148 = vmatmul.mubr.bf16.gmra.mrb[0].mxu0 %v1052
  %v1149 = vpop.f32.mrb[0].mxu0
  %v1150 = vadd.f32 0.0, %v1149
  %v1151 = vpop.f32.mrb[0].mxu0
  %v1152 = vpop.f32.mrb[0].mxu0
  %v1153 = vadd.f32 0.0, %v1152
  %v1154 = vpop.f32.mrb[0].mxu0
  %1155 = vmatprep.mubr.bf16.mxu0 0
  %1156 = vmatmul.mubr.bf16.gmra.mrb[0].mxu0 %v1055
  %v1157 = vpop.f32.mrb[0].mxu0
  %v1158 = vadd.f32 0.0, %v1157
  %v1159 = vpop.f32.mrb[0].mxu0
  %v1160 = vpop.f32.mrb[0].mxu0
  %v1161 = vadd.f32 0.0, %v1160
  %v1162 = vpop.f32.mrb[0].mxu0
  %1163 = vmatprep.mubr.bf16.mxu0 0
  %1164 = vmatmul.mubr.bf16.gmra.mrb[0].mxu0 %v1058
  %v1165 = vpop.f32.mrb[0].mxu0
  %v1166 = vadd.f32 0.0, %v1165
  %v1167 = vpop.f32.mrb[0].mxu0
  %v1168 = vpop.f32.mrb[0].mxu0
  %v1169 = vadd.f32 0.0, %v1168
  %v1170 = vpop.f32.mrb[0].mxu0
  %1171 = vmatprep.mubr.bf16.mxu0 0
  %1172 = vmatmul.mubr.bf16.gmra.mrb[0].mxu0 %v1061
  %v1173 = vpop.f32.mrb[0].mxu0
  %v1174 = vadd.f32 0.0, %v1173
  %v1175 = vpop.f32.mrb[0].mxu0
  %v1176 = vpop.f32.mrb[0].mxu0
  %v1177 = vadd.f32 0.0, %v1176
  %v1178 = vpop.f32.mrb[0].mxu0
  %1179 = vmatprep.mubr.bf16.mxu0 0
  %1180 = vmatmul.mubr.bf16.gmra.mrb[0].mxu0 %v1064
  %v1181 = vpop.f32.mrb[0].mxu0
  %v1182 = vadd.f32 0.0, %v1181
  %v1183 = vpop.f32.mrb[0].mxu0
  %v1184 = vpop.f32.mrb[0].mxu0
  %v1185 = vadd.f32 0.0, %v1184
  %v1186 = vpop.f32.mrb[0].mxu0
  %1187 = vmatprep.mubr.bf16.mxu0 0
  %1188 = vmatmul.mubr.bf16.gmra.mrb[0].mxu0 %v1067
  %v1189 = vpop.f32.mrb[0].mxu0
  %v1190 = vadd.f32 0.0, %v1189
  %v1191 = vpop.f32.mrb[0].mxu0
  %v1192 = vpop.f32.mrb[0].mxu0
  %v1193 = vadd.f32 0.0, %v1192
  %v1194 = vpop.f32.mrb[0].mxu0
  %1195 = vmatprep.mubr.bf16.mxu0 0
  %1196 = vmatmul.mubr.bf16.gmra.mrb[0].mxu0 %v1070
  %v1197 = vpop.f32.mrb[0].mxu0
  %v1198 = vadd.f32 0.0, %v1197
  %v1199 = vpop.f32.mrb[0].mxu0
  %v1200 = vpop.f32.mrb[0].mxu0
  %v1201 = vadd.f32 0.0, %v1200
  %v1202 = vpop.f32.mrb[0].mxu0
  %1203 = vmatprep.mubr.bf16.mxu0 0
  %1204 = vmatmul.mubr.bf16.gmra.mrb[0].mxu0 %v1073
  %v1205 = vpop.f32.mrb[0].mxu0
  %v1206 = vadd.f32 0.0, %v1205
  %v1207 = vpop.f32.mrb[0].mxu0
  %v1208 = vpop.f32.mrb[0].mxu0
  %v1209 = vpop.f32.mrb[0].mxu0
  %1210 = vdwg.mxu0
  %v1211 = vadd.f32 %v965, %v1110
  %v1212 = vadd.f32 %v966, %v1113
  %v1213 = vadd.f32 %v967, %v1118
  %v1214 = vadd.f32 %v968, %v1121
  %v1215 = vadd.f32 %v969, %v1126
  %v1216 = vadd.f32 %v970, %v1129
  %v1217 = vadd.f32 %v971, %v1134
  %v1218 = vadd.f32 %v972, %v1137
  %v1219 = vadd.f32 %v973, %v1142
  %v1220 = vadd.f32 %v974, %v1145
  %v1221 = vadd.f32 %v975, %v1150
  %v1222 = vadd.f32 %v976, %v1153
  %v1223 = vadd.f32 %v977, %v1158
  %v1224 = vadd.f32 %v978, %v1161
  %v1225 = vadd.f32 %v979, %v1166
  %v1226 = vadd.f32 %v980, %v1169
  %v1227 = vadd.f32 %v981, %v1174
  %v1228 = vadd.f32 %v982, %v1177
  %v1229 = vadd.f32 %v983, %v1182
  %v1230 = vadd.f32 %v984, %v1185
  %v1231 = vadd.f32 %v985, %v1190
  %v1232 = vadd.f32 %v986, %v1193
  %v1233 = vadd.f32 %v987, %v1198
  %v1234 = vadd.f32 %v988, %v1201
  %v1235 = vadd.f32 %v989, %v1206
  %v1236 = vld [vmem:[%s0 + $0x11] sm:$0xff]
  %v1237 = vld [vmem:[%s0 + $0x19] sm:$0xff]
  %v1238 = vld [vmem:[%s0 + $0x21] sm:$0xff]
  %v1239 = vld [vmem:[%s0 + $0x29] sm:$0xff]
  %v1240 = vld [vmem:[%s0 + $0x31] sm:$0xff]
  %v1241 = vld [vmem:[%s0 + $0x39] sm:$0xff]
  %v1242 = vld [vmem:[%s0 + $0x41] sm:$0xff]
  %v1243 = vld [vmem:[%s0 + $0x49] sm:$0xff]
  %v1244 = vld [vmem:[%s0 + $0x51] sm:$0xff]
  %v1245 = vld [vmem:[%s0 + $0x59] sm:$0xff]
  %v1246 = vld [vmem:[%s0 + $0x61] sm:$0xff]
  %v1247 = vld [vmem:[%s0 + $0x69] sm:$0xff]
  %v1248 = vld [vmem:[%s0 + $0x71] sm:$0xff]
  %v1249 = vld [vmem:[%s0 + $0x79] sm:$0xff]
  %v1250 = vld [vmem:[%s0 + $0x81] sm:$0xff]
  %v1251 = vld [vmem:[%s0 + $0x89] sm:$0xff]
  %v1252 = vld [vmem:[%s0 + $0x91] sm:$0xff]
  %v1253 = vld [vmem:[%s0 + $0x99] sm:$0xff]
  %v1254 = vld [vmem:[%s0 + $0xa1] sm:$0xff]
  %v1255 = vld [vmem:[%s0 + $0xa9] sm:$0xff]
  %v1256 = vld [vmem:[%s0 + $0xb1] sm:$0xff]
  %v1257 = vld [vmem:[%s0 + $0xb9] sm:$0xff]
  %v1258 = vld [vmem:[%s0 + $0xc1] sm:$0xff]
  %v1259 = vld [vmem:[%s0 + $0xc9] sm:$0xff]
  %v1260 = vld [vmem:[%s0 + $0xd1] sm:$0xff]
  %v1261 = vpack.c.bf16 %v1237, %v1236
  %v1262 = vpack.c.bf16 %v1239, %v1238
  %v1263 = vpack.c.bf16 %v1241, %v1240
  %v1264 = vpack.c.bf16 %v1243, %v1242
  %v1265 = vpack.c.bf16 %v1245, %v1244
  %v1266 = vpack.c.bf16 %v1247, %v1246
  %v1267 = vpack.c.bf16 %v1249, %v1248
  %v1268 = vpack.c.bf16 %v1251, %v1250
  %v1269 = vpack.c.bf16 %v1253, %v1252
  %v1270 = vpack.c.bf16 %v1255, %v1254
  %v1271 = vpack.c.bf16 %v1257, %v1256
  %v1272 = vpack.c.bf16 %v1259, %v1258
  %v1273 = vpack.c.bf16 %v1260, %v1260
  %v1274 = vld [vmem:[%s1 + $0x28] sm:$0xf]
  %v1275 = vld [vmem:[%s1 + $0x2c] sm:$0xf]
  %v1278 = vunpack.c.l.b16 %v1274
  %v1279 = vunpack.c.l.b16 %v1275
  %v1280 = vpack.c.b16 %v1279, %v1278
  %v1283 = vsel %vm141, %v1261, 0
  %v1286 = vsel %vm141, %v1262, 0
  %v1289 = vsel %vm141, %v1263, 0
  %v1292 = vsel %vm141, %v1264, 0
  %v1295 = vsel %vm141, %v1265, 0
  %v1298 = vsel %vm141, %v1266, 0
  %v1301 = vsel %vm141, %v1267, 0
  %v1304 = vsel %vm141, %v1268, 0
  %v1307 = vsel %vm141, %v1269, 0
  %v1310 = vsel %vm141, %v1270, 0
  %v1313 = vsel %vm141, %v1271, 0
  %v1316 = vsel %vm141, %v1272, 0
  %v1319 = vsel %vm141, %v1273, 0
  %1321 = vmatprep.subr.bf16.mxu0 0
  %1322 = vmatpush1.bf16.msra.mxu0 %v1280
  %1323 = vmatprep.subr.bf16.mxu0 0
  %1324 = vmatpush1.bf16.msra.mxu0 0
  %1325 = vmatprep.subr.bf16.mxu0 0
  %1326 = vmatpush1.bf16.msra.mxu0 0
  %1327 = vmatprep.subr.bf16.mxu0 0
  %1328 = vmatpush1.bf16.msra.mxu0 0
  %1329 = vmatprep.subr.bf16.mxu0 0
  %1330 = vmatpush1.bf16.msra.mxu0 0
  %1331 = vmatprep.subr.bf16.mxu0 0
  %1332 = vmatpush1.bf16.msra.mxu0 0
  %1333 = vmatprep.subr.bf16.mxu0 0
  %1334 = vmatpush1.bf16.msra.mxu0 0
  %1335 = vmatprep.subr.bf16.mxu0 0
  %1336 = vmatpush1.bf16.msra.mxu0 0
  %1337 = vmatprep.subr.bf16.mxu0 0
  %1338 = vmatpush1.bf16.msra.mxu0 0
  %1339 = vmatprep.subr.bf16.mxu0 0
  %1340 = vmatpush1.bf16.msra.mxu0 0
  %1341 = vmatprep.subr.bf16.mxu0 0
  %1342 = vmatpush1.bf16.msra.mxu0 0
  %1343 = vmatprep.subr.bf16.mxu0 0
  %1344 = vmatpush1.bf16.msra.mxu0 0
  %1345 = vmatprep.subr.bf16.mxu0 0
  %1346 = vmatpush1.bf16.msra.mxu0 0
  %1347 = vmatprep.subr.bf16.mxu0 0
  %1348 = vmatpush1.bf16.msra.mxu0 0
  %1349 = vmatprep.subr.bf16.mxu0 0
  %1350 = vmatpush1.bf16.msra.mxu0 0
  %1351 = vmatprep.subr.bf16.mxu0 0
  %1352 = vmatpush1.bf16.msra.mxu0 0
  %1353 = vmatprep.mubr.bf16.mxu0 0
  %1354 = vmatmul.mubr.bf16.gmra.mrb[0].mxu0 %v1283
  %v1355 = vpop.f32.mrb[0].mxu0
  %v1356 = vadd.f32 0.0, %v1355
  %v1357 = vpop.f32.mrb[0].mxu0
  %v1358 = vpop.f32.mrb[0].mxu0
  %v1359 = vadd.f32 0.0, %v1358
  %v1360 = vpop.f32.mrb[0].mxu0
  %1361 = vmatprep.mubr.bf16.mxu0 0
  %1362 = vmatmul.mubr.bf16.gmra.mrb[0].mxu0 %v1286
  %v1363 = vpop.f32.mrb[0].mxu0
  %v1364 = vadd.f32 0.0, %v1363
  %v1365 = vpop.f32.mrb[0].mxu0
  %v1366 = vpop.f32.mrb[0].mxu0
  %v1367 = vadd.f32 0.0, %v1366
  %v1368 = vpop.f32.mrb[0].mxu0
  %1369 = vmatprep.mubr.bf16.mxu0 0
  %1370 = vmatmul.mubr.bf16.gmra.mrb[0].mxu0 %v1289
  %v1371 = vpop.f32.mrb[0].mxu0
  %v1372 = vadd.f32 0.0, %v1371
  %v1373 = vpop.f32.mrb[0].mxu0
  %v1374 = vpop.f32.mrb[0].mxu0
  %v1375 = vadd.f32 0.0, %v1374
  %v1376 = vpop.f32.mrb[0].mxu0
  %1377 = vmatprep.mubr.bf16.mxu0 0
  %1378 = vmatmul.mubr.bf16.gmra.mrb[0].mxu0 %v1292
  %v1379 = vpop.f32.mrb[0].mxu0
  %v1380 = vadd.f32 0.0, %v1379
  %v1381 = vpop.f32.mrb[0].mxu0
  %v1382 = vpop.f32.mrb[0].mxu0
  %v1383 = vadd.f32 0.0, %v1382
  %v1384 = vpop.f32.mrb[0].mxu0
  %1385 = vmatprep.mubr.bf16.mxu0 0
  %1386 = vmatmul.mubr.bf16.gmra.mrb[0].mxu0 %v1295
  %v1387 = vpop.f32.mrb[0].mxu0
  %v1388 = vadd.f32 0.0, %v1387
  %v1389 = vpop.f32.mrb[0].mxu0
  %v1390 = vpop.f32.mrb[0].mxu0
  %v1391 = vadd.f32 0.0, %v1390
  %v1392 = vpop.f32.mrb[0].mxu0
  %1393 = vmatprep.mubr.bf16.mxu0 0
  %1394 = vmatmul.mubr.bf16.gmra.mrb[0].mxu0 %v1298
  %v1395 = vpop.f32.mrb[0].mxu0
  %v1396 = vadd.f32 0.0, %v1395
  %v1397 = vpop.f32.mrb[0].mxu0
  %v1398 = vpop.f32.mrb[0].mxu0
  %v1399 = vadd.f32 0.0, %v1398
  %v1400 = vpop.f32.mrb[0].mxu0
  %1401 = vmatprep.mubr.bf16.mxu0 0
  %1402 = vmatmul.mubr.bf16.gmra.mrb[0].mxu0 %v1301
  %v1403 = vpop.f32.mrb[0].mxu0
  %v1404 = vadd.f32 0.0, %v1403
  %v1405 = vpop.f32.mrb[0].mxu0
  %v1406 = vpop.f32.mrb[0].mxu0
  %v1407 = vadd.f32 0.0, %v1406
  %v1408 = vpop.f32.mrb[0].mxu0
  %1409 = vmatprep.mubr.bf16.mxu0 0
  %1410 = vmatmul.mubr.bf16.gmra.mrb[0].mxu0 %v1304
  %v1411 = vpop.f32.mrb[0].mxu0
  %v1412 = vadd.f32 0.0, %v1411
  %v1413 = vpop.f32.mrb[0].mxu0
  %v1414 = vpop.f32.mrb[0].mxu0
  %v1415 = vadd.f32 0.0, %v1414
  %v1416 = vpop.f32.mrb[0].mxu0
  %1417 = vmatprep.mubr.bf16.mxu0 0
  %1418 = vmatmul.mubr.bf16.gmra.mrb[0].mxu0 %v1307
  %v1419 = vpop.f32.mrb[0].mxu0
  %v1420 = vadd.f32 0.0, %v1419
  %v1421 = vpop.f32.mrb[0].mxu0
  %v1422 = vpop.f32.mrb[0].mxu0
  %v1423 = vadd.f32 0.0, %v1422
  %v1424 = vpop.f32.mrb[0].mxu0
  %1425 = vmatprep.mubr.bf16.mxu0 0
  %1426 = vmatmul.mubr.bf16.gmra.mrb[0].mxu0 %v1310
  %v1427 = vpop.f32.mrb[0].mxu0
  %v1428 = vadd.f32 0.0, %v1427
  %v1429 = vpop.f32.mrb[0].mxu0
  %v1430 = vpop.f32.mrb[0].mxu0
  %v1431 = vadd.f32 0.0, %v1430
  %v1432 = vpop.f32.mrb[0].mxu0
  %1433 = vmatprep.mubr.bf16.mxu0 0
  %1434 = vmatmul.mubr.bf16.gmra.mrb[0].mxu0 %v1313
  %v1435 = vpop.f32.mrb[0].mxu0
  %v1436 = vadd.f32 0.0, %v1435
  %v1437 = vpop.f32.mrb[0].mxu0
  %v1438 = vpop.f32.mrb[0].mxu0
  %v1439 = vadd.f32 0.0, %v1438
  %v1440 = vpop.f32.mrb[0].mxu0
  %1441 = vmatprep.mubr.bf16.mxu0 0
  %1442 = vmatmul.mubr.bf16.gmra.mrb[0].mxu0 %v1316
  %v1443 = vpop.f32.mrb[0].mxu0
  %v1444 = vadd.f32 0.0, %v1443
  %v1445 = vpop.f32.mrb[0].mxu0
  %v1446 = vpop.f32.mrb[0].mxu0
  %v1447 = vadd.f32 0.0, %v1446
  %v1448 = vpop.f32.mrb[0].mxu0
  %1449 = vmatprep.mubr.bf16.mxu0 0
  %1450 = vmatmul.mubr.bf16.gmra.mrb[0].mxu0 %v1319
  %v1451 = vpop.f32.mrb[0].mxu0
  %v1452 = vadd.f32 0.0, %v1451
  %v1453 = vpop.f32.mrb[0].mxu0
  %v1454 = vpop.f32.mrb[0].mxu0
  %v1455 = vpop.f32.mrb[0].mxu0
  %1456 = vdwg.mxu0
  %v1457 = vadd.f32 %v1211, %v1356
  %v1458 = vadd.f32 %v1212, %v1359
  %v1459 = vadd.f32 %v1213, %v1364
  %v1460 = vadd.f32 %v1214, %v1367
  %v1461 = vadd.f32 %v1215, %v1372
  %v1462 = vadd.f32 %v1216, %v1375
  %v1463 = vadd.f32 %v1217, %v1380
  %v1464 = vadd.f32 %v1218, %v1383
  %v1465 = vadd.f32 %v1219, %v1388
  %v1466 = vadd.f32 %v1220, %v1391
  %v1467 = vadd.f32 %v1221, %v1396
  %v1468 = vadd.f32 %v1222, %v1399
  %v1469 = vadd.f32 %v1223, %v1404
  %v1470 = vadd.f32 %v1224, %v1407
  %v1471 = vadd.f32 %v1225, %v1412
  %v1472 = vadd.f32 %v1226, %v1415
  %v1473 = vadd.f32 %v1227, %v1420
  %v1474 = vadd.f32 %v1228, %v1423
  %v1475 = vadd.f32 %v1229, %v1428
  %v1476 = vadd.f32 %v1230, %v1431
  %v1477 = vadd.f32 %v1231, %v1436
  %v1478 = vadd.f32 %v1232, %v1439
  %v1479 = vadd.f32 %v1233, %v1444
  %v1480 = vadd.f32 %v1234, %v1447
  %v1481 = vadd.f32 %v1235, %v1452
  %v1482 = vld [vmem:[%s0 + $0x19] sm:$0xff]
  %v1483 = vld [vmem:[%s0 + $0x21] sm:$0xff]
  %v1484 = vld [vmem:[%s0 + $0x29] sm:$0xff]
  %v1485 = vld [vmem:[%s0 + $0x31] sm:$0xff]
  %v1486 = vld [vmem:[%s0 + $0x39] sm:$0xff]
  %v1487 = vld [vmem:[%s0 + $0x41] sm:$0xff]
  %v1488 = vld [vmem:[%s0 + $0x49] sm:$0xff]
  %v1489 = vld [vmem:[%s0 + $0x51] sm:$0xff]
  %v1490 = vld [vmem:[%s0 + $0x59] sm:$0xff]
  %v1491 = vld [vmem:[%s0 + $0x61] sm:$0xff]
  %v1492 = vld [vmem:[%s0 + $0x69] sm:$0xff]
  %v1493 = vld [vmem:[%s0 + $0x71] sm:$0xff]
  %v1494 = vld [vmem:[%s0 + $0x79] sm:$0xff]
  %v1495 = vld [vmem:[%s0 + $0x81] sm:$0xff]
  %v1496 = vld [vmem:[%s0 + $0x89] sm:$0xff]
  %v1497 = vld [vmem:[%s0 + $0x91] sm:$0xff]
  %v1498 = vld [vmem:[%s0 + $0x99] sm:$0xff]
  %v1499 = vld [vmem:[%s0 + $0xa1] sm:$0xff]
  %v1500 = vld [vmem:[%s0 + $0xa9] sm:$0xff]
  %v1501 = vld [vmem:[%s0 + $0xb1] sm:$0xff]
  %v1502 = vld [vmem:[%s0 + $0xb9] sm:$0xff]
  %v1503 = vld [vmem:[%s0 + $0xc1] sm:$0xff]
  %v1504 = vld [vmem:[%s0 + $0xc9] sm:$0xff]
  %v1505 = vld [vmem:[%s0 + $0xd1] sm:$0xff]
  %v1506 = vld [vmem:[%s0 + $0xd9] sm:$0xff]
  %v1507 = vpack.c.bf16 %v1483, %v1482
  %v1508 = vpack.c.bf16 %v1485, %v1484
  %v1509 = vpack.c.bf16 %v1487, %v1486
  %v1510 = vpack.c.bf16 %v1489, %v1488
  %v1511 = vpack.c.bf16 %v1491, %v1490
  %v1512 = vpack.c.bf16 %v1493, %v1492
  %v1513 = vpack.c.bf16 %v1495, %v1494
  %v1514 = vpack.c.bf16 %v1497, %v1496
  %v1515 = vpack.c.bf16 %v1499, %v1498
  %v1516 = vpack.c.bf16 %v1501, %v1500
  %v1517 = vpack.c.bf16 %v1503, %v1502
  %v1518 = vpack.c.bf16 %v1505, %v1504
  %v1519 = vpack.c.bf16 %v1506, %v1506
  %v1520 = vld [vmem:[%s1 + $0x30] sm:$0xf]
  %v1521 = vld [vmem:[%s1 + $0x34] sm:$0xf]
  %v1524 = vunpack.c.l.b16 %v1520
  %v1525 = vunpack.c.l.b16 %v1521
  %v1526 = vpack.c.b16 %v1525, %v1524
  %v1529 = vsel %vm141, %v1507, 0
  %v1532 = vsel %vm141, %v1508, 0
  %v1535 = vsel %vm141, %v1509, 0
  %v1538 = vsel %vm141, %v1510, 0
  %v1541 = vsel %vm141, %v1511, 0
  %v1544 = vsel %vm141, %v1512, 0
  %v1547 = vsel %vm141, %v1513, 0
  %v1550 = vsel %vm141, %v1514, 0
  %v1553 = vsel %vm141, %v1515, 0
  %v1556 = vsel %vm141, %v1516, 0
  %v1559 = vsel %vm141, %v1517, 0
  %v1562 = vsel %vm141, %v1518, 0
  %v1565 = vsel %vm141, %v1519, 0
  %1567 = vmatprep.subr.bf16.mxu0 0
  %1568 = vmatpush1.bf16.msra.mxu0 %v1526
  %1569 = vmatprep.subr.bf16.mxu0 0
  %1570 = vmatpush1.bf16.msra.mxu0 0
  %1571 = vmatprep.subr.bf16.mxu0 0
  %1572 = vmatpush1.bf16.msra.mxu0 0
  %1573 = vmatprep.subr.bf16.mxu0 0
  %1574 = vmatpush1.bf16.msra.mxu0 0
  %1575 = vmatprep.subr.bf16.mxu0 0
  %1576 = vmatpush1.bf16.msra.mxu0 0
  %1577 = vmatprep.subr.bf16.mxu0 0
  %1578 = vmatpush1.bf16.msra.mxu0 0
  %1579 = vmatprep.subr.bf16.mxu0 0
  %1580 = vmatpush1.bf16.msra.mxu0 0
  %1581 = vmatprep.subr.bf16.mxu0 0
  %1582 = vmatpush1.bf16.msra.mxu0 0
  %1583 = vmatprep.subr.bf16.mxu0 0
  %1584 = vmatpush1.bf16.msra.mxu0 0
  %1585 = vmatprep.subr.bf16.mxu0 0
  %1586 = vmatpush1.bf16.msra.mxu0 0
  %1587 = vmatprep.subr.bf16.mxu0 0
  %1588 = vmatpush1.bf16.msra.mxu0 0
  %1589 = vmatprep.subr.bf16.mxu0 0
  %1590 = vmatpush1.bf16.msra.mxu0 0
  %1591 = vmatprep.subr.bf16.mxu0 0
  %1592 = vmatpush1.bf16.msra.mxu0 0
  %1593 = vmatprep.subr.bf16.mxu0 0
  %1594 = vmatpush1.bf16.msra.mxu0 0
  %1595 = vmatprep.subr.bf16.mxu0 0
  %1596 = vmatpush1.bf16.msra.mxu0 0
  %1597 = vmatprep.subr.bf16.mxu0 0
  %1598 = vmatpush1.bf16.msra.mxu0 0
  %1599 = vmatprep.mubr.bf16.mxu0 0
  %1600 = vmatmul.mubr.bf16.gmra.mrb[0].mxu0 %v1529
  %v1601 = vpop.f32.mrb[0].mxu0
  %v1602 = vadd.f32 0.0, %v1601
  %v1603 = vpop.f32.mrb[0].mxu0
  %v1604 = vpop.f32.mrb[0].mxu0
  %v1605 = vadd.f32 0.0, %v1604
  %v1606 = vpop.f32.mrb[0].mxu0
  %1607 = vmatprep.mubr.bf16.mxu0 0
  %1608 = vmatmul.mubr.bf16.gmra.mrb[0].mxu0 %v1532
  %v1609 = vpop.f32.mrb[0].mxu0
  %v1610 = vadd.f32 0.0, %v1609
  %v1611 = vpop.f32.mrb[0].mxu0
  %v1612 = vpop.f32.mrb[0].mxu0
  %v1613 = vadd.f32 0.0, %v1612
  %v1614 = vpop.f32.mrb[0].mxu0
  %1615 = vmatprep.mubr.bf16.mxu0 0
  %1616 = vmatmul.mubr.bf16.gmra.mrb[0].mxu0 %v1535
  %v1617 = vpop.f32.mrb[0].mxu0
  %v1618 = vadd.f32 0.0, %v1617
  %v1619 = vpop.f32.mrb[0].mxu0
  %v1620 = vpop.f32.mrb[0].mxu0
  %v1621 = vadd.f32 0.0, %v1620
  %v1622 = vpop.f32.mrb[0].mxu0
  %1623 = vmatprep.mubr.bf16.mxu0 0
  %1624 = vmatmul.mubr.bf16.gmra.mrb[0].mxu0 %v1538
  %v1625 = vpop.f32.mrb[0].mxu0
  %v1626 = vadd.f32 0.0, %v1625
  %v1627 = vpop.f32.mrb[0].mxu0
  %v1628 = vpop.f32.mrb[0].mxu0
  %v1629 = vadd.f32 0.0, %v1628
  %v1630 = vpop.f32.mrb[0].mxu0
  %1631 = vmatprep.mubr.bf16.mxu0 0
  %1632 = vmatmul.mubr.bf16.gmra.mrb[0].mxu0 %v1541
  %v1633 = vpop.f32.mrb[0].mxu0
  %v1634 = vadd.f32 0.0, %v1633
  %v1635 = vpop.f32.mrb[0].mxu0
  %v1636 = vpop.f32.mrb[0].mxu0
  %v1637 = vadd.f32 0.0, %v1636
  %v1638 = vpop.f32.mrb[0].mxu0
  %1639 = vmatprep.mubr.bf16.mxu0 0
  %1640 = vmatmul.mubr.bf16.gmra.mrb[0].mxu0 %v1544
  %v1641 = vpop.f32.mrb[0].mxu0
  %v1642 = vadd.f32 0.0, %v1641
  %v1643 = vpop.f32.mrb[0].mxu0
  %v1644 = vpop.f32.mrb[0].mxu0
  %v1645 = vadd.f32 0.0, %v1644
  %v1646 = vpop.f32.mrb[0].mxu0
  %1647 = vmatprep.mubr.bf16.mxu0 0
  %1648 = vmatmul.mubr.bf16.gmra.mrb[0].mxu0 %v1547
  %v1649 = vpop.f32.mrb[0].mxu0
  %v1650 = vadd.f32 0.0, %v1649
  %v1651 = vpop.f32.mrb[0].mxu0
  %v1652 = vpop.f32.mrb[0].mxu0
  %v1653 = vadd.f32 0.0, %v1652
  %v1654 = vpop.f32.mrb[0].mxu0
  %1655 = vmatprep.mubr.bf16.mxu0 0
  %1656 = vmatmul.mubr.bf16.gmra.mrb[0].mxu0 %v1550
  %v1657 = vpop.f32.mrb[0].mxu0
  %v1658 = vadd.f32 0.0, %v1657
  %v1659 = vpop.f32.mrb[0].mxu0
  %v1660 = vpop.f32.mrb[0].mxu0
  %v1661 = vadd.f32 0.0, %v1660
  %v1662 = vpop.f32.mrb[0].mxu0
  %1663 = vmatprep.mubr.bf16.mxu0 0
  %1664 = vmatmul.mubr.bf16.gmra.mrb[0].mxu0 %v1553
  %v1665 = vpop.f32.mrb[0].mxu0
  %v1666 = vadd.f32 0.0, %v1665
  %v1667 = vpop.f32.mrb[0].mxu0
  %v1668 = vpop.f32.mrb[0].mxu0
  %v1669 = vadd.f32 0.0, %v1668
  %v1670 = vpop.f32.mrb[0].mxu0
  %1671 = vmatprep.mubr.bf16.mxu0 0
  %1672 = vmatmul.mubr.bf16.gmra.mrb[0].mxu0 %v1556
  %v1673 = vpop.f32.mrb[0].mxu0
  %v1674 = vadd.f32 0.0, %v1673
  %v1675 = vpop.f32.mrb[0].mxu0
  %v1676 = vpop.f32.mrb[0].mxu0
  %v1677 = vadd.f32 0.0, %v1676
  %v1678 = vpop.f32.mrb[0].mxu0
  %1679 = vmatprep.mubr.bf16.mxu0 0
  %1680 = vmatmul.mubr.bf16.gmra.mrb[0].mxu0 %v1559
  %v1681 = vpop.f32.mrb[0].mxu0
  %v1682 = vadd.f32 0.0, %v1681
  %v1683 = vpop.f32.mrb[0].mxu0
  %v1684 = vpop.f32.mrb[0].mxu0
  %v1685 = vadd.f32 0.0, %v1684
  %v1686 = vpop.f32.mrb[0].mxu0
  %1687 = vmatprep.mubr.bf16.mxu0 0
  %1688 = vmatmul.mubr.bf16.gmra.mrb[0].mxu0 %v1562
  %v1689 = vpop.f32.mrb[0].mxu0
  %v1690 = vadd.f32 0.0, %v1689
  %v1691 = vpop.f32.mrb[0].mxu0
  %v1692 = vpop.f32.mrb[0].mxu0
  %v1693 = vadd.f32 0.0, %v1692
  %v1694 = vpop.f32.mrb[0].mxu0
  %1695 = vmatprep.mubr.bf16.mxu0 0
  %1696 = vmatmul.mubr.bf16.gmra.mrb[0].mxu0 %v1565
  %v1697 = vpop.f32.mrb[0].mxu0
  %v1698 = vadd.f32 0.0, %v1697
  %v1699 = vpop.f32.mrb[0].mxu0
  %v1700 = vpop.f32.mrb[0].mxu0
  %v1701 = vpop.f32.mrb[0].mxu0
  %1702 = vdwg.mxu0
  %v1703 = vadd.f32 %v1457, %v1602
  %v1704 = vadd.f32 %v1458, %v1605
  %v1705 = vadd.f32 %v1459, %v1610
  %v1706 = vadd.f32 %v1460, %v1613
  %v1707 = vadd.f32 %v1461, %v1618
  %v1708 = vadd.f32 %v1462, %v1621
  %v1709 = vadd.f32 %v1463, %v1626
  %v1710 = vadd.f32 %v1464, %v1629
  %v1711 = vadd.f32 %v1465, %v1634
  %v1712 = vadd.f32 %v1466, %v1637
  %v1713 = vadd.f32 %v1467, %v1642
  %v1714 = vadd.f32 %v1468, %v1645
  %v1715 = vadd.f32 %v1469, %v1650
  %v1716 = vadd.f32 %v1470, %v1653
  %v1717 = vadd.f32 %v1471, %v1658
  %v1718 = vadd.f32 %v1472, %v1661
  %v1719 = vadd.f32 %v1473, %v1666
  %v1720 = vadd.f32 %v1474, %v1669
  %v1721 = vadd.f32 %v1475, %v1674
  %v1722 = vadd.f32 %v1476, %v1677
  %v1723 = vadd.f32 %v1477, %v1682
  %v1724 = vadd.f32 %v1478, %v1685
  %v1725 = vadd.f32 %v1479, %v1690
  %v1726 = vadd.f32 %v1480, %v1693
  %v1727 = vadd.f32 %v1481, %v1698
  %v1728 = vld [vmem:[%s0 + $0x1a] sm:$0xff]
  %v1729 = vld [vmem:[%s0 + $0x22] sm:$0xff]
  %v1730 = vld [vmem:[%s0 + $0x2a] sm:$0xff]
  %v1731 = vld [vmem:[%s0 + $0x32] sm:$0xff]
  %v1732 = vld [vmem:[%s0 + $0x3a] sm:$0xff]
  %v1733 = vld [vmem:[%s0 + $0x42] sm:$0xff]
  %v1734 = vld [vmem:[%s0 + $0x4a] sm:$0xff]
  %v1735 = vld [vmem:[%s0 + $0x52] sm:$0xff]
  %v1736 = vld [vmem:[%s0 + $0x5a] sm:$0xff]
  %v1737 = vld [vmem:[%s0 + $0x62] sm:$0xff]
  %v1738 = vld [vmem:[%s0 + $0x6a] sm:$0xff]
  %v1739 = vld [vmem:[%s0 + $0x72] sm:$0xff]
  %v1740 = vld [vmem:[%s0 + $0x7a] sm:$0xff]
  %v1741 = vld [vmem:[%s0 + $0x82] sm:$0xff]
  %v1742 = vld [vmem:[%s0 + $0x8a] sm:$0xff]
  %v1743 = vld [vmem:[%s0 + $0x92] sm:$0xff]
  %v1744 = vld [vmem:[%s0 + $0x9a] sm:$0xff]
  %v1745 = vld [vmem:[%s0 + $0xa2] sm:$0xff]
  %v1746 = vld [vmem:[%s0 + $0xaa] sm:$0xff]
  %v1747 = vld [vmem:[%s0 + $0xb2] sm:$0xff]
  %v1748 = vld [vmem:[%s0 + $0xba] sm:$0xff]
  %v1749 = vld [vmem:[%s0 + $0xc2] sm:$0xff]
  %v1750 = vld [vmem:[%s0 + $0xca] sm:$0xff]
  %v1751 = vld [vmem:[%s0 + $0xd2] sm:$0xff]
  %v1752 = vld [vmem:[%s0 + $0xda] sm:$0xff]
  %v1753 = vpack.c.bf16 %v1729, %v1728
  %v1754 = vpack.c.bf16 %v1731, %v1730
  %v1755 = vpack.c.bf16 %v1733, %v1732
  %v1756 = vpack.c.bf16 %v1735, %v1734
  %v1757 = vpack.c.bf16 %v1737, %v1736
  %v1758 = vpack.c.bf16 %v1739, %v1738
  %v1759 = vpack.c.bf16 %v1741, %v1740
  %v1760 = vpack.c.bf16 %v1743, %v1742
  %v1761 = vpack.c.bf16 %v1745, %v1744
  %v1762 = vpack.c.bf16 %v1747, %v1746
  %v1763 = vpack.c.bf16 %v1749, %v1748
  %v1764 = vpack.c.bf16 %v1751, %v1750
  %v1765 = vpack.c.bf16 %v1752, %v1752
  %v1766 = vld [vmem:[%s1 + $0x38] sm:$0xf]
  %v1767 = vld [vmem:[%s1 + $0x3c] sm:$0xf]
  %v1770 = vunpack.c.l.b16 %v1766
  %v1771 = vunpack.c.l.b16 %v1767
  %v1772 = vpack.c.b16 %v1771, %v1770
  %v1775 = vsel %vm141, %v1753, 0
  %v1778 = vsel %vm141, %v1754, 0
  %v1781 = vsel %vm141, %v1755, 0
  %v1784 = vsel %vm141, %v1756, 0
  %v1787 = vsel %vm141, %v1757, 0
  %v1790 = vsel %vm141, %v1758, 0
  %v1793 = vsel %vm141, %v1759, 0
  %v1796 = vsel %vm141, %v1760, 0
  %v1799 = vsel %vm141, %v1761, 0
  %v1802 = vsel %vm141, %v1762, 0
  %v1805 = vsel %vm141, %v1763, 0
  %v1808 = vsel %vm141, %v1764, 0
  %v1811 = vsel %vm141, %v1765, 0
  %1813 = vmatprep.subr.bf16.mxu0 0
  %1814 = vmatpush1.bf16.msra.mxu0 %v1772
  %1815 = vmatprep.subr.bf16.mxu0 0
  %1816 = vmatpush1.bf16.msra.mxu0 0
  %1817 = vmatprep.subr.bf16.mxu0 0
  %1818 = vmatpush1.bf16.msra.mxu0 0
  %1819 = vmatprep.subr.bf16.mxu0 0
  %1820 = vmatpush1.bf16.msra.mxu0 0
  %1821 = vmatprep.subr.bf16.mxu0 0
  %1822 = vmatpush1.bf16.msra.mxu0 0
  %1823 = vmatprep.subr.bf16.mxu0 0
  %1824 = vmatpush1.bf16.msra.mxu0 0
  %1825 = vmatprep.subr.bf16.mxu0 0
  %1826 = vmatpush1.bf16.msra.mxu0 0
  %1827 = vmatprep.subr.bf16.mxu0 0
  %1828 = vmatpush1.bf16.msra.mxu0 0
  %1829 = vmatprep.subr.bf16.mxu0 0
  %1830 = vmatpush1.bf16.msra.mxu0 0
  %1831 = vmatprep.subr.bf16.mxu0 0
  %1832 = vmatpush1.bf16.msra.mxu0 0
  %1833 = vmatprep.subr.bf16.mxu0 0
  %1834 = vmatpush1.bf16.msra.mxu0 0
  %1835 = vmatprep.subr.bf16.mxu0 0
  %1836 = vmatpush1.bf16.msra.mxu0 0
  %1837 = vmatprep.subr.bf16.mxu0 0
  %1838 = vmatpush1.bf16.msra.mxu0 0
  %1839 = vmatprep.subr.bf16.mxu0 0
  %1840 = vmatpush1.bf16.msra.mxu0 0
  %1841 = vmatprep.subr.bf16.mxu0 0
  %1842 = vmatpush1.bf16.msra.mxu0 0
  %1843 = vmatprep.subr.bf16.mxu0 0
  %1844 = vmatpush1.bf16.msra.mxu0 0
  %1845 = vmatprep.mubr.bf16.mxu0 0
  %1846 = vmatmul.mubr.bf16.gmra.mrb[0].mxu0 %v1775
  %v1847 = vpop.f32.mrb[0].mxu0
  %v1848 = vadd.f32 0.0, %v1847
  %v1849 = vpop.f32.mrb[0].mxu0
  %v1850 = vpop.f32.mrb[0].mxu0
  %v1851 = vadd.f32 0.0, %v1850
  %v1852 = vpop.f32.mrb[0].mxu0
  %1853 = vmatprep.mubr.bf16.mxu0 0
  %1854 = vmatmul.mubr.bf16.gmra.mrb[0].mxu0 %v1778
  %v1855 = vpop.f32.mrb[0].mxu0
  %v1856 = vadd.f32 0.0, %v1855
  %v1857 = vpop.f32.mrb[0].mxu0
  %v1858 = vpop.f32.mrb[0].mxu0
  %v1859 = vadd.f32 0.0, %v1858
  %v1860 = vpop.f32.mrb[0].mxu0
  %1861 = vmatprep.mubr.bf16.mxu0 0
  %1862 = vmatmul.mubr.bf16.gmra.mrb[0].mxu0 %v1781
  %v1863 = vpop.f32.mrb[0].mxu0
  %v1864 = vadd.f32 0.0, %v1863
  %v1865 = vpop.f32.mrb[0].mxu0
  %v1866 = vpop.f32.mrb[0].mxu0
  %v1867 = vadd.f32 0.0, %v1866
  %v1868 = vpop.f32.mrb[0].mxu0
  %1869 = vmatprep.mubr.bf16.mxu0 0
  %1870 = vmatmul.mubr.bf16.gmra.mrb[0].mxu0 %v1784
  %v1871 = vpop.f32.mrb[0].mxu0
  %v1872 = vadd.f32 0.0, %v1871
  %v1873 = vpop.f32.mrb[0].mxu0
  %v1874 = vpop.f32.mrb[0].mxu0
  %v1875 = vadd.f32 0.0, %v1874
  %v1876 = vpop.f32.mrb[0].mxu0
  %1877 = vmatprep.mubr.bf16.mxu0 0
  %1878 = vmatmul.mubr.bf16.gmra.mrb[0].mxu0 %v1787
  %v1879 = vpop.f32.mrb[0].mxu0
  %v1880 = vadd.f32 0.0, %v1879
  %v1881 = vpop.f32.mrb[0].mxu0
  %v1882 = vpop.f32.mrb[0].mxu0
  %v1883 = vadd.f32 0.0, %v1882
  %v1884 = vpop.f32.mrb[0].mxu0
  %1885 = vmatprep.mubr.bf16.mxu0 0
  %1886 = vmatmul.mubr.bf16.gmra.mrb[0].mxu0 %v1790
  %v1887 = vpop.f32.mrb[0].mxu0
  %v1888 = vadd.f32 0.0, %v1887
  %v1889 = vpop.f32.mrb[0].mxu0
  %v1890 = vpop.f32.mrb[0].mxu0
  %v1891 = vadd.f32 0.0, %v1890
  %v1892 = vpop.f32.mrb[0].mxu0
  %1893 = vmatprep.mubr.bf16.mxu0 0
  %1894 = vmatmul.mubr.bf16.gmra.mrb[0].mxu0 %v1793
  %v1895 = vpop.f32.mrb[0].mxu0
  %v1896 = vadd.f32 0.0, %v1895
  %v1897 = vpop.f32.mrb[0].mxu0
  %v1898 = vpop.f32.mrb[0].mxu0
  %v1899 = vadd.f32 0.0, %v1898
  %v1900 = vpop.f32.mrb[0].mxu0
  %1901 = vmatprep.mubr.bf16.mxu0 0
  %1902 = vmatmul.mubr.bf16.gmra.mrb[0].mxu0 %v1796
  %v1903 = vpop.f32.mrb[0].mxu0
  %v1904 = vadd.f32 0.0, %v1903
  %v1905 = vpop.f32.mrb[0].mxu0
  %v1906 = vpop.f32.mrb[0].mxu0
  %v1907 = vadd.f32 0.0, %v1906
  %v1908 = vpop.f32.mrb[0].mxu0
  %1909 = vmatprep.mubr.bf16.mxu0 0
  %1910 = vmatmul.mubr.bf16.gmra.mrb[0].mxu0 %v1799
  %v1911 = vpop.f32.mrb[0].mxu0
  %v1912 = vadd.f32 0.0, %v1911
  %v1913 = vpop.f32.mrb[0].mxu0
  %v1914 = vpop.f32.mrb[0].mxu0
  %v1915 = vadd.f32 0.0, %v1914
  %v1916 = vpop.f32.mrb[0].mxu0
  %1917 = vmatprep.mubr.bf16.mxu0 0
  %1918 = vmatmul.mubr.bf16.gmra.mrb[0].mxu0 %v1802
  %v1919 = vpop.f32.mrb[0].mxu0
  %v1920 = vadd.f32 0.0, %v1919
  %v1921 = vpop.f32.mrb[0].mxu0
  %v1922 = vpop.f32.mrb[0].mxu0
  %v1923 = vadd.f32 0.0, %v1922
  %v1924 = vpop.f32.mrb[0].mxu0
  %1925 = vmatprep.mubr.bf16.mxu0 0
  %1926 = vmatmul.mubr.bf16.gmra.mrb[0].mxu0 %v1805
  %v1927 = vpop.f32.mrb[0].mxu0
  %v1928 = vadd.f32 0.0, %v1927
  %v1929 = vpop.f32.mrb[0].mxu0
  %v1930 = vpop.f32.mrb[0].mxu0
  %v1931 = vadd.f32 0.0, %v1930
  %v1932 = vpop.f32.mrb[0].mxu0
  %1933 = vmatprep.mubr.bf16.mxu0 0
  %1934 = vmatmul.mubr.bf16.gmra.mrb[0].mxu0 %v1808
  %v1935 = vpop.f32.mrb[0].mxu0
  %v1936 = vadd.f32 0.0, %v1935
  %v1937 = vpop.f32.mrb[0].mxu0
  %v1938 = vpop.f32.mrb[0].mxu0
  %v1939 = vadd.f32 0.0, %v1938
  %v1940 = vpop.f32.mrb[0].mxu0
  %1941 = vmatprep.mubr.bf16.mxu0 0
  %1942 = vmatmul.mubr.bf16.gmra.mrb[0].mxu0 %v1811
  %v1943 = vpop.f32.mrb[0].mxu0
  %v1944 = vadd.f32 0.0, %v1943
  %v1945 = vpop.f32.mrb[0].mxu0
  %v1946 = vpop.f32.mrb[0].mxu0
  %v1947 = vpop.f32.mrb[0].mxu0
  %1948 = vdwg.mxu0
  %v1949 = vadd.f32 %v1703, %v1848
  %v1950 = vadd.f32 %v1704, %v1851
  %v1951 = vadd.f32 %v1705, %v1856
  %v1952 = vadd.f32 %v1706, %v1859
  %v1953 = vadd.f32 %v1707, %v1864
  %v1954 = vadd.f32 %v1708, %v1867
  %v1955 = vadd.f32 %v1709, %v1872
  %v1956 = vadd.f32 %v1710, %v1875
  %v1957 = vadd.f32 %v1711, %v1880
  %v1958 = vadd.f32 %v1712, %v1883
  %v1959 = vadd.f32 %v1713, %v1888
  %v1960 = vadd.f32 %v1714, %v1891
  %v1961 = vadd.f32 %v1715, %v1896
  %v1962 = vadd.f32 %v1716, %v1899
  %v1963 = vadd.f32 %v1717, %v1904
  %v1964 = vadd.f32 %v1718, %v1907
  %v1965 = vadd.f32 %v1719, %v1912
  %v1966 = vadd.f32 %v1720, %v1915
  %v1967 = vadd.f32 %v1721, %v1920
  %v1968 = vadd.f32 %v1722, %v1923
  %v1969 = vadd.f32 %v1723, %v1928
  %v1970 = vadd.f32 %v1724, %v1931
  %v1971 = vadd.f32 %v1725, %v1936
  %v1972 = vadd.f32 %v1726, %v1939
  %v1973 = vadd.f32 %v1727, %v1944
  %v1974 = vld [vmem:[%s0 + $0x1b] sm:$0xff]
  %v1975 = vld [vmem:[%s0 + $0x23] sm:$0xff]
  %v1976 = vld [vmem:[%s0 + $0x2b] sm:$0xff]
  %v1977 = vld [vmem:[%s0 + $0x33] sm:$0xff]
  %v1978 = vld [vmem:[%s0 + $0x3b] sm:$0xff]
  %v1979 = vld [vmem:[%s0 + $0x43] sm:$0xff]
  %v1980 = vld [vmem:[%s0 + $0x4b] sm:$0xff]
  %v1981 = vld [vmem:[%s0 + $0x53] sm:$0xff]
  %v1982 = vld [vmem:[%s0 + $0x5b] sm:$0xff]
  %v1983 = vld [vmem:[%s0 + $0x63] sm:$0xff]
  %v1984 = vld [vmem:[%s0 + $0x6b] sm:$0xff]
  %v1985 = vld [vmem:[%s0 + $0x73] sm:$0xff]
  %v1986 = vld [vmem:[%s0 + $0x7b] sm:$0xff]
  %v1987 = vld [vmem:[%s0 + $0x83] sm:$0xff]
  %v1988 = vld [vmem:[%s0 + $0x8b] sm:$0xff]
  %v1989 = vld [vmem:[%s0 + $0x93] sm:$0xff]
  %v1990 = vld [vmem:[%s0 + $0x9b] sm:$0xff]
  %v1991 = vld [vmem:[%s0 + $0xa3] sm:$0xff]
  %v1992 = vld [vmem:[%s0 + $0xab] sm:$0xff]
  %v1993 = vld [vmem:[%s0 + $0xb3] sm:$0xff]
  %v1994 = vld [vmem:[%s0 + $0xbb] sm:$0xff]
  %v1995 = vld [vmem:[%s0 + $0xc3] sm:$0xff]
  %v1996 = vld [vmem:[%s0 + $0xcb] sm:$0xff]
  %v1997 = vld [vmem:[%s0 + $0xd3] sm:$0xff]
  %v1998 = vld [vmem:[%s0 + $0xdb] sm:$0xff]
  %v1999 = vpack.c.bf16 %v1975, %v1974
  %v2000 = vpack.c.bf16 %v1977, %v1976
  %v2001 = vpack.c.bf16 %v1979, %v1978
  %v2002 = vpack.c.bf16 %v1981, %v1980
  %v2003 = vpack.c.bf16 %v1983, %v1982
  %v2004 = vpack.c.bf16 %v1985, %v1984
  %v2005 = vpack.c.bf16 %v1987, %v1986
  %v2006 = vpack.c.bf16 %v1989, %v1988
  %v2007 = vpack.c.bf16 %v1991, %v1990
  %v2008 = vpack.c.bf16 %v1993, %v1992
  %v2009 = vpack.c.bf16 %v1995, %v1994
  %v2010 = vpack.c.bf16 %v1997, %v1996
  %v2011 = vpack.c.bf16 %v1998, %v1998
  %v2012 = vld [vmem:[%s1 + $0x40] sm:$0xf]
  %v2013 = vld [vmem:[%s1 + $0x44] sm:$0xf]
  %v2016 = vunpack.c.l.b16 %v2012
  %v2017 = vunpack.c.l.b16 %v2013
  %v2018 = vpack.c.b16 %v2017, %v2016
  %v2021 = vsel %vm141, %v1999, 0
  %v2024 = vsel %vm141, %v2000, 0
  %v2027 = vsel %vm141, %v2001, 0
  %v2030 = vsel %vm141, %v2002, 0
  %v2033 = vsel %vm141, %v2003, 0
  %v2036 = vsel %vm141, %v2004, 0
  %v2039 = vsel %vm141, %v2005, 0
  %v2042 = vsel %vm141, %v2006, 0
  %v2045 = vsel %vm141, %v2007, 0
  %v2048 = vsel %vm141, %v2008, 0
  %v2051 = vsel %vm141, %v2009, 0
  %v2054 = vsel %vm141, %v2010, 0
  %v2057 = vsel %vm141, %v2011, 0
  %2059 = vmatprep.subr.bf16.mxu0 0
  %2060 = vmatpush1.bf16.msra.mxu0 %v2018
  %2061 = vmatprep.subr.bf16.mxu0 0
  %2062 = vmatpush1.bf16.msra.mxu0 0
  %2063 = vmatprep.subr.bf16.mxu0 0
  %2064 = vmatpush1.bf16.msra.mxu0 0
  %2065 = vmatprep.subr.bf16.mxu0 0
  %2066 = vmatpush1.bf16.msra.mxu0 0
  %2067 = vmatprep.subr.bf16.mxu0 0
  %2068 = vmatpush1.bf16.msra.mxu0 0
  %2069 = vmatprep.subr.bf16.mxu0 0
  %2070 = vmatpush1.bf16.msra.mxu0 0
  %2071 = vmatprep.subr.bf16.mxu0 0
  %2072 = vmatpush1.bf16.msra.mxu0 0
  %2073 = vmatprep.subr.bf16.mxu0 0
  %2074 = vmatpush1.bf16.msra.mxu0 0
  %2075 = vmatprep.subr.bf16.mxu0 0
  %2076 = vmatpush1.bf16.msra.mxu0 0
  %2077 = vmatprep.subr.bf16.mxu0 0
  %2078 = vmatpush1.bf16.msra.mxu0 0
  %2079 = vmatprep.subr.bf16.mxu0 0
  %2080 = vmatpush1.bf16.msra.mxu0 0
  %2081 = vmatprep.subr.bf16.mxu0 0
  %2082 = vmatpush1.bf16.msra.mxu0 0
  %2083 = vmatprep.subr.bf16.mxu0 0
  %2084 = vmatpush1.bf16.msra.mxu0 0
  %2085 = vmatprep.subr.bf16.mxu0 0
  %2086 = vmatpush1.bf16.msra.mxu0 0
  %2087 = vmatprep.subr.bf16.mxu0 0
  %2088 = vmatpush1.bf16.msra.mxu0 0
  %2089 = vmatprep.subr.bf16.mxu0 0
  %2090 = vmatpush1.bf16.msra.mxu0 0
  %2091 = vmatprep.mubr.bf16.mxu0 0
  %2092 = vmatmul.mubr.bf16.gmra.mrb[0].mxu0 %v2021
  %v2093 = vpop.f32.mrb[0].mxu0
  %v2094 = vadd.f32 0.0, %v2093
  %v2095 = vpop.f32.mrb[0].mxu0
  %v2096 = vpop.f32.mrb[0].mxu0
  %v2097 = vadd.f32 0.0, %v2096
  %v2098 = vpop.f32.mrb[0].mxu0
  %2099 = vmatprep.mubr.bf16.mxu0 0
  %2100 = vmatmul.mubr.bf16.gmra.mrb[0].mxu0 %v2024
  %v2101 = vpop.f32.mrb[0].mxu0
  %v2102 = vadd.f32 0.0, %v2101
  %v2103 = vpop.f32.mrb[0].mxu0
  %v2104 = vpop.f32.mrb[0].mxu0
  %v2105 = vadd.f32 0.0, %v2104
  %v2106 = vpop.f32.mrb[0].mxu0
  %2107 = vmatprep.mubr.bf16.mxu0 0
  %2108 = vmatmul.mubr.bf16.gmra.mrb[0].mxu0 %v2027
  %v2109 = vpop.f32.mrb[0].mxu0
  %v2110 = vadd.f32 0.0, %v2109
  %v2111 = vpop.f32.mrb[0].mxu0
  %v2112 = vpop.f32.mrb[0].mxu0
  %v2113 = vadd.f32 0.0, %v2112
  %v2114 = vpop.f32.mrb[0].mxu0
  %2115 = vmatprep.mubr.bf16.mxu0 0
  %2116 = vmatmul.mubr.bf16.gmra.mrb[0].mxu0 %v2030
  %v2117 = vpop.f32.mrb[0].mxu0
  %v2118 = vadd.f32 0.0, %v2117
  %v2119 = vpop.f32.mrb[0].mxu0
  %v2120 = vpop.f32.mrb[0].mxu0
  %v2121 = vadd.f32 0.0, %v2120
  %v2122 = vpop.f32.mrb[0].mxu0
  %2123 = vmatprep.mubr.bf16.mxu0 0
  %2124 = vmatmul.mubr.bf16.gmra.mrb[0].mxu0 %v2033
  %v2125 = vpop.f32.mrb[0].mxu0
  %v2126 = vadd.f32 0.0, %v2125
  %v2127 = vpop.f32.mrb[0].mxu0
  %v2128 = vpop.f32.mrb[0].mxu0
  %v2129 = vadd.f32 0.0, %v2128
  %v2130 = vpop.f32.mrb[0].mxu0
  %2131 = vmatprep.mubr.bf16.mxu0 0
  %2132 = vmatmul.mubr.bf16.gmra.mrb[0].mxu0 %v2036
  %v2133 = vpop.f32.mrb[0].mxu0
  %v2134 = vadd.f32 0.0, %v2133
  %v2135 = vpop.f32.mrb[0].mxu0
  %v2136 = vpop.f32.mrb[0].mxu0
  %v2137 = vadd.f32 0.0, %v2136
  %v2138 = vpop.f32.mrb[0].mxu0
  %2139 = vmatprep.mubr.bf16.mxu0 0
  %2140 = vmatmul.mubr.bf16.gmra.mrb[0].mxu0 %v2039
  %v2141 = vpop.f32.mrb[0].mxu0
  %v2142 = vadd.f32 0.0, %v2141
  %v2143 = vpop.f32.mrb[0].mxu0
  %v2144 = vpop.f32.mrb[0].mxu0
  %v2145 = vadd.f32 0.0, %v2144
  %v2146 = vpop.f32.mrb[0].mxu0
  %2147 = vmatprep.mubr.bf16.mxu0 0
  %2148 = vmatmul.mubr.bf16.gmra.mrb[0].mxu0 %v2042
  %v2149 = vpop.f32.mrb[0].mxu0
  %v2150 = vadd.f32 0.0, %v2149
  %v2151 = vpop.f32.mrb[0].mxu0
  %v2152 = vpop.f32.mrb[0].mxu0
  %v2153 = vadd.f32 0.0, %v2152
  %v2154 = vpop.f32.mrb[0].mxu0
  %2155 = vmatprep.mubr.bf16.mxu0 0
  %2156 = vmatmul.mubr.bf16.gmra.mrb[0].mxu0 %v2045
  %v2157 = vpop.f32.mrb[0].mxu0
  %v2158 = vadd.f32 0.0, %v2157
  %v2159 = vpop.f32.mrb[0].mxu0
  %v2160 = vpop.f32.mrb[0].mxu0
  %v2161 = vadd.f32 0.0, %v2160
  %v2162 = vpop.f32.mrb[0].mxu0
  %2163 = vmatprep.mubr.bf16.mxu0 0
  %2164 = vmatmul.mubr.bf16.gmra.mrb[0].mxu0 %v2048
  %v2165 = vpop.f32.mrb[0].mxu0
  %v2166 = vadd.f32 0.0, %v2165
  %v2167 = vpop.f32.mrb[0].mxu0
  %v2168 = vpop.f32.mrb[0].mxu0
  %v2169 = vadd.f32 0.0, %v2168
  %v2170 = vpop.f32.mrb[0].mxu0
  %2171 = vmatprep.mubr.bf16.mxu0 0
  %2172 = vmatmul.mubr.bf16.gmra.mrb[0].mxu0 %v2051
  %v2173 = vpop.f32.mrb[0].mxu0
  %v2174 = vadd.f32 0.0, %v2173
  %v2175 = vpop.f32.mrb[0].mxu0
  %v2176 = vpop.f32.mrb[0].mxu0
  %v2177 = vadd.f32 0.0, %v2176
  %v2178 = vpop.f32.mrb[0].mxu0
  %2179 = vmatprep.mubr.bf16.mxu0 0
  %2180 = vmatmul.mubr.bf16.gmra.mrb[0].mxu0 %v2054
  %v2181 = vpop.f32.mrb[0].mxu0
  %v2182 = vadd.f32 0.0, %v2181
  %v2183 = vpop.f32.mrb[0].mxu0
  %v2184 = vpop.f32.mrb[0].mxu0
  %v2185 = vadd.f32 0.0, %v2184
  %v2186 = vpop.f32.mrb[0].mxu0
  %2187 = vmatprep.mubr.bf16.mxu0 0
  %2188 = vmatmul.mubr.bf16.gmra.mrb[0].mxu0 %v2057
  %v2189 = vpop.f32.mrb[0].mxu0
  %v2190 = vadd.f32 0.0, %v2189
  %v2191 = vpop.f32.mrb[0].mxu0
  %v2192 = vpop.f32.mrb[0].mxu0
  %v2193 = vpop.f32.mrb[0].mxu0
  %2194 = vdwg.mxu0
  %v2195 = vadd.f32 %v1949, %v2094
  %v2196 = vadd.f32 %v1950, %v2097
  %v2197 = vadd.f32 %v1951, %v2102
  %v2198 = vadd.f32 %v1952, %v2105
  %v2199 = vadd.f32 %v1953, %v2110
  %v2200 = vadd.f32 %v1954, %v2113
  %v2201 = vadd.f32 %v1955, %v2118
  %v2202 = vadd.f32 %v1956, %v2121
  %v2203 = vadd.f32 %v1957, %v2126
  %v2204 = vadd.f32 %v1958, %v2129
  %v2205 = vadd.f32 %v1959, %v2134
  %v2206 = vadd.f32 %v1960, %v2137
  %v2207 = vadd.f32 %v1961, %v2142
  %v2208 = vadd.f32 %v1962, %v2145
  %v2209 = vadd.f32 %v1963, %v2150
  %v2210 = vadd.f32 %v1964, %v2153
  %v2211 = vadd.f32 %v1965, %v2158
  %v2212 = vadd.f32 %v1966, %v2161
  %v2213 = vadd.f32 %v1967, %v2166
  %v2214 = vadd.f32 %v1968, %v2169
  %v2215 = vadd.f32 %v1969, %v2174
  %v2216 = vadd.f32 %v1970, %v2177
  %v2217 = vadd.f32 %v1971, %v2182
  %v2218 = vadd.f32 %v1972, %v2185
  %v2219 = vadd.f32 %v1973, %v2190
  %2221 = vset.pattern.permute.xlu0 0
  %2222 = vperm.xlu0 %2221, %v30
  %v2223 = vpop.permute.xlu0 %2222
  %2226 = vset.pattern.permute.xlu0 0
  %2227 = vperm.xlu0 %2226, %v31
  %v2228 = vpop.permute.xlu0 %2227
  %2231 = vset.pattern.permute.xlu0 0
  %2232 = vperm.xlu0 %2231, %v32
  %v2233 = vpop.permute.xlu0 %2232
  %2236 = vset.pattern.permute.xlu0 0
  %2237 = vperm.xlu0 %2236, %v33
  %v2238 = vpop.permute.xlu0 %2237
  %2241 = vset.pattern.permute.xlu0 0
  %2242 = vperm.xlu0 %2241, %v34
  %v2243 = vpop.permute.xlu0 %2242
  %2246 = vset.pattern.permute.xlu0 0
  %2247 = vperm.xlu0 %2246, %v35
  %v2248 = vpop.permute.xlu0 %2247
  %2251 = vset.pattern.permute.xlu0 0
  %2252 = vperm.xlu0 %2251, %v36
  %v2253 = vpop.permute.xlu0 %2252
  %2256 = vset.pattern.permute.xlu0 0
  %2257 = vperm.xlu0 %2256, %v37
  %v2258 = vpop.permute.xlu0 %2257
  %2261 = vset.pattern.permute.xlu0 0
  %2262 = vperm.xlu0 %2261, %v38
  %v2263 = vpop.permute.xlu0 %2262
  %2266 = vset.pattern.permute.xlu0 0
  %2267 = vperm.xlu0 %2266, %v39
  %v2268 = vpop.permute.xlu0 %2267
  %2271 = vset.pattern.permute.xlu0 0
  %2272 = vperm.xlu0 %2271, %v40
  %v2273 = vpop.permute.xlu0 %2272
  %2276 = vset.pattern.permute.xlu0 0
  %2277 = vperm.xlu0 %2276, %v41
  %v2278 = vpop.permute.xlu0 %2277
  %2281 = vset.pattern.permute.xlu0 0
  %2282 = vperm.xlu0 %2281, %v42
  %v2283 = vpop.permute.xlu0 %2282
  %2286 = vset.pattern.permute.xlu0 0
  %2287 = vperm.xlu0 %2286, %v43
  %v2288 = vpop.permute.xlu0 %2287
  %2291 = vset.pattern.permute.xlu0 0
  %2292 = vperm.xlu0 %2291, %v44
  %v2293 = vpop.permute.xlu0 %2292
  %2296 = vset.pattern.permute.xlu0 0
  %2297 = vperm.xlu0 %2296, %v45
  %v2298 = vpop.permute.xlu0 %2297
  %2301 = vset.pattern.permute.xlu0 0
  %2302 = vperm.xlu0 %2301, %v46
  %v2303 = vpop.permute.xlu0 %2302
  %2306 = vset.pattern.permute.xlu0 0
  %2307 = vperm.xlu0 %2306, %v47
  %v2308 = vpop.permute.xlu0 %2307
  %2311 = vset.pattern.permute.xlu0 0
  %2312 = vperm.xlu0 %2311, %v48
  %v2313 = vpop.permute.xlu0 %2312
  %2316 = vset.pattern.permute.xlu0 0
  %2317 = vperm.xlu0 %2316, %v49
  %v2318 = vpop.permute.xlu0 %2317
  %2321 = vset.pattern.permute.xlu0 0
  %2322 = vperm.xlu0 %2321, %v50
  %v2323 = vpop.permute.xlu0 %2322
  %2326 = vset.pattern.permute.xlu0 0
  %2327 = vperm.xlu0 %2326, %v51
  %v2328 = vpop.permute.xlu0 %2327
  %2331 = vset.pattern.permute.xlu0 0
  %2332 = vperm.xlu0 %2331, %v52
  %v2333 = vpop.permute.xlu0 %2332
  %2336 = vset.pattern.permute.xlu0 0
  %2337 = vperm.xlu0 %2336, %v53
  %v2338 = vpop.permute.xlu0 %2337
  %2341 = vset.pattern.permute.xlu0 0
  %2342 = vperm.xlu0 %2341, %v54
  %v2343 = vpop.permute.xlu0 %2342
  %v2345 = vmul.f32 %v2195, %v2223
  %v2346 = vmul.f32 %v2196, %v2228
  %v2347 = vmul.f32 %v2197, %v2233
  %v2348 = vmul.f32 %v2198, %v2238
  %v2349 = vmul.f32 %v2199, %v2243
  %v2350 = vmul.f32 %v2200, %v2248
  %v2351 = vmul.f32 %v2201, %v2253
  %v2352 = vmul.f32 %v2202, %v2258
  %v2353 = vmul.f32 %v2203, %v2263
  %v2354 = vmul.f32 %v2204, %v2268
  %v2355 = vmul.f32 %v2205, %v2273
  %v2356 = vmul.f32 %v2206, %v2278
  %v2357 = vmul.f32 %v2207, %v2283
  %v2358 = vmul.f32 %v2208, %v2288
  %v2359 = vmul.f32 %v2209, %v2293
  %v2360 = vmul.f32 %v2210, %v2298
  %v2361 = vmul.f32 %v2211, %v2303
  %v2362 = vmul.f32 %v2212, %v2308
  %v2363 = vmul.f32 %v2213, %v2313
  %v2364 = vmul.f32 %v2214, %v2318
  %v2365 = vmul.f32 %v2215, %v2323
  %v2366 = vmul.f32 %v2216, %v2328
  %v2367 = vmul.f32 %v2217, %v2333
  %v2368 = vmul.f32 %v2218, %v2338
  %v2369 = vmul.f32 %v2219, %v2343
  %v2370 = vadd.f32 %v2345, %v2346
  %v2371 = vadd.f32 %v2370, %v2347
  %v2372 = vadd.f32 %v2371, %v2348
  %v2373 = vadd.f32 %v2372, %v2349
  %v2374 = vadd.f32 %v2373, %v2350
  %v2375 = vadd.f32 %v2374, %v2351
  %v2376 = vadd.f32 %v2375, %v2352
  %v2377 = vadd.f32 %v2376, %v2353
  %v2378 = vadd.f32 %v2377, %v2354
  %v2379 = vadd.f32 %v2378, %v2355
  %v2380 = vadd.f32 %v2379, %v2356
  %v2381 = vadd.f32 %v2380, %v2357
  %v2382 = vadd.f32 %v2381, %v2358
  %v2383 = vadd.f32 %v2382, %v2359
  %v2384 = vadd.f32 %v2383, %v2360
  %v2385 = vadd.f32 %v2384, %v2361
  %v2386 = vadd.f32 %v2385, %v2362
  %v2387 = vadd.f32 %v2386, %v2363
  %v2388 = vadd.f32 %v2387, %v2364
  %v2389 = vadd.f32 %v2388, %v2365
  %v2390 = vadd.f32 %v2389, %v2366
  %v2391 = vadd.f32 %v2390, %v2367
  %v2392 = vadd.f32 %v2391, %v2368
  %v2393 = vadd.f32 %v2392, %v2369
  %v2394 = vrot.slane %v2393, 4
  %v2395 = vadd.f32 %v2393, %v2394
  %v2396 = vrot.slane %v2395, 2
  %v2397 = vadd.f32 %v2395, %v2396
  %v2398 = vrot.slane %v2397, 1
  %v2399 = vadd.f32 %v2397, %v2398
  %v2400 = vmul.f32 %v2399, 0.0078125
  %v2401 = vsub.f32 %v2345, %v2400
  %v2402 = vsub.f32 %v2346, %v2400
  %v2403 = vsub.f32 %v2347, %v2400
  %v2404 = vsub.f32 %v2348, %v2400
  %v2405 = vsub.f32 %v2349, %v2400
  %v2406 = vsub.f32 %v2350, %v2400
  %v2407 = vsub.f32 %v2351, %v2400
  %v2408 = vsub.f32 %v2352, %v2400
  %v2409 = vsub.f32 %v2353, %v2400
  %v2410 = vsub.f32 %v2354, %v2400
  %v2411 = vsub.f32 %v2355, %v2400
  %v2412 = vsub.f32 %v2356, %v2400
  %v2413 = vsub.f32 %v2357, %v2400
  %v2414 = vsub.f32 %v2358, %v2400
  %v2415 = vsub.f32 %v2359, %v2400
  %v2416 = vsub.f32 %v2360, %v2400
  %v2417 = vsub.f32 %v2361, %v2400
  %v2418 = vsub.f32 %v2362, %v2400
  %v2419 = vsub.f32 %v2363, %v2400
  %v2420 = vsub.f32 %v2364, %v2400
  %v2421 = vsub.f32 %v2365, %v2400
  %v2422 = vsub.f32 %v2366, %v2400
  %v2423 = vsub.f32 %v2367, %v2400
  %v2424 = vsub.f32 %v2368, %v2400
  %v2425 = vsub.f32 %v2369, %v2400
  %v2426 = vmul.f32 %v2401, %v2223
  %v2427 = vmul.f32 %v2402, %v2228
  %v2428 = vmul.f32 %v2403, %v2233
  %v2429 = vmul.f32 %v2404, %v2238
  %v2430 = vmul.f32 %v2405, %v2243
  %v2431 = vmul.f32 %v2406, %v2248
  %v2432 = vmul.f32 %v2407, %v2253
  %v2433 = vmul.f32 %v2408, %v2258
  %v2434 = vmul.f32 %v2409, %v2263
  %v2435 = vmul.f32 %v2410, %v2268
  %v2436 = vmul.f32 %v2411, %v2273
  %v2437 = vmul.f32 %v2412, %v2278
  %v2438 = vmul.f32 %v2413, %v2283
  %v2439 = vmul.f32 %v2414, %v2288
  %v2440 = vmul.f32 %v2415, %v2293
  %v2441 = vmul.f32 %v2416, %v2298
  %v2442 = vmul.f32 %v2417, %v2303
  %v2443 = vmul.f32 %v2418, %v2308
  %v2444 = vmul.f32 %v2419, %v2313
  %v2445 = vmul.f32 %v2420, %v2318
  %v2446 = vmul.f32 %v2421, %v2323
  %v2447 = vmul.f32 %v2422, %v2328
  %v2448 = vmul.f32 %v2423, %v2333
  %v2449 = vmul.f32 %v2424, %v2338
  %v2450 = vmul.f32 %v2425, %v2343
  %v2451 = vmul.f32 %v2426, %v2426
  %v2452 = vmul.f32 %v2427, %v2427
  %v2453 = vmul.f32 %v2428, %v2428
  %v2454 = vmul.f32 %v2429, %v2429
  %v2455 = vmul.f32 %v2430, %v2430
  %v2456 = vmul.f32 %v2431, %v2431
  %v2457 = vmul.f32 %v2432, %v2432
  %v2458 = vmul.f32 %v2433, %v2433
  %v2459 = vmul.f32 %v2434, %v2434
  %v2460 = vmul.f32 %v2435, %v2435
  %v2461 = vmul.f32 %v2436, %v2436
  %v2462 = vmul.f32 %v2437, %v2437
  %v2463 = vmul.f32 %v2438, %v2438
  %v2464 = vmul.f32 %v2439, %v2439
  %v2465 = vmul.f32 %v2440, %v2440
  %v2466 = vmul.f32 %v2441, %v2441
  %v2467 = vmul.f32 %v2442, %v2442
  %v2468 = vmul.f32 %v2443, %v2443
  %v2469 = vmul.f32 %v2444, %v2444
  %v2470 = vmul.f32 %v2445, %v2445
  %v2471 = vmul.f32 %v2446, %v2446
  %v2472 = vmul.f32 %v2447, %v2447
  %v2473 = vmul.f32 %v2448, %v2448
  %v2474 = vmul.f32 %v2449, %v2449
  %v2475 = vmul.f32 %v2450, %v2450
  %v2476 = vadd.f32 %v2451, %v2452
  %v2477 = vadd.f32 %v2476, %v2453
  %v2478 = vadd.f32 %v2477, %v2454
  %v2479 = vadd.f32 %v2478, %v2455
  %v2480 = vadd.f32 %v2479, %v2456
  %v2481 = vadd.f32 %v2480, %v2457
  %v2482 = vadd.f32 %v2481, %v2458
  %v2483 = vadd.f32 %v2482, %v2459
  %v2484 = vadd.f32 %v2483, %v2460
  %v2485 = vadd.f32 %v2484, %v2461
  %v2486 = vadd.f32 %v2485, %v2462
  %v2487 = vadd.f32 %v2486, %v2463
  %v2488 = vadd.f32 %v2487, %v2464
  %v2489 = vadd.f32 %v2488, %v2465
  %v2490 = vadd.f32 %v2489, %v2466
  %v2491 = vadd.f32 %v2490, %v2467
  %v2492 = vadd.f32 %v2491, %v2468
  %v2493 = vadd.f32 %v2492, %v2469
  %v2494 = vadd.f32 %v2493, %v2470
  %v2495 = vadd.f32 %v2494, %v2471
  %v2496 = vadd.f32 %v2495, %v2472
  %v2497 = vadd.f32 %v2496, %v2473
  %v2498 = vadd.f32 %v2497, %v2474
  %v2499 = vadd.f32 %v2498, %v2475
  %v2500 = vrot.slane %v2499, 4
  %v2501 = vadd.f32 %v2499, %v2500
  %v2502 = vrot.slane %v2501, 2
  %v2503 = vadd.f32 %v2501, %v2502
  %v2504 = vrot.slane %v2503, 1
  %v2505 = vadd.f32 %v2503, %v2504
  %v2506 = vmul.f32 %v2505, 0.0078125
  %v2507 = vld [vmem:[%s2] sm:$0x1]
  %v2508 = vadd.f32 %v2506, 1e-05
  %v2509 = vrsqrt.pop %v2508
  %v2510 = vmul.f32 %v2507, %v2509
  %v2512 = vlaneseq
  %v2513 = vshrl.u32 %v2512, 7
  %v2514 = vsub.s32 0, %v2513
  %v2515 = vrot.slane %v2510, %v2514
  %v2517 = vmul.f32 %v2426, %v2515
  %v2518 = vmul.f32 %v2427, %v2515
  %v2519 = vmul.f32 %v2428, %v2515
  %v2520 = vmul.f32 %v2429, %v2515
  %v2521 = vmul.f32 %v2430, %v2515
  %v2522 = vmul.f32 %v2431, %v2515
  %v2523 = vmul.f32 %v2432, %v2515
  %v2524 = vmul.f32 %v2433, %v2515
  %v2525 = vmul.f32 %v2434, %v2515
  %v2526 = vmul.f32 %v2435, %v2515
  %v2527 = vmul.f32 %v2436, %v2515
  %v2528 = vmul.f32 %v2437, %v2515
  %v2529 = vmul.f32 %v2438, %v2515
  %v2530 = vmul.f32 %v2439, %v2515
  %v2531 = vmul.f32 %v2440, %v2515
  %v2532 = vmul.f32 %v2441, %v2515
  %v2533 = vmul.f32 %v2442, %v2515
  %v2534 = vmul.f32 %v2443, %v2515
  %v2535 = vmul.f32 %v2444, %v2515
  %v2536 = vmul.f32 %v2445, %v2515
  %v2537 = vmul.f32 %v2446, %v2515
  %v2538 = vmul.f32 %v2447, %v2515
  %v2539 = vmul.f32 %v2448, %v2515
  %v2540 = vmul.f32 %v2449, %v2515
  %v2541 = vmul.f32 %v2450, %v2515
  %v2542 = vld [vmem:[%s3] sm:$0x1]
  %v2544 = vlaneseq
  %v2545 = vshrl.u32 %v2544, 7
  %v2546 = vsub.s32 0, %v2545
  %v2547 = vrot.slane %v2542, %v2546
  %v2549 = vadd.f32 %v2517, %v2547
  %v2550 = vadd.f32 %v2518, %v2547
  %v2551 = vadd.f32 %v2519, %v2547
  %v2552 = vadd.f32 %v2520, %v2547
  %v2553 = vadd.f32 %v2521, %v2547
  %v2554 = vadd.f32 %v2522, %v2547
  %v2555 = vadd.f32 %v2523, %v2547
  %v2556 = vadd.f32 %v2524, %v2547
  %v2557 = vadd.f32 %v2525, %v2547
  %v2558 = vadd.f32 %v2526, %v2547
  %v2559 = vadd.f32 %v2527, %v2547
  %v2560 = vadd.f32 %v2528, %v2547
  %v2561 = vadd.f32 %v2529, %v2547
  %v2562 = vadd.f32 %v2530, %v2547
  %v2563 = vadd.f32 %v2531, %v2547
  %v2564 = vadd.f32 %v2532, %v2547
  %v2565 = vadd.f32 %v2533, %v2547
  %v2566 = vadd.f32 %v2534, %v2547
  %v2567 = vadd.f32 %v2535, %v2547
  %v2568 = vadd.f32 %v2536, %v2547
  %v2569 = vadd.f32 %v2537, %v2547
  %v2570 = vadd.f32 %v2538, %v2547
  %v2571 = vadd.f32 %v2539, %v2547
  %v2572 = vadd.f32 %v2540, %v2547
  %v2573 = vadd.f32 %v2541, %v2547
  %v2574 = vmul.f32 %v2549, %v2223
  %v2575 = vmul.f32 %v2550, %v2228
  %v2576 = vmul.f32 %v2551, %v2233
  %v2577 = vmul.f32 %v2552, %v2238
  %v2578 = vmul.f32 %v2553, %v2243
  %v2579 = vmul.f32 %v2554, %v2248
  %v2580 = vmul.f32 %v2555, %v2253
  %v2581 = vmul.f32 %v2556, %v2258
  %v2582 = vmul.f32 %v2557, %v2263
  %v2583 = vmul.f32 %v2558, %v2268
  %v2584 = vmul.f32 %v2559, %v2273
  %v2585 = vmul.f32 %v2560, %v2278
  %v2586 = vmul.f32 %v2561, %v2283
  %v2587 = vmul.f32 %v2562, %v2288
  %v2588 = vmul.f32 %v2563, %v2293
  %v2589 = vmul.f32 %v2564, %v2298
  %v2590 = vmul.f32 %v2565, %v2303
  %v2591 = vmul.f32 %v2566, %v2308
  %v2592 = vmul.f32 %v2567, %v2313
  %v2593 = vmul.f32 %v2568, %v2318
  %v2594 = vmul.f32 %v2569, %v2323
  %v2595 = vmul.f32 %v2570, %v2328
  %v2596 = vmul.f32 %v2571, %v2333
  %v2597 = vmul.f32 %v2572, %v2338
  %v2598 = vmul.f32 %v2573, %v2343
  %v2599 = vmax.f32 %v2574, 0.0
  %v2600 = vmax.f32 %v2575, 0.0
  %v2601 = vmax.f32 %v2576, 0.0
  %v2602 = vmax.f32 %v2577, 0.0
  %v2603 = vmax.f32 %v2578, 0.0
  %v2604 = vmax.f32 %v2579, 0.0
  %v2605 = vmax.f32 %v2580, 0.0
  %v2606 = vmax.f32 %v2581, 0.0
  %v2607 = vmax.f32 %v2582, 0.0
  %v2608 = vmax.f32 %v2583, 0.0
  %v2609 = vmax.f32 %v2584, 0.0
  %v2610 = vmax.f32 %v2585, 0.0
  %v2611 = vmax.f32 %v2586, 0.0
  %v2612 = vmax.f32 %v2587, 0.0
  %v2613 = vmax.f32 %v2588, 0.0
  %v2614 = vmax.f32 %v2589, 0.0
  %v2615 = vmax.f32 %v2590, 0.0
  %v2616 = vmax.f32 %v2591, 0.0
  %v2617 = vmax.f32 %v2592, 0.0
  %v2618 = vmax.f32 %v2593, 0.0
  %v2619 = vmax.f32 %v2594, 0.0
  %v2620 = vmax.f32 %v2595, 0.0
  %v2621 = vmax.f32 %v2596, 0.0
  %v2622 = vmax.f32 %v2597, 0.0
  %v2623 = vmax.f32 %v2598, 0.0
  %2624 = vst [vmem:[#allocation2] sm:$0xff] 0.0
  %2625 = vst [vmem:[#allocation2 + $0x8] sm:$0xff] 0.0
  %2626 = vst [vmem:[#allocation2 + $0x10] sm:$0xff] 0.0
  %2627 = vst [vmem:[#allocation2 + $0x18] sm:$0xff] 0.0
  %2628 = vst [vmem:[#allocation2 + $0x20] sm:$0xff] 0.0
  %2629 = vst [vmem:[#allocation2 + $0x28] sm:$0xff] 0.0
  %2630 = vst [vmem:[#allocation2 + $0x30] sm:$0xff] 0.0
  %2631 = vst [vmem:[#allocation2 + $0x38] sm:$0xff] 0.0
  %2632 = vst [vmem:[#allocation2 + $0x40] sm:$0xff] 0.0
  %2633 = vst [vmem:[#allocation2 + $0x48] sm:$0xff] 0.0
  %2634 = vst [vmem:[#allocation2 + $0x50] sm:$0xff] 0.0
  %2635 = vst [vmem:[#allocation2 + $0x58] sm:$0xff] 0.0
  %2636 = vst [vmem:[#allocation2 + $0x60] sm:$0xff] 0.0
  %2637 = vst [vmem:[#allocation2 + $0x68] sm:$0xff] 0.0
  %2638 = vst [vmem:[#allocation2 + $0x70] sm:$0xff] 0.0
  %2639 = vst [vmem:[#allocation2 + $0x78] sm:$0xff] 0.0
  %2640 = vst [vmem:[#allocation2 + $0x80] sm:$0xff] 0.0
  %2641 = vst [vmem:[#allocation2 + $0x88] sm:$0xff] 0.0
  %2642 = vst [vmem:[#allocation2 + $0x90] sm:$0xff] 0.0
  %2643 = vst [vmem:[#allocation2 + $0x98] sm:$0xff] 0.0
  %2644 = vst [vmem:[#allocation2 + $0xa0] sm:$0xff] 0.0
  %2645 = vst [vmem:[#allocation2 + $0xa8] sm:$0xff] 0.0
  %2646 = vst [vmem:[#allocation2 + $0xb0] sm:$0xff] 0.0
  %2647 = vst [vmem:[#allocation2 + $0xb8] sm:$0xff] 0.0
  %2648 = vst [vmem:[#allocation2 + $0xc0] sm:$0xff] 0.0
  %2649 = vst [vmem:[#allocation2 + $0xc8] sm:$0xff] 0.0
  %2650 = vst [vmem:[#allocation2 + $0xd0] sm:$0xff] 0.0
  %2651 = vst [vmem:[#allocation2 + $0xd8] sm:$0xff] 0.0
  %2652 = vst [vmem:[#allocation2 + $0xe0] sm:$0xff] 0.0
  %2653 = vst [vmem:[#allocation2 + $0x10] sm:$0xff] %v2599
  %2654 = vst [vmem:[#allocation2 + $0x18] sm:$0xff] %v2600
  %2655 = vst [vmem:[#allocation2 + $0x20] sm:$0xff] %v2601
  %2656 = vst [vmem:[#allocation2 + $0x28] sm:$0xff] %v2602
  %2657 = vst [vmem:[#allocation2 + $0x30] sm:$0xff] %v2603
  %2658 = vst [vmem:[#allocation2 + $0x38] sm:$0xff] %v2604
  %2659 = vst [vmem:[#allocation2 + $0x40] sm:$0xff] %v2605
  %2660 = vst [vmem:[#allocation2 + $0x48] sm:$0xff] %v2606
  %2661 = vst [vmem:[#allocation2 + $0x50] sm:$0xff] %v2607
  %2662 = vst [vmem:[#allocation2 + $0x58] sm:$0xff] %v2608
  %2663 = vst [vmem:[#allocation2 + $0x60] sm:$0xff] %v2609
  %2664 = vst [vmem:[#allocation2 + $0x68] sm:$0xff] %v2610
  %2665 = vst [vmem:[#allocation2 + $0x70] sm:$0xff] %v2611
  %2666 = vst [vmem:[#allocation2 + $0x78] sm:$0xff] %v2612
  %2667 = vst [vmem:[#allocation2 + $0x80] sm:$0xff] %v2613
  %2668 = vst [vmem:[#allocation2 + $0x88] sm:$0xff] %v2614
  %2669 = vst [vmem:[#allocation2 + $0x90] sm:$0xff] %v2615
  %2670 = vst [vmem:[#allocation2 + $0x98] sm:$0xff] %v2616
  %2671 = vst [vmem:[#allocation2 + $0xa0] sm:$0xff] %v2617
  %2672 = vst [vmem:[#allocation2 + $0xa8] sm:$0xff] %v2618
  %2673 = vst [vmem:[#allocation2 + $0xb0] sm:$0xff] %v2619
  %2674 = vst [vmem:[#allocation2 + $0xb8] sm:$0xff] %v2620
  %2675 = vst [vmem:[#allocation2 + $0xc0] sm:$0xff] %v2621
  %2676 = vst [vmem:[#allocation2 + $0xc8] sm:$0xff] %v2622
  %2677 = vst [vmem:[#allocation2 + $0xd0] sm:$0xff] %v2623
  %v2678 = vld [vmem:[%s0 + $0x10] sm:$0xff]
  %v2679 = vld [vmem:[%s0 + $0x18] sm:$0xff]
  %v2680 = vld [vmem:[%s0 + $0x20] sm:$0xff]
  %v2681 = vld [vmem:[%s0 + $0x28] sm:$0xff]
  %v2682 = vld [vmem:[%s0 + $0x30] sm:$0xff]
  %v2683 = vld [vmem:[%s0 + $0x38] sm:$0xff]
  %v2684 = vld [vmem:[%s0 + $0x40] sm:$0xff]
  %v2685 = vld [vmem:[%s0 + $0x48] sm:$0xff]
  %v2686 = vld [vmem:[%s0 + $0x50] sm:$0xff]
  %v2687 = vld [vmem:[%s0 + $0x58] sm:$0xff]
  %v2688 = vld [vmem:[%s0 + $0x60] sm:$0xff]
  %v2689 = vld [vmem:[%s0 + $0x68] sm:$0xff]
  %v2690 = vld [vmem:[%s0 + $0x70] sm:$0xff]
  %v2691 = vld [vmem:[%s0 + $0x78] sm:$0xff]
  %v2692 = vld [vmem:[%s0 + $0x80] sm:$0xff]
  %v2693 = vld [vmem:[%s0 + $0x88] sm:$0xff]
  %v2694 = vld [vmem:[%s0 + $0x90] sm:$0xff]
  %v2695 = vld [vmem:[%s0 + $0x98] sm:$0xff]
  %v2696 = vld [vmem:[%s0 + $0xa0] sm:$0xff]
  %v2697 = vld [vmem:[%s0 + $0xa8] sm:$0xff]
  %v2698 = vld [vmem:[%s0 + $0xb0] sm:$0xff]
  %v2699 = vld [vmem:[%s0 + $0xb8] sm:$0xff]
  %v2700 = vld [vmem:[%s0 + $0xc0] sm:$0xff]
  %v2701 = vld [vmem:[%s0 + $0xc8] sm:$0xff]
  %v2702 = vld [vmem:[%s0 + $0xd0] sm:$0xff]
  %v2703 = vld [vmem:[#allocation2 + $0x5] sm:$0xff]
  %v2704 = vld [vmem:[#allocation2 + $0xd] sm:$0xff]
  %v2705 = vld [vmem:[#allocation2 + $0x15] sm:$0xff]
  %v2706 = vld [vmem:[#allocation2 + $0x1d] sm:$0xff]
  %v2707 = vld [vmem:[#allocation2 + $0x25] sm:$0xff]
  %v2708 = vld [vmem:[#allocation2 + $0x2d] sm:$0xff]
  %v2709 = vld [vmem:[#allocation2 + $0x35] sm:$0xff]
  %v2710 = vld [vmem:[#allocation2 + $0x3d] sm:$0xff]
  %v2711 = vld [vmem:[#allocation2 + $0x45] sm:$0xff]
  %v2712 = vld [vmem:[#allocation2 + $0x4d] sm:$0xff]
  %v2713 = vld [vmem:[#allocation2 + $0x55] sm:$0xff]
  %v2714 = vld [vmem:[#allocation2 + $0x5d] sm:$0xff]
  %v2715 = vld [vmem:[#allocation2 + $0x65] sm:$0xff]
  %v2716 = vld [vmem:[#allocation2 + $0x6d] sm:$0xff]
  %v2717 = vld [vmem:[#allocation2 + $0x75] sm:$0xff]
  %v2718 = vld [vmem:[#allocation2 + $0x7d] sm:$0xff]
  %v2719 = vld [vmem:[#allocation2 + $0x85] sm:$0xff]
  %v2720 = vld [vmem:[#allocation2 + $0x8d] sm:$0xff]
  %v2721 = vld [vmem:[#allocation2 + $0x95] sm:$0xff]
  %v2722 = vld [vmem:[#allocation2 + $0x9d] sm:$0xff]
  %v2723 = vld [vmem:[#allocation2 + $0xa5] sm:$0xff]
  %v2724 = vld [vmem:[#allocation2 + $0xad] sm:$0xff]
  %v2725 = vld [vmem:[#allocation2 + $0xb5] sm:$0xff]
  %v2726 = vld [vmem:[#allocation2 + $0xbd] sm:$0xff]
  %v2727 = vld [vmem:[#allocation2 + $0xc5] sm:$0xff]
  %v2728 = vpack.c.bf16 %v2704, %v2703
  %v2729 = vpack.c.bf16 %v2706, %v2705
  %v2730 = vpack.c.bf16 %v2708, %v2707
  %v2731 = vpack.c.bf16 %v2710, %v2709
  %v2732 = vpack.c.bf16 %v2712, %v2711
  %v2733 = vpack.c.bf16 %v2714, %v2713
  %v2734 = vpack.c.bf16 %v2716, %v2715
  %v2735 = vpack.c.bf16 %v2718, %v2717
  %v2736 = vpack.c.bf16 %v2720, %v2719
  %v2737 = vpack.c.bf16 %v2722, %v2721
  %v2738 = vpack.c.bf16 %v2724, %v2723
  %v2739 = vpack.c.bf16 %v2726, %v2725
  %v2740 = vpack.c.bf16 %v2727, %v2727
  %v2741 = vld [vmem:[%s4] sm:$0xf]
  %v2742 = vld [vmem:[%s4 + $0x4] sm:$0xf]
  %v2743 = vld [vmem:[#allocation2 + $0x6] sm:$0xff]
  %v2744 = vld [vmem:[#allocation2 + $0xe] sm:$0xff]
  %v2745 = vld [vmem:[#allocation2 + $0x16] sm:$0xff]
  %v2746 = vld [vmem:[#allocation2 + $0x1e] sm:$0xff]
  %v2747 = vld [vmem:[#allocation2 + $0x26] sm:$0xff]
  %v2748 = vld [vmem:[#allocation2 + $0x2e] sm:$0xff]
  %v2749 = vld [vmem:[#allocation2 + $0x36] sm:$0xff]
  %v2750 = vld [vmem:[#allocation2 + $0x3e] sm:$0xff]
  %v2751 = vld [vmem:[#allocation2 + $0x46] sm:$0xff]
  %v2752 = vld [vmem:[#allocation2 + $0x4e] sm:$0xff]
  %v2753 = vld [vmem:[#allocation2 + $0x56] sm:$0xff]
  %v2754 = vld [vmem:[#allocation2 + $0x5e] sm:$0xff]
  %v2755 = vld [vmem:[#allocation2 + $0x66] sm:$0xff]
  %v2756 = vld [vmem:[#allocation2 + $0x6e] sm:$0xff]
  %v2757 = vld [vmem:[#allocation2 + $0x76] sm:$0xff]
  %v2758 = vld [vmem:[#allocation2 + $0x7e] sm:$0xff]
  %v2759 = vld [vmem:[#allocation2 + $0x86] sm:$0xff]
  %v2760 = vld [vmem:[#allocation2 + $0x8e] sm:$0xff]
  %v2761 = vld [vmem:[#allocation2 + $0x96] sm:$0xff]
  %v2762 = vld [vmem:[#allocation2 + $0x9e] sm:$0xff]
  %v2763 = vld [vmem:[#allocation2 + $0xa6] sm:$0xff]
  %v2764 = vld [vmem:[#allocation2 + $0xae] sm:$0xff]
  %v2765 = vld [vmem:[#allocation2 + $0xb6] sm:$0xff]
  %v2766 = vld [vmem:[#allocation2 + $0xbe] sm:$0xff]
  %v2767 = vld [vmem:[#allocation2 + $0xc6] sm:$0xff]
  %v2768 = vpack.c.bf16 %v2744, %v2743
  %v2769 = vpack.c.bf16 %v2746, %v2745
  %v2770 = vpack.c.bf16 %v2748, %v2747
  %v2771 = vpack.c.bf16 %v2750, %v2749
  %v2772 = vpack.c.bf16 %v2752, %v2751
  %v2773 = vpack.c.bf16 %v2754, %v2753
  %v2774 = vpack.c.bf16 %v2756, %v2755
  %v2775 = vpack.c.bf16 %v2758, %v2757
  %v2776 = vpack.c.bf16 %v2760, %v2759
  %v2777 = vpack.c.bf16 %v2762, %v2761
  %v2778 = vpack.c.bf16 %v2764, %v2763
  %v2779 = vpack.c.bf16 %v2766, %v2765
  %v2780 = vpack.c.bf16 %v2767, %v2767
  %v2781 = vld [vmem:[%s4 + $0x8] sm:$0xf]
  %v2782 = vld [vmem:[%s4 + $0xc] sm:$0xf]
  %v2785 = vunpack.c.l.b16 %v2781
  %v2786 = vunpack.c.l.b16 %v2782
  %v2787 = vpack.c.b16 %v2786, %v2785
  %v2790 = vsel %vm141, %v2768, 0
  %v2793 = vsel %vm141, %v2769, 0
  %v2796 = vsel %vm141, %v2770, 0
  %v2799 = vsel %vm141, %v2771, 0
  %v2802 = vsel %vm141, %v2772, 0
  %v2805 = vsel %vm141, %v2773, 0
  %v2808 = vsel %vm141, %v2774, 0
  %v2811 = vsel %vm141, %v2775, 0
  %v2814 = vsel %vm141, %v2776, 0
  %v2817 = vsel %vm141, %v2777, 0
  %v2820 = vsel %vm141, %v2778, 0
  %v2823 = vsel %vm141, %v2779, 0
  %v2826 = vsel %vm141, %v2780, 0
  %2828 = vmatprep.subr.bf16.mxu0 0
  %2829 = vmatpush1.bf16.msra.mxu0 %v2787
  %2830 = vmatprep.subr.bf16.mxu0 0
  %2831 = vmatpush1.bf16.msra.mxu0 0
  %2832 = vmatprep.subr.bf16.mxu0 0
  %2833 = vmatpush1.bf16.msra.mxu0 0
  %2834 = vmatprep.subr.bf16.mxu0 0
  %2835 = vmatpush1.bf16.msra.mxu0 0
  %2836 = vmatprep.subr.bf16.mxu0 0
  %2837 = vmatpush1.bf16.msra.mxu0 0
  %2838 = vmatprep.subr.bf16.mxu0 0
  %2839 = vmatpush1.bf16.msra.mxu0 0
  %2840 = vmatprep.subr.bf16.mxu0 0
  %2841 = vmatpush1.bf16.msra.mxu0 0
  %2842 = vmatprep.subr.bf16.mxu0 0
  %2843 = vmatpush1.bf16.msra.mxu0 0
  %2844 = vmatprep.subr.bf16.mxu0 0
  %2845 = vmatpush1.bf16.msra.mxu0 0
  %2846 = vmatprep.subr.bf16.mxu0 0
  %2847 = vmatpush1.bf16.msra.mxu0 0
  %2848 = vmatprep.subr.bf16.mxu0 0
  %2849 = vmatpush1.bf16.msra.mxu0 0
  %2850 = vmatprep.subr.bf16.mxu0 0
  %2851 = vmatpush1.bf16.msra.mxu0 0
  %2852 = vmatprep.subr.bf16.mxu0 0
  %2853 = vmatpush1.bf16.msra.mxu0 0
  %2854 = vmatprep.subr.bf16.mxu0 0
  %2855 = vmatpush1.bf16.msra.mxu0 0
  %2856 = vmatprep.subr.bf16.mxu0 0
  %2857 = vmatpush1.bf16.msra.mxu0 0
  %2858 = vmatprep.subr.bf16.mxu0 0
  %2859 = vmatpush1.bf16.msra.mxu0 0
  %2860 = vmatprep.mubr.bf16.mxu0 0
  %2861 = vmatmul.mubr.bf16.gmra.mrb[0].mxu0 %v2790
  %v2862 = vpop.f32.mrb[0].mxu0
  %v2863 = vadd.f32 0.0, %v2862
  %v2864 = vpop.f32.mrb[0].mxu0
  %v2865 = vpop.f32.mrb[0].mxu0
  %v2866 = vadd.f32 0.0, %v2865
  %v2867 = vpop.f32.mrb[0].mxu0
  %2868 = vmatprep.mubr.bf16.mxu0 0
  %2869 = vmatmul.mubr.bf16.gmra.mrb[0].mxu0 %v2793
  %v2870 = vpop.f32.mrb[0].mxu0
  %v2871 = vadd.f32 0.0, %v2870
  %v2872 = vpop.f32.mrb[0].mxu0
  %v2873 = vpop.f32.mrb[0].mxu0
  %v2874 = vadd.f32 0.0, %v2873
  %v2875 = vpop.f32.mrb[0].mxu0
  %2876 = vmatprep.mubr.bf16.mxu0 0
  %2877 = vmatmul.mubr.bf16.gmra.mrb[0].mxu0 %v2796
  %v2878 = vpop.f32.mrb[0].mxu0
  %v2879 = vadd.f32 0.0, %v2878
  %v2880 = vpop.f32.mrb[0].mxu0
  %v2881 = vpop.f32.mrb[0].mxu0
  %v2882 = vadd.f32 0.0, %v2881
  %v2883 = vpop.f32.mrb[0].mxu0
  %2884 = vmatprep.mubr.bf16.mxu0 0
  %2885 = vmatmul.mubr.bf16.gmra.mrb[0].mxu0 %v2799
  %v2886 = vpop.f32.mrb[0].mxu0
  %v2887 = vadd.f32 0.0, %v2886
  %v2888 = vpop.f32.mrb[0].mxu0
  %v2889 = vpop.f32.mrb[0].mxu0
  %v2890 = vadd.f32 0.0, %v2889
  %v2891 = vpop.f32.mrb[0].mxu0
  %2892 = vmatprep.mubr.bf16.mxu0 0
  %2893 = vmatmul.mubr.bf16.gmra.mrb[0].mxu0 %v2802
  %v2894 = vpop.f32.mrb[0].mxu0
  %v2895 = vadd.f32 0.0, %v2894
  %v2896 = vpop.f32.mrb[0].mxu0
  %v2897 = vpop.f32.mrb[0].mxu0
  %v2898 = vadd.f32 0.0, %v2897
  %v2899 = vpop.f32.mrb[0].mxu0
  %2900 = vmatprep.mubr.bf16.mxu0 0
  %2901 = vmatmul.mubr.bf16.gmra.mrb[0].mxu0 %v2805
  %v2902 = vpop.f32.mrb[0].mxu0
  %v2903 = vadd.f32 0.0, %v2902
  %v2904 = vpop.f32.mrb[0].mxu0
  %v2905 = vpop.f32.mrb[0].mxu0
  %v2906 = vadd.f32 0.0, %v2905
  %v2907 = vpop.f32.mrb[0].mxu0
  %2908 = vmatprep.mubr.bf16.mxu0 0
  %2909 = vmatmul.mubr.bf16.gmra.mrb[0].mxu0 %v2808
  %v2910 = vpop.f32.mrb[0].mxu0
  %v2911 = vadd.f32 0.0, %v2910
  %v2912 = vpop.f32.mrb[0].mxu0
  %v2913 = vpop.f32.mrb[0].mxu0
  %v2914 = vadd.f32 0.0, %v2913
  %v2915 = vpop.f32.mrb[0].mxu0
  %2916 = vmatprep.mubr.bf16.mxu0 0
  %2917 = vmatmul.mubr.bf16.gmra.mrb[0].mxu0 %v2811
  %v2918 = vpop.f32.mrb[0].mxu0
  %v2919 = vadd.f32 0.0, %v2918
  %v2920 = vpop.f32.mrb[0].mxu0
  %v2921 = vpop.f32.mrb[0].mxu0
  %v2922 = vadd.f32 0.0, %v2921
  %v2923 = vpop.f32.mrb[0].mxu0
  %2924 = vmatprep.mubr.bf16.mxu0 0
  %2925 = vmatmul.mubr.bf16.gmra.mrb[0].mxu0 %v2814
  %v2926 = vpop.f32.mrb[0].mxu0
  %v2927 = vadd.f32 0.0, %v2926
  %v2928 = vpop.f32.mrb[0].mxu0
  %v2929 = vpop.f32.mrb[0].mxu0
  %v2930 = vadd.f32 0.0, %v2929
  %v2931 = vpop.f32.mrb[0].mxu0
  %2932 = vmatprep.mubr.bf16.mxu0 0
  %2933 = vmatmul.mubr.bf16.gmra.mrb[0].mxu0 %v2817
  %v2934 = vpop.f32.mrb[0].mxu0
  %v2935 = vadd.f32 0.0, %v2934
  %v2936 = vpop.f32.mrb[0].mxu0
  %v2937 = vpop.f32.mrb[0].mxu0
  %v2938 = vadd.f32 0.0, %v2937
  %v2939 = vpop.f32.mrb[0].mxu0
  %2940 = vmatprep.mubr.bf16.mxu0 0
  %2941 = vmatmul.mubr.bf16.gmra.mrb[0].mxu0 %v2820
  %v2942 = vpop.f32.mrb[0].mxu0
  %v2943 = vadd.f32 0.0, %v2942
  %v2944 = vpop.f32.mrb[0].mxu0
  %v2945 = vpop.f32.mrb[0].mxu0
  %v2946 = vadd.f32 0.0, %v2945
  %v2947 = vpop.f32.mrb[0].mxu0
  %2948 = vmatprep.mubr.bf16.mxu0 0
  %2949 = vmatmul.mubr.bf16.gmra.mrb[0].mxu0 %v2823
  %v2950 = vpop.f32.mrb[0].mxu0
  %v2951 = vadd.f32 0.0, %v2950
  %v2952 = vpop.f32.mrb[0].mxu0
  %v2953 = vpop.f32.mrb[0].mxu0
  %v2954 = vadd.f32 0.0, %v2953
  %v2955 = vpop.f32.mrb[0].mxu0
  %2956 = vmatprep.mubr.bf16.mxu0 0
  %2957 = vmatmul.mubr.bf16.gmra.mrb[0].mxu0 %v2826
  %v2958 = vpop.f32.mrb[0].mxu0
  %v2959 = vadd.f32 0.0, %v2958
  %v2960 = vpop.f32.mrb[0].mxu0
  %v2961 = vpop.f32.mrb[0].mxu0
  %v2962 = vpop.f32.mrb[0].mxu0
  %2963 = vdwg.mxu0
  %v2966 = vunpack.c.l.b16 %v2741
  %v2967 = vunpack.c.l.b16 %v2742
  %v2968 = vpack.c.b16 %v2967, %v2966
  %v2971 = vsel %vm141, %v2728, 0
  %v2974 = vsel %vm141, %v2729, 0
  %v2977 = vsel %vm141, %v2730, 0
  %v2980 = vsel %vm141, %v2731, 0
  %v2983 = vsel %vm141, %v2732, 0
  %v2986 = vsel %vm141, %v2733, 0
  %v2989 = vsel %vm141, %v2734, 0
  %v2992 = vsel %vm141, %v2735, 0
  %v2995 = vsel %vm141, %v2736, 0
  %v2998 = vsel %vm141, %v2737, 0
  %v3001 = vsel %vm141, %v2738, 0
  %v3004 = vsel %vm141, %v2739, 0
  %v3007 = vsel %vm141, %v2740, 0
  %3009 = vmatprep.subr.bf16.mxu0 0
  %3010 = vmatpush1.bf16.msra.mxu0 %v2968
  %3011 = vmatprep.subr.bf16.mxu0 0
  %3012 = vmatpush1.bf16.msra.mxu0 0
  %3013 = vmatprep.subr.bf16.mxu0 0
  %3014 = vmatpush1.bf16.msra.mxu0 0
  %3015 = vmatprep.subr.bf16.mxu0 0
  %3016 = vmatpush1.bf16.msra.mxu0 0
  %3017 = vmatprep.subr.bf16.mxu0 0
  %3018 = vmatpush1.bf16.msra.mxu0 0
  %3019 = vmatprep.subr.bf16.mxu0 0
  %3020 = vmatpush1.bf16.msra.mxu0 0
  %3021 = vmatprep.subr.bf16.mxu0 0
  %3022 = vmatpush1.bf16.msra.mxu0 0
  %3023 = vmatprep.subr.bf16.mxu0 0
  %3024 = vmatpush1.bf16.msra.mxu0 0
  %3025 = vmatprep.subr.bf16.mxu0 0
  %3026 = vmatpush1.bf16.msra.mxu0 0
  %3027 = vmatprep.subr.bf16.mxu0 0
  %3028 = vmatpush1.bf16.msra.mxu0 0
  %3029 = vmatprep.subr.bf16.mxu0 0
  %3030 = vmatpush1.bf16.msra.mxu0 0
  %3031 = vmatprep.subr.bf16.mxu0 0
  %3032 = vmatpush1.bf16.msra.mxu0 0
  %3033 = vmatprep.subr.bf16.mxu0 0
  %3034 = vmatpush1.bf16.msra.mxu0 0
  %3035 = vmatprep.subr.bf16.mxu0 0
  %3036 = vmatpush1.bf16.msra.mxu0 0
  %3037 = vmatprep.subr.bf16.mxu0 0
  %3038 = vmatpush1.bf16.msra.mxu0 0
  %3039 = vmatprep.subr.bf16.mxu0 0
  %3040 = vmatpush1.bf16.msra.mxu0 0
  %3041 = vmatprep.mubr.bf16.mxu0 0
  %3042 = vmatmul.mubr.bf16.gmra.mrb[0].mxu0 %v2971
  %v3043 = vpop.f32.mrb[0].mxu0
  %v3044 = vadd.f32 %v2863, %v3043
  %v3045 = vpop.f32.mrb[0].mxu0
  %v3046 = vpop.f32.mrb[0].mxu0
  %v3047 = vadd.f32 %v2866, %v3046
  %v3048 = vpop.f32.mrb[0].mxu0
  %3049 = vmatprep.mubr.bf16.mxu0 0
  %3050 = vmatmul.mubr.bf16.gmra.mrb[0].mxu0 %v2974
  %v3051 = vpop.f32.mrb[0].mxu0
  %v3052 = vadd.f32 %v2871, %v3051
  %v3053 = vpop.f32.mrb[0].mxu0
  %v3054 = vpop.f32.mrb[0].mxu0
  %v3055 = vadd.f32 %v2874, %v3054
  %v3056 = vpop.f32.mrb[0].mxu0
  %3057 = vmatprep.mubr.bf16.mxu0 0
  %3058 = vmatmul.mubr.bf16.gmra.mrb[0].mxu0 %v2977
  %v3059 = vpop.f32.mrb[0].mxu0
  %v3060 = vadd.f32 %v2879, %v3059
  %v3061 = vpop.f32.mrb[0].mxu0
  %v3062 = vpop.f32.mrb[0].mxu0
  %v3063 = vadd.f32 %v2882, %v3062
  %v3064 = vpop.f32.mrb[0].mxu0
  %3065 = vmatprep.mubr.bf16.mxu0 0
  %3066 = vmatmul.mubr.bf16.gmra.mrb[0].mxu0 %v2980
  %v3067 = vpop.f32.mrb[0].mxu0
  %v3068 = vadd.f32 %v2887, %v3067
  %v3069 = vpop.f32.mrb[0].mxu0
  %v3070 = vpop.f32.mrb[0].mxu0
  %v3071 = vadd.f32 %v2890, %v3070
  %v3072 = vpop.f32.mrb[0].mxu0
  %3073 = vmatprep.mubr.bf16.mxu0 0
  %3074 = vmatmul.mubr.bf16.gmra.mrb[0].mxu0 %v2983
  %v3075 = vpop.f32.mrb[0].mxu0
  %v3076 = vadd.f32 %v2895, %v3075
  %v3077 = vpop.f32.mrb[0].mxu0
  %v3078 = vpop.f32.mrb[0].mxu0
  %v3079 = vadd.f32 %v2898, %v3078
  %v3080 = vpop.f32.mrb[0].mxu0
  %3081 = vmatprep.mubr.bf16.mxu0 0
  %3082 = vmatmul.mubr.bf16.gmra.mrb[0].mxu0 %v2986
  %v3083 = vpop.f32.mrb[0].mxu0
  %v3084 = vadd.f32 %v2903, %v3083
  %v3085 = vpop.f32.mrb[0].mxu0
  %v3086 = vpop.f32.mrb[0].mxu0
  %v3087 = vadd.f32 %v2906, %v3086
  %v3088 = vpop.f32.mrb[0].mxu0
  %3089 = vmatprep.mubr.bf16.mxu0 0
  %3090 = vmatmul.mubr.bf16.gmra.mrb[0].mxu0 %v2989
  %v3091 = vpop.f32.mrb[0].mxu0
  %v3092 = vadd.f32 %v2911, %v3091
  %v3093 = vpop.f32.mrb[0].mxu0
  %v3094 = vpop.f32.mrb[0].mxu0
  %v3095 = vadd.f32 %v2914, %v3094
  %v3096 = vpop.f32.mrb[0].mxu0
  %3097 = vmatprep.mubr.bf16.mxu0 0
  %3098 = vmatmul.mubr.bf16.gmra.mrb[0].mxu0 %v2992
  %v3099 = vpop.f32.mrb[0].mxu0
  %v3100 = vadd.f32 %v2919, %v3099
  %v3101 = vpop.f32.mrb[0].mxu0
  %v3102 = vpop.f32.mrb[0].mxu0
  %v3103 = vadd.f32 %v2922, %v3102
  %v3104 = vpop.f32.mrb[0].mxu0
  %3105 = vmatprep.mubr.bf16.mxu0 0
  %3106 = vmatmul.mubr.bf16.gmra.mrb[0].mxu0 %v2995
  %v3107 = vpop.f32.mrb[0].mxu0
  %v3108 = vadd.f32 %v2927, %v3107
  %v3109 = vpop.f32.mrb[0].mxu0
  %v3110 = vpop.f32.mrb[0].mxu0
  %v3111 = vadd.f32 %v2930, %v3110
  %v3112 = vpop.f32.mrb[0].mxu0
  %3113 = vmatprep.mubr.bf16.mxu0 0
  %3114 = vmatmul.mubr.bf16.gmra.mrb[0].mxu0 %v2998
  %v3115 = vpop.f32.mrb[0].mxu0
  %v3116 = vadd.f32 %v2935, %v3115
  %v3117 = vpop.f32.mrb[0].mxu0
  %v3118 = vpop.f32.mrb[0].mxu0
  %v3119 = vadd.f32 %v2938, %v3118
  %v3120 = vpop.f32.mrb[0].mxu0
  %3121 = vmatprep.mubr.bf16.mxu0 0
  %3122 = vmatmul.mubr.bf16.gmra.mrb[0].mxu0 %v3001
  %v3123 = vpop.f32.mrb[0].mxu0
  %v3124 = vadd.f32 %v2943, %v3123
  %v3125 = vpop.f32.mrb[0].mxu0
  %v3126 = vpop.f32.mrb[0].mxu0
  %v3127 = vadd.f32 %v2946, %v3126
  %v3128 = vpop.f32.mrb[0].mxu0
  %3129 = vmatprep.mubr.bf16.mxu0 0
  %3130 = vmatmul.mubr.bf16.gmra.mrb[0].mxu0 %v3004
  %v3131 = vpop.f32.mrb[0].mxu0
  %v3132 = vadd.f32 %v2951, %v3131
  %v3133 = vpop.f32.mrb[0].mxu0
  %v3134 = vpop.f32.mrb[0].mxu0
  %v3135 = vadd.f32 %v2954, %v3134
  %v3136 = vpop.f32.mrb[0].mxu0
  %3137 = vmatprep.mubr.bf16.mxu0 0
  %3138 = vmatmul.mubr.bf16.gmra.mrb[0].mxu0 %v3007
  %v3139 = vpop.f32.mrb[0].mxu0
  %v3140 = vadd.f32 %v2959, %v3139
  %v3141 = vpop.f32.mrb[0].mxu0
  %v3142 = vpop.f32.mrb[0].mxu0
  %v3143 = vpop.f32.mrb[0].mxu0
  %3144 = vdwg.mxu0
  %v3145 = vld [vmem:[#allocation2 + $0x7] sm:$0xff]
  %v3146 = vld [vmem:[#allocation2 + $0xf] sm:$0xff]
  %v3147 = vld [vmem:[#allocation2 + $0x17] sm:$0xff]
  %v3148 = vld [vmem:[#allocation2 + $0x1f] sm:$0xff]
  %v3149 = vld [vmem:[#allocation2 + $0x27] sm:$0xff]
  %v3150 = vld [vmem:[#allocation2 + $0x2f] sm:$0xff]
  %v3151 = vld [vmem:[#allocation2 + $0x37] sm:$0xff]
  %v3152 = vld [vmem:[#allocation2 + $0x3f] sm:$0xff]
  %v3153 = vld [vmem:[#allocation2 + $0x47] sm:$0xff]
  %v3154 = vld [vmem:[#allocation2 + $0x4f] sm:$0xff]
  %v3155 = vld [vmem:[#allocation2 + $0x57] sm:$0xff]
  %v3156 = vld [vmem:[#allocation2 + $0x5f] sm:$0xff]
  %v3157 = vld [vmem:[#allocation2 + $0x67] sm:$0xff]
  %v3158 = vld [vmem:[#allocation2 + $0x6f] sm:$0xff]
  %v3159 = vld [vmem:[#allocation2 + $0x77] sm:$0xff]
  %v3160 = vld [vmem:[#allocation2 + $0x7f] sm:$0xff]
  %v3161 = vld [vmem:[#allocation2 + $0x87] sm:$0xff]
  %v3162 = vld [vmem:[#allocation2 + $0x8f] sm:$0xff]
  %v3163 = vld [vmem:[#allocation2 + $0x97] sm:$0xff]
  %v3164 = vld [vmem:[#allocation2 + $0x9f] sm:$0xff]
  %v3165 = vld [vmem:[#allocation2 + $0xa7] sm:$0xff]
  %v3166 = vld [vmem:[#allocation2 + $0xaf] sm:$0xff]
  %v3167 = vld [vmem:[#allocation2 + $0xb7] sm:$0xff]
  %v3168 = vld [vmem:[#allocation2 + $0xbf] sm:$0xff]
  %v3169 = vld [vmem:[#allocation2 + $0xc7] sm:$0xff]
  %v3170 = vpack.c.bf16 %v3146, %v3145
  %v3171 = vpack.c.bf16 %v3148, %v3147
  %v3172 = vpack.c.bf16 %v3150, %v3149
  %v3173 = vpack.c.bf16 %v3152, %v3151
  %v3174 = vpack.c.bf16 %v3154, %v3153
  %v3175 = vpack.c.bf16 %v3156, %v3155
  %v3176 = vpack.c.bf16 %v3158, %v3157
  %v3177 = vpack.c.bf16 %v3160, %v3159
  %v3178 = vpack.c.bf16 %v3162, %v3161
  %v3179 = vpack.c.bf16 %v3164, %v3163
  %v3180 = vpack.c.bf16 %v3166, %v3165
  %v3181 = vpack.c.bf16 %v3168, %v3167
  %v3182 = vpack.c.bf16 %v3169, %v3169
  %v3183 = vld [vmem:[%s4 + $0x10] sm:$0xf]
  %v3184 = vld [vmem:[%s4 + $0x14] sm:$0xf]
  %v3187 = vunpack.c.l.b16 %v3183
  %v3188 = vunpack.c.l.b16 %v3184
  %v3189 = vpack.c.b16 %v3188, %v3187
  %v3192 = vsel %vm141, %v3170, 0
  %v3195 = vsel %vm141, %v3171, 0
  %v3198 = vsel %vm141, %v3172, 0
  %v3201 = vsel %vm141, %v3173, 0
  %v3204 = vsel %vm141, %v3174, 0
  %v3207 = vsel %vm141, %v3175, 0
  %v3210 = vsel %vm141, %v3176, 0
  %v3213 = vsel %vm141, %v3177, 0
  %v3216 = vsel %vm141, %v3178, 0
  %v3219 = vsel %vm141, %v3179, 0
  %v3222 = vsel %vm141, %v3180, 0
  %v3225 = vsel %vm141, %v3181, 0
  %v3228 = vsel %vm141, %v3182, 0
  %3230 = vmatprep.subr.bf16.mxu0 0
  %3231 = vmatpush1.bf16.msra.mxu0 %v3189
  %3232 = vmatprep.subr.bf16.mxu0 0
  %3233 = vmatpush1.bf16.msra.mxu0 0
  %3234 = vmatprep.subr.bf16.mxu0 0
  %3235 = vmatpush1.bf16.msra.mxu0 0
  %3236 = vmatprep.subr.bf16.mxu0 0
  %3237 = vmatpush1.bf16.msra.mxu0 0
  %3238 = vmatprep.subr.bf16.mxu0 0
  %3239 = vmatpush1.bf16.msra.mxu0 0
  %3240 = vmatprep.subr.bf16.mxu0 0
  %3241 = vmatpush1.bf16.msra.mxu0 0
  %3242 = vmatprep.subr.bf16.mxu0 0
  %3243 = vmatpush1.bf16.msra.mxu0 0
  %3244 = vmatprep.subr.bf16.mxu0 0
  %3245 = vmatpush1.bf16.msra.mxu0 0
  %3246 = vmatprep.subr.bf16.mxu0 0
  %3247 = vmatpush1.bf16.msra.mxu0 0
  %3248 = vmatprep.subr.bf16.mxu0 0
  %3249 = vmatpush1.bf16.msra.mxu0 0
  %3250 = vmatprep.subr.bf16.mxu0 0
  %3251 = vmatpush1.bf16.msra.mxu0 0
  %3252 = vmatprep.subr.bf16.mxu0 0
  %3253 = vmatpush1.bf16.msra.mxu0 0
  %3254 = vmatprep.subr.bf16.mxu0 0
  %3255 = vmatpush1.bf16.msra.mxu0 0
  %3256 = vmatprep.subr.bf16.mxu0 0
  %3257 = vmatpush1.bf16.msra.mxu0 0
  %3258 = vmatprep.subr.bf16.mxu0 0
  %3259 = vmatpush1.bf16.msra.mxu0 0
  %3260 = vmatprep.subr.bf16.mxu0 0
  %3261 = vmatpush1.bf16.msra.mxu0 0
  %3262 = vmatprep.mubr.bf16.mxu0 0
  %3263 = vmatmul.mubr.bf16.gmra.mrb[0].mxu0 %v3192
  %v3264 = vpop.f32.mrb[0].mxu0
  %v3265 = vadd.f32 0.0, %v3264
  %v3266 = vpop.f32.mrb[0].mxu0
  %v3267 = vpop.f32.mrb[0].mxu0
  %v3268 = vadd.f32 0.0, %v3267
  %v3269 = vpop.f32.mrb[0].mxu0
  %3270 = vmatprep.mubr.bf16.mxu0 0
  %3271 = vmatmul.mubr.bf16.gmra.mrb[0].mxu0 %v3195
  %v3272 = vpop.f32.mrb[0].mxu0
  %v3273 = vadd.f32 0.0, %v3272
  %v3274 = vpop.f32.mrb[0].mxu0
  %v3275 = vpop.f32.mrb[0].mxu0
  %v3276 = vadd.f32 0.0, %v3275
  %v3277 = vpop.f32.mrb[0].mxu0
  %3278 = vmatprep.mubr.bf16.mxu0 0
  %3279 = vmatmul.mubr.bf16.gmra.mrb[0].mxu0 %v3198
  %v3280 = vpop.f32.mrb[0].mxu0
  %v3281 = vadd.f32 0.0, %v3280
  %v3282 = vpop.f32.mrb[0].mxu0
  %v3283 = vpop.f32.mrb[0].mxu0
  %v3284 = vadd.f32 0.0, %v3283
  %v3285 = vpop.f32.mrb[0].mxu0
  %3286 = vmatprep.mubr.bf16.mxu0 0
  %3287 = vmatmul.mubr.bf16.gmra.mrb[0].mxu0 %v3201
  %v3288 = vpop.f32.mrb[0].mxu0
  %v3289 = vadd.f32 0.0, %v3288
  %v3290 = vpop.f32.mrb[0].mxu0
  %v3291 = vpop.f32.mrb[0].mxu0
  %v3292 = vadd.f32 0.0, %v3291
  %v3293 = vpop.f32.mrb[0].mxu0
  %3294 = vmatprep.mubr.bf16.mxu0 0
  %3295 = vmatmul.mubr.bf16.gmra.mrb[0].mxu0 %v3204
  %v3296 = vpop.f32.mrb[0].mxu0
  %v3297 = vadd.f32 0.0, %v3296
  %v3298 = vpop.f32.mrb[0].mxu0
  %v3299 = vpop.f32.mrb[0].mxu0
  %v3300 = vadd.f32 0.0, %v3299
  %v3301 = vpop.f32.mrb[0].mxu0
  %3302 = vmatprep.mubr.bf16.mxu0 0
  %3303 = vmatmul.mubr.bf16.gmra.mrb[0].mxu0 %v3207
  %v3304 = vpop.f32.mrb[0].mxu0
  %v3305 = vadd.f32 0.0, %v3304
  %v3306 = vpop.f32.mrb[0].mxu0
  %v3307 = vpop.f32.mrb[0].mxu0
  %v3308 = vadd.f32 0.0, %v3307
  %v3309 = vpop.f32.mrb[0].mxu0
  %3310 = vmatprep.mubr.bf16.mxu0 0
  %3311 = vmatmul.mubr.bf16.gmra.mrb[0].mxu0 %v3210
  %v3312 = vpop.f32.mrb[0].mxu0
  %v3313 = vadd.f32 0.0, %v3312
  %v3314 = vpop.f32.mrb[0].mxu0
  %v3315 = vpop.f32.mrb[0].mxu0
  %v3316 = vadd.f32 0.0, %v3315
  %v3317 = vpop.f32.mrb[0].mxu0
  %3318 = vmatprep.mubr.bf16.mxu0 0
  %3319 = vmatmul.mubr.bf16.gmra.mrb[0].mxu0 %v3213
  %v3320 = vpop.f32.mrb[0].mxu0
  %v3321 = vadd.f32 0.0, %v3320
  %v3322 = vpop.f32.mrb[0].mxu0
  %v3323 = vpop.f32.mrb[0].mxu0
  %v3324 = vadd.f32 0.0, %v3323
  %v3325 = vpop.f32.mrb[0].mxu0
  %3326 = vmatprep.mubr.bf16.mxu0 0
  %3327 = vmatmul.mubr.bf16.gmra.mrb[0].mxu0 %v3216
  %v3328 = vpop.f32.mrb[0].mxu0
  %v3329 = vadd.f32 0.0, %v3328
  %v3330 = vpop.f32.mrb[0].mxu0
  %v3331 = vpop.f32.mrb[0].mxu0
  %v3332 = vadd.f32 0.0, %v3331
  %v3333 = vpop.f32.mrb[0].mxu0
  %3334 = vmatprep.mubr.bf16.mxu0 0
  %3335 = vmatmul.mubr.bf16.gmra.mrb[0].mxu0 %v3219
  %v3336 = vpop.f32.mrb[0].mxu0
  %v3337 = vadd.f32 0.0, %v3336
  %v3338 = vpop.f32.mrb[0].mxu0
  %v3339 = vpop.f32.mrb[0].mxu0
  %v3340 = vadd.f32 0.0, %v3339
  %v3341 = vpop.f32.mrb[0].mxu0
  %3342 = vmatprep.mubr.bf16.mxu0 0
  %3343 = vmatmul.mubr.bf16.gmra.mrb[0].mxu0 %v3222
  %v3344 = vpop.f32.mrb[0].mxu0
  %v3345 = vadd.f32 0.0, %v3344
  %v3346 = vpop.f32.mrb[0].mxu0
  %v3347 = vpop.f32.mrb[0].mxu0
  %v3348 = vadd.f32 0.0, %v3347
  %v3349 = vpop.f32.mrb[0].mxu0
  %3350 = vmatprep.mubr.bf16.mxu0 0
  %3351 = vmatmul.mubr.bf16.gmra.mrb[0].mxu0 %v3225
  %v3352 = vpop.f32.mrb[0].mxu0
  %v3353 = vadd.f32 0.0, %v3352
  %v3354 = vpop.f32.mrb[0].mxu0
  %v3355 = vpop.f32.mrb[0].mxu0
  %v3356 = vadd.f32 0.0, %v3355
  %v3357 = vpop.f32.mrb[0].mxu0
  %3358 = vmatprep.mubr.bf16.mxu0 0
  %3359 = vmatmul.mubr.bf16.gmra.mrb[0].mxu0 %v3228
  %v3360 = vpop.f32.mrb[0].mxu0
  %v3361 = vadd.f32 0.0, %v3360
  %v3362 = vpop.f32.mrb[0].mxu0
  %v3363 = vpop.f32.mrb[0].mxu0
  %v3364 = vpop.f32.mrb[0].mxu0
  %3365 = vdwg.mxu0
  %v3366 = vadd.f32 %v3044, %v3265
  %v3367 = vadd.f32 %v3047, %v3268
  %v3368 = vadd.f32 %v3052, %v3273
  %v3369 = vadd.f32 %v3055, %v3276
  %v3370 = vadd.f32 %v3060, %v3281
  %v3371 = vadd.f32 %v3063, %v3284
  %v3372 = vadd.f32 %v3068, %v3289
  %v3373 = vadd.f32 %v3071, %v3292
  %v3374 = vadd.f32 %v3076, %v3297
  %v3375 = vadd.f32 %v3079, %v3300
  %v3376 = vadd.f32 %v3084, %v3305
  %v3377 = vadd.f32 %v3087, %v3308
  %v3378 = vadd.f32 %v3092, %v3313
  %v3379 = vadd.f32 %v3095, %v3316
  %v3380 = vadd.f32 %v3100, %v3321
  %v3381 = vadd.f32 %v3103, %v3324
  %v3382 = vadd.f32 %v3108, %v3329
  %v3383 = vadd.f32 %v3111, %v3332
  %v3384 = vadd.f32 %v3116, %v3337
  %v3385 = vadd.f32 %v3119, %v3340
  %v3386 = vadd.f32 %v3124, %v3345
  %v3387 = vadd.f32 %v3127, %v3348
  %v3388 = vadd.f32 %v3132, %v3353
  %v3389 = vadd.f32 %v3135, %v3356
  %v3390 = vadd.f32 %v3140, %v3361
  %v3391 = vld [vmem:[#allocation2 + $0xf] sm:$0xff]
  %v3392 = vld [vmem:[#allocation2 + $0x17] sm:$0xff]
  %v3393 = vld [vmem:[#allocation2 + $0x1f] sm:$0xff]
  %v3394 = vld [vmem:[#allocation2 + $0x27] sm:$0xff]
  %v3395 = vld [vmem:[#allocation2 + $0x2f] sm:$0xff]
  %v3396 = vld [vmem:[#allocation2 + $0x37] sm:$0xff]
  %v3397 = vld [vmem:[#allocation2 + $0x3f] sm:$0xff]
  %v3398 = vld [vmem:[#allocation2 + $0x47] sm:$0xff]
  %v3399 = vld [vmem:[#allocation2 + $0x4f] sm:$0xff]
  %v3400 = vld [vmem:[#allocation2 + $0x57] sm:$0xff]
  %v3401 = vld [vmem:[#allocation2 + $0x5f] sm:$0xff]
  %v3402 = vld [vmem:[#allocation2 + $0x67] sm:$0xff]
  %v3403 = vld [vmem:[#allocation2 + $0x6f] sm:$0xff]
  %v3404 = vld [vmem:[#allocation2 + $0x77] sm:$0xff]
  %v3405 = vld [vmem:[#allocation2 + $0x7f] sm:$0xff]
  %v3406 = vld [vmem:[#allocation2 + $0x87] sm:$0xff]
  %v3407 = vld [vmem:[#allocation2 + $0x8f] sm:$0xff]
  %v3408 = vld [vmem:[#allocation2 + $0x97] sm:$0xff]
  %v3409 = vld [vmem:[#allocation2 + $0x9f] sm:$0xff]
  %v3410 = vld [vmem:[#allocation2 + $0xa7] sm:$0xff]
  %v3411 = vld [vmem:[#allocation2 + $0xaf] sm:$0xff]
  %v3412 = vld [vmem:[#allocation2 + $0xb7] sm:$0xff]
  %v3413 = vld [vmem:[#allocation2 + $0xbf] sm:$0xff]
  %v3414 = vld [vmem:[#allocation2 + $0xc7] sm:$0xff]
  %v3415 = vld [vmem:[#allocation2 + $0xcf] sm:$0xff]
  %v3416 = vpack.c.bf16 %v3392, %v3391
  %v3417 = vpack.c.bf16 %v3394, %v3393
  %v3418 = vpack.c.bf16 %v3396, %v3395
  %v3419 = vpack.c.bf16 %v3398, %v3397
  %v3420 = vpack.c.bf16 %v3400, %v3399
  %v3421 = vpack.c.bf16 %v3402, %v3401
  %v3422 = vpack.c.bf16 %v3404, %v3403
  %v3423 = vpack.c.bf16 %v3406, %v3405
  %v3424 = vpack.c.bf16 %v3408, %v3407
  %v3425 = vpack.c.bf16 %v3410, %v3409
  %v3426 = vpack.c.bf16 %v3412, %v3411
  %v3427 = vpack.c.bf16 %v3414, %v3413
  %v3428 = vpack.c.bf16 %v3415, %v3415
  %v3429 = vld [vmem:[%s4 + $0x18] sm:$0xf]
  %v3430 = vld [vmem:[%s4 + $0x1c] sm:$0xf]
  %v3433 = vunpack.c.l.b16 %v3429
  %v3434 = vunpack.c.l.b16 %v3430
  %v3435 = vpack.c.b16 %v3434, %v3433
  %v3438 = vsel %vm141, %v3416, 0
  %v3441 = vsel %vm141, %v3417, 0
  %v3444 = vsel %vm141, %v3418, 0
  %v3447 = vsel %vm141, %v3419, 0
  %v3450 = vsel %vm141, %v3420, 0
  %v3453 = vsel %vm141, %v3421, 0
  %v3456 = vsel %vm141, %v3422, 0
  %v3459 = vsel %vm141, %v3423, 0
  %v3462 = vsel %vm141, %v3424, 0
  %v3465 = vsel %vm141, %v3425, 0
  %v3468 = vsel %vm141, %v3426, 0
  %v3471 = vsel %vm141, %v3427, 0
  %v3474 = vsel %vm141, %v3428, 0
  %3476 = vmatprep.subr.bf16.mxu0 0
  %3477 = vmatpush1.bf16.msra.mxu0 %v3435
  %3478 = vmatprep.subr.bf16.mxu0 0
  %3479 = vmatpush1.bf16.msra.mxu0 0
  %3480 = vmatprep.subr.bf16.mxu0 0
  %3481 = vmatpush1.bf16.msra.mxu0 0
  %3482 = vmatprep.subr.bf16.mxu0 0
  %3483 = vmatpush1.bf16.msra.mxu0 0
  %3484 = vmatprep.subr.bf16.mxu0 0
  %3485 = vmatpush1.bf16.msra.mxu0 0
  %3486 = vmatprep.subr.bf16.mxu0 0
  %3487 = vmatpush1.bf16.msra.mxu0 0
  %3488 = vmatprep.subr.bf16.mxu0 0
  %3489 = vmatpush1.bf16.msra.mxu0 0
  %3490 = vmatprep.subr.bf16.mxu0 0
  %3491 = vmatpush1.bf16.msra.mxu0 0
  %3492 = vmatprep.subr.bf16.mxu0 0
  %3493 = vmatpush1.bf16.msra.mxu0 0
  %3494 = vmatprep.subr.bf16.mxu0 0
  %3495 = vmatpush1.bf16.msra.mxu0 0
  %3496 = vmatprep.subr.bf16.mxu0 0
  %3497 = vmatpush1.bf16.msra.mxu0 0
  %3498 = vmatprep.subr.bf16.mxu0 0
  %3499 = vmatpush1.bf16.msra.mxu0 0
  %3500 = vmatprep.subr.bf16.mxu0 0
  %3501 = vmatpush1.bf16.msra.mxu0 0
  %3502 = vmatprep.subr.bf16.mxu0 0
  %3503 = vmatpush1.bf16.msra.mxu0 0
  %3504 = vmatprep.subr.bf16.mxu0 0
  %3505 = vmatpush1.bf16.msra.mxu0 0
  %3506 = vmatprep.subr.bf16.mxu0 0
  %3507 = vmatpush1.bf16.msra.mxu0 0
  %3508 = vmatprep.mubr.bf16.mxu0 0
  %3509 = vmatmul.mubr.bf16.gmra.mrb[0].mxu0 %v3438
  %v3510 = vpop.f32.mrb[0].mxu0
  %v3511 = vadd.f32 0.0, %v3510
  %v3512 = vpop.f32.mrb[0].mxu0
  %v3513 = vpop.f32.mrb[0].mxu0
  %v3514 = vadd.f32 0.0, %v3513
  %v3515 = vpop.f32.mrb[0].mxu0
  %3516 = vmatprep.mubr.bf16.mxu0 0
  %3517 = vmatmul.mubr.bf16.gmra.mrb[0].mxu0 %v3441
  %v3518 = vpop.f32.mrb[0].mxu0
  %v3519 = vadd.f32 0.0, %v3518
  %v3520 = vpop.f32.mrb[0].mxu0
  %v3521 = vpop.f32.mrb[0].mxu0
  %v3522 = vadd.f32 0.0, %v3521
  %v3523 = vpop.f32.mrb[0].mxu0
  %3524 = vmatprep.mubr.bf16.mxu0 0
  %3525 = vmatmul.mubr.bf16.gmra.mrb[0].mxu0 %v3444
  %v3526 = vpop.f32.mrb[0].mxu0
  %v3527 = vadd.f32 0.0, %v3526
  %v3528 = vpop.f32.mrb[0].mxu0
  %v3529 = vpop.f32.mrb[0].mxu0
  %v3530 = vadd.f32 0.0, %v3529
  %v3531 = vpop.f32.mrb[0].mxu0
  %3532 = vmatprep.mubr.bf16.mxu0 0
  %3533 = vmatmul.mubr.bf16.gmra.mrb[0].mxu0 %v3447
  %v3534 = vpop.f32.mrb[0].mxu0
  %v3535 = vadd.f32 0.0, %v3534
  %v3536 = vpop.f32.mrb[0].mxu0
  %v3537 = vpop.f32.mrb[0].mxu0
  %v3538 = vadd.f32 0.0, %v3537
  %v3539 = vpop.f32.mrb[0].mxu0
  %3540 = vmatprep.mubr.bf16.mxu0 0
  %3541 = vmatmul.mubr.bf16.gmra.mrb[0].mxu0 %v3450
  %v3542 = vpop.f32.mrb[0].mxu0
  %v3543 = vadd.f32 0.0, %v3542
  %v3544 = vpop.f32.mrb[0].mxu0
  %v3545 = vpop.f32.mrb[0].mxu0
  %v3546 = vadd.f32 0.0, %v3545
  %v3547 = vpop.f32.mrb[0].mxu0
  %3548 = vmatprep.mubr.bf16.mxu0 0
  %3549 = vmatmul.mubr.bf16.gmra.mrb[0].mxu0 %v3453
  %v3550 = vpop.f32.mrb[0].mxu0
  %v3551 = vadd.f32 0.0, %v3550
  %v3552 = vpop.f32.mrb[0].mxu0
  %v3553 = vpop.f32.mrb[0].mxu0
  %v3554 = vadd.f32 0.0, %v3553
  %v3555 = vpop.f32.mrb[0].mxu0
  %3556 = vmatprep.mubr.bf16.mxu0 0
  %3557 = vmatmul.mubr.bf16.gmra.mrb[0].mxu0 %v3456
  %v3558 = vpop.f32.mrb[0].mxu0
  %v3559 = vadd.f32 0.0, %v3558
  %v3560 = vpop.f32.mrb[0].mxu0
  %v3561 = vpop.f32.mrb[0].mxu0
  %v3562 = vadd.f32 0.0, %v3561
  %v3563 = vpop.f32.mrb[0].mxu0
  %3564 = vmatprep.mubr.bf16.mxu0 0
  %3565 = vmatmul.mubr.bf16.gmra.mrb[0].mxu0 %v3459
  %v3566 = vpop.f32.mrb[0].mxu0
  %v3567 = vadd.f32 0.0, %v3566
  %v3568 = vpop.f32.mrb[0].mxu0
  %v3569 = vpop.f32.mrb[0].mxu0
  %v3570 = vadd.f32 0.0, %v3569
  %v3571 = vpop.f32.mrb[0].mxu0
  %3572 = vmatprep.mubr.bf16.mxu0 0
  %3573 = vmatmul.mubr.bf16.gmra.mrb[0].mxu0 %v3462
  %v3574 = vpop.f32.mrb[0].mxu0
  %v3575 = vadd.f32 0.0, %v3574
  %v3576 = vpop.f32.mrb[0].mxu0
  %v3577 = vpop.f32.mrb[0].mxu0
  %v3578 = vadd.f32 0.0, %v3577
  %v3579 = vpop.f32.mrb[0].mxu0
  %3580 = vmatprep.mubr.bf16.mxu0 0
  %3581 = vmatmul.mubr.bf16.gmra.mrb[0].mxu0 %v3465
  %v3582 = vpop.f32.mrb[0].mxu0
  %v3583 = vadd.f32 0.0, %v3582
  %v3584 = vpop.f32.mrb[0].mxu0
  %v3585 = vpop.f32.mrb[0].mxu0
  %v3586 = vadd.f32 0.0, %v3585
  %v3587 = vpop.f32.mrb[0].mxu0
  %3588 = vmatprep.mubr.bf16.mxu0 0
  %3589 = vmatmul.mubr.bf16.gmra.mrb[0].mxu0 %v3468
  %v3590 = vpop.f32.mrb[0].mxu0
  %v3591 = vadd.f32 0.0, %v3590
  %v3592 = vpop.f32.mrb[0].mxu0
  %v3593 = vpop.f32.mrb[0].mxu0
  %v3594 = vadd.f32 0.0, %v3593
  %v3595 = vpop.f32.mrb[0].mxu0
  %3596 = vmatprep.mubr.bf16.mxu0 0
  %3597 = vmatmul.mubr.bf16.gmra.mrb[0].mxu0 %v3471
  %v3598 = vpop.f32.mrb[0].mxu0
  %v3599 = vadd.f32 0.0, %v3598
  %v3600 = vpop.f32.mrb[0].mxu0
  %v3601 = vpop.f32.mrb[0].mxu0
  %v3602 = vadd.f32 0.0, %v3601
  %v3603 = vpop.f32.mrb[0].mxu0
  %3604 = vmatprep.mubr.bf16.mxu0 0
  %3605 = vmatmul.mubr.bf16.gmra.mrb[0].mxu0 %v3474
  %v3606 = vpop.f32.mrb[0].mxu0
  %v3607 = vadd.f32 0.0, %v3606
  %v3608 = vpop.f32.mrb[0].mxu0
  %v3609 = vpop.f32.mrb[0].mxu0
  %v3610 = vpop.f32.mrb[0].mxu0
  %3611 = vdwg.mxu0
  %v3612 = vadd.f32 %v3366, %v3511
  %v3613 = vadd.f32 %v3367, %v3514
  %v3614 = vadd.f32 %v3368, %v3519
  %v3615 = vadd.f32 %v3369, %v3522
  %v3616 = vadd.f32 %v3370, %v3527
  %v3617 = vadd.f32 %v3371, %v3530
  %v3618 = vadd.f32 %v3372, %v3535
  %v3619 = vadd.f32 %v3373, %v3538
  %v3620 = vadd.f32 %v3374, %v3543
  %v3621 = vadd.f32 %v3375, %v3546
  %v3622 = vadd.f32 %v3376, %v3551
  %v3623 = vadd.f32 %v3377, %v3554
  %v3624 = vadd.f32 %v3378, %v3559
  %v3625 = vadd.f32 %v3379, %v3562
  %v3626 = vadd.f32 %v3380, %v3567
  %v3627 = vadd.f32 %v3381, %v3570
  %v3628 = vadd.f32 %v3382, %v3575
  %v3629 = vadd.f32 %v3383, %v3578
  %v3630 = vadd.f32 %v3384, %v3583
  %v3631 = vadd.f32 %v3385, %v3586
  %v3632 = vadd.f32 %v3386, %v3591
  %v3633 = vadd.f32 %v3387, %v3594
  %v3634 = vadd.f32 %v3388, %v3599
  %v3635 = vadd.f32 %v3389, %v3602
  %v3636 = vadd.f32 %v3390, %v3607
  %v3637 = vld [vmem:[#allocation2 + $0x10] sm:$0xff]
  %v3638 = vld [vmem:[#allocation2 + $0x18] sm:$0xff]
  %v3639 = vld [vmem:[#allocation2 + $0x20] sm:$0xff]
  %v3640 = vld [vmem:[#allocation2 + $0x28] sm:$0xff]
  %v3641 = vld [vmem:[#allocation2 + $0x30] sm:$0xff]
  %v3642 = vld [vmem:[#allocation2 + $0x38] sm:$0xff]
  %v3643 = vld [vmem:[#allocation2 + $0x40] sm:$0xff]
  %v3644 = vld [vmem:[#allocation2 + $0x48] sm:$0xff]
  %v3645 = vld [vmem:[#allocation2 + $0x50] sm:$0xff]
  %v3646 = vld [vmem:[#allocation2 + $0x58] sm:$0xff]
  %v3647 = vld [vmem:[#allocation2 + $0x60] sm:$0xff]
  %v3648 = vld [vmem:[#allocation2 + $0x68] sm:$0xff]
  %v3649 = vld [vmem:[#allocation2 + $0x70] sm:$0xff]
  %v3650 = vld [vmem:[#allocation2 + $0x78] sm:$0xff]
  %v3651 = vld [vmem:[#allocation2 + $0x80] sm:$0xff]
  %v3652 = vld [vmem:[#allocation2 + $0x88] sm:$0xff]
  %v3653 = vld [vmem:[#allocation2 + $0x90] sm:$0xff]
  %v3654 = vld [vmem:[#allocation2 + $0x98] sm:$0xff]
  %v3655 = vld [vmem:[#allocation2 + $0xa0] sm:$0xff]
  %v3656 = vld [vmem:[#allocation2 + $0xa8] sm:$0xff]
  %v3657 = vld [vmem:[#allocation2 + $0xb0] sm:$0xff]
  %v3658 = vld [vmem:[#allocation2 + $0xb8] sm:$0xff]
  %v3659 = vld [vmem:[#allocation2 + $0xc0] sm:$0xff]
  %v3660 = vld [vmem:[#allocation2 + $0xc8] sm:$0xff]
  %v3661 = vld [vmem:[#allocation2 + $0xd0] sm:$0xff]
  %v3662 = vpack.c.bf16 %v3638, %v3637
  %v3663 = vpack.c.bf16 %v3640, %v3639
  %v3664 = vpack.c.bf16 %v3642, %v3641
  %v3665 = vpack.c.bf16 %v3644, %v3643
  %v3666 = vpack.c.bf16 %v3646, %v3645
  %v3667 = vpack.c.bf16 %v3648, %v3647
  %v3668 = vpack.c.bf16 %v3650, %v3649
  %v3669 = vpack.c.bf16 %v3652, %v3651
  %v3670 = vpack.c.bf16 %v3654, %v3653
  %v3671 = vpack.c.bf16 %v3656, %v3655
  %v3672 = vpack.c.bf16 %v3658, %v3657
  %v3673 = vpack.c.bf16 %v3660, %v3659
  %v3674 = vpack.c.bf16 %v3661, %v3661
  %v3675 = vld [vmem:[%s4 + $0x20] sm:$0xf]
  %v3676 = vld [vmem:[%s4 + $0x24] sm:$0xf]
  %v3679 = vunpack.c.l.b16 %v3675
  %v3680 = vunpack.c.l.b16 %v3676
  %v3681 = vpack.c.b16 %v3680, %v3679
  %v3684 = vsel %vm141, %v3662, 0
  %v3687 = vsel %vm141, %v3663, 0
  %v3690 = vsel %vm141, %v3664, 0
  %v3693 = vsel %vm141, %v3665, 0
  %v3696 = vsel %vm141, %v3666, 0
  %v3699 = vsel %vm141, %v3667, 0
  %v3702 = vsel %vm141, %v3668, 0
  %v3705 = vsel %vm141, %v3669, 0
  %v3708 = vsel %vm141, %v3670, 0
  %v3711 = vsel %vm141, %v3671, 0
  %v3714 = vsel %vm141, %v3672, 0
  %v3717 = vsel %vm141, %v3673, 0
  %v3720 = vsel %vm141, %v3674, 0
  %3722 = vmatprep.subr.bf16.mxu0 0
  %3723 = vmatpush1.bf16.msra.mxu0 %v3681
  %3724 = vmatprep.subr.bf16.mxu0 0
  %3725 = vmatpush1.bf16.msra.mxu0 0
  %3726 = vmatprep.subr.bf16.mxu0 0
  %3727 = vmatpush1.bf16.msra.mxu0 0
  %3728 = vmatprep.subr.bf16.mxu0 0
  %3729 = vmatpush1.bf16.msra.mxu0 0
  %3730 = vmatprep.subr.bf16.mxu0 0
  %3731 = vmatpush1.bf16.msra.mxu0 0
  %3732 = vmatprep.subr.bf16.mxu0 0
  %3733 = vmatpush1.bf16.msra.mxu0 0
  %3734 = vmatprep.subr.bf16.mxu0 0
  %3735 = vmatpush1.bf16.msra.mxu0 0
  %3736 = vmatprep.subr.bf16.mxu0 0
  %3737 = vmatpush1.bf16.msra.mxu0 0
  %3738 = vmatprep.subr.bf16.mxu0 0
  %3739 = vmatpush1.bf16.msra.mxu0 0
  %3740 = vmatprep.subr.bf16.mxu0 0
  %3741 = vmatpush1.bf16.msra.mxu0 0
  %3742 = vmatprep.subr.bf16.mxu0 0
  %3743 = vmatpush1.bf16.msra.mxu0 0
  %3744 = vmatprep.subr.bf16.mxu0 0
  %3745 = vmatpush1.bf16.msra.mxu0 0
  %3746 = vmatprep.subr.bf16.mxu0 0
  %3747 = vmatpush1.bf16.msra.mxu0 0
  %3748 = vmatprep.subr.bf16.mxu0 0
  %3749 = vmatpush1.bf16.msra.mxu0 0
  %3750 = vmatprep.subr.bf16.mxu0 0
  %3751 = vmatpush1.bf16.msra.mxu0 0
  %3752 = vmatprep.subr.bf16.mxu0 0
  %3753 = vmatpush1.bf16.msra.mxu0 0
  %3754 = vmatprep.mubr.bf16.mxu0 0
  %3755 = vmatmul.mubr.bf16.gmra.mrb[0].mxu0 %v3684
  %v3756 = vpop.f32.mrb[0].mxu0
  %v3757 = vadd.f32 0.0, %v3756
  %v3758 = vpop.f32.mrb[0].mxu0
  %v3759 = vpop.f32.mrb[0].mxu0
  %v3760 = vadd.f32 0.0, %v3759
  %v3761 = vpop.f32.mrb[0].mxu0
  %3762 = vmatprep.mubr.bf16.mxu0 0
  %3763 = vmatmul.mubr.bf16.gmra.mrb[0].mxu0 %v3687
  %v3764 = vpop.f32.mrb[0].mxu0
  %v3765 = vadd.f32 0.0, %v3764
  %v3766 = vpop.f32.mrb[0].mxu0
  %v3767 = vpop.f32.mrb[0].mxu0
  %v3768 = vadd.f32 0.0, %v3767
  %v3769 = vpop.f32.mrb[0].mxu0
  %3770 = vmatprep.mubr.bf16.mxu0 0
  %3771 = vmatmul.mubr.bf16.gmra.mrb[0].mxu0 %v3690
  %v3772 = vpop.f32.mrb[0].mxu0
  %v3773 = vadd.f32 0.0, %v3772
  %v3774 = vpop.f32.mrb[0].mxu0
  %v3775 = vpop.f32.mrb[0].mxu0
  %v3776 = vadd.f32 0.0, %v3775
  %v3777 = vpop.f32.mrb[0].mxu0
  %3778 = vmatprep.mubr.bf16.mxu0 0
  %3779 = vmatmul.mubr.bf16.gmra.mrb[0].mxu0 %v3693
  %v3780 = vpop.f32.mrb[0].mxu0
  %v3781 = vadd.f32 0.0, %v3780
  %v3782 = vpop.f32.mrb[0].mxu0
  %v3783 = vpop.f32.mrb[0].mxu0
  %v3784 = vadd.f32 0.0, %v3783
  %v3785 = vpop.f32.mrb[0].mxu0
  %3786 = vmatprep.mubr.bf16.mxu0 0
  %3787 = vmatmul.mubr.bf16.gmra.mrb[0].mxu0 %v3696
  %v3788 = vpop.f32.mrb[0].mxu0
  %v3789 = vadd.f32 0.0, %v3788
  %v3790 = vpop.f32.mrb[0].mxu0
  %v3791 = vpop.f32.mrb[0].mxu0
  %v3792 = vadd.f32 0.0, %v3791
  %v3793 = vpop.f32.mrb[0].mxu0
  %3794 = vmatprep.mubr.bf16.mxu0 0
  %3795 = vmatmul.mubr.bf16.gmra.mrb[0].mxu0 %v3699
  %v3796 = vpop.f32.mrb[0].mxu0
  %v3797 = vadd.f32 0.0, %v3796
  %v3798 = vpop.f32.mrb[0].mxu0
  %v3799 = vpop.f32.mrb[0].mxu0
  %v3800 = vadd.f32 0.0, %v3799
  %v3801 = vpop.f32.mrb[0].mxu0
  %3802 = vmatprep.mubr.bf16.mxu0 0
  %3803 = vmatmul.mubr.bf16.gmra.mrb[0].mxu0 %v3702
  %v3804 = vpop.f32.mrb[0].mxu0
  %v3805 = vadd.f32 0.0, %v3804
  %v3806 = vpop.f32.mrb[0].mxu0
  %v3807 = vpop.f32.mrb[0].mxu0
  %v3808 = vadd.f32 0.0, %v3807
  %v3809 = vpop.f32.mrb[0].mxu0
  %3810 = vmatprep.mubr.bf16.mxu0 0
  %3811 = vmatmul.mubr.bf16.gmra.mrb[0].mxu0 %v3705
  %v3812 = vpop.f32.mrb[0].mxu0
  %v3813 = vadd.f32 0.0, %v3812
  %v3814 = vpop.f32.mrb[0].mxu0
  %v3815 = vpop.f32.mrb[0].mxu0
  %v3816 = vadd.f32 0.0, %v3815
  %v3817 = vpop.f32.mrb[0].mxu0
  %3818 = vmatprep.mubr.bf16.mxu0 0
  %3819 = vmatmul.mubr.bf16.gmra.mrb[0].mxu0 %v3708
  %v3820 = vpop.f32.mrb[0].mxu0
  %v3821 = vadd.f32 0.0, %v3820
  %v3822 = vpop.f32.mrb[0].mxu0
  %v3823 = vpop.f32.mrb[0].mxu0
  %v3824 = vadd.f32 0.0, %v3823
  %v3825 = vpop.f32.mrb[0].mxu0
  %3826 = vmatprep.mubr.bf16.mxu0 0
  %3827 = vmatmul.mubr.bf16.gmra.mrb[0].mxu0 %v3711
  %v3828 = vpop.f32.mrb[0].mxu0
  %v3829 = vadd.f32 0.0, %v3828
  %v3830 = vpop.f32.mrb[0].mxu0
  %v3831 = vpop.f32.mrb[0].mxu0
  %v3832 = vadd.f32 0.0, %v3831
  %v3833 = vpop.f32.mrb[0].mxu0
  %3834 = vmatprep.mubr.bf16.mxu0 0
  %3835 = vmatmul.mubr.bf16.gmra.mrb[0].mxu0 %v3714
  %v3836 = vpop.f32.mrb[0].mxu0
  %v3837 = vadd.f32 0.0, %v3836
  %v3838 = vpop.f32.mrb[0].mxu0
  %v3839 = vpop.f32.mrb[0].mxu0
  %v3840 = vadd.f32 0.0, %v3839
  %v3841 = vpop.f32.mrb[0].mxu0
  %3842 = vmatprep.mubr.bf16.mxu0 0
  %3843 = vmatmul.mubr.bf16.gmra.mrb[0].mxu0 %v3717
  %v3844 = vpop.f32.mrb[0].mxu0
  %v3845 = vadd.f32 0.0, %v3844
  %v3846 = vpop.f32.mrb[0].mxu0
  %v3847 = vpop.f32.mrb[0].mxu0
  %v3848 = vadd.f32 0.0, %v3847
  %v3849 = vpop.f32.mrb[0].mxu0
  %3850 = vmatprep.mubr.bf16.mxu0 0
  %3851 = vmatmul.mubr.bf16.gmra.mrb[0].mxu0 %v3720
  %v3852 = vpop.f32.mrb[0].mxu0
  %v3853 = vadd.f32 0.0, %v3852
  %v3854 = vpop.f32.mrb[0].mxu0
  %v3855 = vpop.f32.mrb[0].mxu0
  %v3856 = vpop.f32.mrb[0].mxu0
  %3857 = vdwg.mxu0
  %v3858 = vadd.f32 %v3612, %v3757
  %v3859 = vadd.f32 %v3613, %v3760
  %v3860 = vadd.f32 %v3614, %v3765
  %v3861 = vadd.f32 %v3615, %v3768
  %v3862 = vadd.f32 %v3616, %v3773
  %v3863 = vadd.f32 %v3617, %v3776
  %v3864 = vadd.f32 %v3618, %v3781
  %v3865 = vadd.f32 %v3619, %v3784
  %v3866 = vadd.f32 %v3620, %v3789
  %v3867 = vadd.f32 %v3621, %v3792
  %v3868 = vadd.f32 %v3622, %v3797
  %v3869 = vadd.f32 %v3623, %v3800
  %v3870 = vadd.f32 %v3624, %v3805
  %v3871 = vadd.f32 %v3625, %v3808
  %v3872 = vadd.f32 %v3626, %v3813
  %v3873 = vadd.f32 %v3627, %v3816
  %v3874 = vadd.f32 %v3628, %v3821
  %v3875 = vadd.f32 %v3629, %v3824
  %v3876 = vadd.f32 %v3630, %v3829
  %v3877 = vadd.f32 %v3631, %v3832
  %v3878 = vadd.f32 %v3632, %v3837
  %v3879 = vadd.f32 %v3633, %v3840
  %v3880 = vadd.f32 %v3634, %v3845
  %v3881 = vadd.f32 %v3635, %v3848
  %v3882 = vadd.f32 %v3636, %v3853
  %v3883 = vld [vmem:[#allocation2 + $0x11] sm:$0xff]
  %v3884 = vld [vmem:[#allocation2 + $0x19] sm:$0xff]
  %v3885 = vld [vmem:[#allocation2 + $0x21] sm:$0xff]
  %v3886 = vld [vmem:[#allocation2 + $0x29] sm:$0xff]
  %v3887 = vld [vmem:[#allocation2 + $0x31] sm:$0xff]
  %v3888 = vld [vmem:[#allocation2 + $0x39] sm:$0xff]
  %v3889 = vld [vmem:[#allocation2 + $0x41] sm:$0xff]
  %v3890 = vld [vmem:[#allocation2 + $0x49] sm:$0xff]
  %v3891 = vld [vmem:[#allocation2 + $0x51] sm:$0xff]
  %v3892 = vld [vmem:[#allocation2 + $0x59] sm:$0xff]
  %v3893 = vld [vmem:[#allocation2 + $0x61] sm:$0xff]
  %v3894 = vld [vmem:[#allocation2 + $0x69] sm:$0xff]
  %v3895 = vld [vmem:[#allocation2 + $0x71] sm:$0xff]
  %v3896 = vld [vmem:[#allocation2 + $0x79] sm:$0xff]
  %v3897 = vld [vmem:[#allocation2 + $0x81] sm:$0xff]
  %v3898 = vld [vmem:[#allocation2 + $0x89] sm:$0xff]
  %v3899 = vld [vmem:[#allocation2 + $0x91] sm:$0xff]
  %v3900 = vld [vmem:[#allocation2 + $0x99] sm:$0xff]
  %v3901 = vld [vmem:[#allocation2 + $0xa1] sm:$0xff]
  %v3902 = vld [vmem:[#allocation2 + $0xa9] sm:$0xff]
  %v3903 = vld [vmem:[#allocation2 + $0xb1] sm:$0xff]
  %v3904 = vld [vmem:[#allocation2 + $0xb9] sm:$0xff]
  %v3905 = vld [vmem:[#allocation2 + $0xc1] sm:$0xff]
  %v3906 = vld [vmem:[#allocation2 + $0xc9] sm:$0xff]
  %v3907 = vld [vmem:[#allocation2 + $0xd1] sm:$0xff]
  %v3908 = vpack.c.bf16 %v3884, %v3883
  %v3909 = vpack.c.bf16 %v3886, %v3885
  %v3910 = vpack.c.bf16 %v3888, %v3887
  %v3911 = vpack.c.bf16 %v3890, %v3889
  %v3912 = vpack.c.bf16 %v3892, %v3891
  %v3913 = vpack.c.bf16 %v3894, %v3893
  %v3914 = vpack.c.bf16 %v3896, %v3895
  %v3915 = vpack.c.bf16 %v3898, %v3897
  %v3916 = vpack.c.bf16 %v3900, %v3899
  %v3917 = vpack.c.bf16 %v3902, %v3901
  %v3918 = vpack.c.bf16 %v3904, %v3903
  %v3919 = vpack.c.bf16 %v3906, %v3905
  %v3920 = vpack.c.bf16 %v3907, %v3907
  %v3921 = vld [vmem:[%s4 + $0x28] sm:$0xf]
  %v3922 = vld [vmem:[%s4 + $0x2c] sm:$0xf]
  %v3925 = vunpack.c.l.b16 %v3921
  %v3926 = vunpack.c.l.b16 %v3922
  %v3927 = vpack.c.b16 %v3926, %v3925
  %v3930 = vsel %vm141, %v3908, 0
  %v3933 = vsel %vm141, %v3909, 0
  %v3936 = vsel %vm141, %v3910, 0
  %v3939 = vsel %vm141, %v3911, 0
  %v3942 = vsel %vm141, %v3912, 0
  %v3945 = vsel %vm141, %v3913, 0
  %v3948 = vsel %vm141, %v3914, 0
  %v3951 = vsel %vm141, %v3915, 0
  %v3954 = vsel %vm141, %v3916, 0
  %v3957 = vsel %vm141, %v3917, 0
  %v3960 = vsel %vm141, %v3918, 0
  %v3963 = vsel %vm141, %v3919, 0
  %v3966 = vsel %vm141, %v3920, 0
  %3968 = vmatprep.subr.bf16.mxu0 0
  %3969 = vmatpush1.bf16.msra.mxu0 %v3927
  %3970 = vmatprep.subr.bf16.mxu0 0
  %3971 = vmatpush1.bf16.msra.mxu0 0
  %3972 = vmatprep.subr.bf16.mxu0 0
  %3973 = vmatpush1.bf16.msra.mxu0 0
  %3974 = vmatprep.subr.bf16.mxu0 0
  %3975 = vmatpush1.bf16.msra.mxu0 0
  %3976 = vmatprep.subr.bf16.mxu0 0
  %3977 = vmatpush1.bf16.msra.mxu0 0
  %3978 = vmatprep.subr.bf16.mxu0 0
  %3979 = vmatpush1.bf16.msra.mxu0 0
  %3980 = vmatprep.subr.bf16.mxu0 0
  %3981 = vmatpush1.bf16.msra.mxu0 0
  %3982 = vmatprep.subr.bf16.mxu0 0
  %3983 = vmatpush1.bf16.msra.mxu0 0
  %3984 = vmatprep.subr.bf16.mxu0 0
  %3985 = vmatpush1.bf16.msra.mxu0 0
  %3986 = vmatprep.subr.bf16.mxu0 0
  %3987 = vmatpush1.bf16.msra.mxu0 0
  %3988 = vmatprep.subr.bf16.mxu0 0
  %3989 = vmatpush1.bf16.msra.mxu0 0
  %3990 = vmatprep.subr.bf16.mxu0 0
  %3991 = vmatpush1.bf16.msra.mxu0 0
  %3992 = vmatprep.subr.bf16.mxu0 0
  %3993 = vmatpush1.bf16.msra.mxu0 0
  %3994 = vmatprep.subr.bf16.mxu0 0
  %3995 = vmatpush1.bf16.msra.mxu0 0
  %3996 = vmatprep.subr.bf16.mxu0 0
  %3997 = vmatpush1.bf16.msra.mxu0 0
  %3998 = vmatprep.subr.bf16.mxu0 0
  %3999 = vmatpush1.bf16.msra.mxu0 0
  %4000 = vmatprep.mubr.bf16.mxu0 0
  %4001 = vmatmul.mubr.bf16.gmra.mrb[0].mxu0 %v3930
  %v4002 = vpop.f32.mrb[0].mxu0
  %v4003 = vadd.f32 0.0, %v4002
  %v4004 = vpop.f32.mrb[0].mxu0
  %v4005 = vpop.f32.mrb[0].mxu0
  %v4006 = vadd.f32 0.0, %v4005
  %v4007 = vpop.f32.mrb[0].mxu0
  %4008 = vmatprep.mubr.bf16.mxu0 0
  %4009 = vmatmul.mubr.bf16.gmra.mrb[0].mxu0 %v3933
  %v4010 = vpop.f32.mrb[0].mxu0
  %v4011 = vadd.f32 0.0, %v4010
  %v4012 = vpop.f32.mrb[0].mxu0
  %v4013 = vpop.f32.mrb[0].mxu0
  %v4014 = vadd.f32 0.0, %v4013
  %v4015 = vpop.f32.mrb[0].mxu0
  %4016 = vmatprep.mubr.bf16.mxu0 0
  %4017 = vmatmul.mubr.bf16.gmra.mrb[0].mxu0 %v3936
  %v4018 = vpop.f32.mrb[0].mxu0
  %v4019 = vadd.f32 0.0, %v4018
  %v4020 = vpop.f32.mrb[0].mxu0
  %v4021 = vpop.f32.mrb[0].mxu0
  %v4022 = vadd.f32 0.0, %v4021
  %v4023 = vpop.f32.mrb[0].mxu0
  %4024 = vmatprep.mubr.bf16.mxu0 0
  %4025 = vmatmul.mubr.bf16.gmra.mrb[0].mxu0 %v3939
  %v4026 = vpop.f32.mrb[0].mxu0
  %v4027 = vadd.f32 0.0, %v4026
  %v4028 = vpop.f32.mrb[0].mxu0
  %v4029 = vpop.f32.mrb[0].mxu0
  %v4030 = vadd.f32 0.0, %v4029
  %v4031 = vpop.f32.mrb[0].mxu0
  %4032 = vmatprep.mubr.bf16.mxu0 0
  %4033 = vmatmul.mubr.bf16.gmra.mrb[0].mxu0 %v3942
  %v4034 = vpop.f32.mrb[0].mxu0
  %v4035 = vadd.f32 0.0, %v4034
  %v4036 = vpop.f32.mrb[0].mxu0
  %v4037 = vpop.f32.mrb[0].mxu0
  %v4038 = vadd.f32 0.0, %v4037
  %v4039 = vpop.f32.mrb[0].mxu0
  %4040 = vmatprep.mubr.bf16.mxu0 0
  %4041 = vmatmul.mubr.bf16.gmra.mrb[0].mxu0 %v3945
  %v4042 = vpop.f32.mrb[0].mxu0
  %v4043 = vadd.f32 0.0, %v4042
  %v4044 = vpop.f32.mrb[0].mxu0
  %v4045 = vpop.f32.mrb[0].mxu0
  %v4046 = vadd.f32 0.0, %v4045
  %v4047 = vpop.f32.mrb[0].mxu0
  %4048 = vmatprep.mubr.bf16.mxu0 0
  %4049 = vmatmul.mubr.bf16.gmra.mrb[0].mxu0 %v3948
  %v4050 = vpop.f32.mrb[0].mxu0
  %v4051 = vadd.f32 0.0, %v4050
  %v4052 = vpop.f32.mrb[0].mxu0
  %v4053 = vpop.f32.mrb[0].mxu0
  %v4054 = vadd.f32 0.0, %v4053
  %v4055 = vpop.f32.mrb[0].mxu0
  %4056 = vmatprep.mubr.bf16.mxu0 0
  %4057 = vmatmul.mubr.bf16.gmra.mrb[0].mxu0 %v3951
  %v4058 = vpop.f32.mrb[0].mxu0
  %v4059 = vadd.f32 0.0, %v4058
  %v4060 = vpop.f32.mrb[0].mxu0
  %v4061 = vpop.f32.mrb[0].mxu0
  %v4062 = vadd.f32 0.0, %v4061
  %v4063 = vpop.f32.mrb[0].mxu0
  %4064 = vmatprep.mubr.bf16.mxu0 0
  %4065 = vmatmul.mubr.bf16.gmra.mrb[0].mxu0 %v3954
  %v4066 = vpop.f32.mrb[0].mxu0
  %v4067 = vadd.f32 0.0, %v4066
  %v4068 = vpop.f32.mrb[0].mxu0
  %v4069 = vpop.f32.mrb[0].mxu0
  %v4070 = vadd.f32 0.0, %v4069
  %v4071 = vpop.f32.mrb[0].mxu0
  %4072 = vmatprep.mubr.bf16.mxu0 0
  %4073 = vmatmul.mubr.bf16.gmra.mrb[0].mxu0 %v3957
  %v4074 = vpop.f32.mrb[0].mxu0
  %v4075 = vadd.f32 0.0, %v4074
  %v4076 = vpop.f32.mrb[0].mxu0
  %v4077 = vpop.f32.mrb[0].mxu0
  %v4078 = vadd.f32 0.0, %v4077
  %v4079 = vpop.f32.mrb[0].mxu0
  %4080 = vmatprep.mubr.bf16.mxu0 0
  %4081 = vmatmul.mubr.bf16.gmra.mrb[0].mxu0 %v3960
  %v4082 = vpop.f32.mrb[0].mxu0
  %v4083 = vadd.f32 0.0, %v4082
  %v4084 = vpop.f32.mrb[0].mxu0
  %v4085 = vpop.f32.mrb[0].mxu0
  %v4086 = vadd.f32 0.0, %v4085
  %v4087 = vpop.f32.mrb[0].mxu0
  %4088 = vmatprep.mubr.bf16.mxu0 0
  %4089 = vmatmul.mubr.bf16.gmra.mrb[0].mxu0 %v3963
  %v4090 = vpop.f32.mrb[0].mxu0
  %v4091 = vadd.f32 0.0, %v4090
  %v4092 = vpop.f32.mrb[0].mxu0
  %v4093 = vpop.f32.mrb[0].mxu0
  %v4094 = vadd.f32 0.0, %v4093
  %v4095 = vpop.f32.mrb[0].mxu0
  %4096 = vmatprep.mubr.bf16.mxu0 0
  %4097 = vmatmul.mubr.bf16.gmra.mrb[0].mxu0 %v3966
  %v4098 = vpop.f32.mrb[0].mxu0
  %v4099 = vadd.f32 0.0, %v4098
  %v4100 = vpop.f32.mrb[0].mxu0
  %v4101 = vpop.f32.mrb[0].mxu0
  %v4102 = vpop.f32.mrb[0].mxu0
  %4103 = vdwg.mxu0
  %v4104 = vadd.f32 %v3858, %v4003
  %v4105 = vadd.f32 %v3859, %v4006
  %v4106 = vadd.f32 %v3860, %v4011
  %v4107 = vadd.f32 %v3861, %v4014
  %v4108 = vadd.f32 %v3862, %v4019
  %v4109 = vadd.f32 %v3863, %v4022
  %v4110 = vadd.f32 %v3864, %v4027
  %v4111 = vadd.f32 %v3865, %v4030
  %v4112 = vadd.f32 %v3866, %v4035
  %v4113 = vadd.f32 %v3867, %v4038
  %v4114 = vadd.f32 %v3868, %v4043
  %v4115 = vadd.f32 %v3869, %v4046
  %v4116 = vadd.f32 %v3870, %v4051
  %v4117 = vadd.f32 %v3871, %v4054
  %v4118 = vadd.f32 %v3872, %v4059
  %v4119 = vadd.f32 %v3873, %v4062
  %v4120 = vadd.f32 %v3874, %v4067
  %v4121 = vadd.f32 %v3875, %v4070
  %v4122 = vadd.f32 %v3876, %v4075
  %v4123 = vadd.f32 %v3877, %v4078
  %v4124 = vadd.f32 %v3878, %v4083
  %v4125 = vadd.f32 %v3879, %v4086
  %v4126 = vadd.f32 %v3880, %v4091
  %v4127 = vadd.f32 %v3881, %v4094
  %v4128 = vadd.f32 %v3882, %v4099
  %v4129 = vld [vmem:[#allocation2 + $0x19] sm:$0xff]
  %v4130 = vld [vmem:[#allocation2 + $0x21] sm:$0xff]
  %v4131 = vld [vmem:[#allocation2 + $0x29] sm:$0xff]
  %v4132 = vld [vmem:[#allocation2 + $0x31] sm:$0xff]
  %v4133 = vld [vmem:[#allocation2 + $0x39] sm:$0xff]
  %v4134 = vld [vmem:[#allocation2 + $0x41] sm:$0xff]
  %v4135 = vld [vmem:[#allocation2 + $0x49] sm:$0xff]
  %v4136 = vld [vmem:[#allocation2 + $0x51] sm:$0xff]
  %v4137 = vld [vmem:[#allocation2 + $0x59] sm:$0xff]
  %v4138 = vld [vmem:[#allocation2 + $0x61] sm:$0xff]
  %v4139 = vld [vmem:[#allocation2 + $0x69] sm:$0xff]
  %v4140 = vld [vmem:[#allocation2 + $0x71] sm:$0xff]
  %v4141 = vld [vmem:[#allocation2 + $0x79] sm:$0xff]
  %v4142 = vld [vmem:[#allocation2 + $0x81] sm:$0xff]
  %v4143 = vld [vmem:[#allocation2 + $0x89] sm:$0xff]
  %v4144 = vld [vmem:[#allocation2 + $0x91] sm:$0xff]
  %v4145 = vld [vmem:[#allocation2 + $0x99] sm:$0xff]
  %v4146 = vld [vmem:[#allocation2 + $0xa1] sm:$0xff]
  %v4147 = vld [vmem:[#allocation2 + $0xa9] sm:$0xff]
  %v4148 = vld [vmem:[#allocation2 + $0xb1] sm:$0xff]
  %v4149 = vld [vmem:[#allocation2 + $0xb9] sm:$0xff]
  %v4150 = vld [vmem:[#allocation2 + $0xc1] sm:$0xff]
  %v4151 = vld [vmem:[#allocation2 + $0xc9] sm:$0xff]
  %v4152 = vld [vmem:[#allocation2 + $0xd1] sm:$0xff]
  %v4153 = vld [vmem:[#allocation2 + $0xd9] sm:$0xff]
  %v4154 = vpack.c.bf16 %v4130, %v4129
  %v4155 = vpack.c.bf16 %v4132, %v4131
  %v4156 = vpack.c.bf16 %v4134, %v4133
  %v4157 = vpack.c.bf16 %v4136, %v4135
  %v4158 = vpack.c.bf16 %v4138, %v4137
  %v4159 = vpack.c.bf16 %v4140, %v4139
  %v4160 = vpack.c.bf16 %v4142, %v4141
  %v4161 = vpack.c.bf16 %v4144, %v4143
  %v4162 = vpack.c.bf16 %v4146, %v4145
  %v4163 = vpack.c.bf16 %v4148, %v4147
  %v4164 = vpack.c.bf16 %v4150, %v4149
  %v4165 = vpack.c.bf16 %v4152, %v4151
  %v4166 = vpack.c.bf16 %v4153, %v4153
  %v4167 = vld [vmem:[%s4 + $0x30] sm:$0xf]
  %v4168 = vld [vmem:[%s4 + $0x34] sm:$0xf]
  %v4171 = vunpack.c.l.b16 %v4167
  %v4172 = vunpack.c.l.b16 %v4168
  %v4173 = vpack.c.b16 %v4172, %v4171
  %v4176 = vsel %vm141, %v4154, 0
  %v4179 = vsel %vm141, %v4155, 0
  %v4182 = vsel %vm141, %v4156, 0
  %v4185 = vsel %vm141, %v4157, 0
  %v4188 = vsel %vm141, %v4158, 0
  %v4191 = vsel %vm141, %v4159, 0
  %v4194 = vsel %vm141, %v4160, 0
  %v4197 = vsel %vm141, %v4161, 0
  %v4200 = vsel %vm141, %v4162, 0
  %v4203 = vsel %vm141, %v4163, 0
  %v4206 = vsel %vm141, %v4164, 0
  %v4209 = vsel %vm141, %v4165, 0
  %v4212 = vsel %vm141, %v4166, 0
  %4214 = vmatprep.subr.bf16.mxu0 0
  %4215 = vmatpush1.bf16.msra.mxu0 %v4173
  %4216 = vmatprep.subr.bf16.mxu0 0
  %4217 = vmatpush1.bf16.msra.mxu0 0
  %4218 = vmatprep.subr.bf16.mxu0 0
  %4219 = vmatpush1.bf16.msra.mxu0 0
  %4220 = vmatprep.subr.bf16.mxu0 0
  %4221 = vmatpush1.bf16.msra.mxu0 0
  %4222 = vmatprep.subr.bf16.mxu0 0
  %4223 = vmatpush1.bf16.msra.mxu0 0
  %4224 = vmatprep.subr.bf16.mxu0 0
  %4225 = vmatpush1.bf16.msra.mxu0 0
  %4226 = vmatprep.subr.bf16.mxu0 0
  %4227 = vmatpush1.bf16.msra.mxu0 0
  %4228 = vmatprep.subr.bf16.mxu0 0
  %4229 = vmatpush1.bf16.msra.mxu0 0
  %4230 = vmatprep.subr.bf16.mxu0 0
  %4231 = vmatpush1.bf16.msra.mxu0 0
  %4232 = vmatprep.subr.bf16.mxu0 0
  %4233 = vmatpush1.bf16.msra.mxu0 0
  %4234 = vmatprep.subr.bf16.mxu0 0
  %4235 = vmatpush1.bf16.msra.mxu0 0
  %4236 = vmatprep.subr.bf16.mxu0 0
  %4237 = vmatpush1.bf16.msra.mxu0 0
  %4238 = vmatprep.subr.bf16.mxu0 0
  %4239 = vmatpush1.bf16.msra.mxu0 0
  %4240 = vmatprep.subr.bf16.mxu0 0
  %4241 = vmatpush1.bf16.msra.mxu0 0
  %4242 = vmatprep.subr.bf16.mxu0 0
  %4243 = vmatpush1.bf16.msra.mxu0 0
  %4244 = vmatprep.subr.bf16.mxu0 0
  %4245 = vmatpush1.bf16.msra.mxu0 0
  %4246 = vmatprep.mubr.bf16.mxu0 0
  %4247 = vmatmul.mubr.bf16.gmra.mrb[0].mxu0 %v4176
  %v4248 = vpop.f32.mrb[0].mxu0
  %v4249 = vadd.f32 0.0, %v4248
  %v4250 = vpop.f32.mrb[0].mxu0
  %v4251 = vpop.f32.mrb[0].mxu0
  %v4252 = vadd.f32 0.0, %v4251
  %v4253 = vpop.f32.mrb[0].mxu0
  %4254 = vmatprep.mubr.bf16.mxu0 0
  %4255 = vmatmul.mubr.bf16.gmra.mrb[0].mxu0 %v4179
  %v4256 = vpop.f32.mrb[0].mxu0
  %v4257 = vadd.f32 0.0, %v4256
  %v4258 = vpop.f32.mrb[0].mxu0
  %v4259 = vpop.f32.mrb[0].mxu0
  %v4260 = vadd.f32 0.0, %v4259
  %v4261 = vpop.f32.mrb[0].mxu0
  %4262 = vmatprep.mubr.bf16.mxu0 0
  %4263 = vmatmul.mubr.bf16.gmra.mrb[0].mxu0 %v4182
  %v4264 = vpop.f32.mrb[0].mxu0
  %v4265 = vadd.f32 0.0, %v4264
  %v4266 = vpop.f32.mrb[0].mxu0
  %v4267 = vpop.f32.mrb[0].mxu0
  %v4268 = vadd.f32 0.0, %v4267
  %v4269 = vpop.f32.mrb[0].mxu0
  %4270 = vmatprep.mubr.bf16.mxu0 0
  %4271 = vmatmul.mubr.bf16.gmra.mrb[0].mxu0 %v4185
  %v4272 = vpop.f32.mrb[0].mxu0
  %v4273 = vadd.f32 0.0, %v4272
  %v4274 = vpop.f32.mrb[0].mxu0
  %v4275 = vpop.f32.mrb[0].mxu0
  %v4276 = vadd.f32 0.0, %v4275
  %v4277 = vpop.f32.mrb[0].mxu0
  %4278 = vmatprep.mubr.bf16.mxu0 0
  %4279 = vmatmul.mubr.bf16.gmra.mrb[0].mxu0 %v4188
  %v4280 = vpop.f32.mrb[0].mxu0
  %v4281 = vadd.f32 0.0, %v4280
  %v4282 = vpop.f32.mrb[0].mxu0
  %v4283 = vpop.f32.mrb[0].mxu0
  %v4284 = vadd.f32 0.0, %v4283
  %v4285 = vpop.f32.mrb[0].mxu0
  %4286 = vmatprep.mubr.bf16.mxu0 0
  %4287 = vmatmul.mubr.bf16.gmra.mrb[0].mxu0 %v4191
  %v4288 = vpop.f32.mrb[0].mxu0
  %v4289 = vadd.f32 0.0, %v4288
  %v4290 = vpop.f32.mrb[0].mxu0
  %v4291 = vpop.f32.mrb[0].mxu0
  %v4292 = vadd.f32 0.0, %v4291
  %v4293 = vpop.f32.mrb[0].mxu0
  %4294 = vmatprep.mubr.bf16.mxu0 0
  %4295 = vmatmul.mubr.bf16.gmra.mrb[0].mxu0 %v4194
  %v4296 = vpop.f32.mrb[0].mxu0
  %v4297 = vadd.f32 0.0, %v4296
  %v4298 = vpop.f32.mrb[0].mxu0
  %v4299 = vpop.f32.mrb[0].mxu0
  %v4300 = vadd.f32 0.0, %v4299
  %v4301 = vpop.f32.mrb[0].mxu0
  %4302 = vmatprep.mubr.bf16.mxu0 0
  %4303 = vmatmul.mubr.bf16.gmra.mrb[0].mxu0 %v4197
  %v4304 = vpop.f32.mrb[0].mxu0
  %v4305 = vadd.f32 0.0, %v4304
  %v4306 = vpop.f32.mrb[0].mxu0
  %v4307 = vpop.f32.mrb[0].mxu0
  %v4308 = vadd.f32 0.0, %v4307
  %v4309 = vpop.f32.mrb[0].mxu0
  %4310 = vmatprep.mubr.bf16.mxu0 0
  %4311 = vmatmul.mubr.bf16.gmra.mrb[0].mxu0 %v4200
  %v4312 = vpop.f32.mrb[0].mxu0
  %v4313 = vadd.f32 0.0, %v4312
  %v4314 = vpop.f32.mrb[0].mxu0
  %v4315 = vpop.f32.mrb[0].mxu0
  %v4316 = vadd.f32 0.0, %v4315
  %v4317 = vpop.f32.mrb[0].mxu0
  %4318 = vmatprep.mubr.bf16.mxu0 0
  %4319 = vmatmul.mubr.bf16.gmra.mrb[0].mxu0 %v4203
  %v4320 = vpop.f32.mrb[0].mxu0
  %v4321 = vadd.f32 0.0, %v4320
  %v4322 = vpop.f32.mrb[0].mxu0
  %v4323 = vpop.f32.mrb[0].mxu0
  %v4324 = vadd.f32 0.0, %v4323
  %v4325 = vpop.f32.mrb[0].mxu0
  %4326 = vmatprep.mubr.bf16.mxu0 0
  %4327 = vmatmul.mubr.bf16.gmra.mrb[0].mxu0 %v4206
  %v4328 = vpop.f32.mrb[0].mxu0
  %v4329 = vadd.f32 0.0, %v4328
  %v4330 = vpop.f32.mrb[0].mxu0
  %v4331 = vpop.f32.mrb[0].mxu0
  %v4332 = vadd.f32 0.0, %v4331
  %v4333 = vpop.f32.mrb[0].mxu0
  %4334 = vmatprep.mubr.bf16.mxu0 0
  %4335 = vmatmul.mubr.bf16.gmra.mrb[0].mxu0 %v4209
  %v4336 = vpop.f32.mrb[0].mxu0
  %v4337 = vadd.f32 0.0, %v4336
  %v4338 = vpop.f32.mrb[0].mxu0
  %v4339 = vpop.f32.mrb[0].mxu0
  %v4340 = vadd.f32 0.0, %v4339
  %v4341 = vpop.f32.mrb[0].mxu0
  %4342 = vmatprep.mubr.bf16.mxu0 0
  %4343 = vmatmul.mubr.bf16.gmra.mrb[0].mxu0 %v4212
  %v4344 = vpop.f32.mrb[0].mxu0
  %v4345 = vadd.f32 0.0, %v4344
  %v4346 = vpop.f32.mrb[0].mxu0
  %v4347 = vpop.f32.mrb[0].mxu0
  %v4348 = vpop.f32.mrb[0].mxu0
  %4349 = vdwg.mxu0
  %v4350 = vadd.f32 %v4104, %v4249
  %v4351 = vadd.f32 %v4105, %v4252
  %v4352 = vadd.f32 %v4106, %v4257
  %v4353 = vadd.f32 %v4107, %v4260
  %v4354 = vadd.f32 %v4108, %v4265
  %v4355 = vadd.f32 %v4109, %v4268
  %v4356 = vadd.f32 %v4110, %v4273
  %v4357 = vadd.f32 %v4111, %v4276
  %v4358 = vadd.f32 %v4112, %v4281
  %v4359 = vadd.f32 %v4113, %v4284
  %v4360 = vadd.f32 %v4114, %v4289
  %v4361 = vadd.f32 %v4115, %v4292
  %v4362 = vadd.f32 %v4116, %v4297
  %v4363 = vadd.f32 %v4117, %v4300
  %v4364 = vadd.f32 %v4118, %v4305
  %v4365 = vadd.f32 %v4119, %v4308
  %v4366 = vadd.f32 %v4120, %v4313
  %v4367 = vadd.f32 %v4121, %v4316
  %v4368 = vadd.f32 %v4122, %v4321
  %v4369 = vadd.f32 %v4123, %v4324
  %v4370 = vadd.f32 %v4124, %v4329
  %v4371 = vadd.f32 %v4125, %v4332
  %v4372 = vadd.f32 %v4126, %v4337
  %v4373 = vadd.f32 %v4127, %v4340
  %v4374 = vadd.f32 %v4128, %v4345
  %v4375 = vld [vmem:[#allocation2 + $0x1a] sm:$0xff]
  %v4376 = vld [vmem:[#allocation2 + $0x22] sm:$0xff]
  %v4377 = vld [vmem:[#allocation2 + $0x2a] sm:$0xff]
  %v4378 = vld [vmem:[#allocation2 + $0x32] sm:$0xff]
  %v4379 = vld [vmem:[#allocation2 + $0x3a] sm:$0xff]
  %v4380 = vld [vmem:[#allocation2 + $0x42] sm:$0xff]
  %v4381 = vld [vmem:[#allocation2 + $0x4a] sm:$0xff]
  %v4382 = vld [vmem:[#allocation2 + $0x52] sm:$0xff]
  %v4383 = vld [vmem:[#allocation2 + $0x5a] sm:$0xff]
  %v4384 = vld [vmem:[#allocation2 + $0x62] sm:$0xff]
  %v4385 = vld [vmem:[#allocation2 + $0x6a] sm:$0xff]
  %v4386 = vld [vmem:[#allocation2 + $0x72] sm:$0xff]
  %v4387 = vld [vmem:[#allocation2 + $0x7a] sm:$0xff]
  %v4388 = vld [vmem:[#allocation2 + $0x82] sm:$0xff]
  %v4389 = vld [vmem:[#allocation2 + $0x8a] sm:$0xff]
  %v4390 = vld [vmem:[#allocation2 + $0x92] sm:$0xff]
  %v4391 = vld [vmem:[#allocation2 + $0x9a] sm:$0xff]
  %v4392 = vld [vmem:[#allocation2 + $0xa2] sm:$0xff]
  %v4393 = vld [vmem:[#allocation2 + $0xaa] sm:$0xff]
  %v4394 = vld [vmem:[#allocation2 + $0xb2] sm:$0xff]
  %v4395 = vld [vmem:[#allocation2 + $0xba] sm:$0xff]
  %v4396 = vld [vmem:[#allocation2 + $0xc2] sm:$0xff]
  %v4397 = vld [vmem:[#allocation2 + $0xca] sm:$0xff]
  %v4398 = vld [vmem:[#allocation2 + $0xd2] sm:$0xff]
  %v4399 = vld [vmem:[#allocation2 + $0xda] sm:$0xff]
  %v4400 = vpack.c.bf16 %v4376, %v4375
  %v4401 = vpack.c.bf16 %v4378, %v4377
  %v4402 = vpack.c.bf16 %v4380, %v4379
  %v4403 = vpack.c.bf16 %v4382, %v4381
  %v4404 = vpack.c.bf16 %v4384, %v4383
  %v4405 = vpack.c.bf16 %v4386, %v4385
  %v4406 = vpack.c.bf16 %v4388, %v4387
  %v4407 = vpack.c.bf16 %v4390, %v4389
  %v4408 = vpack.c.bf16 %v4392, %v4391
  %v4409 = vpack.c.bf16 %v4394, %v4393
  %v4410 = vpack.c.bf16 %v4396, %v4395
  %v4411 = vpack.c.bf16 %v4398, %v4397
  %v4412 = vpack.c.bf16 %v4399, %v4399
  %v4413 = vld [vmem:[%s4 + $0x38] sm:$0xf]
  %v4414 = vld [vmem:[%s4 + $0x3c] sm:$0xf]
  %v4417 = vunpack.c.l.b16 %v4413
  %v4418 = vunpack.c.l.b16 %v4414
  %v4419 = vpack.c.b16 %v4418, %v4417
  %v4422 = vsel %vm141, %v4400, 0
  %v4425 = vsel %vm141, %v4401, 0
  %v4428 = vsel %vm141, %v4402, 0
  %v4431 = vsel %vm141, %v4403, 0
  %v4434 = vsel %vm141, %v4404, 0
  %v4437 = vsel %vm141, %v4405, 0
  %v4440 = vsel %vm141, %v4406, 0
  %v4443 = vsel %vm141, %v4407, 0
  %v4446 = vsel %vm141, %v4408, 0
  %v4449 = vsel %vm141, %v4409, 0
  %v4452 = vsel %vm141, %v4410, 0
  %v4455 = vsel %vm141, %v4411, 0
  %v4458 = vsel %vm141, %v4412, 0
  %4460 = vmatprep.subr.bf16.mxu0 0
  %4461 = vmatpush1.bf16.msra.mxu0 %v4419
  %4462 = vmatprep.subr.bf16.mxu0 0
  %4463 = vmatpush1.bf16.msra.mxu0 0
  %4464 = vmatprep.subr.bf16.mxu0 0
  %4465 = vmatpush1.bf16.msra.mxu0 0
  %4466 = vmatprep.subr.bf16.mxu0 0
  %4467 = vmatpush1.bf16.msra.mxu0 0
  %4468 = vmatprep.subr.bf16.mxu0 0
  %4469 = vmatpush1.bf16.msra.mxu0 0
  %4470 = vmatprep.subr.bf16.mxu0 0
  %4471 = vmatpush1.bf16.msra.mxu0 0
  %4472 = vmatprep.subr.bf16.mxu0 0
  %4473 = vmatpush1.bf16.msra.mxu0 0
  %4474 = vmatprep.subr.bf16.mxu0 0
  %4475 = vmatpush1.bf16.msra.mxu0 0
  %4476 = vmatprep.subr.bf16.mxu0 0
  %4477 = vmatpush1.bf16.msra.mxu0 0
  %4478 = vmatprep.subr.bf16.mxu0 0
  %4479 = vmatpush1.bf16.msra.mxu0 0
  %4480 = vmatprep.subr.bf16.mxu0 0
  %4481 = vmatpush1.bf16.msra.mxu0 0
  %4482 = vmatprep.subr.bf16.mxu0 0
  %4483 = vmatpush1.bf16.msra.mxu0 0
  %4484 = vmatprep.subr.bf16.mxu0 0
  %4485 = vmatpush1.bf16.msra.mxu0 0
  %4486 = vmatprep.subr.bf16.mxu0 0
  %4487 = vmatpush1.bf16.msra.mxu0 0
  %4488 = vmatprep.subr.bf16.mxu0 0
  %4489 = vmatpush1.bf16.msra.mxu0 0
  %4490 = vmatprep.subr.bf16.mxu0 0
  %4491 = vmatpush1.bf16.msra.mxu0 0
  %4492 = vmatprep.mubr.bf16.mxu0 0
  %4493 = vmatmul.mubr.bf16.gmra.mrb[0].mxu0 %v4422
  %v4494 = vpop.f32.mrb[0].mxu0
  %v4495 = vadd.f32 0.0, %v4494
  %v4496 = vpop.f32.mrb[0].mxu0
  %v4497 = vpop.f32.mrb[0].mxu0
  %v4498 = vadd.f32 0.0, %v4497
  %v4499 = vpop.f32.mrb[0].mxu0
  %4500 = vmatprep.mubr.bf16.mxu0 0
  %4501 = vmatmul.mubr.bf16.gmra.mrb[0].mxu0 %v4425
  %v4502 = vpop.f32.mrb[0].mxu0
  %v4503 = vadd.f32 0.0, %v4502
  %v4504 = vpop.f32.mrb[0].mxu0
  %v4505 = vpop.f32.mrb[0].mxu0
  %v4506 = vadd.f32 0.0, %v4505
  %v4507 = vpop.f32.mrb[0].mxu0
  %4508 = vmatprep.mubr.bf16.mxu0 0
  %4509 = vmatmul.mubr.bf16.gmra.mrb[0].mxu0 %v4428
  %v4510 = vpop.f32.mrb[0].mxu0
  %v4511 = vadd.f32 0.0, %v4510
  %v4512 = vpop.f32.mrb[0].mxu0
  %v4513 = vpop.f32.mrb[0].mxu0
  %v4514 = vadd.f32 0.0, %v4513
  %v4515 = vpop.f32.mrb[0].mxu0
  %4516 = vmatprep.mubr.bf16.mxu0 0
  %4517 = vmatmul.mubr.bf16.gmra.mrb[0].mxu0 %v4431
  %v4518 = vpop.f32.mrb[0].mxu0
  %v4519 = vadd.f32 0.0, %v4518
  %v4520 = vpop.f32.mrb[0].mxu0
  %v4521 = vpop.f32.mrb[0].mxu0
  %v4522 = vadd.f32 0.0, %v4521
  %v4523 = vpop.f32.mrb[0].mxu0
  %4524 = vmatprep.mubr.bf16.mxu0 0
  %4525 = vmatmul.mubr.bf16.gmra.mrb[0].mxu0 %v4434
  %v4526 = vpop.f32.mrb[0].mxu0
  %v4527 = vadd.f32 0.0, %v4526
  %v4528 = vpop.f32.mrb[0].mxu0
  %v4529 = vpop.f32.mrb[0].mxu0
  %v4530 = vadd.f32 0.0, %v4529
  %v4531 = vpop.f32.mrb[0].mxu0
  %4532 = vmatprep.mubr.bf16.mxu0 0
  %4533 = vmatmul.mubr.bf16.gmra.mrb[0].mxu0 %v4437
  %v4534 = vpop.f32.mrb[0].mxu0
  %v4535 = vadd.f32 0.0, %v4534
  %v4536 = vpop.f32.mrb[0].mxu0
  %v4537 = vpop.f32.mrb[0].mxu0
  %v4538 = vadd.f32 0.0, %v4537
  %v4539 = vpop.f32.mrb[0].mxu0
  %4540 = vmatprep.mubr.bf16.mxu0 0
  %4541 = vmatmul.mubr.bf16.gmra.mrb[0].mxu0 %v4440
  %v4542 = vpop.f32.mrb[0].mxu0
  %v4543 = vadd.f32 0.0, %v4542
  %v4544 = vpop.f32.mrb[0].mxu0
  %v4545 = vpop.f32.mrb[0].mxu0
  %v4546 = vadd.f32 0.0, %v4545
  %v4547 = vpop.f32.mrb[0].mxu0
  %4548 = vmatprep.mubr.bf16.mxu0 0
  %4549 = vmatmul.mubr.bf16.gmra.mrb[0].mxu0 %v4443
  %v4550 = vpop.f32.mrb[0].mxu0
  %v4551 = vadd.f32 0.0, %v4550
  %v4552 = vpop.f32.mrb[0].mxu0
  %v4553 = vpop.f32.mrb[0].mxu0
  %v4554 = vadd.f32 0.0, %v4553
  %v4555 = vpop.f32.mrb[0].mxu0
  %4556 = vmatprep.mubr.bf16.mxu0 0
  %4557 = vmatmul.mubr.bf16.gmra.mrb[0].mxu0 %v4446
  %v4558 = vpop.f32.mrb[0].mxu0
  %v4559 = vadd.f32 0.0, %v4558
  %v4560 = vpop.f32.mrb[0].mxu0
  %v4561 = vpop.f32.mrb[0].mxu0
  %v4562 = vadd.f32 0.0, %v4561
  %v4563 = vpop.f32.mrb[0].mxu0
  %4564 = vmatprep.mubr.bf16.mxu0 0
  %4565 = vmatmul.mubr.bf16.gmra.mrb[0].mxu0 %v4449
  %v4566 = vpop.f32.mrb[0].mxu0
  %v4567 = vadd.f32 0.0, %v4566
  %v4568 = vpop.f32.mrb[0].mxu0
  %v4569 = vpop.f32.mrb[0].mxu0
  %v4570 = vadd.f32 0.0, %v4569
  %v4571 = vpop.f32.mrb[0].mxu0
  %4572 = vmatprep.mubr.bf16.mxu0 0
  %4573 = vmatmul.mubr.bf16.gmra.mrb[0].mxu0 %v4452
  %v4574 = vpop.f32.mrb[0].mxu0
  %v4575 = vadd.f32 0.0, %v4574
  %v4576 = vpop.f32.mrb[0].mxu0
  %v4577 = vpop.f32.mrb[0].mxu0
  %v4578 = vadd.f32 0.0, %v4577
  %v4579 = vpop.f32.mrb[0].mxu0
  %4580 = vmatprep.mubr.bf16.mxu0 0
  %4581 = vmatmul.mubr.bf16.gmra.mrb[0].mxu0 %v4455
  %v4582 = vpop.f32.mrb[0].mxu0
  %v4583 = vadd.f32 0.0, %v4582
  %v4584 = vpop.f32.mrb[0].mxu0
  %v4585 = vpop.f32.mrb[0].mxu0
  %v4586 = vadd.f32 0.0, %v4585
  %v4587 = vpop.f32.mrb[0].mxu0
  %4588 = vmatprep.mubr.bf16.mxu0 0
  %4589 = vmatmul.mubr.bf16.gmra.mrb[0].mxu0 %v4458
  %v4590 = vpop.f32.mrb[0].mxu0
  %v4591 = vadd.f32 0.0, %v4590
  %v4592 = vpop.f32.mrb[0].mxu0
  %v4593 = vpop.f32.mrb[0].mxu0
  %v4594 = vpop.f32.mrb[0].mxu0
  %4595 = vdwg.mxu0
  %v4596 = vadd.f32 %v4350, %v4495
  %v4597 = vadd.f32 %v4351, %v4498
  %v4598 = vadd.f32 %v4352, %v4503
  %v4599 = vadd.f32 %v4353, %v4506
  %v4600 = vadd.f32 %v4354, %v4511
  %v4601 = vadd.f32 %v4355, %v4514
  %v4602 = vadd.f32 %v4356, %v4519
  %v4603 = vadd.f32 %v4357, %v4522
  %v4604 = vadd.f32 %v4358, %v4527
  %v4605 = vadd.f32 %v4359, %v4530
  %v4606 = vadd.f32 %v4360, %v4535
  %v4607 = vadd.f32 %v4361, %v4538
  %v4608 = vadd.f32 %v4362, %v4543
  %v4609 = vadd.f32 %v4363, %v4546
  %v4610 = vadd.f32 %v4364, %v4551
  %v4611 = vadd.f32 %v4365, %v4554
  %v4612 = vadd.f32 %v4366, %v4559
  %v4613 = vadd.f32 %v4367, %v4562
  %v4614 = vadd.f32 %v4368, %v4567
  %v4615 = vadd.f32 %v4369, %v4570
  %v4616 = vadd.f32 %v4370, %v4575
  %v4617 = vadd.f32 %v4371, %v4578
  %v4618 = vadd.f32 %v4372, %v4583
  %v4619 = vadd.f32 %v4373, %v4586
  %v4620 = vadd.f32 %v4374, %v4591
  %v4621 = vld [vmem:[#allocation2 + $0x1b] sm:$0xff]
  %v4622 = vld [vmem:[#allocation2 + $0x23] sm:$0xff]
  %v4623 = vld [vmem:[#allocation2 + $0x2b] sm:$0xff]
  %v4624 = vld [vmem:[#allocation2 + $0x33] sm:$0xff]
  %v4625 = vld [vmem:[#allocation2 + $0x3b] sm:$0xff]
  %v4626 = vld [vmem:[#allocation2 + $0x43] sm:$0xff]
  %v4627 = vld [vmem:[#allocation2 + $0x4b] sm:$0xff]
  %v4628 = vld [vmem:[#allocation2 + $0x53] sm:$0xff]
  %v4629 = vld [vmem:[#allocation2 + $0x5b] sm:$0xff]
  %v4630 = vld [vmem:[#allocation2 + $0x63] sm:$0xff]
  %v4631 = vld [vmem:[#allocation2 + $0x6b] sm:$0xff]
  %v4632 = vld [vmem:[#allocation2 + $0x73] sm:$0xff]
  %v4633 = vld [vmem:[#allocation2 + $0x7b] sm:$0xff]
  %v4634 = vld [vmem:[#allocation2 + $0x83] sm:$0xff]
  %v4635 = vld [vmem:[#allocation2 + $0x8b] sm:$0xff]
  %v4636 = vld [vmem:[#allocation2 + $0x93] sm:$0xff]
  %v4637 = vld [vmem:[#allocation2 + $0x9b] sm:$0xff]
  %v4638 = vld [vmem:[#allocation2 + $0xa3] sm:$0xff]
  %v4639 = vld [vmem:[#allocation2 + $0xab] sm:$0xff]
  %v4640 = vld [vmem:[#allocation2 + $0xb3] sm:$0xff]
  %v4641 = vld [vmem:[#allocation2 + $0xbb] sm:$0xff]
  %v4642 = vld [vmem:[#allocation2 + $0xc3] sm:$0xff]
  %v4643 = vld [vmem:[#allocation2 + $0xcb] sm:$0xff]
  %v4644 = vld [vmem:[#allocation2 + $0xd3] sm:$0xff]
  %v4645 = vld [vmem:[#allocation2 + $0xdb] sm:$0xff]
  %v4646 = vpack.c.bf16 %v4622, %v4621
  %v4647 = vpack.c.bf16 %v4624, %v4623
  %v4648 = vpack.c.bf16 %v4626, %v4625
  %v4649 = vpack.c.bf16 %v4628, %v4627
  %v4650 = vpack.c.bf16 %v4630, %v4629
  %v4651 = vpack.c.bf16 %v4632, %v4631
  %v4652 = vpack.c.bf16 %v4634, %v4633
  %v4653 = vpack.c.bf16 %v4636, %v4635
  %v4654 = vpack.c.bf16 %v4638, %v4637
  %v4655 = vpack.c.bf16 %v4640, %v4639
  %v4656 = vpack.c.bf16 %v4642, %v4641
  %v4657 = vpack.c.bf16 %v4644, %v4643
  %v4658 = vpack.c.bf16 %v4645, %v4645
  %v4659 = vld [vmem:[%s4 + $0x40] sm:$0xf]
  %v4660 = vld [vmem:[%s4 + $0x44] sm:$0xf]
  %v4663 = vunpack.c.l.b16 %v4659
  %v4664 = vunpack.c.l.b16 %v4660
  %v4665 = vpack.c.b16 %v4664, %v4663
  %v4668 = vsel %vm141, %v4646, 0
  %v4671 = vsel %vm141, %v4647, 0
  %v4674 = vsel %vm141, %v4648, 0
  %v4677 = vsel %vm141, %v4649, 0
  %v4680 = vsel %vm141, %v4650, 0
  %v4683 = vsel %vm141, %v4651, 0
  %v4686 = vsel %vm141, %v4652, 0
  %v4689 = vsel %vm141, %v4653, 0
  %v4692 = vsel %vm141, %v4654, 0
  %v4695 = vsel %vm141, %v4655, 0
  %v4698 = vsel %vm141, %v4656, 0
  %v4701 = vsel %vm141, %v4657, 0
  %v4704 = vsel %vm141, %v4658, 0
  %4706 = vmatprep.subr.bf16.mxu0 0
  %4707 = vmatpush1.bf16.msra.mxu0 %v4665
  %4708 = vmatprep.subr.bf16.mxu0 0
  %4709 = vmatpush1.bf16.msra.mxu0 0
  %4710 = vmatprep.subr.bf16.mxu0 0
  %4711 = vmatpush1.bf16.msra.mxu0 0
  %4712 = vmatprep.subr.bf16.mxu0 0
  %4713 = vmatpush1.bf16.msra.mxu0 0
  %4714 = vmatprep.subr.bf16.mxu0 0
  %4715 = vmatpush1.bf16.msra.mxu0 0
  %4716 = vmatprep.subr.bf16.mxu0 0
  %4717 = vmatpush1.bf16.msra.mxu0 0
  %4718 = vmatprep.subr.bf16.mxu0 0
  %4719 = vmatpush1.bf16.msra.mxu0 0
  %4720 = vmatprep.subr.bf16.mxu0 0
  %4721 = vmatpush1.bf16.msra.mxu0 0
  %4722 = vmatprep.subr.bf16.mxu0 0
  %4723 = vmatpush1.bf16.msra.mxu0 0
  %4724 = vmatprep.subr.bf16.mxu0 0
  %4725 = vmatpush1.bf16.msra.mxu0 0
  %4726 = vmatprep.subr.bf16.mxu0 0
  %4727 = vmatpush1.bf16.msra.mxu0 0
  %4728 = vmatprep.subr.bf16.mxu0 0
  %4729 = vmatpush1.bf16.msra.mxu0 0
  %4730 = vmatprep.subr.bf16.mxu0 0
  %4731 = vmatpush1.bf16.msra.mxu0 0
  %4732 = vmatprep.subr.bf16.mxu0 0
  %4733 = vmatpush1.bf16.msra.mxu0 0
  %4734 = vmatprep.subr.bf16.mxu0 0
  %4735 = vmatpush1.bf16.msra.mxu0 0
  %4736 = vmatprep.subr.bf16.mxu0 0
  %4737 = vmatpush1.bf16.msra.mxu0 0
  %4738 = vmatprep.mubr.bf16.mxu0 0
  %4739 = vmatmul.mubr.bf16.gmra.mrb[0].mxu0 %v4668
  %v4740 = vpop.f32.mrb[0].mxu0
  %v4741 = vadd.f32 0.0, %v4740
  %v4742 = vpop.f32.mrb[0].mxu0
  %v4743 = vpop.f32.mrb[0].mxu0
  %v4744 = vadd.f32 0.0, %v4743
  %v4745 = vpop.f32.mrb[0].mxu0
  %4746 = vmatprep.mubr.bf16.mxu0 0
  %4747 = vmatmul.mubr.bf16.gmra.mrb[0].mxu0 %v4671
  %v4748 = vpop.f32.mrb[0].mxu0
  %v4749 = vadd.f32 0.0, %v4748
  %v4750 = vpop.f32.mrb[0].mxu0
  %v4751 = vpop.f32.mrb[0].mxu0
  %v4752 = vadd.f32 0.0, %v4751
  %v4753 = vpop.f32.mrb[0].mxu0
  %4754 = vmatprep.mubr.bf16.mxu0 0
  %4755 = vmatmul.mubr.bf16.gmra.mrb[0].mxu0 %v4674
  %v4756 = vpop.f32.mrb[0].mxu0
  %v4757 = vadd.f32 0.0, %v4756
  %v4758 = vpop.f32.mrb[0].mxu0
  %v4759 = vpop.f32.mrb[0].mxu0
  %v4760 = vadd.f32 0.0, %v4759
  %v4761 = vpop.f32.mrb[0].mxu0
  %4762 = vmatprep.mubr.bf16.mxu0 0
  %4763 = vmatmul.mubr.bf16.gmra.mrb[0].mxu0 %v4677
  %v4764 = vpop.f32.mrb[0].mxu0
  %v4765 = vadd.f32 0.0, %v4764
  %v4766 = vpop.f32.mrb[0].mxu0
  %v4767 = vpop.f32.mrb[0].mxu0
  %v4768 = vadd.f32 0.0, %v4767
  %v4769 = vpop.f32.mrb[0].mxu0
  %4770 = vmatprep.mubr.bf16.mxu0 0
  %4771 = vmatmul.mubr.bf16.gmra.mrb[0].mxu0 %v4680
  %v4772 = vpop.f32.mrb[0].mxu0
  %v4773 = vadd.f32 0.0, %v4772
  %v4774 = vpop.f32.mrb[0].mxu0
  %v4775 = vpop.f32.mrb[0].mxu0
  %v4776 = vadd.f32 0.0, %v4775
  %v4777 = vpop.f32.mrb[0].mxu0
  %4778 = vmatprep.mubr.bf16.mxu0 0
  %4779 = vmatmul.mubr.bf16.gmra.mrb[0].mxu0 %v4683
  %v4780 = vpop.f32.mrb[0].mxu0
  %v4781 = vadd.f32 0.0, %v4780
  %v4782 = vpop.f32.mrb[0].mxu0
  %v4783 = vpop.f32.mrb[0].mxu0
  %v4784 = vadd.f32 0.0, %v4783
  %v4785 = vpop.f32.mrb[0].mxu0
  %4786 = vmatprep.mubr.bf16.mxu0 0
  %4787 = vmatmul.mubr.bf16.gmra.mrb[0].mxu0 %v4686
  %v4788 = vpop.f32.mrb[0].mxu0
  %v4789 = vadd.f32 0.0, %v4788
  %v4790 = vpop.f32.mrb[0].mxu0
  %v4791 = vpop.f32.mrb[0].mxu0
  %v4792 = vadd.f32 0.0, %v4791
  %v4793 = vpop.f32.mrb[0].mxu0
  %4794 = vmatprep.mubr.bf16.mxu0 0
  %4795 = vmatmul.mubr.bf16.gmra.mrb[0].mxu0 %v4689
  %v4796 = vpop.f32.mrb[0].mxu0
  %v4797 = vadd.f32 0.0, %v4796
  %v4798 = vpop.f32.mrb[0].mxu0
  %v4799 = vpop.f32.mrb[0].mxu0
  %v4800 = vadd.f32 0.0, %v4799
  %v4801 = vpop.f32.mrb[0].mxu0
  %4802 = vmatprep.mubr.bf16.mxu0 0
  %4803 = vmatmul.mubr.bf16.gmra.mrb[0].mxu0 %v4692
  %v4804 = vpop.f32.mrb[0].mxu0
  %v4805 = vadd.f32 0.0, %v4804
  %v4806 = vpop.f32.mrb[0].mxu0
  %v4807 = vpop.f32.mrb[0].mxu0
  %v4808 = vadd.f32 0.0, %v4807
  %v4809 = vpop.f32.mrb[0].mxu0
  %4810 = vmatprep.mubr.bf16.mxu0 0
  %4811 = vmatmul.mubr.bf16.gmra.mrb[0].mxu0 %v4695
  %v4812 = vpop.f32.mrb[0].mxu0
  %v4813 = vadd.f32 0.0, %v4812
  %v4814 = vpop.f32.mrb[0].mxu0
  %v4815 = vpop.f32.mrb[0].mxu0
  %v4816 = vadd.f32 0.0, %v4815
  %v4817 = vpop.f32.mrb[0].mxu0
  %4818 = vmatprep.mubr.bf16.mxu0 0
  %4819 = vmatmul.mubr.bf16.gmra.mrb[0].mxu0 %v4698
  %v4820 = vpop.f32.mrb[0].mxu0
  %v4821 = vadd.f32 0.0, %v4820
  %v4822 = vpop.f32.mrb[0].mxu0
  %v4823 = vpop.f32.mrb[0].mxu0
  %v4824 = vadd.f32 0.0, %v4823
  %v4825 = vpop.f32.mrb[0].mxu0
  %4826 = vmatprep.mubr.bf16.mxu0 0
  %4827 = vmatmul.mubr.bf16.gmra.mrb[0].mxu0 %v4701
  %v4828 = vpop.f32.mrb[0].mxu0
  %v4829 = vadd.f32 0.0, %v4828
  %v4830 = vpop.f32.mrb[0].mxu0
  %v4831 = vpop.f32.mrb[0].mxu0
  %v4832 = vadd.f32 0.0, %v4831
  %v4833 = vpop.f32.mrb[0].mxu0
  %4834 = vmatprep.mubr.bf16.mxu0 0
  %4835 = vmatmul.mubr.bf16.gmra.mrb[0].mxu0 %v4704
  %v4836 = vpop.f32.mrb[0].mxu0
  %v4837 = vadd.f32 0.0, %v4836
  %v4838 = vpop.f32.mrb[0].mxu0
  %v4839 = vpop.f32.mrb[0].mxu0
  %v4840 = vpop.f32.mrb[0].mxu0
  %4841 = vdwg.mxu0
  %v4842 = vadd.f32 %v4596, %v4741
  %v4843 = vadd.f32 %v4597, %v4744
  %v4844 = vadd.f32 %v4598, %v4749
  %v4845 = vadd.f32 %v4599, %v4752
  %v4846 = vadd.f32 %v4600, %v4757
  %v4847 = vadd.f32 %v4601, %v4760
  %v4848 = vadd.f32 %v4602, %v4765
  %v4849 = vadd.f32 %v4603, %v4768
  %v4850 = vadd.f32 %v4604, %v4773
  %v4851 = vadd.f32 %v4605, %v4776
  %v4852 = vadd.f32 %v4606, %v4781
  %v4853 = vadd.f32 %v4607, %v4784
  %v4854 = vadd.f32 %v4608, %v4789
  %v4855 = vadd.f32 %v4609, %v4792
  %v4856 = vadd.f32 %v4610, %v4797
  %v4857 = vadd.f32 %v4611, %v4800
  %v4858 = vadd.f32 %v4612, %v4805
  %v4859 = vadd.f32 %v4613, %v4808
  %v4860 = vadd.f32 %v4614, %v4813
  %v4861 = vadd.f32 %v4615, %v4816
  %v4862 = vadd.f32 %v4616, %v4821
  %v4863 = vadd.f32 %v4617, %v4824
  %v4864 = vadd.f32 %v4618, %v4829
  %v4865 = vadd.f32 %v4619, %v4832
  %v4866 = vadd.f32 %v4620, %v4837
  %v4867 = vmul.f32 %v4842, %v2223
  %v4868 = vmul.f32 %v4843, %v2228
  %v4869 = vmul.f32 %v4844, %v2233
  %v4870 = vmul.f32 %v4845, %v2238
  %v4871 = vmul.f32 %v4846, %v2243
  %v4872 = vmul.f32 %v4847, %v2248
  %v4873 = vmul.f32 %v4848, %v2253
  %v4874 = vmul.f32 %v4849, %v2258
  %v4875 = vmul.f32 %v4850, %v2263
  %v4876 = vmul.f32 %v4851, %v2268
  %v4877 = vmul.f32 %v4852, %v2273
  %v4878 = vmul.f32 %v4853, %v2278
  %v4879 = vmul.f32 %v4854, %v2283
  %v4880 = vmul.f32 %v4855, %v2288
  %v4881 = vmul.f32 %v4856, %v2293
  %v4882 = vmul.f32 %v4857, %v2298
  %v4883 = vmul.f32 %v4858, %v2303
  %v4884 = vmul.f32 %v4859, %v2308
  %v4885 = vmul.f32 %v4860, %v2313
  %v4886 = vmul.f32 %v4861, %v2318
  %v4887 = vmul.f32 %v4862, %v2323
  %v4888 = vmul.f32 %v4863, %v2328
  %v4889 = vmul.f32 %v4864, %v2333
  %v4890 = vmul.f32 %v4865, %v2338
  %v4891 = vmul.f32 %v4866, %v2343
  %v4892 = vadd.f32 %v4867, %v4868
  %v4893 = vadd.f32 %v4892, %v4869
  %v4894 = vadd.f32 %v4893, %v4870
  %v4895 = vadd.f32 %v4894, %v4871
  %v4896 = vadd.f32 %v4895, %v4872
  %v4897 = vadd.f32 %v4896, %v4873
  %v4898 = vadd.f32 %v4897, %v4874
  %v4899 = vadd.f32 %v4898, %v4875
  %v4900 = vadd.f32 %v4899, %v4876
  %v4901 = vadd.f32 %v4900, %v4877
  %v4902 = vadd.f32 %v4901, %v4878
  %v4903 = vadd.f32 %v4902, %v4879
  %v4904 = vadd.f32 %v4903, %v4880
  %v4905 = vadd.f32 %v4904, %v4881
  %v4906 = vadd.f32 %v4905, %v4882
  %v4907 = vadd.f32 %v4906, %v4883
  %v4908 = vadd.f32 %v4907, %v4884
  %v4909 = vadd.f32 %v4908, %v4885
  %v4910 = vadd.f32 %v4909, %v4886
  %v4911 = vadd.f32 %v4910, %v4887
  %v4912 = vadd.f32 %v4911, %v4888
  %v4913 = vadd.f32 %v4912, %v4889
  %v4914 = vadd.f32 %v4913, %v4890
  %v4915 = vadd.f32 %v4914, %v4891
  %v4916 = vrot.slane %v4915, 4
  %v4917 = vadd.f32 %v4915, %v4916
  %v4918 = vrot.slane %v4917, 2
  %v4919 = vadd.f32 %v4917, %v4918
  %v4920 = vrot.slane %v4919, 1
  %v4921 = vadd.f32 %v4919, %v4920
  %v4922 = vmul.f32 %v4921, 0.0078125
  %v4923 = vsub.f32 %v4867, %v4922
  %v4924 = vsub.f32 %v4868, %v4922
  %v4925 = vsub.f32 %v4869, %v4922
  %v4926 = vsub.f32 %v4870, %v4922
  %v4927 = vsub.f32 %v4871, %v4922
  %v4928 = vsub.f32 %v4872, %v4922
  %v4929 = vsub.f32 %v4873, %v4922
  %v4930 = vsub.f32 %v4874, %v4922
  %v4931 = vsub.f32 %v4875, %v4922
  %v4932 = vsub.f32 %v4876, %v4922
  %v4933 = vsub.f32 %v4877, %v4922
  %v4934 = vsub.f32 %v4878, %v4922
  %v4935 = vsub.f32 %v4879, %v4922
  %v4936 = vsub.f32 %v4880, %v4922
  %v4937 = vsub.f32 %v4881, %v4922
  %v4938 = vsub.f32 %v4882, %v4922
  %v4939 = vsub.f32 %v4883, %v4922
  %v4940 = vsub.f32 %v4884, %v4922
  %v4941 = vsub.f32 %v4885, %v4922
  %v4942 = vsub.f32 %v4886, %v4922
  %v4943 = vsub.f32 %v4887, %v4922
  %v4944 = vsub.f32 %v4888, %v4922
  %v4945 = vsub.f32 %v4889, %v4922
  %v4946 = vsub.f32 %v4890, %v4922
  %v4947 = vsub.f32 %v4891, %v4922
  %v4948 = vmul.f32 %v4923, %v2223
  %v4949 = vmul.f32 %v4924, %v2228
  %v4950 = vmul.f32 %v4925, %v2233
  %v4951 = vmul.f32 %v4926, %v2238
  %v4952 = vmul.f32 %v4927, %v2243
  %v4953 = vmul.f32 %v4928, %v2248
  %v4954 = vmul.f32 %v4929, %v2253
  %v4955 = vmul.f32 %v4930, %v2258
  %v4956 = vmul.f32 %v4931, %v2263
  %v4957 = vmul.f32 %v4932, %v2268
  %v4958 = vmul.f32 %v4933, %v2273
  %v4959 = vmul.f32 %v4934, %v2278
  %v4960 = vmul.f32 %v4935, %v2283
  %v4961 = vmul.f32 %v4936, %v2288
  %v4962 = vmul.f32 %v4937, %v2293
  %v4963 = vmul.f32 %v4938, %v2298
  %v4964 = vmul.f32 %v4939, %v2303
  %v4965 = vmul.f32 %v4940, %v2308
  %v4966 = vmul.f32 %v4941, %v2313
  %v4967 = vmul.f32 %v4942, %v2318
  %v4968 = vmul.f32 %v4943, %v2323
  %v4969 = vmul.f32 %v4944, %v2328
  %v4970 = vmul.f32 %v4945, %v2333
  %v4971 = vmul.f32 %v4946, %v2338
  %v4972 = vmul.f32 %v4947, %v2343
  %v4973 = vmul.f32 %v4948, %v4948
  %v4974 = vmul.f32 %v4949, %v4949
  %v4975 = vmul.f32 %v4950, %v4950
  %v4976 = vmul.f32 %v4951, %v4951
  %v4977 = vmul.f32 %v4952, %v4952
  %v4978 = vmul.f32 %v4953, %v4953
  %v4979 = vmul.f32 %v4954, %v4954
  %v4980 = vmul.f32 %v4955, %v4955
  %v4981 = vmul.f32 %v4956, %v4956
  %v4982 = vmul.f32 %v4957, %v4957
  %v4983 = vmul.f32 %v4958, %v4958
  %v4984 = vmul.f32 %v4959, %v4959
  %v4985 = vmul.f32 %v4960, %v4960
  %v4986 = vmul.f32 %v4961, %v4961
  %v4987 = vmul.f32 %v4962, %v4962
  %v4988 = vmul.f32 %v4963, %v4963
  %v4989 = vmul.f32 %v4964, %v4964
  %v4990 = vmul.f32 %v4965, %v4965
  %v4991 = vmul.f32 %v4966, %v4966
  %v4992 = vmul.f32 %v4967, %v4967
  %v4993 = vmul.f32 %v4968, %v4968
  %v4994 = vmul.f32 %v4969, %v4969
  %v4995 = vmul.f32 %v4970, %v4970
  %v4996 = vmul.f32 %v4971, %v4971
  %v4997 = vmul.f32 %v4972, %v4972
  %v4998 = vadd.f32 %v4973, %v4974
  %v4999 = vadd.f32 %v4998, %v4975
  %v5000 = vadd.f32 %v4999, %v4976
  %v5001 = vadd.f32 %v5000, %v4977
  %v5002 = vadd.f32 %v5001, %v4978
  %v5003 = vadd.f32 %v5002, %v4979
  %v5004 = vadd.f32 %v5003, %v4980
  %v5005 = vadd.f32 %v5004, %v4981
  %v5006 = vadd.f32 %v5005, %v4982
  %v5007 = vadd.f32 %v5006, %v4983
  %v5008 = vadd.f32 %v5007, %v4984
  %v5009 = vadd.f32 %v5008, %v4985
  %v5010 = vadd.f32 %v5009, %v4986
  %v5011 = vadd.f32 %v5010, %v4987
  %v5012 = vadd.f32 %v5011, %v4988
  %v5013 = vadd.f32 %v5012, %v4989
  %v5014 = vadd.f32 %v5013, %v4990
  %v5015 = vadd.f32 %v5014, %v4991
  %v5016 = vadd.f32 %v5015, %v4992
  %v5017 = vadd.f32 %v5016, %v4993
  %v5018 = vadd.f32 %v5017, %v4994
  %v5019 = vadd.f32 %v5018, %v4995
  %v5020 = vadd.f32 %v5019, %v4996
  %v5021 = vadd.f32 %v5020, %v4997
  %v5022 = vrot.slane %v5021, 4
  %v5023 = vadd.f32 %v5021, %v5022
  %v5024 = vrot.slane %v5023, 2
  %v5025 = vadd.f32 %v5023, %v5024
  %v5026 = vrot.slane %v5025, 1
  %v5027 = vadd.f32 %v5025, %v5026
  %v5028 = vmul.f32 %v5027, 0.0078125
  %v5029 = vld [vmem:[%s5] sm:$0x1]
  %v5030 = vadd.f32 %v5028, 1e-05
  %v5031 = vrsqrt.pop %v5030
  %v5032 = vmul.f32 %v5029, %v5031
  %v5034 = vlaneseq
  %v5035 = vshrl.u32 %v5034, 7
  %v5036 = vsub.s32 0, %v5035
  %v5037 = vrot.slane %v5032, %v5036
  %v5039 = vmul.f32 %v4948, %v5037
  %v5040 = vmul.f32 %v4949, %v5037
  %v5041 = vmul.f32 %v4950, %v5037
  %v5042 = vmul.f32 %v4951, %v5037
  %v5043 = vmul.f32 %v4952, %v5037
  %v5044 = vmul.f32 %v4953, %v5037
  %v5045 = vmul.f32 %v4954, %v5037
  %v5046 = vmul.f32 %v4955, %v5037
  %v5047 = vmul.f32 %v4956, %v5037
  %v5048 = vmul.f32 %v4957, %v5037
  %v5049 = vmul.f32 %v4958, %v5037
  %v5050 = vmul.f32 %v4959, %v5037
  %v5051 = vmul.f32 %v4960, %v5037
  %v5052 = vmul.f32 %v4961, %v5037
  %v5053 = vmul.f32 %v4962, %v5037
  %v5054 = vmul.f32 %v4963, %v5037
  %v5055 = vmul.f32 %v4964, %v5037
  %v5056 = vmul.f32 %v4965, %v5037
  %v5057 = vmul.f32 %v4966, %v5037
  %v5058 = vmul.f32 %v4967, %v5037
  %v5059 = vmul.f32 %v4968, %v5037
  %v5060 = vmul.f32 %v4969, %v5037
  %v5061 = vmul.f32 %v4970, %v5037
  %v5062 = vmul.f32 %v4971, %v5037
  %v5063 = vmul.f32 %v4972, %v5037
  %v5064 = vld [vmem:[%s6] sm:$0x1]
  %v5066 = vlaneseq
  %v5067 = vshrl.u32 %v5066, 7
  %v5068 = vsub.s32 0, %v5067
  %v5069 = vrot.slane %v5064, %v5068
  %v5071 = vadd.f32 %v5039, %v5069
  %v5072 = vadd.f32 %v5040, %v5069
  %v5073 = vadd.f32 %v5041, %v5069
  %v5074 = vadd.f32 %v5042, %v5069
  %v5075 = vadd.f32 %v5043, %v5069
  %v5076 = vadd.f32 %v5044, %v5069
  %v5077 = vadd.f32 %v5045, %v5069
  %v5078 = vadd.f32 %v5046, %v5069
  %v5079 = vadd.f32 %v5047, %v5069
  %v5080 = vadd.f32 %v5048, %v5069
  %v5081 = vadd.f32 %v5049, %v5069
  %v5082 = vadd.f32 %v5050, %v5069
  %v5083 = vadd.f32 %v5051, %v5069
  %v5084 = vadd.f32 %v5052, %v5069
  %v5085 = vadd.f32 %v5053, %v5069
  %v5086 = vadd.f32 %v5054, %v5069
  %v5087 = vadd.f32 %v5055, %v5069
  %v5088 = vadd.f32 %v5056, %v5069
  %v5089 = vadd.f32 %v5057, %v5069
  %v5090 = vadd.f32 %v5058, %v5069
  %v5091 = vadd.f32 %v5059, %v5069
  %v5092 = vadd.f32 %v5060, %v5069
  %v5093 = vadd.f32 %v5061, %v5069
  %v5094 = vadd.f32 %v5062, %v5069
  %v5095 = vadd.f32 %v5063, %v5069
  %v5096 = vmul.f32 %v5071, %v2223
  %v5097 = vmul.f32 %v5072, %v2228
  %v5098 = vmul.f32 %v5073, %v2233
  %v5099 = vmul.f32 %v5074, %v2238
  %v5100 = vmul.f32 %v5075, %v2243
  %v5101 = vmul.f32 %v5076, %v2248
  %v5102 = vmul.f32 %v5077, %v2253
  %v5103 = vmul.f32 %v5078, %v2258
  %v5104 = vmul.f32 %v5079, %v2263
  %v5105 = vmul.f32 %v5080, %v2268
  %v5106 = vmul.f32 %v5081, %v2273
  %v5107 = vmul.f32 %v5082, %v2278
  %v5108 = vmul.f32 %v5083, %v2283
  %v5109 = vmul.f32 %v5084, %v2288
  %v5110 = vmul.f32 %v5085, %v2293
  %v5111 = vmul.f32 %v5086, %v2298
  %v5112 = vmul.f32 %v5087, %v2303
  %v5113 = vmul.f32 %v5088, %v2308
  %v5114 = vmul.f32 %v5089, %v2313
  %v5115 = vmul.f32 %v5090, %v2318
  %v5116 = vmul.f32 %v5091, %v2323
  %v5117 = vmul.f32 %v5092, %v2328
  %v5118 = vmul.f32 %v5093, %v2333
  %v5119 = vmul.f32 %v5094, %v2338
  %v5120 = vmul.f32 %v5095, %v2343
  %v5121 = vadd.f32 %v5096, %v2678
  %v5122 = vadd.f32 %v5097, %v2679
  %v5123 = vadd.f32 %v5098, %v2680
  %v5124 = vadd.f32 %v5099, %v2681
  %v5125 = vadd.f32 %v5100, %v2682
  %v5126 = vadd.f32 %v5101, %v2683
  %v5127 = vadd.f32 %v5102, %v2684
  %v5128 = vadd.f32 %v5103, %v2685
  %v5129 = vadd.f32 %v5104, %v2686
  %v5130 = vadd.f32 %v5105, %v2687
  %v5131 = vadd.f32 %v5106, %v2688
  %v5132 = vadd.f32 %v5107, %v2689
  %v5133 = vadd.f32 %v5108, %v2690
  %v5134 = vadd.f32 %v5109, %v2691
  %v5135 = vadd.f32 %v5110, %v2692
  %v5136 = vadd.f32 %v5111, %v2693
  %v5137 = vadd.f32 %v5112, %v2694
  %v5138 = vadd.f32 %v5113, %v2695
  %v5139 = vadd.f32 %v5114, %v2696
  %v5140 = vadd.f32 %v5115, %v2697
  %v5141 = vadd.f32 %v5116, %v2698
  %v5142 = vadd.f32 %v5117, %v2699
  %v5143 = vadd.f32 %v5118, %v2700
  %v5144 = vadd.f32 %v5119, %v2701
  %v5145 = vadd.f32 %v5120, %v2702
  %v5146 = vmax.f32 %v5121, 0.0
  %v5147 = vmax.f32 %v5122, 0.0
  %v5148 = vmax.f32 %v5123, 0.0
  %v5149 = vmax.f32 %v5124, 0.0
  %v5150 = vmax.f32 %v5125, 0.0
  %v5151 = vmax.f32 %v5126, 0.0
  %v5152 = vmax.f32 %v5127, 0.0
  %v5153 = vmax.f32 %v5128, 0.0
  %v5154 = vmax.f32 %v5129, 0.0
  %v5155 = vmax.f32 %v5130, 0.0
  %v5156 = vmax.f32 %v5131, 0.0
  %v5157 = vmax.f32 %v5132, 0.0
  %v5158 = vmax.f32 %v5133, 0.0
  %v5159 = vmax.f32 %v5134, 0.0
  %v5160 = vmax.f32 %v5135, 0.0
  %v5161 = vmax.f32 %v5136, 0.0
  %v5162 = vmax.f32 %v5137, 0.0
  %v5163 = vmax.f32 %v5138, 0.0
  %v5164 = vmax.f32 %v5139, 0.0
  %v5165 = vmax.f32 %v5140, 0.0
  %v5166 = vmax.f32 %v5141, 0.0
  %v5167 = vmax.f32 %v5142, 0.0
  %v5168 = vmax.f32 %v5143, 0.0
  %v5169 = vmax.f32 %v5144, 0.0
  %v5170 = vmax.f32 %v5145, 0.0
  %5171 = vst [vmem:[%s8] sm:$0xff] 0.0
  %5172 = vst [vmem:[%s8 + $0x8] sm:$0xff] 0.0
  %5173 = vst [vmem:[%s8 + $0x10] sm:$0xff] 0.0
  %5174 = vst [vmem:[%s8 + $0x18] sm:$0xff] 0.0
  %5175 = vst [vmem:[%s8 + $0x20] sm:$0xff] 0.0
  %5176 = vst [vmem:[%s8 + $0x28] sm:$0xff] 0.0
  %5177 = vst [vmem:[%s8 + $0x30] sm:$0xff] 0.0
  %5178 = vst [vmem:[%s8 + $0x38] sm:$0xff] 0.0
  %5179 = vst [vmem:[%s8 + $0x40] sm:$0xff] 0.0
  %5180 = vst [vmem:[%s8 + $0x48] sm:$0xff] 0.0
  %5181 = vst [vmem:[%s8 + $0x50] sm:$0xff] 0.0
  %5182 = vst [vmem:[%s8 + $0x58] sm:$0xff] 0.0
  %5183 = vst [vmem:[%s8 + $0x60] sm:$0xff] 0.0
  %5184 = vst [vmem:[%s8 + $0x68] sm:$0xff] 0.0
  %5185 = vst [vmem:[%s8 + $0x70] sm:$0xff] 0.0
  %5186 = vst [vmem:[%s8 + $0x78] sm:$0xff] 0.0
  %5187 = vst [vmem:[%s8 + $0x80] sm:$0xff] 0.0
  %5188 = vst [vmem:[%s8 + $0x88] sm:$0xff] 0.0
  %5189 = vst [vmem:[%s8 + $0x90] sm:$0xff] 0.0
  %5190 = vst [vmem:[%s8 + $0x98] sm:$0xff] 0.0
  %5191 = vst [vmem:[%s8 + $0xa0] sm:$0xff] 0.0
  %5192 = vst [vmem:[%s8 + $0xa8] sm:$0xff] 0.0
  %5193 = vst [vmem:[%s8 + $0xb0] sm:$0xff] 0.0
  %5194 = vst [vmem:[%s8 + $0xb8] sm:$0xff] 0.0
  %5195 = vst [vmem:[%s8 + $0xc0] sm:$0xff] 0.0
  %5196 = vst [vmem:[%s8 + $0xc8] sm:$0xff] 0.0
  %5197 = vst [vmem:[%s8 + $0xd0] sm:$0xff] 0.0
  %5198 = vst [vmem:[%s8 + $0xd8] sm:$0xff] 0.0
  %5199 = vst [vmem:[%s8 + $0xe0] sm:$0xff] 0.0
  %5200 = vst [vmem:[%s8 + $0x10] sm:$0xff] %v5146
  %5201 = vst [vmem:[%s8 + $0x18] sm:$0xff] %v5147
  %5202 = vst [vmem:[%s8 + $0x20] sm:$0xff] %v5148
  %5203 = vst [vmem:[%s8 + $0x28] sm:$0xff] %v5149
  %5204 = vst [vmem:[%s8 + $0x30] sm:$0xff] %v5150
  %5205 = vst [vmem:[%s8 + $0x38] sm:$0xff] %v5151
  %5206 = vst [vmem:[%s8 + $0x40] sm:$0xff] %v5152
  %5207 = vst [vmem:[%s8 + $0x48] sm:$0xff] %v5153
  %5208 = vst [vmem:[%s8 + $0x50] sm:$0xff] %v5154
  %5209 = vst [vmem:[%s8 + $0x58] sm:$0xff] %v5155
  %5210 = vst [vmem:[%s8 + $0x60] sm:$0xff] %v5156
  %5211 = vst [vmem:[%s8 + $0x68] sm:$0xff] %v5157
  %5212 = vst [vmem:[%s8 + $0x70] sm:$0xff] %v5158
  %5213 = vst [vmem:[%s8 + $0x78] sm:$0xff] %v5159
  %5214 = vst [vmem:[%s8 + $0x80] sm:$0xff] %v5160
  %5215 = vst [vmem:[%s8 + $0x88] sm:$0xff] %v5161
  %5216 = vst [vmem:[%s8 + $0x90] sm:$0xff] %v5162
  %5217 = vst [vmem:[%s8 + $0x98] sm:$0xff] %v5163
  %5218 = vst [vmem:[%s8 + $0xa0] sm:$0xff] %v5164
  %5219 = vst [vmem:[%s8 + $0xa8] sm:$0xff] %v5165
  %5220 = vst [vmem:[%s8 + $0xb0] sm:$0xff] %v5166
  %5221 = vst [vmem:[%s8 + $0xb8] sm:$0xff] %v5167
  %5222 = vst [vmem:[%s8 + $0xc0] sm:$0xff] %v5168
  %5223 = vst [vmem:[%s8 + $0xc8] sm:$0xff] %v5169
  %5224 = vst [vmem:[%s8 + $0xd0] sm:$0xff] %v5170
  // Predicated region
  $region34: #{resnet_vision_forward.7} parent=0 // pred_check
    _
  $region35: #{resnet_vision_forward.7} parent=0 // pred_check_branch
    %5226 = sbr.rel (0) target = $region37
  $region36: #{resnet_vision_forward.7} parent=0 // pred_region
    _
  $region37: #{resnet_vision_forward.7} parent=0 // pred_fallthru
    _
  // Predicated region
  $region38: #{resnet_vision_forward.7} parent=0 // pred_check
    _
  $region39: #{resnet_vision_forward.7} parent=0 // pred_check_branch
    %5228 = sbr.rel (0) target = $region41
  $region40: #{resnet_vision_forward.7} parent=0 // pred_region
    _
  $region41: #{resnet_vision_forward.7} parent=0 // pred_fallthru
    _

</llo_original>
